<compile_context>
chip_gen: v7x
topology: tpu7x:2x2x1
jax: 0.10.0
libtpu: 0.0.40
codegen_flags: <defaults>
</compile_context>

<pallas_src>
import functools

import jax
import jax.numpy as jnp
from jax.experimental import pallas as pl
from jax.experimental.pallas import tpu as pltpu

BN_EPS = 1e-5


@functools.lru_cache(maxsize=None)
def _vmem_limit_bytes():
    """Generation-aware scoped-VMEM budget (~75% of physical, capped at 100 MiB).

    v5e/v6e (128 MiB physical) -> 96 MiB; v7x (64 MiB physical) -> 48 MiB.
    """
    cap = 128 * 1024 * 1024
    try:
        cap = int(pltpu.get_tpu_info().vmem_capacity_bytes)
    except Exception:
        pass
    return int(min((cap * 3) // 4, 100 * 1024 * 1024))


def _compiler_params(n_axes=1):
    return pltpu.CompilerParams(
        dimension_semantics=("parallel",) * n_axes,
        vmem_limit_bytes=_vmem_limit_bytes(),
    )


# ----------------------------------------------------------------------------
# Stage A: fused conv1 | u_conv1 | u_conv2 (single K=9*Cin matmul) + bn1 stats
# ----------------------------------------------------------------------------

def _conv_x_kernel(x_ref, w_ref, y1_ref, x2_ref, x3_ref, s1_ref, s2_ref,
                   xpad_ref, slab_ref, *, H, W, Cin, C):
    # x_ref    : (1, H, W, Cin) unpadded NHWC image for this batch element
    # w_ref    : (9*Cin, 3C)    bf16 conv1|u_conv1|u_conv2 weights (tap-major)
    # xpad_ref : (H+2, W+2, Cin) f32 scratch; zero ring + interior image
    # slab_ref : (HW, 9*Cin)    f32 im2col slab scratch
    Hp, Wp = H + 2, W + 2
    HW = H * W

    # Zero only the thin halo strips each step (cheaper than the old iota mask,
    # no wrapper jnp.pad, and megacore-safe under a "parallel" batch axis).
    zrow = jnp.zeros((1, Wp, Cin), jnp.float32)
    zcol = jnp.zeros((Hp, 1, Cin), jnp.float32)
    xpad_ref[0:1, :, :] = zrow
    xpad_ref[Hp - 1:Hp, :, :] = zrow
    xpad_ref[:, 0:1, :] = zcol
    xpad_ref[:, Wp - 1:Wp, :] = zcol
    xpad_ref[1:H + 1, 1:W + 1, :] = x_ref[0]

    # Assemble the nine shifted windows once into the (HW, 9*Cin) slab, then do
    # a single K = 9*Cin bf16 matmul with f32 accumulation (MXU-native).
    for kh in range(3):
        for kw in range(3):
            t = 3 * kh + kw
            slab_ref[:, t * Cin:(t + 1) * Cin] = (
                xpad_ref[kh:kh + H, kw:kw + W, :].reshape(HW, Cin))
    acc = jnp.dot(slab_ref[...].astype(jnp.bfloat16), w_ref[...],
                  preferred_element_type=jnp.float32)          # (HW, 3C) f32

    y1 = acc[:, 0:C]
    y1_ref[0] = y1                                             # raw conv1
    x2_ref[0] = acc[:, C:2 * C]                                # u_conv1(x)
    x3_ref[0] = acc[:, 2 * C:3 * C]                            # u_conv2(x)
    # one-pass bn1 partial stats: sum and sum-of-squares (var = E[x^2]-E[x]^2)
    s1_ref[0] = jnp.sum(y1, axis=0, keepdims=True)
    s2_ref[0] = jnp.sum(y1 * y1, axis=0, keepdims=True)


def fused_conv_x(x_nhwc, w_all, B, H, W, Cin, C):
    # TODO(synk): for large H*W (esp. v7x 64 MiB VMEM) tile the grid over
    # (B, H/rows) with a 2-row halo instead of whole-image blocks.
    # TODO(synk): at large C, give the constant-index weight spec
    # pipeline_mode=pl.Buffered(1) (or split 3C over a grid axis) to control its
    # VMEM footprint; negligible at these shapes.
    Hp, Wp, HW, Ct = H + 2, W + 2, H * W, 3 * C
    kern = functools.partial(_conv_x_kernel, H=H, W=W, Cin=Cin, C=C)
    flops = 2 * B * HW * (9 * Cin) * Ct
    bytes_acc = 4 * (x_nhwc.size + 3 * B * HW * C + 2 * B * C) + 2 * w_all.size
    grid_spec = pltpu.PrefetchScalarGridSpec(
        num_scalar_prefetch=0, grid=(B,),
        in_specs=[
            pl.BlockSpec((1, H, W, Cin), lambda b: (b, 0, 0, 0)),
            pl.BlockSpec((9 * Cin, Ct), lambda b: (0, 0)),
        ],
        out_specs=(
            pl.BlockSpec((1, HW, C), lambda b: (b, 0, 0)),
            pl.BlockSpec((1, HW, C), lambda b: (b, 0, 0)),
            pl.BlockSpec((1, HW, C), lambda b: (b, 0, 0)),
            pl.BlockSpec((1, 1, C), lambda b: (b, 0, 0)),
            pl.BlockSpec((1, 1, C), lambda b: (b, 0, 0)),
        ),
        scratch_shapes=[
            pltpu.VMEM((Hp, Wp, Cin), jnp.float32),
            pltpu.VMEM((HW, 9 * Cin), jnp.float32),
        ],
    )
    return pl.pallas_call(
        kern,
        out_shape=(
            jax.ShapeDtypeStruct((B, HW, C), jnp.float32),
            jax.ShapeDtypeStruct((B, HW, C), jnp.float32),
            jax.ShapeDtypeStruct((B, HW, C), jnp.float32),
            jax.ShapeDtypeStruct((B, 1, C), jnp.float32),
            jax.ShapeDtypeStruct((B, 1, C), jnp.float32),
        ),
        grid_spec=grid_spec,
        compiler_params=_compiler_params(1),
        cost_estimate=pl.CostEstimate(flops=flops, transcendentals=0,
                                      bytes_accessed=bytes_acc),
    )(x_nhwc, w_all)


# ----------------------------------------------------------------------------
# Stage B: bn1 + ReLU fused into the conv2 prologue (single matmul) + bn2 stats
# ----------------------------------------------------------------------------

def _bn1_conv2_kernel(y1_ref, w_ref, mu_ref, inv_ref, y2_ref, s1_ref, s2_ref,
                      pad_ref, slab_ref, *, H, W, C):
    # y1_ref  : (1, HW, C) raw conv1 tile for this batch element
    # mu/inv  : (1, 1, C)  bn1 batch mean / rsqrt(var + eps)
    # pad_ref : (H+2, W+2, C) f32 scratch; zero ring + relu(bn1(conv1)) interior
    Hp, Wp = H + 2, W + 2
    HW = H * W

    zrow = jnp.zeros((1, Wp, C), jnp.float32)
    zcol = jnp.zeros((Hp, 1, C), jnp.float32)
    pad_ref[0:1, :, :] = zrow
    pad_ref[Hp - 1:Hp, :, :] = zrow
    pad_ref[:, 0:1, :] = zcol
    pad_ref[:, Wp - 1:Wp, :] = zcol

    # bn1 (training-mode batch stats, gamma=1, beta=0) + ReLU, interior only,
    # so conv2 sees the exact zero-padded relu(bn1(conv1(x))).
    a = jnp.maximum((y1_ref[0] - mu_ref[0]) * inv_ref[0], 0.0)    # (HW, C)
    pad_ref[1:H + 1, 1:W + 1, :] = a.reshape(H, W, C)

    for kh in range(3):
        for kw in range(3):
            t = 3 * kh + kw
            slab_ref[:, t * C:(t + 1) * C] = (
                pad_ref[kh:kh + H, kw:kw + W, :].reshape(HW, C))
    acc = jnp.dot(slab_ref[...].astype(jnp.bfloat16), w_ref[...],
                  preferred_element_type=jnp.float32)             # (HW, C) f32

    y2_ref[0] = acc                                               # raw conv2
    s1_ref[0] = jnp.sum(acc, axis=0, keepdims=True)
    s2_ref[0] = jnp.sum(acc * acc, axis=0, keepdims=True)


def bn1_conv2(y1, w2r, mu1, inv1, B, H, W, C):
    Hp, Wp, HW = H + 2, W + 2, H * W
    kern = functools.partial(_bn1_conv2_kernel, H=H, W=W, C=C)
    flops = 2 * B * HW * (9 * C) * C + 4 * B * HW * C
    bytes_acc = 4 * (y1.size + B * HW * C + 2 * B * C + 2 * C) + 2 * w2r.size
    grid_spec = pltpu.PrefetchScalarGridSpec(
        num_scalar_prefetch=0, grid=(B,),
        in_specs=[
            pl.BlockSpec((1, HW, C), lambda b: (b, 0, 0)),
            pl.BlockSpec((9 * C, C), lambda b: (0, 0)),
            pl.BlockSpec((1, 1, C), lambda b: (0, 0, 0)),
            pl.BlockSpec((1, 1, C), lambda b: (0, 0, 0)),
        ],
        out_specs=(
            pl.BlockSpec((1, HW, C), lambda b: (b, 0, 0)),
            pl.BlockSpec((1, 1, C), lambda b: (b, 0, 0)),
            pl.BlockSpec((1, 1, C), lambda b: (b, 0, 0)),
        ),
        scratch_shapes=[
            pltpu.VMEM((Hp, Wp, C), jnp.float32),
            pltpu.VMEM((HW, 9 * C), jnp.float32),
        ],
    )
    return pl.pallas_call(
        kern,
        out_shape=(
            jax.ShapeDtypeStruct((B, HW, C), jnp.float32),
            jax.ShapeDtypeStruct((B, 1, C), jnp.float32),
            jax.ShapeDtypeStruct((B, 1, C), jnp.float32),
        ),
        grid_spec=grid_spec,
        compiler_params=_compiler_params(1),
        cost_estimate=pl.CostEstimate(flops=flops, transcendentals=0,
                                      bytes_accessed=bytes_acc),
    )(y1, w2r, mu1, inv1)


# ----------------------------------------------------------------------------
# Stage C: lane-dense fused tail: bn2 + shortcut + dense product + ReLU
# ----------------------------------------------------------------------------

def _tail_prev_kernel(y2_ref, mu_ref, inv_ref, sc_ref, x2_ref, x3_ref, prev_ref,
                      out_ref, so_ref, *, Kp):
    out2 = (y2_ref[...] - mu_ref[...]) * inv_ref[...]          # bn2 (gamma=1, beta=0)
    out0 = prev_ref[0]
    for k in range(1, Kp):                                     # reversed dense product
        out0 = out0 * prev_ref[k]
    so = x2_ref[...] * x3_ref[...] * out0                      # out_so
    so_ref[...] = so
    out_ref[...] = jnp.maximum(out2 + sc_ref[...] + so, 0.0)   # relu(out1 + out_so)


def _tail_noprev_kernel(y2_ref, mu_ref, inv_ref, sc_ref, x2_ref, x3_ref,
                        out_ref, so_ref):
    out2 = (y2_ref[...] - mu_ref[...]) * inv_ref[...]
    so = x2_ref[...] * x3_ref[...]                             # out0 == 1 exactly
    so_ref[...] = so
    out_ref[...] = jnp.maximum(out2 + sc_ref[...] + so, 0.0)


def _pick_tm(M):
    """Largest row-tile (<= 2048, multiple of 8, divides M); degenerate M -> M."""
    cap = 2048
    if M <= cap or M % 8 != 0:
        return M
    tm = cap
    while tm >= 8 and M % tm != 0:
        tm -= 8
    return tm if tm >= 8 else M


def fused_tail(y2f, mu2l, inv2l, scf, x2f, x3f, prevf=None):
    M, L = y2f.shape
    TM = _pick_tm(M)
    in_specs = [
        pl.BlockSpec((TM, L), lambda i: (i, 0)),
        pl.BlockSpec((1, L), lambda i: (0, 0)),
        pl.BlockSpec((1, L), lambda i: (0, 0)),
        pl.BlockSpec((TM, L), lambda i: (i, 0)),
        pl.BlockSpec((TM, L), lambda i: (i, 0)),
        pl.BlockSpec((TM, L), lambda i: (i, 0)),
    ]
    args = [y2f, mu2l, inv2l, scf, x2f, x3f]
    if prevf is None:
        kern = _tail_noprev_kernel
        flops = M * L * 5
        bytes_acc = 4 * (6 * M * L + 2 * L)
    else:
        Kp = prevf.shape[0]
        kern = functools.partial(_tail_prev_kernel, Kp=Kp)
        in_specs.append(pl.BlockSpec((Kp, TM, L), lambda i: (0, i, 0)))
        args.append(prevf)
        flops = M * L * (Kp + 5)
        bytes_acc = 4 * (6 * M * L + prevf.size + 2 * L)
    grid_spec = pltpu.PrefetchScalarGridSpec(
        num_scalar_prefetch=0, grid=(M // TM,),
        in_specs=in_specs,
        out_specs=(pl.BlockSpec((TM, L), lambda i: (i, 0)),
                   pl.BlockSpec((TM, L), lambda i: (i, 0))),
    )
    return pl.pallas_call(
        kern,
        out_shape=(jax.ShapeDtypeStruct((M, L), jnp.float32),
                   jax.ShapeDtypeStruct((M, L), jnp.float32)),
        grid_spec=grid_spec,
        compiler_params=_compiler_params(1),
        cost_estimate=pl.CostEstimate(flops=flops, transcendentals=0,
                                      bytes_accessed=bytes_acc),
    )(*args)


# ----------------------------------------------------------------------------
# BasicBlock forward
# ----------------------------------------------------------------------------

def basic_block_forward(x_nchw, second_ords_nchw, params):
    """xa = (x, second_ords) -> (out, second_ords + [out_so]); NCHW in/out."""
    # NCHW <-> NHWC conversion only at the block (model) boundary; a multi-block
    # network should stay NHWC / lane-dense between blocks.
    x = jnp.transpose(x_nchw, (0, 2, 3, 1)).astype(jnp.float32)   # NHWC
    B, H, W, Cin = x.shape
    C = params['w1'].shape[-1]
    assert Cin == C  # identity shortcut (stride == 1, in_planes == planes)
    n = float(B * H * W)
    HW = H * W

    # ---- stage A: fused conv1 | u_conv1 | u_conv2 over x --------------------
    # Weights concatenated along Cout, flattened tap-major to (9*Cin, 3C) and
    # cast to bf16 (MXU-native operands; accumulation stays f32 in-kernel).
    w_all = jnp.concatenate([params['w1'], params['wu1'], params['wu2']],
                            axis=-1).reshape(9 * Cin, 3 * C).astype(jnp.bfloat16)
    y1, x2o, x3o, s1, s2 = fused_conv_x(x, w_all, B, H, W, Cin, C)

    # bn1 statistics (training-mode batch stats, biased variance, clamped >= 0)
    # TODO(synk): one-pass E[x^2]-E[x]^2 can cancel badly at very large B*H*W;
    # switch to Welford/two-pass partials if this block is used at scale.
    mu1 = jnp.sum(s1, axis=(0, 1)) / n
    var1 = jnp.maximum(jnp.sum(s2, axis=(0, 1)) / n - mu1 * mu1, 0.0)
    inv1 = jax.lax.rsqrt(var1 + BN_EPS)

    # ---- stage B: relu(bn1(.)) fused into conv2 -----------------------------
    w2r = params['w2'].reshape(9 * C, C).astype(jnp.bfloat16)
    y2, s1b, s2b = bn1_conv2(y1, w2r, mu1.reshape(1, 1, C),
                             inv1.reshape(1, 1, C), B, H, W, C)

    mu2 = jnp.sum(s1b, axis=(0, 1)) / n
    var2 = jnp.maximum(jnp.sum(s2b, axis=(0, 1)) / n - mu2 * mu2, 0.0)
    inv2 = jax.lax.rsqrt(var2 + BN_EPS)

    # ---- stage C: lane-dense fused tail -------------------------------------
    total = B * H * W * C
    # NOTE: falls back to L = C (narrow, non-lane-dense) when 128 % C != 0 or
    # total % 128 != 0 -- a known performance cliff for odd channel counts.
    L = 128 if (128 % C == 0 and total % 128 == 0) else C
    M = total // L
    # per-channel bn2 stats tiled over the 128-lane dim (channel == lane % C)
    mu2l = jnp.tile(mu2, L // C).reshape(1, L)
    inv2l = jnp.tile(inv2, L // C).reshape(1, L)

    y2f = y2.reshape(M, L)
    scf = x.reshape(M, L)             # shortcut == identity
    x2f = x2o.reshape(M, L)
    x3f = x3o.reshape(M, L)

    # TODO(synk): shortcut_sep / cond_short reprojection of previous dense terms
    # is not implemented (only triggered when their shapes mismatch; the default
    # config keeps matching shapes, so cond == False).
    # TODO(synk): bf16 storage of inter-stage activations would halve HBM
    # traffic on v6e/v7x; kept f32 for parity with the f32 PyTorch reference.
    prev = [jnp.transpose(p, (0, 2, 3, 1)).astype(jnp.float32).reshape(M, L)
            for p in second_ords_nchw]
    if prev:
        prevf = jnp.stack(prev[::-1], axis=0)      # reversed == PyTorch order
        outf, sof = fused_tail(y2f, mu2l, inv2l, scf, x2f, x3f, prevf)
    else:
        # out0 == 1 exactly: specialised kernel, no ones array streamed from HBM
        outf, sof = fused_tail(y2f, mu2l, inv2l, scf, x2f, x3f, None)

    out_nchw = jnp.transpose(outf.reshape(B, H, W, C), (0, 3, 1, 2))
    so_nchw = jnp.transpose(sof.reshape(B, H, W, C), (0, 3, 1, 2))
    # append_bef_norm=True and no local convs -> appended term == out_so
    return out_nchw, list(second_ords_nchw) + [so_nchw]


# ----------------------------------------------------------------------------
# Main
# ----------------------------------------------------------------------------

if __name__ == "__main__":
    key = jax.random.PRNGKey(0)
    k1, k2, k3, k4, kx, kp1, kp2 = jax.random.split(key, 7)

    in_planes = planes = 4
    B, H, W = 2, 16, 16

    def conv_w(k, cout, cin):
        # PyTorch Conv2d weight layout OIHW, converted to HWIO for the kernel.
        w = jax.random.normal(k, (cout, cin, 3, 3), jnp.float32) * 0.1
        return jnp.transpose(w, (2, 3, 1, 0))

    params = dict(
        w1=conv_w(k1, planes, in_planes),      # conv1
        w2=conv_w(k2, planes, planes),         # conv2
        wu1=conv_w(k3, in_planes, in_planes),  # u_conv1 (planes_ho == planes1)
        wu2=conv_w(k4, in_planes, in_planes),  # u_conv2
    )

    x = jax.random.normal(kx, (B, in_planes, H, W), jnp.float32)
    second_ords = [
        0.5 * jax.random.normal(kp1, (B, planes, H, W), jnp.float32),
        0.5 * jax.random.normal(kp2, (B, planes, H, W), jnp.float32),
    ]

    fwd = jax.jit(basic_block_forward)
    out, new_second_ords = fwd(x, second_ords, params)
    jax.block_until_ready(out)
    jax.block_until_ready(new_second_ords[-1])
    print("KERNEL_OK")
</pallas_src>

<mosaic_0001>
module attributes {stable_mosaic.version = 11 : i64} {
  func.func @_conv_x_kernel(%arg0: i32, %arg1: memref<1x16x16x4xf32, #tpu.memory_space<vmem>>, %arg2: memref<36x12xbf16, #tpu.memory_space<vmem>>, %arg3: memref<1x256x4xf32, #tpu.memory_space<vmem>>, %arg4: memref<1x256x4xf32, #tpu.memory_space<vmem>>, %arg5: memref<1x256x4xf32, #tpu.memory_space<vmem>>, %arg6: memref<1x1x4xf32, #tpu.memory_space<vmem>>, %arg7: memref<1x1x4xf32, #tpu.memory_space<vmem>>, %arg8: memref<18x18x4xf32, #tpu.memory_space<vmem>>, %arg9: memref<256x36xf32, #tpu.memory_space<vmem>>) attributes {dimension_semantics = [#tpu.dimension_semantics<parallel>], iteration_bounds = array<i64: 2>, scalar_prefetch = 0 : i64, scratch_operands = 2 : i64, tpu.core_type = #tpu.core_type<tc>, window_params = [{transform_indices = @transform_0, window_bounds = array<i64: 1, 16, 16, 4>}, {pipeline_mode = #tpu.pipeline_mode<synchronous>, transform_indices = @transform_1, window_bounds = array<i64: 36, 12>}, {transform_indices = @transform_2, window_bounds = array<i64: 1, 256, 4>}, {transform_indices = @transform_3, window_bounds = array<i64: 1, 256, 4>}, {transform_indices = @transform_4, window_bounds = array<i64: 1, 256, 4>}, {transform_indices = @transform_5, window_bounds = array<i64: 1, 1, 4>}, {transform_indices = @transform_6, window_bounds = array<i64: 1, 1, 4>}]} {
    %cst = arith.constant 0.000000e+00 : f32
    %0 = vector.broadcast %cst : f32 to vector<1x18x4xf32>
    %cst_0 = arith.constant 0.000000e+00 : f32
    %1 = vector.broadcast %cst_0 : f32 to vector<18x1x4xf32>
    %c0 = arith.constant 0 : index
    %c0_1 = arith.constant 0 : index
    %c0_2 = arith.constant 0 : index
    %2 = vector.load %arg8[%c0, %c0_1, %c0_2] : memref<18x18x4xf32, #tpu.memory_space<vmem>>, vector<1x18x4xf32>
    tpu.vector_store %arg8[%c0, %c0_1, %c0_2], %0 {strides = array<i32>} : memref<18x18x4xf32, #tpu.memory_space<vmem>>, vector<1x18x4xf32>,
    %c17 = arith.constant 17 : index
    %c0_3 = arith.constant 0 : index
    %c0_4 = arith.constant 0 : index
    %3 = vector.load %arg8[%c17, %c0_3, %c0_4] : memref<18x18x4xf32, #tpu.memory_space<vmem>>, vector<1x18x4xf32>
    tpu.vector_store %arg8[%c17, %c0_3, %c0_4], %0 {strides = array<i32>} : memref<18x18x4xf32, #tpu.memory_space<vmem>>, vector<1x18x4xf32>,
    %c0_5 = arith.constant 0 : index
    %c0_6 = arith.constant 0 : index
    %c0_7 = arith.constant 0 : index
    %4 = vector.load %arg8[%c0_5, %c0_6, %c0_7] : memref<18x18x4xf32, #tpu.memory_space<vmem>>, vector<18x1x4xf32>
    tpu.vector_store %arg8[%c0_5, %c0_6, %c0_7], %1 {strides = array<i32>} : memref<18x18x4xf32, #tpu.memory_space<vmem>>, vector<18x1x4xf32>,
    %c0_8 = arith.constant 0 : index
    %c17_9 = arith.constant 17 : index
    %c0_10 = arith.constant 0 : index
    %5 = vector.load %arg8[%c0_8, %c17_9, %c0_10] : memref<18x18x4xf32, #tpu.memory_space<vmem>>, vector<18x1x4xf32>
    tpu.vector_store %arg8[%c0_8, %c17_9, %c0_10], %1 {strides = array<i32>} : memref<18x18x4xf32, #tpu.memory_space<vmem>>, vector<18x1x4xf32>,
    %c0_11 = arith.constant 0 : index
    %c0_12 = arith.constant 0 : index
    %c0_13 = arith.constant 0 : index
    %c0_14 = arith.constant 0 : index
    %6 = vector.load %arg1[%c0_11, %c0_12, %c0_13, %c0_14] : memref<1x16x16x4xf32, #tpu.memory_space<vmem>>, vector<1x16x16x4xf32>
    %7 = vector.shape_cast %6 : vector<1x16x16x4xf32> to vector<16x16x4xf32>
    %c1 = arith.constant 1 : index
    %c1_15 = arith.constant 1 : index
    %c0_16 = arith.constant 0 : index
    %8 = vector.load %arg8[%c1, %c1_15, %c0_16] : memref<18x18x4xf32, #tpu.memory_space<vmem>>, vector<16x16x4xf32>
    tpu.vector_store %arg8[%c1, %c1_15, %c0_16], %7 {strides = array<i32>} : memref<18x18x4xf32, #tpu.memory_space<vmem>>, vector<16x16x4xf32>,
    %c0_17 = arith.constant 0 : index
    %c0_18 = arith.constant 0 : index
    %c0_19 = arith.constant 0 : index
    %9 = vector.load %arg8[%c0_17, %c0_18, %c0_19] : memref<18x18x4xf32, #tpu.memory_space<vmem>>, vector<16x16x4xf32>
    %10 = vector.shape_cast %9 : vector<16x16x4xf32> to vector<256x4xf32>
    %c0_20 = arith.constant 0 : index
    %c0_21 = arith.constant 0 : index
    %11 = vector.load %arg9[%c0_20, %c0_21] : memref<256x36xf32, #tpu.memory_space<vmem>>, vector<256x4xf32>
    tpu.vector_store %arg9[%c0_20, %c0_21], %10 {strides = array<i32>} : memref<256x36xf32, #tpu.memory_space<vmem>>, vector<256x4xf32>,
    %c0_22 = arith.constant 0 : index
    %c1_23 = arith.constant 1 : index
    %c0_24 = arith.constant 0 : index
    %12 = vector.load %arg8[%c0_22, %c1_23, %c0_24] : memref<18x18x4xf32, #tpu.memory_space<vmem>>, vector<16x16x4xf32>
    %13 = vector.shape_cast %12 : vector<16x16x4xf32> to vector<256x4xf32>
    %c0_25 = arith.constant 0 : index
    %c4 = arith.constant 4 : index
    %14 = vector.load %arg9[%c0_25, %c4] : memref<256x36xf32, #tpu.memory_space<vmem>>, vector<256x4xf32>
    tpu.vector_store %arg9[%c0_25, %c4], %13 {strides = array<i32>} : memref<256x36xf32, #tpu.memory_space<vmem>>, vector<256x4xf32>,
    %c0_26 = arith.constant 0 : index
    %c2 = arith.constant 2 : index
    %c0_27 = arith.constant 0 : index
    %15 = vector.load %arg8[%c0_26, %c2, %c0_27] : memref<18x18x4xf32, #tpu.memory_space<vmem>>, vector<16x16x4xf32>
    %16 = vector.shape_cast %15 : vector<16x16x4xf32> to vector<256x4xf32>
    %c0_28 = arith.constant 0 : index
    %c8 = arith.constant 8 : index
    %17 = vector.load %arg9[%c0_28, %c8] : memref<256x36xf32, #tpu.memory_space<vmem>>, vector<256x4xf32>
    tpu.vector_store %arg9[%c0_28, %c8], %16 {strides = array<i32>} : memref<256x36xf32, #tpu.memory_space<vmem>>, vector<256x4xf32>,
    %c1_29 = arith.constant 1 : index
    %c0_30 = arith.constant 0 : index
    %c0_31 = arith.constant 0 : index
    %18 = vector.load %arg8[%c1_29, %c0_30, %c0_31] : memref<18x18x4xf32, #tpu.memory_space<vmem>>, vector<16x16x4xf32>
    %19 = vector.shape_cast %18 : vector<16x16x4xf32> to vector<256x4xf32>
    %c0_32 = arith.constant 0 : index
    %c12 = arith.constant 12 : index
    %20 = vector.load %arg9[%c0_32, %c12] : memref<256x36xf32, #tpu.memory_space<vmem>>, vector<256x4xf32>
    tpu.vector_store %arg9[%c0_32, %c12], %19 {strides = array<i32>} : memref<256x36xf32, #tpu.memory_space<vmem>>, vector<256x4xf32>,
    %c1_33 = arith.constant 1 : index
    %c1_34 = arith.constant 1 : index
    %c0_35 = arith.constant 0 : index
    %21 = vector.load %arg8[%c1_33, %c1_34, %c0_35] : memref<18x18x4xf32, #tpu.memory_space<vmem>>, vector<16x16x4xf32>
    %22 = vector.shape_cast %21 : vector<16x16x4xf32> to vector<256x4xf32>
    %c0_36 = arith.constant 0 : index
    %c16 = arith.constant 16 : index
    %23 = vector.load %arg9[%c0_36, %c16] : memref<256x36xf32, #tpu.memory_space<vmem>>, vector<256x4xf32>
    tpu.vector_store %arg9[%c0_36, %c16], %22 {strides = array<i32>} : memref<256x36xf32, #tpu.memory_space<vmem>>, vector<256x4xf32>,
    %c1_37 = arith.constant 1 : index
    %c2_38 = arith.constant 2 : index
    %c0_39 = arith.constant 0 : index
    %24 = vector.load %arg8[%c1_37, %c2_38, %c0_39] : memref<18x18x4xf32, #tpu.memory_space<vmem>>, vector<16x16x4xf32>
    %25 = vector.shape_cast %24 : vector<16x16x4xf32> to vector<256x4xf32>
    %c0_40 = arith.constant 0 : index
    %c20 = arith.constant 20 : index
    %26 = vector.load %arg9[%c0_40, %c20] : memref<256x36xf32, #tpu.memory_space<vmem>>, vector<256x4xf32>
    tpu.vector_store %arg9[%c0_40, %c20], %25 {strides = array<i32>} : memref<256x36xf32, #tpu.memory_space<vmem>>, vector<256x4xf32>,
    %c2_41 = arith.constant 2 : index
    %c0_42 = arith.constant 0 : index
    %c0_43 = arith.constant 0 : index
    %27 = vector.load %arg8[%c2_41, %c0_42, %c0_43] : memref<18x18x4xf32, #tpu.memory_space<vmem>>, vector<16x16x4xf32>
    %28 = vector.shape_cast %27 : vector<16x16x4xf32> to vector<256x4xf32>
    %c0_44 = arith.constant 0 : index
    %c24 = arith.constant 24 : index
    %29 = vector.load %arg9[%c0_44, %c24] : memref<256x36xf32, #tpu.memory_space<vmem>>, vector<256x4xf32>
    tpu.vector_store %arg9[%c0_44, %c24], %28 {strides = array<i32>} : memref<256x36xf32, #tpu.memory_space<vmem>>, vector<256x4xf32>,
    %c2_45 = arith.constant 2 : index
    %c1_46 = arith.constant 1 : index
    %c0_47 = arith.constant 0 : index
    %30 = vector.load %arg8[%c2_45, %c1_46, %c0_47] : memref<18x18x4xf32, #tpu.memory_space<vmem>>, vector<16x16x4xf32>
    %31 = vector.shape_cast %30 : vector<16x16x4xf32> to vector<256x4xf32>
    %c0_48 = arith.constant 0 : index
    %c28 = arith.constant 28 : index
    %32 = vector.load %arg9[%c0_48, %c28] : memref<256x36xf32, #tpu.memory_space<vmem>>, vector<256x4xf32>
    tpu.vector_store %arg9[%c0_48, %c28], %31 {strides = array<i32>} : memref<256x36xf32, #tpu.memory_space<vmem>>, vector<256x4xf32>,
    %c2_49 = arith.constant 2 : index
    %c2_50 = arith.constant 2 : index
    %c0_51 = arith.constant 0 : index
    %33 = vector.load %arg8[%c2_49, %c2_50, %c0_51] : memref<18x18x4xf32, #tpu.memory_space<vmem>>, vector<16x16x4xf32>
    %34 = vector.shape_cast %33 : vector<16x16x4xf32> to vector<256x4xf32>
    %c0_52 = arith.constant 0 : index
    %c32 = arith.constant 32 : index
    %35 = vector.load %arg9[%c0_52, %c32] : memref<256x36xf32, #tpu.memory_space<vmem>>, vector<256x4xf32>
    tpu.vector_store %arg9[%c0_52, %c32], %34 {strides = array<i32>} : memref<256x36xf32, #tpu.memory_space<vmem>>, vector<256x4xf32>,
    %c0_53 = arith.constant 0 : index
    %c0_54 = arith.constant 0 : index
    %36 = vector.load %arg9[%c0_53, %c0_54] : memref<256x36xf32, #tpu.memory_space<vmem>>, vector<256x36xf32>
    %37 = arith.truncf %36 : vector<256x36xf32> to vector<256x36xbf16>
    %c0_55 = arith.constant 0 : index
    %c0_56 = arith.constant 0 : index
    %38 = vector.load %arg2[%c0_55, %c0_56] : memref<36x12xbf16, #tpu.memory_space<vmem>>, vector<36x12xbf16>
    %cst_57 = arith.constant dense<0.000000e+00> : vector<256x12xf32>
    %39 = tpu.matmul %37, %38, %cst_57 {dimension_numbers = #tpu.dot_dimension_numbers<[1], [0], [0], [1], [0, 0, 1, 1], [], []>} : vector<256x36xbf16>, vector<36x12xbf16>, vector<256x12xf32> -> vector<256x12xf32>
    %40 = vector.extract_strided_slice %39 {offsets = [0, 0], sizes = [256, 4], strides = [1, 1]} : vector<256x12xf32> to vector<256x4xf32>
    %c0_58 = arith.constant 0 : index
    %c0_59 = arith.constant 0 : index
    %c0_60 = arith.constant 0 : index
    %41 = vector.load %arg3[%c0_58, %c0_59, %c0_60] : memref<1x256x4xf32, #tpu.memory_space<vmem>>, vector<1x256x4xf32>
    %42 = vector.shape_cast %41 : vector<1x256x4xf32> to vector<256x4xf32>
    %43 = vector.shape_cast %40 : vector<256x4xf32> to vector<1x256x4xf32>
    tpu.vector_store %arg3[%c0_58, %c0_59, %c0_60], %43 {strides = array<i32>} : memref<1x256x4xf32, #tpu.memory_space<vmem>>, vector<1x256x4xf32>,
    %44 = vector.extract_strided_slice %39 {offsets = [0, 4], sizes = [256, 4], strides = [1, 1]} : vector<256x12xf32> to vector<256x4xf32>
    %c0_61 = arith.constant 0 : index
    %c0_62 = arith.constant 0 : index
    %c0_63 = arith.constant 0 : index
    %45 = vector.load %arg4[%c0_61, %c0_62, %c0_63] : memref<1x256x4xf32, #tpu.memory_space<vmem>>, vector<1x256x4xf32>
    %46 = vector.shape_cast %45 : vector<1x256x4xf32> to vector<256x4xf32>
    %47 = vector.shape_cast %44 : vector<256x4xf32> to vector<1x256x4xf32>
    tpu.vector_store %arg4[%c0_61, %c0_62, %c0_63], %47 {strides = array<i32>} : memref<1x256x4xf32, #tpu.memory_space<vmem>>, vector<1x256x4xf32>,
    %48 = vector.extract_strided_slice %39 {offsets = [0, 8], sizes = [256, 4], strides = [1, 1]} : vector<256x12xf32> to vector<256x4xf32>
    %c0_64 = arith.constant 0 : index
    %c0_65 = arith.constant 0 : index
    %c0_66 = arith.constant 0 : index
    %49 = vector.load %arg5[%c0_64, %c0_65, %c0_66] : memref<1x256x4xf32, #tpu.memory_space<vmem>>, vector<1x256x4xf32>
    %50 = vector.shape_cast %49 : vector<1x256x4xf32> to vector<256x4xf32>
    %51 = vector.shape_cast %48 : vector<256x4xf32> to vector<1x256x4xf32>
    tpu.vector_store %arg5[%c0_64, %c0_65, %c0_66], %51 {strides = array<i32>} : memref<1x256x4xf32, #tpu.memory_space<vmem>>, vector<1x256x4xf32>,
    %cst_67 = arith.constant dense<0.000000e+00> : vector<4xf32>
    %52 = vector.multi_reduction <add>, %40, %cst_67 [0] : vector<256x4xf32> to vector<4xf32>
    %53 = vector.shape_cast %52 : vector<4xf32> to vector<1x4xf32>
    %c0_68 = arith.constant 0 : index
    %c0_69 = arith.constant 0 : index
    %c0_70 = arith.constant 0 : index
    %54 = vector.load %arg6[%c0_68, %c0_69, %c0_70] : memref<1x1x4xf32, #tpu.memory_space<vmem>>, vector<1x1x4xf32>
    %55 = vector.shape_cast %54 : vector<1x1x4xf32> to vector<1x4xf32>
    %56 = vector.shape_cast %53 : vector<1x4xf32> to vector<1x1x4xf32>
    tpu.vector_store %arg6[%c0_68, %c0_69, %c0_70], %56 {strides = array<i32>} : memref<1x1x4xf32, #tpu.memory_space<vmem>>, vector<1x1x4xf32>,
    %57 = arith.mulf %40, %40 : vector<256x4xf32>
    %cst_71 = arith.constant dense<0.000000e+00> : vector<4xf32>
    %58 = vector.multi_reduction <add>, %57, %cst_71 [0] : vector<256x4xf32> to vector<4xf32>
    %59 = vector.shape_cast %58 : vector<4xf32> to vector<1x4xf32>
    %c0_72 = arith.constant 0 : index
    %c0_73 = arith.constant 0 : index
    %c0_74 = arith.constant 0 : index
    %60 = vector.load %arg7[%c0_72, %c0_73, %c0_74] : memref<1x1x4xf32, #tpu.memory_space<vmem>>, vector<1x1x4xf32>
    %61 = vector.shape_cast %60 : vector<1x1x4xf32> to vector<1x4xf32>
    %62 = vector.shape_cast %59 : vector<1x4xf32> to vector<1x1x4xf32>
    tpu.vector_store %arg7[%c0_72, %c0_73, %c0_74], %62 {strides = array<i32>} : memref<1x1x4xf32, #tpu.memory_space<vmem>>, vector<1x1x4xf32>,
    return
  }
  func.func @transform_0(%arg0: i32) -> (i32, i32, i32, i32) {
    %c0_i32 = arith.constant 0 : i32
    %c0_i32_0 = arith.constant 0 : i32
    %c0_i32_1 = arith.constant 0 : i32
    %c0_i32_2 = arith.constant 0 : i32
    return %arg0, %c0_i32, %c0_i32_0, %c0_i32_1 : i32, i32, i32, i32
  }
  func.func @transform_1(%arg0: i32) -> (i32, i32) {
    %c0_i32 = arith.constant 0 : i32
    %c0_i32_0 = arith.constant 0 : i32
    %c0_i32_1 = arith.constant 0 : i32
    return %c0_i32, %c0_i32_0 : i32, i32
  }
  func.func @transform_2(%arg0: i32) -> (i32, i32, i32) {
    %c0_i32 = arith.constant 0 : i32
    %c0_i32_0 = arith.constant 0 : i32
    %c0_i32_1 = arith.constant 0 : i32
    return %arg0, %c0_i32, %c0_i32_0 : i32, i32, i32
  }
  func.func @transform_3(%arg0: i32) -> (i32, i32, i32) {
    %c0_i32 = arith.constant 0 : i32
    %c0_i32_0 = arith.constant 0 : i32
    %c0_i32_1 = arith.constant 0 : i32
    return %arg0, %c0_i32, %c0_i32_0 : i32, i32, i32
  }
  func.func @transform_4(%arg0: i32) -> (i32, i32, i32) {
    %c0_i32 = arith.constant 0 : i32
    %c0_i32_0 = arith.constant 0 : i32
    %c0_i32_1 = arith.constant 0 : i32
    return %arg0, %c0_i32, %c0_i32_0 : i32, i32, i32
  }
  func.func @transform_5(%arg0: i32) -> (i32, i32, i32) {
    %c0_i32 = arith.constant 0 : i32
    %c0_i32_0 = arith.constant 0 : i32
    %c0_i32_1 = arith.constant 0 : i32
    return %arg0, %c0_i32, %c0_i32_0 : i32, i32, i32
  }
  func.func @transform_6(%arg0: i32) -> (i32, i32, i32) {
    %c0_i32 = arith.constant 0 : i32
    %c0_i32_0 = arith.constant 0 : i32
    %c0_i32_1 = arith.constant 0 : i32
    return %arg0, %c0_i32, %c0_i32_0 : i32, i32, i32
  }
}

module attributes {stable_mosaic.version = 11 : i64} {
  func.func @_bn1_conv2_kernel(%arg0: i32, %arg1: memref<1x256x4xf32, #tpu.memory_space<vmem>>, %arg2: memref<36x4xbf16, #tpu.memory_space<vmem>>, %arg3: memref<1x1x4xf32, #tpu.memory_space<vmem>>, %arg4: memref<1x1x4xf32, #tpu.memory_space<vmem>>, %arg5: memref<1x256x4xf32, #tpu.memory_space<vmem>>, %arg6: memref<1x1x4xf32, #tpu.memory_space<vmem>>, %arg7: memref<1x1x4xf32, #tpu.memory_space<vmem>>, %arg8: memref<18x18x4xf32, #tpu.memory_space<vmem>>, %arg9: memref<256x36xf32, #tpu.memory_space<vmem>>) attributes {dimension_semantics = [#tpu.dimension_semantics<parallel>], iteration_bounds = array<i64: 2>, scalar_prefetch = 0 : i64, scratch_operands = 2 : i64, tpu.core_type = #tpu.core_type<tc>, window_params = [{transform_indices = @transform_0, window_bounds = array<i64: 1, 256, 4>}, {pipeline_mode = #tpu.pipeline_mode<synchronous>, transform_indices = @transform_1, window_bounds = array<i64: 36, 4>}, {pipeline_mode = #tpu.pipeline_mode<synchronous>, transform_indices = @transform_2, window_bounds = array<i64: 1, 1, 4>}, {pipeline_mode = #tpu.pipeline_mode<synchronous>, transform_indices = @transform_3, window_bounds = array<i64: 1, 1, 4>}, {transform_indices = @transform_4, window_bounds = array<i64: 1, 256, 4>}, {transform_indices = @transform_5, window_bounds = array<i64: 1, 1, 4>}, {transform_indices = @transform_6, window_bounds = array<i64: 1, 1, 4>}]} {
    %cst = arith.constant 0.000000e+00 : f32
    %0 = vector.broadcast %cst : f32 to vector<1x18x4xf32>
    %cst_0 = arith.constant 0.000000e+00 : f32
    %1 = vector.broadcast %cst_0 : f32 to vector<18x1x4xf32>
    %c0 = arith.constant 0 : index
    %c0_1 = arith.constant 0 : index
    %c0_2 = arith.constant 0 : index
    %2 = vector.load %arg8[%c0, %c0_1, %c0_2] : memref<18x18x4xf32, #tpu.memory_space<vmem>>, vector<1x18x4xf32>
    tpu.vector_store %arg8[%c0, %c0_1, %c0_2], %0 {strides = array<i32>} : memref<18x18x4xf32, #tpu.memory_space<vmem>>, vector<1x18x4xf32>,
    %c17 = arith.constant 17 : index
    %c0_3 = arith.constant 0 : index
    %c0_4 = arith.constant 0 : index
    %3 = vector.load %arg8[%c17, %c0_3, %c0_4] : memref<18x18x4xf32, #tpu.memory_space<vmem>>, vector<1x18x4xf32>
    tpu.vector_store %arg8[%c17, %c0_3, %c0_4], %0 {strides = array<i32>} : memref<18x18x4xf32, #tpu.memory_space<vmem>>, vector<1x18x4xf32>,
    %c0_5 = arith.constant 0 : index
    %c0_6 = arith.constant 0 : index
    %c0_7 = arith.constant 0 : index
    %4 = vector.load %arg8[%c0_5, %c0_6, %c0_7] : memref<18x18x4xf32, #tpu.memory_space<vmem>>, vector<18x1x4xf32>
    tpu.vector_store %arg8[%c0_5, %c0_6, %c0_7], %1 {strides = array<i32>} : memref<18x18x4xf32, #tpu.memory_space<vmem>>, vector<18x1x4xf32>,
    %c0_8 = arith.constant 0 : index
    %c17_9 = arith.constant 17 : index
    %c0_10 = arith.constant 0 : index
    %5 = vector.load %arg8[%c0_8, %c17_9, %c0_10] : memref<18x18x4xf32, #tpu.memory_space<vmem>>, vector<18x1x4xf32>
    tpu.vector_store %arg8[%c0_8, %c17_9, %c0_10], %1 {strides = array<i32>} : memref<18x18x4xf32, #tpu.memory_space<vmem>>, vector<18x1x4xf32>,
    %c0_11 = arith.constant 0 : index
    %c0_12 = arith.constant 0 : index
    %c0_13 = arith.constant 0 : index
    %6 = vector.load %arg1[%c0_11, %c0_12, %c0_13] : memref<1x256x4xf32, #tpu.memory_space<vmem>>, vector<1x256x4xf32>
    %7 = vector.shape_cast %6 : vector<1x256x4xf32> to vector<256x4xf32>
    %c0_14 = arith.constant 0 : index
    %c0_15 = arith.constant 0 : index
    %c0_16 = arith.constant 0 : index
    %8 = vector.load %arg3[%c0_14, %c0_15, %c0_16] : memref<1x1x4xf32, #tpu.memory_space<vmem>>, vector<1x1x4xf32>
    %9 = vector.shape_cast %8 : vector<1x1x4xf32> to vector<1x4xf32>
    %10 = vector.broadcast %9 : vector<1x4xf32> to vector<256x4xf32>
    %11 = arith.subf %7, %10 : vector<256x4xf32>
    %c0_17 = arith.constant 0 : index
    %c0_18 = arith.constant 0 : index
    %c0_19 = arith.constant 0 : index
    %12 = vector.load %arg4[%c0_17, %c0_18, %c0_19] : memref<1x1x4xf32, #tpu.memory_space<vmem>>, vector<1x1x4xf32>
    %13 = vector.shape_cast %12 : vector<1x1x4xf32> to vector<1x4xf32>
    %14 = vector.broadcast %13 : vector<1x4xf32> to vector<256x4xf32>
    %15 = arith.mulf %11, %14 : vector<256x4xf32>
    %cst_20 = arith.constant 0.000000e+00 : f32
    %16 = vector.broadcast %cst_20 : f32 to vector<256x4xf32>
    %17 = arith.maximumf %15, %16 : vector<256x4xf32>
    %18 = vector.shape_cast %17 : vector<256x4xf32> to vector<16x16x4xf32>
    %c1 = arith.constant 1 : index
    %c1_21 = arith.constant 1 : index
    %c0_22 = arith.constant 0 : index
    %19 = vector.load %arg8[%c1, %c1_21, %c0_22] : memref<18x18x4xf32, #tpu.memory_space<vmem>>, vector<16x16x4xf32>
    tpu.vector_store %arg8[%c1, %c1_21, %c0_22], %18 {strides = array<i32>} : memref<18x18x4xf32, #tpu.memory_space<vmem>>, vector<16x16x4xf32>,
    %c0_23 = arith.constant 0 : index
    %c0_24 = arith.constant 0 : index
    %c0_25 = arith.constant 0 : index
    %20 = vector.load %arg8[%c0_23, %c0_24, %c0_25] : memref<18x18x4xf32, #tpu.memory_space<vmem>>, vector<16x16x4xf32>
    %21 = vector.shape_cast %20 : vector<16x16x4xf32> to vector<256x4xf32>
    %c0_26 = arith.constant 0 : index
    %c0_27 = arith.constant 0 : index
    %22 = vector.load %arg9[%c0_26, %c0_27] : memref<256x36xf32, #tpu.memory_space<vmem>>, vector<256x4xf32>
    tpu.vector_store %arg9[%c0_26, %c0_27], %21 {strides = array<i32>} : memref<256x36xf32, #tpu.memory_space<vmem>>, vector<256x4xf32>,
    %c0_28 = arith.constant 0 : index
    %c1_29 = arith.constant 1 : index
    %c0_30 = arith.constant 0 : index
    %23 = vector.load %arg8[%c0_28, %c1_29, %c0_30] : memref<18x18x4xf32, #tpu.memory_space<vmem>>, vector<16x16x4xf32>
    %24 = vector.shape_cast %23 : vector<16x16x4xf32> to vector<256x4xf32>
    %c0_31 = arith.constant 0 : index
    %c4 = arith.constant 4 : index
    %25 = vector.load %arg9[%c0_31, %c4] : memref<256x36xf32, #tpu.memory_space<vmem>>, vector<256x4xf32>
    tpu.vector_store %arg9[%c0_31, %c4], %24 {strides = array<i32>} : memref<256x36xf32, #tpu.memory_space<vmem>>, vector<256x4xf32>,
    %c0_32 = arith.constant 0 : index
    %c2 = arith.constant 2 : index
    %c0_33 = arith.constant 0 : index
    %26 = vector.load %arg8[%c0_32, %c2, %c0_33] : memref<18x18x4xf32, #tpu.memory_space<vmem>>, vector<16x16x4xf32>
    %27 = vector.shape_cast %26 : vector<16x16x4xf32> to vector<256x4xf32>
    %c0_34 = arith.constant 0 : index
    %c8 = arith.constant 8 : index
    %28 = vector.load %arg9[%c0_34, %c8] : memref<256x36xf32, #tpu.memory_space<vmem>>, vector<256x4xf32>
    tpu.vector_store %arg9[%c0_34, %c8], %27 {strides = array<i32>} : memref<256x36xf32, #tpu.memory_space<vmem>>, vector<256x4xf32>,
    %c1_35 = arith.constant 1 : index
    %c0_36 = arith.constant 0 : index
    %c0_37 = arith.constant 0 : index
    %29 = vector.load %arg8[%c1_35, %c0_36, %c0_37] : memref<18x18x4xf32, #tpu.memory_space<vmem>>, vector<16x16x4xf32>
    %30 = vector.shape_cast %29 : vector<16x16x4xf32> to vector<256x4xf32>
    %c0_38 = arith.constant 0 : index
    %c12 = arith.constant 12 : index
    %31 = vector.load %arg9[%c0_38, %c12] : memref<256x36xf32, #tpu.memory_space<vmem>>, vector<256x4xf32>
    tpu.vector_store %arg9[%c0_38, %c12], %30 {strides = array<i32>} : memref<256x36xf32, #tpu.memory_space<vmem>>, vector<256x4xf32>,
    %c1_39 = arith.constant 1 : index
    %c1_40 = arith.constant 1 : index
    %c0_41 = arith.constant 0 : index
    %32 = vector.load %arg8[%c1_39, %c1_40, %c0_41] : memref<18x18x4xf32, #tpu.memory_space<vmem>>, vector<16x16x4xf32>
    %33 = vector.shape_cast %32 : vector<16x16x4xf32> to vector<256x4xf32>
    %c0_42 = arith.constant 0 : index
    %c16 = arith.constant 16 : index
    %34 = vector.load %arg9[%c0_42, %c16] : memref<256x36xf32, #tpu.memory_space<vmem>>, vector<256x4xf32>
    tpu.vector_store %arg9[%c0_42, %c16], %33 {strides = array<i32>} : memref<256x36xf32, #tpu.memory_space<vmem>>, vector<256x4xf32>,
    %c1_43 = arith.constant 1 : index
    %c2_44 = arith.constant 2 : index
    %c0_45 = arith.constant 0 : index
    %35 = vector.load %arg8[%c1_43, %c2_44, %c0_45] : memref<18x18x4xf32, #tpu.memory_space<vmem>>, vector<16x16x4xf32>
    %36 = vector.shape_cast %35 : vector<16x16x4xf32> to vector<256x4xf32>
    %c0_46 = arith.constant 0 : index
    %c20 = arith.constant 20 : index
    %37 = vector.load %arg9[%c0_46, %c20] : memref<256x36xf32, #tpu.memory_space<vmem>>, vector<256x4xf32>
    tpu.vector_store %arg9[%c0_46, %c20], %36 {strides = array<i32>} : memref<256x36xf32, #tpu.memory_space<vmem>>, vector<256x4xf32>,
    %c2_47 = arith.constant 2 : index
    %c0_48 = arith.constant 0 : index
    %c0_49 = arith.constant 0 : index
    %38 = vector.load %arg8[%c2_47, %c0_48, %c0_49] : memref<18x18x4xf32, #tpu.memory_space<vmem>>, vector<16x16x4xf32>
    %39 = vector.shape_cast %38 : vector<16x16x4xf32> to vector<256x4xf32>
    %c0_50 = arith.constant 0 : index
    %c24 = arith.constant 24 : index
    %40 = vector.load %arg9[%c0_50, %c24] : memref<256x36xf32, #tpu.memory_space<vmem>>, vector<256x4xf32>
    tpu.vector_store %arg9[%c0_50, %c24], %39 {strides = array<i32>} : memref<256x36xf32, #tpu.memory_space<vmem>>, vector<256x4xf32>,
    %c2_51 = arith.constant 2 : index
    %c1_52 = arith.constant 1 : index
    %c0_53 = arith.constant 0 : index
    %41 = vector.load %arg8[%c2_51, %c1_52, %c0_53] : memref<18x18x4xf32, #tpu.memory_space<vmem>>, vector<16x16x4xf32>
    %42 = vector.shape_cast %41 : vector<16x16x4xf32> to vector<256x4xf32>
    %c0_54 = arith.constant 0 : index
    %c28 = arith.constant 28 : index
    %43 = vector.load %arg9[%c0_54, %c28] : memref<256x36xf32, #tpu.memory_space<vmem>>, vector<256x4xf32>
    tpu.vector_store %arg9[%c0_54, %c28], %42 {strides = array<i32>} : memref<256x36xf32, #tpu.memory_space<vmem>>, vector<256x4xf32>,
    %c2_55 = arith.constant 2 : index
    %c2_56 = arith.constant 2 : index
    %c0_57 = arith.constant 0 : index
    %44 = vector.load %arg8[%c2_55, %c2_56, %c0_57] : memref<18x18x4xf32, #tpu.memory_space<vmem>>, vector<16x16x4xf32>
    %45 = vector.shape_cast %44 : vector<16x16x4xf32> to vector<256x4xf32>
    %c0_58 = arith.constant 0 : index
    %c32 = arith.constant 32 : index
    %46 = vector.load %arg9[%c0_58, %c32] : memref<256x36xf32, #tpu.memory_space<vmem>>, vector<256x4xf32>
    tpu.vector_store %arg9[%c0_58, %c32], %45 {strides = array<i32>} : memref<256x36xf32, #tpu.memory_space<vmem>>, vector<256x4xf32>,
    %c0_59 = arith.constant 0 : index
    %c0_60 = arith.constant 0 : index
    %47 = vector.load %arg9[%c0_59, %c0_60] : memref<256x36xf32, #tpu.memory_space<vmem>>, vector<256x36xf32>
    %48 = arith.truncf %47 : vector<256x36xf32> to vector<256x36xbf16>
    %c0_61 = arith.constant 0 : index
    %c0_62 = arith.constant 0 : index
    %49 = vector.load %arg2[%c0_61, %c0_62] : memref<36x4xbf16, #tpu.memory_space<vmem>>, vector<36x4xbf16>
    %cst_63 = arith.constant dense<0.000000e+00> : vector<256x4xf32>
    %50 = tpu.matmul %48, %49, %cst_63 {dimension_numbers = #tpu.dot_dimension_numbers<[1], [0], [0], [1], [0, 0, 1, 1], [], []>} : vector<256x36xbf16>, vector<36x4xbf16>, vector<256x4xf32> -> vector<256x4xf32>
    %c0_64 = arith.constant 0 : index
    %c0_65 = arith.constant 0 : index
    %c0_66 = arith.constant 0 : index
    %51 = vector.load %arg5[%c0_64, %c0_65, %c0_66] : memref<1x256x4xf32, #tpu.memory_space<vmem>>, vector<1x256x4xf32>
    %52 = vector.shape_cast %51 : vector<1x256x4xf32> to vector<256x4xf32>
    %53 = vector.shape_cast %50 : vector<256x4xf32> to vector<1x256x4xf32>
    tpu.vector_store %arg5[%c0_64, %c0_65, %c0_66], %53 {strides = array<i32>} : memref<1x256x4xf32, #tpu.memory_space<vmem>>, vector<1x256x4xf32>,
    %cst_67 = arith.constant dense<0.000000e+00> : vector<4xf32>
    %54 = vector.multi_reduction <add>, %50, %cst_67 [0] : vector<256x4xf32> to vector<4xf32>
    %55 = vector.shape_cast %54 : vector<4xf32> to vector<1x4xf32>
    %c0_68 = arith.constant 0 : index
    %c0_69 = arith.constant 0 : index
    %c0_70 = arith.constant 0 : index
    %56 = vector.load %arg6[%c0_68, %c0_69, %c0_70] : memref<1x1x4xf32, #tpu.memory_space<vmem>>, vector<1x1x4xf32>
    %57 = vector.shape_cast %56 : vector<1x1x4xf32> to vector<1x4xf32>
    %58 = vector.shape_cast %55 : vector<1x4xf32> to vector<1x1x4xf32>
    tpu.vector_store %arg6[%c0_68, %c0_69, %c0_70], %58 {strides = array<i32>} : memref<1x1x4xf32, #tpu.memory_space<vmem>>, vector<1x1x4xf32>,
    %59 = arith.mulf %50, %50 : vector<256x4xf32>
    %cst_71 = arith.constant dense<0.000000e+00> : vector<4xf32>
    %60 = vector.multi_reduction <add>, %59, %cst_71 [0] : vector<256x4xf32> to vector<4xf32>
    %61 = vector.shape_cast %60 : vector<4xf32> to vector<1x4xf32>
    %c0_72 = arith.constant 0 : index
    %c0_73 = arith.constant 0 : index
    %c0_74 = arith.constant 0 : index
    %62 = vector.load %arg7[%c0_72, %c0_73, %c0_74] : memref<1x1x4xf32, #tpu.memory_space<vmem>>, vector<1x1x4xf32>
    %63 = vector.shape_cast %62 : vector<1x1x4xf32> to vector<1x4xf32>
    %64 = vector.shape_cast %61 : vector<1x4xf32> to vector<1x1x4xf32>
    tpu.vector_store %arg7[%c0_72, %c0_73, %c0_74], %64 {strides = array<i32>} : memref<1x1x4xf32, #tpu.memory_space<vmem>>, vector<1x1x4xf32>,
    return
  }
  func.func @transform_0(%arg0: i32) -> (i32, i32, i32) {
    %c0_i32 = arith.constant 0 : i32
    %c0_i32_0 = arith.constant 0 : i32
    %c0_i32_1 = arith.constant 0 : i32
    return %arg0, %c0_i32, %c0_i32_0 : i32, i32, i32
  }
  func.func @transform_1(%arg0: i32) -> (i32, i32) {
    %c0_i32 = arith.constant 0 : i32
    %c0_i32_0 = arith.constant 0 : i32
    %c0_i32_1 = arith.constant 0 : i32
    return %c0_i32, %c0_i32_0 : i32, i32
  }
  func.func @transform_2(%arg0: i32) -> (i32, i32, i32) {
    %c0_i32 = arith.constant 0 : i32
    %c0_i32_0 = arith.constant 0 : i32
    %c0_i32_1 = arith.constant 0 : i32
    %c0_i32_2 = arith.constant 0 : i32
    return %c0_i32, %c0_i32_0, %c0_i32_1 : i32, i32, i32
  }
  func.func @transform_3(%arg0: i32) -> (i32, i32, i32) {
    %c0_i32 = arith.constant 0 : i32
    %c0_i32_0 = arith.constant 0 : i32
    %c0_i32_1 = arith.constant 0 : i32
    %c0_i32_2 = arith.constant 0 : i32
    return %c0_i32, %c0_i32_0, %c0_i32_1 : i32, i32, i32
  }
  func.func @transform_4(%arg0: i32) -> (i32, i32, i32) {
    %c0_i32 = arith.constant 0 : i32
    %c0_i32_0 = arith.constant 0 : i32
    %c0_i32_1 = arith.constant 0 : i32
    return %arg0, %c0_i32, %c0_i32_0 : i32, i32, i32
  }
  func.func @transform_5(%arg0: i32) -> (i32, i32, i32) {
    %c0_i32 = arith.constant 0 : i32
    %c0_i32_0 = arith.constant 0 : i32
    %c0_i32_1 = arith.constant 0 : i32
    return %arg0, %c0_i32, %c0_i32_0 : i32, i32, i32
  }
  func.func @transform_6(%arg0: i32) -> (i32, i32, i32) {
    %c0_i32 = arith.constant 0 : i32
    %c0_i32_0 = arith.constant 0 : i32
    %c0_i32_1 = arith.constant 0 : i32
    return %arg0, %c0_i32, %c0_i32_0 : i32, i32, i32
  }
}

module attributes {stable_mosaic.version = 11 : i64} {
  func.func @_tail_prev_kernel(%arg0: i32, %arg1: memref<16x128xf32, #tpu.memory_space<vmem>>, %arg2: memref<1x128xf32, #tpu.memory_space<vmem>>, %arg3: memref<1x128xf32, #tpu.memory_space<vmem>>, %arg4: memref<16x128xf32, #tpu.memory_space<vmem>>, %arg5: memref<16x128xf32, #tpu.memory_space<vmem>>, %arg6: memref<16x128xf32, #tpu.memory_space<vmem>>, %arg7: memref<2x16x128xf32, #tpu.memory_space<vmem>>, %arg8: memref<16x128xf32, #tpu.memory_space<vmem>>, %arg9: memref<16x128xf32, #tpu.memory_space<vmem>>) attributes {dimension_semantics = [#tpu.dimension_semantics<parallel>], iteration_bounds = array<i64: 1>, scalar_prefetch = 0 : i64, scratch_operands = 0 : i64, tpu.core_type = #tpu.core_type<tc>, window_params = [{transform_indices = @transform_0, window_bounds = array<i64: 16, 128>}, {pipeline_mode = #tpu.pipeline_mode<synchronous>, transform_indices = @transform_1, window_bounds = array<i64: 1, 128>}, {pipeline_mode = #tpu.pipeline_mode<synchronous>, transform_indices = @transform_2, window_bounds = array<i64: 1, 128>}, {transform_indices = @transform_3, window_bounds = array<i64: 16, 128>}, {transform_indices = @transform_4, window_bounds = array<i64: 16, 128>}, {transform_indices = @transform_5, window_bounds = array<i64: 16, 128>}, {transform_indices = @transform_6, window_bounds = array<i64: 2, 16, 128>}, {transform_indices = @transform_7, window_bounds = array<i64: 16, 128>}, {transform_indices = @transform_8, window_bounds = array<i64: 16, 128>}]} {
    %c0 = arith.constant 0 : index
    %c0_0 = arith.constant 0 : index
    %0 = vector.load %arg1[%c0, %c0_0] : memref<16x128xf32, #tpu.memory_space<vmem>>, vector<16x128xf32>
    %c0_1 = arith.constant 0 : index
    %c0_2 = arith.constant 0 : index
    %1 = vector.load %arg2[%c0_1, %c0_2] : memref<1x128xf32, #tpu.memory_space<vmem>>, vector<1x128xf32>
    %2 = vector.broadcast %1 : vector<1x128xf32> to vector<16x128xf32>
    %3 = arith.subf %0, %2 : vector<16x128xf32>
    %c0_3 = arith.constant 0 : index
    %c0_4 = arith.constant 0 : index
    %4 = vector.load %arg3[%c0_3, %c0_4] : memref<1x128xf32, #tpu.memory_space<vmem>>, vector<1x128xf32>
    %5 = vector.broadcast %4 : vector<1x128xf32> to vector<16x128xf32>
    %6 = arith.mulf %3, %5 : vector<16x128xf32>
    %c0_5 = arith.constant 0 : index
    %c0_6 = arith.constant 0 : index
    %c0_7 = arith.constant 0 : index
    %7 = vector.load %arg7[%c0_5, %c0_6, %c0_7] : memref<2x16x128xf32, #tpu.memory_space<vmem>>, vector<1x16x128xf32>
    %8 = vector.shape_cast %7 : vector<1x16x128xf32> to vector<16x128xf32>
    %c1 = arith.constant 1 : index
    %c0_8 = arith.constant 0 : index
    %c0_9 = arith.constant 0 : index
    %9 = vector.load %arg7[%c1, %c0_8, %c0_9] : memref<2x16x128xf32, #tpu.memory_space<vmem>>, vector<1x16x128xf32>
    %10 = vector.shape_cast %9 : vector<1x16x128xf32> to vector<16x128xf32>
    %11 = arith.mulf %8, %10 : vector<16x128xf32>
    %c0_10 = arith.constant 0 : index
    %c0_11 = arith.constant 0 : index
    %12 = vector.load %arg5[%c0_10, %c0_11] : memref<16x128xf32, #tpu.memory_space<vmem>>, vector<16x128xf32>
    %c0_12 = arith.constant 0 : index
    %c0_13 = arith.constant 0 : index
    %13 = vector.load %arg6[%c0_12, %c0_13] : memref<16x128xf32, #tpu.memory_space<vmem>>, vector<16x128xf32>
    %14 = arith.mulf %12, %13 : vector<16x128xf32>
    %15 = arith.mulf %14, %11 : vector<16x128xf32>
    %c0_14 = arith.constant 0 : index
    %c0_15 = arith.constant 0 : index
    %16 = vector.load %arg9[%c0_14, %c0_15] : memref<16x128xf32, #tpu.memory_space<vmem>>, vector<16x128xf32>
    tpu.vector_store %arg9[%c0_14, %c0_15], %15 {strides = array<i32>} : memref<16x128xf32, #tpu.memory_space<vmem>>, vector<16x128xf32>,
    %c0_16 = arith.constant 0 : index
    %c0_17 = arith.constant 0 : index
    %17 = vector.load %arg4[%c0_16, %c0_17] : memref<16x128xf32, #tpu.memory_space<vmem>>, vector<16x128xf32>
    %18 = arith.addf %6, %17 : vector<16x128xf32>
    %19 = arith.addf %18, %15 : vector<16x128xf32>
    %cst = arith.constant 0.000000e+00 : f32
    %20 = vector.broadcast %cst : f32 to vector<16x128xf32>
    %21 = arith.maximumf %19, %20 : vector<16x128xf32>
    %c0_18 = arith.constant 0 : index
    %c0_19 = arith.constant 0 : index
    %22 = vector.load %arg8[%c0_18, %c0_19] : memref<16x128xf32, #tpu.memory_space<vmem>>, vector<16x128xf32>
    tpu.vector_store %arg8[%c0_18, %c0_19], %21 {strides = array<i32>} : memref<16x128xf32, #tpu.memory_space<vmem>>, vector<16x128xf32>,
    return
  }
  func.func @transform_0(%arg0: i32) -> (i32, i32) {
    %c0_i32 = arith.constant 0 : i32
    %c0_i32_0 = arith.constant 0 : i32
    return %arg0, %c0_i32 : i32, i32
  }
  func.func @transform_1(%arg0: i32) -> (i32, i32) {
    %c0_i32 = arith.constant 0 : i32
    %c0_i32_0 = arith.constant 0 : i32
    %c0_i32_1 = arith.constant 0 : i32
    return %c0_i32, %c0_i32_0 : i32, i32
  }
  func.func @transform_2(%arg0: i32) -> (i32, i32) {
    %c0_i32 = arith.constant 0 : i32
    %c0_i32_0 = arith.constant 0 : i32
    %c0_i32_1 = arith.constant 0 : i32
    return %c0_i32, %c0_i32_0 : i32, i32
  }
  func.func @transform_3(%arg0: i32) -> (i32, i32) {
    %c0_i32 = arith.constant 0 : i32
    %c0_i32_0 = arith.constant 0 : i32
    return %arg0, %c0_i32 : i32, i32
  }
  func.func @transform_4(%arg0: i32) -> (i32, i32) {
    %c0_i32 = arith.constant 0 : i32
    %c0_i32_0 = arith.constant 0 : i32
    return %arg0, %c0_i32 : i32, i32
  }
  func.func @transform_5(%arg0: i32) -> (i32, i32) {
    %c0_i32 = arith.constant 0 : i32
    %c0_i32_0 = arith.constant 0 : i32
    return %arg0, %c0_i32 : i32, i32
  }
  func.func @transform_6(%arg0: i32) -> (i32, i32, i32) {
    %c0_i32 = arith.constant 0 : i32
    %c0_i32_0 = arith.constant 0 : i32
    %c0_i32_1 = arith.constant 0 : i32
    return %c0_i32, %arg0, %c0_i32_0 : i32, i32, i32
  }
  func.func @transform_7(%arg0: i32) -> (i32, i32) {
    %c0_i32 = arith.constant 0 : i32
    %c0_i32_0 = arith.constant 0 : i32
    return %arg0, %c0_i32 : i32, i32
  }
  func.func @transform_8(%arg0: i32) -> (i32, i32) {
    %c0_i32 = arith.constant 0 : i32
    %c0_i32_0 = arith.constant 0 : i32
    return %arg0, %c0_i32 : i32, i32
  }
}

</mosaic_0001>

<llo_original>
// kernel: tile.18
$region0: #{tile.18}
  #allocation0 [shape = 's32[1]{0}', space=sflag, size = 0x4, scoped, tag = 'scoped memory for tile.18']
  %s0 = inlined_call_operand.vmem [shape: f32[4], index: 0, kind: input, shape index: {}]
  %s1 = inlined_call_operand.vmem [shape: f32[32,4], index: 1, kind: output, shape index: {}]
  // Predicated region
  $region2: #{tile.18} parent=0 // pred_check
    _
  $region3: #{tile.18} parent=0 // pred_check_branch
    %3 = sbr.rel (0) target = $region5
  $region4: #{tile.18} parent=0 // pred_region
    _
  $region5: #{tile.18} parent=0 // pred_fallthru
    _
  %v4 = vld [vmem:[%s0] ss:$0 sm:$0xff]
  %5 = vst [vmem:[%s1] sm:$0xff] %v4
  %s6 = scalar_lea.vmem %s1, 8
  %7 = vst [vmem:[%s6] sm:$0xff] %v4
  %s8 = scalar_lea.vmem %s1, 16
  %9 = vst [vmem:[%s8] sm:$0xff] %v4
  %s10 = scalar_lea.vmem %s1, 24
  %11 = vst [vmem:[%s10] sm:$0xff] %v4

// kernel: tile.19
$region0: #{tile.19}
  %s0 = inlined_call_operand.vmem [shape: f32[32,4], index: 0, kind: input, shape index: {}]
  %s1 = inlined_call_operand.hbm [shape: f32[1,128], index: 1, kind: output, shape index: {}]
  $region1: #{tile.19} parent=0
    #allocation0 [shape = 'u8[512]{0}', space=vmem, size = 0x400, scoped, tag = 'operand span for operand 1']
    #allocation1 [shape = 's32[1]{0}', space=sflag, size = 0x4, scoped, tag = 'scoped memory for tile.19']
    #allocation2 [shape = 'u8[4096]{0}', space=vmem, size = 0x1000, scoped, tag = 'scoped mem for output reshape']
    %2 = vsyncpa [#allocation1], 0
    %v3 = vld [vmem:[%s0] sm:$0x1]
    %vm4 = vcmask 31744
    %5 = vst.msk [vmem:[#allocation2] sm:$0x1] %vm4, %v3
    %s6 = scalar_lea.vmem %s0, 31
    %v7 = vld [vmem:[%s6] sm:$0x1]
    %8 = vrot.lane.b32.xlu0 %v7, 124
    %v9 = vpop.permute.xlu0 %8
    %vm10 = vcmask 1048544
    %11 = vst.msk [vmem:[#allocation2] sm:$0x1] %vm10, %v9
    %s12 = scalar_lea.vmem %s0, 30
    %v13 = vld [vmem:[%s12] sm:$0x1]
    %14 = vrot.lane.b32.xlu0 %v13, 120
    %v15 = vpop.permute.xlu0 %14
    %vm16 = vcmask 1015744
    %17 = vst.msk [vmem:[#allocation2] sm:$0x1] %vm16, %v15
    %s18 = scalar_lea.vmem %s0, 29
    %v19 = vld [vmem:[%s18] sm:$0x1]
    %20 = vrot.lane.b32.xlu0 %v19, 116
    %v21 = vpop.permute.xlu0 %20
    %vm22 = vcmask 982944
    %23 = vst.msk [vmem:[#allocation2] sm:$0x1] %vm22, %v21
    %s24 = scalar_lea.vmem %s0, 28
    %v25 = vld [vmem:[%s24] sm:$0x1]
    %26 = vrot.lane.b32.xlu0 %v25, 112
    %v27 = vpop.permute.xlu0 %26
    %vm28 = vcmask 950144
    %29 = vst.msk [vmem:[#allocation2] sm:$0x1] %vm28, %v27
    %s30 = scalar_lea.vmem %s0, 27
    %v31 = vld [vmem:[%s30] sm:$0x1]
    %32 = vrot.lane.b32.xlu0 %v31, 108
    %v33 = vpop.permute.xlu0 %32
    %vm34 = vcmask 917344
    %35 = vst.msk [vmem:[#allocation2] sm:$0x1] %vm34, %v33
    %s36 = scalar_lea.vmem %s0, 26
    %v37 = vld [vmem:[%s36] sm:$0x1]
    %38 = vrot.lane.b32.xlu0 %v37, 104
    %v39 = vpop.permute.xlu0 %38
    %vm40 = vcmask 884544
    %41 = vst.msk [vmem:[#allocation2] sm:$0x1] %vm40, %v39
    %s42 = scalar_lea.vmem %s0, 25
    %v43 = vld [vmem:[%s42] sm:$0x1]
    %44 = vrot.lane.b32.xlu0 %v43, 100
    %v45 = vpop.permute.xlu0 %44
    %vm46 = vcmask 851744
    %47 = vst.msk [vmem:[#allocation2] sm:$0x1] %vm46, %v45
    %s48 = scalar_lea.vmem %s0, 24
    %v49 = vld [vmem:[%s48] sm:$0x1]
    %50 = vrot.lane.b32.xlu0 %v49, 96
    %v51 = vpop.permute.xlu0 %50
    %vm52 = vcmask 818944
    %53 = vst.msk [vmem:[#allocation2] sm:$0x1] %vm52, %v51
    %s54 = scalar_lea.vmem %s0, 23
    %v55 = vld [vmem:[%s54] sm:$0x1]
    %56 = vrot.lane.b32.xlu0 %v55, 92
    %v57 = vpop.permute.xlu0 %56
    %vm58 = vcmask 786144
    %59 = vst.msk [vmem:[#allocation2] sm:$0x1] %vm58, %v57
    %s60 = scalar_lea.vmem %s0, 22
    %v61 = vld [vmem:[%s60] sm:$0x1]
    %62 = vrot.lane.b32.xlu0 %v61, 88
    %v63 = vpop.permute.xlu0 %62
    %vm64 = vcmask 753344
    %65 = vst.msk [vmem:[#allocation2] sm:$0x1] %vm64, %v63
    %s66 = scalar_lea.vmem %s0, 21
    %v67 = vld [vmem:[%s66] sm:$0x1]
    %68 = vrot.lane.b32.xlu0 %v67, 84
    %v69 = vpop.permute.xlu0 %68
    %vm70 = vcmask 720544
    %71 = vst.msk [vmem:[#allocation2] sm:$0x1] %vm70, %v69
    %s72 = scalar_lea.vmem %s0, 20
    %v73 = vld [vmem:[%s72] sm:$0x1]
    %74 = vrot.lane.b32.xlu0 %v73, 80
    %v75 = vpop.permute.xlu0 %74
    %vm76 = vcmask 687744
    %77 = vst.msk [vmem:[#allocation2] sm:$0x1] %vm76, %v75
    %s78 = scalar_lea.vmem %s0, 19
    %v79 = vld [vmem:[%s78] sm:$0x1]
    %80 = vrot.lane.b32.xlu0 %v79, 76
    %v81 = vpop.permute.xlu0 %80
    %vm82 = vcmask 654944
    %83 = vst.msk [vmem:[#allocation2] sm:$0x1] %vm82, %v81
    %s84 = scalar_lea.vmem %s0, 18
    %v85 = vld [vmem:[%s84] sm:$0x1]
    %86 = vrot.lane.b32.xlu0 %v85, 72
    %v87 = vpop.permute.xlu0 %86
    %vm88 = vcmask 622144
    %89 = vst.msk [vmem:[#allocation2] sm:$0x1] %vm88, %v87
    %s90 = scalar_lea.vmem %s0, 17
    %v91 = vld [vmem:[%s90] sm:$0x1]
    %92 = vrot.lane.b32.xlu0 %v91, 68
    %v93 = vpop.permute.xlu0 %92
    %vm94 = vcmask 589344
    %95 = vst.msk [vmem:[#allocation2] sm:$0x1] %vm94, %v93
    %s96 = scalar_lea.vmem %s0, 16
    %v97 = vld [vmem:[%s96] sm:$0x1]
    %98 = vrot.lane.b32.xlu0 %v97, 64
    %v99 = vpop.permute.xlu0 %98
    %vm100 = vcmask 556544
    %101 = vst.msk [vmem:[#allocation2] sm:$0x1] %vm100, %v99
    %s102 = scalar_lea.vmem %s0, 15
    %v103 = vld [vmem:[%s102] sm:$0x1]
    %104 = vrot.lane.b32.xlu0 %v103, 60
    %v105 = vpop.permute.xlu0 %104
    %vm106 = vcmask 523744
    %107 = vst.msk [vmem:[#allocation2] sm:$0x1] %vm106, %v105
    %s108 = scalar_lea.vmem %s0, 14
    %v109 = vld [vmem:[%s108] sm:$0x1]
    %110 = vrot.lane.b32.xlu0 %v109, 56
    %v111 = vpop.permute.xlu0 %110
    %vm112 = vcmask 490944
    %113 = vst.msk [vmem:[#allocation2] sm:$0x1] %vm112, %v111
    %s114 = scalar_lea.vmem %s0, 13
    %v115 = vld [vmem:[%s114] sm:$0x1]
    %116 = vrot.lane.b32.xlu0 %v115, 52
    %v117 = vpop.permute.xlu0 %116
    %vm118 = vcmask 458144
    %119 = vst.msk [vmem:[#allocation2] sm:$0x1] %vm118, %v117
    %s120 = scalar_lea.vmem %s0, 12
    %v121 = vld [vmem:[%s120] sm:$0x1]
    %122 = vrot.lane.b32.xlu0 %v121, 48
    %v123 = vpop.permute.xlu0 %122
    %vm124 = vcmask 425344
    %125 = vst.msk [vmem:[#allocation2] sm:$0x1] %vm124, %v123
    %s126 = scalar_lea.vmem %s0, 11
    %v127 = vld [vmem:[%s126] sm:$0x1]
    %128 = vrot.lane.b32.xlu0 %v127, 44
    %v129 = vpop.permute.xlu0 %128
    %vm130 = vcmask 392544
    %131 = vst.msk [vmem:[#allocation2] sm:$0x1] %vm130, %v129
    %s132 = scalar_lea.vmem %s0, 10
    %v133 = vld [vmem:[%s132] sm:$0x1]
    %134 = vrot.lane.b32.xlu0 %v133, 40
    %v135 = vpop.permute.xlu0 %134
    %vm136 = vcmask 359744
    %137 = vst.msk [vmem:[#allocation2] sm:$0x1] %vm136, %v135
    %s138 = scalar_lea.vmem %s0, 9
    %v139 = vld [vmem:[%s138] sm:$0x1]
    %140 = vrot.lane.b32.xlu0 %v139, 36
    %v141 = vpop.permute.xlu0 %140
    %vm142 = vcmask 326944
    %143 = vst.msk [vmem:[#allocation2] sm:$0x1] %vm142, %v141
    %s144 = scalar_lea.vmem %s0, 8
    %v145 = vld [vmem:[%s144] sm:$0x1]
    %146 = vrot.lane.b32.xlu0 %v145, 32
    %v147 = vpop.permute.xlu0 %146
    %vm148 = vcmask 294144
    %149 = vst.msk [vmem:[#allocation2] sm:$0x1] %vm148, %v147
    %s150 = scalar_lea.vmem %s0, 7
    %v151 = vld [vmem:[%s150] sm:$0x1]
    %152 = vrot.lane.b32.xlu0 %v151, 28
    %v153 = vpop.permute.xlu0 %152
    %vm154 = vcmask 261344
    %155 = vst.msk [vmem:[#allocation2] sm:$0x1] %vm154, %v153
    %s156 = scalar_lea.vmem %s0, 6
    %v157 = vld [vmem:[%s156] sm:$0x1]
    %158 = vrot.lane.b32.xlu0 %v157, 24
    %v159 = vpop.permute.xlu0 %158
    %vm160 = vcmask 228544
    %161 = vst.msk [vmem:[#allocation2] sm:$0x1] %vm160, %v159
    %s162 = scalar_lea.vmem %s0, 5
    %v163 = vld [vmem:[%s162] sm:$0x1]
    %164 = vrot.lane.b32.xlu0 %v163, 20
    %v165 = vpop.permute.xlu0 %164
    %vm166 = vcmask 195744
    %167 = vst.msk [vmem:[#allocation2] sm:$0x1] %vm166, %v165
    %s168 = scalar_lea.vmem %s0, 4
    %v169 = vld [vmem:[%s168] sm:$0x1]
    %170 = vrot.lane.b32.xlu0 %v169, 16
    %v171 = vpop.permute.xlu0 %170
    %vm172 = vcmask 162944
    %173 = vst.msk [vmem:[#allocation2] sm:$0x1] %vm172, %v171
    %s174 = scalar_lea.vmem %s0, 3
    %v175 = vld [vmem:[%s174] sm:$0x1]
    %176 = vrot.lane.b32.xlu0 %v175, 12
    %v177 = vpop.permute.xlu0 %176
    %vm178 = vcmask 130144
    %179 = vst.msk [vmem:[#allocation2] sm:$0x1] %vm178, %v177
    %s180 = scalar_lea.vmem %s0, 2
    %v181 = vld [vmem:[%s180] sm:$0x1]
    %182 = vrot.lane.b32.xlu0 %v181, 8
    %v183 = vpop.permute.xlu0 %182
    %vm184 = vcmask 97344
    %185 = vst.msk [vmem:[#allocation2] sm:$0x1] %vm184, %v183
    %s186 = scalar_lea.vmem %s0, 1
    %v187 = vld [vmem:[%s186] sm:$0x1]
    %188 = vrot.lane.b32.xlu0 %v187, 4
    %v189 = vpop.permute.xlu0 %188
    %vm190 = vcmask 64544
    %191 = vst.msk [vmem:[#allocation2] sm:$0x1] %vm190, %v189
    %s193 = sshllo.u32 0, 1
    %v195 = vld [vmem:[#allocation2] sm:%s193]
    %s196 = sshllo.u32 0, 1
    %197 = vst [vmem:[#allocation0] sm:%s196] %v195
    %s199 = ssub.s32 16, 16
    %200 = vsyncadd [#allocation1], %s199
    %s202 = sshll.u32 [#allocation0], 4
    %s203 = int_to_ptr.vmem [resolvable:$true] %s202
    %205 = dma.vmem_to_hbm [thread:$0]  %s203, 16, %s1, [#allocation1]
    %206 = dma.done [#allocation1], 16
    %207 = vsyncpa [#allocation1], 1

// kernel: basic_block_forward.3
$region0: #{basic_block_forward.3}
  #allocation0 [shape = 'u32[]', space=smem, size = 0x4, offset = 0x4, fixed_abs, tag = 'smem constant byte address 0x4 - core index']
  #allocation1 [shape = 'u32[144,128]{1,0:T(1,128)}', space=vmem, size = 0x12000, scoped, tag = 'internal scratch']
  #allocation2 [shape = 'f32[18,18,4]{2,1,0:T(8,128)}', space=vmem, size = 0x36000, scoped, tag = 'scratch operand']
  #allocation3 [shape = 'f32[256,36]{1,0:T(8,128)}', space=vmem, size = 0x20000, scoped, tag = 'scratch operand']
  %s0 = inlined_call_operand.hbm [shape: f32[2,16,16,4], index: 0, kind: input, shape index: {}]
  %s1 = inlined_call_operand.hbm [shape: bf16[36,12], index: 1, kind: input, shape index: {}]
  %s2 = inlined_call_operand.hbm [shape: f32[2,256,4], index: 2, kind: output, shape index: {0}]
  %s3 = inlined_call_operand.hbm [shape: f32[2,256,4], index: 3, kind: output, shape index: {1}]
  %s4 = inlined_call_operand.hbm [shape: f32[2,256,4], index: 4, kind: output, shape index: {2}]
  %s5 = inlined_call_operand.hbm [shape: f32[2,1,4], index: 5, kind: output, shape index: {3}]
  %s6 = inlined_call_operand.hbm [shape: f32[2,1,4], index: 6, kind: output, shape index: {4}]
  %7 = xla_tuple %s2, %s3, %s4, %s5, %s6
  %s8 = sld [smem:[#allocation0]]
  $region81: #{basic_block_forward.3} parent=0
    _
  %s10 = ssub.s32 1, %s8
  %s11 = scalar_select 0, %s10, %s8
  $region1: #{basic_block_forward.3} parent=0
    #allocation4 [shape = 'u8[262144]{0}', space=vmem, size = 0x40000, scoped, tag = 'input window, operand 0']
    #allocation5 [shape = 's32[2]{0}', space=sflag, size = 0x8, scoped, tag = 'scoped memory for basic_block_forward.3']
    #allocation6 [shape = 's32[2]{0}', space=sflag, size = 0x8, scoped, tag = 'scoped memory for basic_block_forward.3']
    #allocation7 [shape = 'u8[10240]{0}', space=vmem, size = 0x2800, scoped, tag = 'input window, operand 1, single buffered']
    #allocation8 [shape = 's32[1]{0}', space=sflag, size = 0x4, scoped, tag = 'scoped memory for basic_block_forward.3']
    #allocation9 [shape = 'u8[262144]{0}', space=vmem, size = 0x40000, scoped, tag = 'output window, operand 0']
    #allocation10 [shape = 'u8[262144]{0}', space=vmem, size = 0x40000, scoped, tag = 'output window, operand 1']
    #allocation11 [shape = 's32[2]{0}', space=sflag, size = 0x8, scoped, tag = 'scoped memory for basic_block_forward.3']
    #allocation12 [shape = 'u8[262144]{0}', space=vmem, size = 0x40000, scoped, tag = 'output window, operand 2']
    #allocation13 [shape = 'u8[1024]{0}', space=vmem, size = 0x400, scoped, tag = 'output window, operand 3']
    #allocation14 [shape = 's32[2]{0}', space=sflag, size = 0x8, scoped, tag = 'scoped memory for basic_block_forward.3']
    #allocation15 [shape = 'u8[1024]{0}', space=vmem, size = 0x400, scoped, tag = 'output window, operand 4']
    %12 = vsyncpa [#allocation5], 0
    %s13 = scalar_lea.sflag [#allocation5], 1
    %14 = vsyncpa %s13, 0
    %15 = vsyncpa [#allocation8], 0
    %16 = vsyncpa [#allocation6], 0
    %s17 = scalar_lea.sflag [#allocation6], 1
    %18 = vsyncpa %s17, 0
    %19 = vsyncpa [#allocation11], 0
    %s20 = scalar_lea.sflag [#allocation11], 1
    %21 = vsyncpa %s20, 0
    %22 = vsyncpa [#allocation14], 0
    %s23 = scalar_lea.sflag [#allocation14], 1
    %24 = vsyncpa %s23, 0
    loop: start=0, step=1, limit=4
    $region2: #{basic_block_forward.3} parent=1 // loop_pre_header
      _
    $region3: #{basic_block_forward.3} parent=1 // loop_header
      %s26 = sphi 0, %s30
      %p27 = scmp.ge.s32.totalorder %s26, 4
      %s36 = sphi 0, %s38
      %s39 = sphi 0, %s36
      %s40 = sphi 0, %s39
      %s56 = sphi 0, %s40
      %s60 = sphi 0, %s60
      %s62 = sphi 0, %s60
      %s63 = sphi 0, %s62
      %s77 = sphi 0, %s63
      %s83 = sphi 0, %s85
      %s86 = sphi 0, %s83
      %s87 = sphi 0, %s86
      %s103 = sphi 0, %s87
      %s109 = sphi 0, %s111
      %s112 = sphi 0, %s109
      %s113 = sphi 0, %s112
      %s129 = sphi 0, %s113
      %s135 = sphi 0, %s137
      %s138 = sphi 0, %s135
      %s139 = sphi 0, %s138
      %s155 = sphi 0, %s139
      %s161 = sphi 0, %s163
      %s164 = sphi 0, %s161
      %s165 = sphi 0, %s164
      %s181 = sphi 0, %s165
      %s187 = sphi 0, %s189
      %s190 = sphi 0, %s187
      %s191 = sphi 0, %s190
      %s207 = sphi 0, %s191
    $region4: #{basic_block_forward.3} parent=1 // loop_header_branch
      %29 = sbr.rel (%p27) target = $region8
    $region5: #{basic_block_forward.3} parent=1 // loop_body
      %s31 = ssub.s32 %s26, 1
      %s32 = ssub.s32 %s26, 2
      %s33 = sadd.s32 %s26, 1
      %s34 = ssub.s32 %s26, %s33
      %p35 = scmp.eq.s32.totalorder %s34, 0
      %s37 = sadd.s32 %s36, 1
      %s38 = scalar_select %p35, %s36, %s37
      %p41 = pneg %p35
      %p42 = scmp.eq.s32.totalorder %s26, 1
      %p43 = por %p41, %p42
      %p44 = scmp.ne.s32.totalorder %s36, %s39
      %p45 = scmp.eq.s32.totalorder %s26, 0
      %p46 = por %p44, %p45
      %p47 = scmp.ne.s32.totalorder %s36, %s39
      %p48 = scmp.eq.s32.totalorder %s31, 1
      %p49 = por %p47, %p48
      %p50 = scmp.ne.s32.totalorder %s39, %s40
      %p51 = scmp.eq.s32.totalorder %s31, 0
      %p52 = por %p50, %p51
      %p53 = scmp.ne.s32.totalorder %s39, %s40
      %p54 = scmp.eq.s32.totalorder %s32, 1
      %p55 = por %p53, %p54
      %p57 = scmp.ne.s32.totalorder %s40, %s56
      %p58 = scmp.eq.s32.totalorder %s32, 0
      %p59 = por %p57, %p58
      %s61 = sadd.s32 %s60, 1
      %p64 = scmp.eq.s32.totalorder %s26, 1
      %p65 = scmp.ne.s32.totalorder %s60, %s62
      %p66 = scmp.eq.s32.totalorder %s26, 0
      %p67 = por %p65, %p66
      %p68 = scmp.ne.s32.totalorder %s60, %s62
      %p69 = scmp.eq.s32.totalorder %s31, 1
      %p70 = por %p68, %p69
      %p71 = scmp.ne.s32.totalorder %s62, %s63
      %p72 = scmp.eq.s32.totalorder %s31, 0
      %p73 = por %p71, %p72
      %p74 = scmp.ne.s32.totalorder %s62, %s63
      %p75 = scmp.eq.s32.totalorder %s32, 1
      %p76 = por %p74, %p75
      %p78 = scmp.ne.s32.totalorder %s63, %s77
      %p79 = scmp.eq.s32.totalorder %s32, 0
      %p80 = por %p78, %p79
      %s81 = ssub.s32 %s26, %s33
      %p82 = scmp.eq.s32.totalorder %s81, 0
      %s84 = sadd.s32 %s83, 1
      %s85 = scalar_select %p82, %s83, %s84
      %p88 = pneg %p82
      %p89 = scmp.eq.s32.totalorder %s26, 1
      %p90 = por %p88, %p89
      %p91 = scmp.ne.s32.totalorder %s83, %s86
      %p92 = scmp.eq.s32.totalorder %s26, 0
      %p93 = por %p91, %p92
      %p94 = scmp.ne.s32.totalorder %s83, %s86
      %p95 = scmp.eq.s32.totalorder %s31, 1
      %p96 = por %p94, %p95
      %p97 = scmp.ne.s32.totalorder %s86, %s87
      %p98 = scmp.eq.s32.totalorder %s31, 0
      %p99 = por %p97, %p98
      %p100 = scmp.ne.s32.totalorder %s86, %s87
      %p101 = scmp.eq.s32.totalorder %s32, 1
      %p102 = por %p100, %p101
      %p104 = scmp.ne.s32.totalorder %s87, %s103
      %p105 = scmp.eq.s32.totalorder %s32, 0
      %p106 = por %p104, %p105
      %s107 = ssub.s32 %s26, %s33
      %p108 = scmp.eq.s32.totalorder %s107, 0
      %s110 = sadd.s32 %s109, 1
      %s111 = scalar_select %p108, %s109, %s110
      %p114 = pneg %p108
      %p115 = scmp.eq.s32.totalorder %s26, 1
      %p116 = por %p114, %p115
      %p117 = scmp.ne.s32.totalorder %s109, %s112
      %p118 = scmp.eq.s32.totalorder %s26, 0
      %p119 = por %p117, %p118
      %p120 = scmp.ne.s32.totalorder %s109, %s112
      %p121 = scmp.eq.s32.totalorder %s31, 1
      %p122 = por %p120, %p121
      %p123 = scmp.ne.s32.totalorder %s112, %s113
      %p124 = scmp.eq.s32.totalorder %s31, 0
      %p125 = por %p123, %p124
      %p126 = scmp.ne.s32.totalorder %s112, %s113
      %p127 = scmp.eq.s32.totalorder %s32, 1
      %p128 = por %p126, %p127
      %p130 = scmp.ne.s32.totalorder %s113, %s129
      %p131 = scmp.eq.s32.totalorder %s32, 0
      %p132 = por %p130, %p131
      %s133 = ssub.s32 %s26, %s33
      %p134 = scmp.eq.s32.totalorder %s133, 0
      %s136 = sadd.s32 %s135, 1
      %s137 = scalar_select %p134, %s135, %s136
      %p140 = pneg %p134
      %p141 = scmp.eq.s32.totalorder %s26, 1
      %p142 = por %p140, %p141
      %p143 = scmp.ne.s32.totalorder %s135, %s138
      %p144 = scmp.eq.s32.totalorder %s26, 0
      %p145 = por %p143, %p144
      %p146 = scmp.ne.s32.totalorder %s135, %s138
      %p147 = scmp.eq.s32.totalorder %s31, 1
      %p148 = por %p146, %p147
      %p149 = scmp.ne.s32.totalorder %s138, %s139
      %p150 = scmp.eq.s32.totalorder %s31, 0
      %p151 = por %p149, %p150
      %p152 = scmp.ne.s32.totalorder %s138, %s139
      %p153 = scmp.eq.s32.totalorder %s32, 1
      %p154 = por %p152, %p153
      %p156 = scmp.ne.s32.totalorder %s139, %s155
      %p157 = scmp.eq.s32.totalorder %s32, 0
      %p158 = por %p156, %p157
      %s159 = ssub.s32 %s26, %s33
      %p160 = scmp.eq.s32.totalorder %s159, 0
      %s162 = sadd.s32 %s161, 1
      %s163 = scalar_select %p160, %s161, %s162
      %p166 = pneg %p160
      %p167 = scmp.eq.s32.totalorder %s26, 1
      %p168 = por %p166, %p167
      %p169 = scmp.ne.s32.totalorder %s161, %s164
      %p170 = scmp.eq.s32.totalorder %s26, 0
      %p171 = por %p169, %p170
      %p172 = scmp.ne.s32.totalorder %s161, %s164
      %p173 = scmp.eq.s32.totalorder %s31, 1
      %p174 = por %p172, %p173
      %p175 = scmp.ne.s32.totalorder %s164, %s165
      %p176 = scmp.eq.s32.totalorder %s31, 0
      %p177 = por %p175, %p176
      %p178 = scmp.ne.s32.totalorder %s164, %s165
      %p179 = scmp.eq.s32.totalorder %s32, 1
      %p180 = por %p178, %p179
      %p182 = scmp.ne.s32.totalorder %s165, %s181
      %p183 = scmp.eq.s32.totalorder %s32, 0
      %p184 = por %p182, %p183
      %s185 = ssub.s32 %s26, %s33
      %p186 = scmp.eq.s32.totalorder %s185, 0
      %s188 = sadd.s32 %s187, 1
      %s189 = scalar_select %p186, %s187, %s188
      %p192 = pneg %p186
      %p193 = scmp.eq.s32.totalorder %s26, 1
      %p194 = por %p192, %p193
      %p195 = scmp.ne.s32.totalorder %s187, %s190
      %p196 = scmp.eq.s32.totalorder %s26, 0
      %p197 = por %p195, %p196
      %p198 = scmp.ne.s32.totalorder %s187, %s190
      %p199 = scmp.eq.s32.totalorder %s31, 1
      %p200 = por %p198, %p199
      %p201 = scmp.ne.s32.totalorder %s190, %s191
      %p202 = scmp.eq.s32.totalorder %s31, 0
      %p203 = por %p201, %p202
      %p204 = scmp.ne.s32.totalorder %s190, %s191
      %p205 = scmp.eq.s32.totalorder %s32, 1
      %p206 = por %p204, %p205
      %p208 = scmp.ne.s32.totalorder %s191, %s207
      %p209 = scmp.eq.s32.totalorder %s32, 0
      %p210 = por %p208, %p209
      %p211 = scmp.le.s32.totalorder 1, %s26
      %p212 = scmp.lt.s32.totalorder %s26, 3
      %p213 = pnand %p211, %p212
      %p214 = pneg %p213
      // Predicated region
      $region9: #{basic_block_forward.3} parent=5 // pred_check
        _
      $region10: #{basic_block_forward.3} parent=5 // pred_check_branch
        %216 = sbr.rel (%p213) target = $region12
      $region11: #{basic_block_forward.3} parent=5 // pred_region
        %s217 = ssub.s32 %s26, 1
        // Predicated region
        $region13: #{basic_block_forward.3} parent=11 // pred_check
          %p218 = pneg %p73
        $region14: #{basic_block_forward.3} parent=11 // pred_check_branch
          %220 = sbr.rel (%p218) target = $region16
        $region15: #{basic_block_forward.3} parent=11 // pred_region
          %s222 = ssub.s32 320, 320
          %223 = vsyncadd [#allocation8], %s222
          %s224 = sshll.u32 [#allocation7], 4
          %s225 = int_to_ptr.vmem [resolvable:$true] %s224
          %230 = dma.hbm_to_vmem [thread:$0]  %s1, 320, %s225, [#allocation8], 64, 64, 4
        $region16: #{basic_block_forward.3} parent=11 // pred_fallthru
          _
      $region12: #{basic_block_forward.3} parent=5 // pred_fallthru
        _
      %p231 = scmp.lt.s32.totalorder %s26, 2
      // Predicated region
      $region17: #{basic_block_forward.3} parent=5 // pred_check
        %p232 = pneg %p231
      $region18: #{basic_block_forward.3} parent=5 // pred_check_branch
        %234 = sbr.rel (%p232) target = $region20
      $region19: #{basic_block_forward.3} parent=5 // pred_region
        // Predicated region
        $region21: #{basic_block_forward.3} parent=19 // pred_check
          %p235 = pneg %p46
        $region22: #{basic_block_forward.3} parent=19 // pred_check_branch
          %237 = sbr.rel (%p235) target = $region24
        $region23: #{basic_block_forward.3} parent=19 // pred_region
          %s238 = sand.u32 %s36, 1
          %s239 = scalar_lea.sflag [#allocation5], %s238
          %s240 = sand.u32 %s36, 1
          %s241 = smul.addr %s240, 256
          %s242 = scalar_lea.vmem [#allocation4], %s241
          %s244 = ssub.s32 4096, 4096
          %245 = vsyncadd %s239, %s244
          %s246 = smul.addr %s26, 32
          %s247 = smul.addr %s246, 128
          %s248 = scalar_lea.hbm %s0, %s247
          %s249 = sshll.u32 %s242, 4
          %s250 = int_to_ptr.vmem [resolvable:$true] %s249
          %255 = dma.hbm_to_vmem [thread:$0]  %s248, 4096, %s250, %s239, 128, 128, 8
        $region24: #{basic_block_forward.3} parent=19 // pred_fallthru
          _
      $region20: #{basic_block_forward.3} parent=5 // pred_fallthru
        _
      %p256 = scmp.le.s32.totalorder 1, %s26
      %p257 = scmp.lt.s32.totalorder %s26, 3
      %p258 = pnand %p256, %p257
      %p259 = pneg %p258
      // Predicated region
      $region25: #{basic_block_forward.3} parent=5 // pred_check
        _
      $region26: #{basic_block_forward.3} parent=5 // pred_check_branch
        %261 = sbr.rel (%p258) target = $region28
      $region27: #{basic_block_forward.3} parent=5 // pred_region
        %s262 = ssub.s32 %s26, 1
        %s263 = sand.u32 %s39, 1
        %s264 = scalar_lea.sflag [#allocation5], %s263
        %s265 = sand.u32 %s39, 1
        %s266 = smul.addr %s265, 256
        %s267 = scalar_lea.vmem [#allocation4], %s266
        // Predicated region
        $region29: #{basic_block_forward.3} parent=27 // pred_check
          %p268 = pneg %p52
        $region30: #{basic_block_forward.3} parent=27 // pred_check_branch
          %270 = sbr.rel (%p268) target = $region32
        $region31: #{basic_block_forward.3} parent=27 // pred_region
          %271 = dma.done %s264, 4096
        $region32: #{basic_block_forward.3} parent=27 // pred_fallthru
          _
        // Predicated region
        $region33: #{basic_block_forward.3} parent=27 // pred_check
          %p272 = pneg %p73
        $region34: #{basic_block_forward.3} parent=27 // pred_check_branch
          %274 = sbr.rel (%p272) target = $region36
        $region35: #{basic_block_forward.3} parent=27 // pred_region
          %275 = dma.done [#allocation8], 320
        $region36: #{basic_block_forward.3} parent=27 // pred_fallthru
          _
        %s276 = sand.u32 %s39, 1
        %s277 = scalar_lea.sflag [#allocation5], %s276
        %s278 = sand.u32 %s39, 1
        %s279 = smul.addr %s278, 256
        %s280 = scalar_lea.vmem [#allocation4], %s279
        %p281 = pneg %p52
        %p282 = pneg %p49
        %p283 = pneg %p73
        %p284 = pneg %p70
        %p285 = pneg %p99
        %p286 = pneg %p96
        %s287 = sand.u32 %s86, 1
        %s288 = scalar_lea.sflag [#allocation6], %s287
        %s289 = sand.u32 %s86, 1
        %s290 = smul.addr %s289, 256
        %s291 = scalar_lea.vmem [#allocation9], %s290
        %p292 = pneg %p125
        %p293 = pneg %p122
        %s294 = sand.u32 %s31, 1
        %s295 = scalar_lea.sflag [#allocation11], %s294
        %s296 = sand.u32 %s112, 1
        %s297 = smul.addr %s296, 256
        %s298 = scalar_lea.vmem [#allocation10], %s297
        %p299 = pneg %p151
        %p300 = pneg %p148
        %s301 = sand.u32 %s31, 1
        %s302 = scalar_lea.sflag [#allocation11], %s301
        %s303 = sand.u32 %s138, 1
        %s304 = smul.addr %s303, 256
        %s305 = scalar_lea.vmem [#allocation12], %s304
        %p306 = pneg %p177
        %p307 = pneg %p174
        %s308 = sand.u32 %s31, 1
        %s309 = scalar_lea.sflag [#allocation14], %s308
        %s310 = sand.u32 %s164, 1
        %s311 = scalar_lea.vmem [#allocation13], %s310
        %p312 = pneg %p203
        %p313 = pneg %p200
        %s314 = sand.u32 %s31, 1
        %s315 = scalar_lea.sflag [#allocation14], %s314
        %s316 = sand.u32 %s190, 1
        %s317 = scalar_lea.vmem [#allocation15], %s316
        %vm319 = vcmask 31744
        %320 = vst.msk [vmem:[#allocation2] sm:$0xff] %vm319, 0.0
        %321 = vst.msk [vmem:[#allocation2 + $0x8] sm:$0xff] %vm319, 0.0
        %vm322 = vcmask 25600
        %323 = vst.msk [vmem:[#allocation2 + $0x10] sm:$0x3] %vm322, 0.0
        %s324 = scalar_lea.vmem [#allocation2], 408
        %325 = vst.msk [vmem:[%s324] sm:$0xff] %vm319, 0.0
        %326 = vst.msk [vmem:[%s324 + $0x8] sm:$0xff] %vm319, 0.0
        %327 = vst.msk [vmem:[%s324 + $0x10] sm:$0x3] %vm322, 0.0
        %vm328 = vcmask 24576
        %329 = vst.msk [vmem:[#allocation2] sm:$0x1] %vm328, 0.0
        %330 = vst.msk [vmem:[#allocation2 + $0x18] sm:$0x1] %vm328, 0.0
        %331 = vst.msk [vmem:[#allocation2 + $0x30] sm:$0x1] %vm328, 0.0
        %332 = vst.msk [vmem:[#allocation2 + $0x48] sm:$0x1] %vm328, 0.0
        %333 = vst.msk [vmem:[#allocation2 + $0x60] sm:$0x1] %vm328, 0.0
        %334 = vst.msk [vmem:[#allocation2 + $0x78] sm:$0x1] %vm328, 0.0
        %335 = vst.msk [vmem:[#allocation2 + $0x90] sm:$0x1] %vm328, 0.0
        %336 = vst.msk [vmem:[#allocation2 + $0xa8] sm:$0x1] %vm328, 0.0
        %337 = vst.msk [vmem:[#allocation2 + $0xc0] sm:$0x1] %vm328, 0.0
        %338 = vst.msk [vmem:[#allocation2 + $0xd8] sm:$0x1] %vm328, 0.0
        %339 = vst.msk [vmem:[#allocation2 + $0xf0] sm:$0x1] %vm328, 0.0
        %340 = vst.msk [vmem:[#allocation2 + $0x108] sm:$0x1] %vm328, 0.0
        %341 = vst.msk [vmem:[#allocation2 + $0x120] sm:$0x1] %vm328, 0.0
        %342 = vst.msk [vmem:[#allocation2 + $0x138] sm:$0x1] %vm328, 0.0
        %343 = vst.msk [vmem:[#allocation2 + $0x150] sm:$0x1] %vm328, 0.0
        %344 = vst.msk [vmem:[#allocation2 + $0x168] sm:$0x1] %vm328, 0.0
        %345 = vst.msk [vmem:[#allocation2 + $0x180] sm:$0x1] %vm328, 0.0
        %346 = vst.msk [vmem:[#allocation2 + $0x198] sm:$0x1] %vm328, 0.0
        %347 = vst.msk [vmem:[#allocation2 + $0x11] sm:$0x1] %vm328, 0.0
        %348 = vst.msk [vmem:[#allocation2 + $0x29] sm:$0x1] %vm328, 0.0
        %349 = vst.msk [vmem:[#allocation2 + $0x41] sm:$0x1] %vm328, 0.0
        %350 = vst.msk [vmem:[#allocation2 + $0x59] sm:$0x1] %vm328, 0.0
        %351 = vst.msk [vmem:[#allocation2 + $0x71] sm:$0x1] %vm328, 0.0
        %352 = vst.msk [vmem:[#allocation2 + $0x89] sm:$0x1] %vm328, 0.0
        %353 = vst.msk [vmem:[#allocation2 + $0xa1] sm:$0x1] %vm328, 0.0
        %354 = vst.msk [vmem:[#allocation2 + $0xb9] sm:$0x1] %vm328, 0.0
        %355 = vst.msk [vmem:[#allocation2 + $0xd1] sm:$0x1] %vm328, 0.0
        %356 = vst.msk [vmem:[#allocation2 + $0xe9] sm:$0x1] %vm328, 0.0
        %357 = vst.msk [vmem:[#allocation2 + $0x101] sm:$0x1] %vm328, 0.0
        %358 = vst.msk [vmem:[#allocation2 + $0x119] sm:$0x1] %vm328, 0.0
        %359 = vst.msk [vmem:[#allocation2 + $0x131] sm:$0x1] %vm328, 0.0
        %360 = vst.msk [vmem:[#allocation2 + $0x149] sm:$0x1] %vm328, 0.0
        %361 = vst.msk [vmem:[#allocation2 + $0x161] sm:$0x1] %vm328, 0.0
        %362 = vst.msk [vmem:[#allocation2 + $0x179] sm:$0x1] %vm328, 0.0
        %363 = vst.msk [vmem:[#allocation2 + $0x191] sm:$0x1] %vm328, 0.0
        %364 = vst.msk [vmem:[#allocation2 + $0x1a9] sm:$0x1] %vm328, 0.0
        %v365 = vld [vmem:[%s267] sm:$0xff]
        %v366 = vld [vmem:[%s267 + $0x8] sm:$0xff]
        %v367 = vld [vmem:[%s267 + $0x10] sm:$0xff]
        %v368 = vld [vmem:[%s267 + $0x18] sm:$0xff]
        %v369 = vld [vmem:[%s267 + $0x20] sm:$0xff]
        %v370 = vld [vmem:[%s267 + $0x28] sm:$0xff]
        %v371 = vld [vmem:[%s267 + $0x30] sm:$0xff]
        %v372 = vld [vmem:[%s267 + $0x38] sm:$0xff]
        %v373 = vld [vmem:[%s267 + $0x40] sm:$0xff]
        %v374 = vld [vmem:[%s267 + $0x48] sm:$0xff]
        %v375 = vld [vmem:[%s267 + $0x50] sm:$0xff]
        %v376 = vld [vmem:[%s267 + $0x58] sm:$0xff]
        %v377 = vld [vmem:[%s267 + $0x60] sm:$0xff]
        %v378 = vld [vmem:[%s267 + $0x68] sm:$0xff]
        %v379 = vld [vmem:[%s267 + $0x70] sm:$0xff]
        %v380 = vld [vmem:[%s267 + $0x78] sm:$0xff]
        %v381 = vld [vmem:[%s267 + $0x80] sm:$0xff]
        %v382 = vld [vmem:[%s267 + $0x88] sm:$0xff]
        %v383 = vld [vmem:[%s267 + $0x90] sm:$0xff]
        %v384 = vld [vmem:[%s267 + $0x98] sm:$0xff]
        %v385 = vld [vmem:[%s267 + $0xa0] sm:$0xff]
        %v386 = vld [vmem:[%s267 + $0xa8] sm:$0xff]
        %v387 = vld [vmem:[%s267 + $0xb0] sm:$0xff]
        %v388 = vld [vmem:[%s267 + $0xb8] sm:$0xff]
        %v389 = vld [vmem:[%s267 + $0xc0] sm:$0xff]
        %v390 = vld [vmem:[%s267 + $0xc8] sm:$0xff]
        %v391 = vld [vmem:[%s267 + $0xd0] sm:$0xff]
        %v392 = vld [vmem:[%s267 + $0xd8] sm:$0xff]
        %v393 = vld [vmem:[%s267 + $0xe0] sm:$0xff]
        %v394 = vld [vmem:[%s267 + $0xe8] sm:$0xff]
        %v395 = vld [vmem:[%s267 + $0xf0] sm:$0xff]
        %v396 = vld [vmem:[%s267 + $0xf8] sm:$0xff]
        %s397 = scalar_lea.vmem [#allocation2], 24
        %398 = vst.msk [vmem:[%s397 + $0x1] sm:$0xff] %vm319, %v365
        %399 = vst.msk [vmem:[%s397 + $0x9] sm:$0xff] %vm319, %v366
        %400 = vst.msk [vmem:[%s397 + $0x19] sm:$0xff] %vm319, %v367
        %401 = vst.msk [vmem:[%s397 + $0x21] sm:$0xff] %vm319, %v368
        %402 = vst.msk [vmem:[%s397 + $0x31] sm:$0xff] %vm319, %v369
        %403 = vst.msk [vmem:[%s397 + $0x39] sm:$0xff] %vm319, %v370
        %404 = vst.msk [vmem:[%s397 + $0x49] sm:$0xff] %vm319, %v371
        %405 = vst.msk [vmem:[%s397 + $0x51] sm:$0xff] %vm319, %v372
        %406 = vst.msk [vmem:[%s397 + $0x61] sm:$0xff] %vm319, %v373
        %407 = vst.msk [vmem:[%s397 + $0x69] sm:$0xff] %vm319, %v374
        %408 = vst.msk [vmem:[%s397 + $0x79] sm:$0xff] %vm319, %v375
        %409 = vst.msk [vmem:[%s397 + $0x81] sm:$0xff] %vm319, %v376
        %410 = vst.msk [vmem:[%s397 + $0x91] sm:$0xff] %vm319, %v377
        %411 = vst.msk [vmem:[%s397 + $0x99] sm:$0xff] %vm319, %v378
        %412 = vst.msk [vmem:[%s397 + $0xa9] sm:$0xff] %vm319, %v379
        %413 = vst.msk [vmem:[%s397 + $0xb1] sm:$0xff] %vm319, %v380
        %414 = vst.msk [vmem:[%s397 + $0xc1] sm:$0xff] %vm319, %v381
        %415 = vst.msk [vmem:[%s397 + $0xc9] sm:$0xff] %vm319, %v382
        %416 = vst.msk [vmem:[%s397 + $0xd9] sm:$0xff] %vm319, %v383
        %417 = vst.msk [vmem:[%s397 + $0xe1] sm:$0xff] %vm319, %v384
        %418 = vst.msk [vmem:[%s397 + $0xf1] sm:$0xff] %vm319, %v385
        %419 = vst.msk [vmem:[%s397 + $0xf9] sm:$0xff] %vm319, %v386
        %420 = vst.msk [vmem:[%s397 + $0x109] sm:$0xff] %vm319, %v387
        %421 = vst.msk [vmem:[%s397 + $0x111] sm:$0xff] %vm319, %v388
        %422 = vst.msk [vmem:[%s397 + $0x121] sm:$0xff] %vm319, %v389
        %423 = vst.msk [vmem:[%s397 + $0x129] sm:$0xff] %vm319, %v390
        %424 = vst.msk [vmem:[%s397 + $0x139] sm:$0xff] %vm319, %v391
        %425 = vst.msk [vmem:[%s397 + $0x141] sm:$0xff] %vm319, %v392
        %426 = vst.msk [vmem:[%s397 + $0x151] sm:$0xff] %vm319, %v393
        %427 = vst.msk [vmem:[%s397 + $0x159] sm:$0xff] %vm319, %v394
        %428 = vst.msk [vmem:[%s397 + $0x169] sm:$0xff] %vm319, %v395
        %429 = vst.msk [vmem:[%s397 + $0x171] sm:$0xff] %vm319, %v396
        %v430 = vld [vmem:[#allocation2] sm:$0xff]
        %v431 = vld [vmem:[#allocation2 + $0x8] sm:$0xff]
        %v432 = vld [vmem:[#allocation2 + $0x18] sm:$0xff]
        %v433 = vld [vmem:[#allocation2 + $0x20] sm:$0xff]
        %v434 = vld [vmem:[#allocation2 + $0x30] sm:$0xff]
        %v435 = vld [vmem:[#allocation2 + $0x38] sm:$0xff]
        %v436 = vld [vmem:[#allocation2 + $0x48] sm:$0xff]
        %v437 = vld [vmem:[#allocation2 + $0x50] sm:$0xff]
        %v438 = vld [vmem:[#allocation2 + $0x60] sm:$0xff]
        %v439 = vld [vmem:[#allocation2 + $0x68] sm:$0xff]
        %v440 = vld [vmem:[#allocation2 + $0x78] sm:$0xff]
        %v441 = vld [vmem:[#allocation2 + $0x80] sm:$0xff]
        %v442 = vld [vmem:[#allocation2 + $0x90] sm:$0xff]
        %v443 = vld [vmem:[#allocation2 + $0x98] sm:$0xff]
        %v444 = vld [vmem:[#allocation2 + $0xa8] sm:$0xff]
        %v445 = vld [vmem:[#allocation2 + $0xb0] sm:$0xff]
        %v446 = vld [vmem:[#allocation2 + $0xc0] sm:$0xff]
        %v447 = vld [vmem:[#allocation2 + $0xc8] sm:$0xff]
        %v448 = vld [vmem:[#allocation2 + $0xd8] sm:$0xff]
        %v449 = vld [vmem:[#allocation2 + $0xe0] sm:$0xff]
        %v450 = vld [vmem:[#allocation2 + $0xf0] sm:$0xff]
        %v451 = vld [vmem:[#allocation2 + $0xf8] sm:$0xff]
        %v452 = vld [vmem:[#allocation2 + $0x108] sm:$0xff]
        %v453 = vld [vmem:[#allocation2 + $0x110] sm:$0xff]
        %v454 = vld [vmem:[#allocation2 + $0x120] sm:$0xff]
        %v455 = vld [vmem:[#allocation2 + $0x128] sm:$0xff]
        %v456 = vld [vmem:[#allocation2 + $0x138] sm:$0xff]
        %v457 = vld [vmem:[#allocation2 + $0x140] sm:$0xff]
        %v458 = vld [vmem:[#allocation2 + $0x150] sm:$0xff]
        %v459 = vld [vmem:[#allocation2 + $0x158] sm:$0xff]
        %v460 = vld [vmem:[#allocation2 + $0x168] sm:$0xff]
        %v461 = vld [vmem:[#allocation2 + $0x170] sm:$0xff]
        %462 = vst.msk [vmem:[#allocation3] sm:$0xff] %vm319, %v430
        %463 = vst.msk [vmem:[#allocation3 + $0x8] sm:$0xff] %vm319, %v431
        %464 = vst.msk [vmem:[#allocation3 + $0x10] sm:$0xff] %vm319, %v432
        %465 = vst.msk [vmem:[#allocation3 + $0x18] sm:$0xff] %vm319, %v433
        %466 = vst.msk [vmem:[#allocation3 + $0x20] sm:$0xff] %vm319, %v434
        %467 = vst.msk [vmem:[#allocation3 + $0x28] sm:$0xff] %vm319, %v435
        %468 = vst.msk [vmem:[#allocation3 + $0x30] sm:$0xff] %vm319, %v436
        %469 = vst.msk [vmem:[#allocation3 + $0x38] sm:$0xff] %vm319, %v437
        %470 = vst.msk [vmem:[#allocation3 + $0x40] sm:$0xff] %vm319, %v438
        %471 = vst.msk [vmem:[#allocation3 + $0x48] sm:$0xff] %vm319, %v439
        %472 = vst.msk [vmem:[#allocation3 + $0x50] sm:$0xff] %vm319, %v440
        %473 = vst.msk [vmem:[#allocation3 + $0x58] sm:$0xff] %vm319, %v441
        %474 = vst.msk [vmem:[#allocation3 + $0x60] sm:$0xff] %vm319, %v442
        %475 = vst.msk [vmem:[#allocation3 + $0x68] sm:$0xff] %vm319, %v443
        %476 = vst.msk [vmem:[#allocation3 + $0x70] sm:$0xff] %vm319, %v444
        %477 = vst.msk [vmem:[#allocation3 + $0x78] sm:$0xff] %vm319, %v445
        %478 = vst.msk [vmem:[#allocation3 + $0x80] sm:$0xff] %vm319, %v446
        %479 = vst.msk [vmem:[#allocation3 + $0x88] sm:$0xff] %vm319, %v447
        %480 = vst.msk [vmem:[#allocation3 + $0x90] sm:$0xff] %vm319, %v448
        %481 = vst.msk [vmem:[#allocation3 + $0x98] sm:$0xff] %vm319, %v449
        %482 = vst.msk [vmem:[#allocation3 + $0xa0] sm:$0xff] %vm319, %v450
        %483 = vst.msk [vmem:[#allocation3 + $0xa8] sm:$0xff] %vm319, %v451
        %484 = vst.msk [vmem:[#allocation3 + $0xb0] sm:$0xff] %vm319, %v452
        %485 = vst.msk [vmem:[#allocation3 + $0xb8] sm:$0xff] %vm319, %v453
        %486 = vst.msk [vmem:[#allocation3 + $0xc0] sm:$0xff] %vm319, %v454
        %487 = vst.msk [vmem:[#allocation3 + $0xc8] sm:$0xff] %vm319, %v455
        %488 = vst.msk [vmem:[#allocation3 + $0xd0] sm:$0xff] %vm319, %v456
        %489 = vst.msk [vmem:[#allocation3 + $0xd8] sm:$0xff] %vm319, %v457
        %490 = vst.msk [vmem:[#allocation3 + $0xe0] sm:$0xff] %vm319, %v458
        %491 = vst.msk [vmem:[#allocation3 + $0xe8] sm:$0xff] %vm319, %v459
        %492 = vst.msk [vmem:[#allocation3 + $0xf0] sm:$0xff] %vm319, %v460
        %493 = vst.msk [vmem:[#allocation3 + $0xf8] sm:$0xff] %vm319, %v461
        %v494 = vld [vmem:[#allocation2 + $0x1] sm:$0xff]
        %v495 = vld [vmem:[#allocation2 + $0x9] sm:$0xff]
        %v496 = vld [vmem:[#allocation2 + $0x19] sm:$0xff]
        %v497 = vld [vmem:[#allocation2 + $0x21] sm:$0xff]
        %v498 = vld [vmem:[#allocation2 + $0x31] sm:$0xff]
        %v499 = vld [vmem:[#allocation2 + $0x39] sm:$0xff]
        %v500 = vld [vmem:[#allocation2 + $0x49] sm:$0xff]
        %v501 = vld [vmem:[#allocation2 + $0x51] sm:$0xff]
        %v502 = vld [vmem:[#allocation2 + $0x61] sm:$0xff]
        %v503 = vld [vmem:[#allocation2 + $0x69] sm:$0xff]
        %v504 = vld [vmem:[#allocation2 + $0x79] sm:$0xff]
        %v505 = vld [vmem:[#allocation2 + $0x81] sm:$0xff]
        %v506 = vld [vmem:[#allocation2 + $0x91] sm:$0xff]
        %v507 = vld [vmem:[#allocation2 + $0x99] sm:$0xff]
        %v508 = vld [vmem:[#allocation2 + $0xa9] sm:$0xff]
        %v509 = vld [vmem:[#allocation2 + $0xb1] sm:$0xff]
        %v510 = vld [vmem:[#allocation2 + $0xc1] sm:$0xff]
        %v511 = vld [vmem:[#allocation2 + $0xc9] sm:$0xff]
        %v512 = vld [vmem:[#allocation2 + $0xd9] sm:$0xff]
        %v513 = vld [vmem:[#allocation2 + $0xe1] sm:$0xff]
        %v514 = vld [vmem:[#allocation2 + $0xf1] sm:$0xff]
        %v515 = vld [vmem:[#allocation2 + $0xf9] sm:$0xff]
        %v516 = vld [vmem:[#allocation2 + $0x109] sm:$0xff]
        %v517 = vld [vmem:[#allocation2 + $0x111] sm:$0xff]
        %v518 = vld [vmem:[#allocation2 + $0x121] sm:$0xff]
        %v519 = vld [vmem:[#allocation2 + $0x129] sm:$0xff]
        %v520 = vld [vmem:[#allocation2 + $0x139] sm:$0xff]
        %v521 = vld [vmem:[#allocation2 + $0x141] sm:$0xff]
        %v522 = vld [vmem:[#allocation2 + $0x151] sm:$0xff]
        %v523 = vld [vmem:[#allocation2 + $0x159] sm:$0xff]
        %v524 = vld [vmem:[#allocation2 + $0x169] sm:$0xff]
        %v525 = vld [vmem:[#allocation2 + $0x171] sm:$0xff]
        %558 = vrot.lane.b32.xlu0 %v494, 4
        %v559 = vpop.permute.xlu0 %558
        %560 = vrot.lane.b32.xlu0 %v495, 4
        %v561 = vpop.permute.xlu0 %560
        %562 = vrot.lane.b32.xlu0 %v496, 4
        %v563 = vpop.permute.xlu0 %562
        %564 = vrot.lane.b32.xlu0 %v497, 4
        %v565 = vpop.permute.xlu0 %564
        %566 = vrot.lane.b32.xlu0 %v498, 4
        %v567 = vpop.permute.xlu0 %566
        %568 = vrot.lane.b32.xlu0 %v499, 4
        %v569 = vpop.permute.xlu0 %568
        %570 = vrot.lane.b32.xlu0 %v500, 4
        %v571 = vpop.permute.xlu0 %570
        %572 = vrot.lane.b32.xlu0 %v501, 4
        %v573 = vpop.permute.xlu0 %572
        %574 = vrot.lane.b32.xlu0 %v502, 4
        %v575 = vpop.permute.xlu0 %574
        %576 = vrot.lane.b32.xlu0 %v503, 4
        %v577 = vpop.permute.xlu0 %576
        %578 = vrot.lane.b32.xlu0 %v504, 4
        %v579 = vpop.permute.xlu0 %578
        %580 = vrot.lane.b32.xlu0 %v505, 4
        %v581 = vpop.permute.xlu0 %580
        %582 = vrot.lane.b32.xlu0 %v506, 4
        %v583 = vpop.permute.xlu0 %582
        %584 = vrot.lane.b32.xlu0 %v507, 4
        %v585 = vpop.permute.xlu0 %584
        %586 = vrot.lane.b32.xlu0 %v508, 4
        %v587 = vpop.permute.xlu0 %586
        %588 = vrot.lane.b32.xlu0 %v509, 4
        %v589 = vpop.permute.xlu0 %588
        %590 = vrot.lane.b32.xlu0 %v510, 4
        %v591 = vpop.permute.xlu0 %590
        %592 = vrot.lane.b32.xlu0 %v511, 4
        %v593 = vpop.permute.xlu0 %592
        %594 = vrot.lane.b32.xlu0 %v512, 4
        %v595 = vpop.permute.xlu0 %594
        %596 = vrot.lane.b32.xlu0 %v513, 4
        %v597 = vpop.permute.xlu0 %596
        %598 = vrot.lane.b32.xlu0 %v514, 4
        %v599 = vpop.permute.xlu0 %598
        %600 = vrot.lane.b32.xlu0 %v515, 4
        %v601 = vpop.permute.xlu0 %600
        %602 = vrot.lane.b32.xlu0 %v516, 4
        %v603 = vpop.permute.xlu0 %602
        %604 = vrot.lane.b32.xlu0 %v517, 4
        %v605 = vpop.permute.xlu0 %604
        %606 = vrot.lane.b32.xlu0 %v518, 4
        %v607 = vpop.permute.xlu0 %606
        %608 = vrot.lane.b32.xlu0 %v519, 4
        %v609 = vpop.permute.xlu0 %608
        %610 = vrot.lane.b32.xlu0 %v520, 4
        %v611 = vpop.permute.xlu0 %610
        %612 = vrot.lane.b32.xlu0 %v521, 4
        %v613 = vpop.permute.xlu0 %612
        %614 = vrot.lane.b32.xlu0 %v522, 4
        %v615 = vpop.permute.xlu0 %614
        %616 = vrot.lane.b32.xlu0 %v523, 4
        %v617 = vpop.permute.xlu0 %616
        %618 = vrot.lane.b32.xlu0 %v524, 4
        %v619 = vpop.permute.xlu0 %618
        %620 = vrot.lane.b32.xlu0 %v525, 4
        %v621 = vpop.permute.xlu0 %620
        %vm654 = vcmask 64544
        %655 = vst.msk [vmem:[#allocation3] sm:$0xff] %vm654, %v559
        %656 = vst.msk [vmem:[#allocation3 + $0x8] sm:$0xff] %vm654, %v561
        %657 = vst.msk [vmem:[#allocation3 + $0x10] sm:$0xff] %vm654, %v563
        %658 = vst.msk [vmem:[#allocation3 + $0x18] sm:$0xff] %vm654, %v565
        %659 = vst.msk [vmem:[#allocation3 + $0x20] sm:$0xff] %vm654, %v567
        %660 = vst.msk [vmem:[#allocation3 + $0x28] sm:$0xff] %vm654, %v569
        %661 = vst.msk [vmem:[#allocation3 + $0x30] sm:$0xff] %vm654, %v571
        %662 = vst.msk [vmem:[#allocation3 + $0x38] sm:$0xff] %vm654, %v573
        %663 = vst.msk [vmem:[#allocation3 + $0x40] sm:$0xff] %vm654, %v575
        %664 = vst.msk [vmem:[#allocation3 + $0x48] sm:$0xff] %vm654, %v577
        %665 = vst.msk [vmem:[#allocation3 + $0x50] sm:$0xff] %vm654, %v579
        %666 = vst.msk [vmem:[#allocation3 + $0x58] sm:$0xff] %vm654, %v581
        %667 = vst.msk [vmem:[#allocation3 + $0x60] sm:$0xff] %vm654, %v583
        %668 = vst.msk [vmem:[#allocation3 + $0x68] sm:$0xff] %vm654, %v585
        %669 = vst.msk [vmem:[#allocation3 + $0x70] sm:$0xff] %vm654, %v587
        %670 = vst.msk [vmem:[#allocation3 + $0x78] sm:$0xff] %vm654, %v589
        %671 = vst.msk [vmem:[#allocation3 + $0x80] sm:$0xff] %vm654, %v591
        %672 = vst.msk [vmem:[#allocation3 + $0x88] sm:$0xff] %vm654, %v593
        %673 = vst.msk [vmem:[#allocation3 + $0x90] sm:$0xff] %vm654, %v595
        %674 = vst.msk [vmem:[#allocation3 + $0x98] sm:$0xff] %vm654, %v597
        %675 = vst.msk [vmem:[#allocation3 + $0xa0] sm:$0xff] %vm654, %v599
        %676 = vst.msk [vmem:[#allocation3 + $0xa8] sm:$0xff] %vm654, %v601
        %677 = vst.msk [vmem:[#allocation3 + $0xb0] sm:$0xff] %vm654, %v603
        %678 = vst.msk [vmem:[#allocation3 + $0xb8] sm:$0xff] %vm654, %v605
        %679 = vst.msk [vmem:[#allocation3 + $0xc0] sm:$0xff] %vm654, %v607
        %680 = vst.msk [vmem:[#allocation3 + $0xc8] sm:$0xff] %vm654, %v609
        %681 = vst.msk [vmem:[#allocation3 + $0xd0] sm:$0xff] %vm654, %v611
        %682 = vst.msk [vmem:[#allocation3 + $0xd8] sm:$0xff] %vm654, %v613
        %683 = vst.msk [vmem:[#allocation3 + $0xe0] sm:$0xff] %vm654, %v615
        %684 = vst.msk [vmem:[#allocation3 + $0xe8] sm:$0xff] %vm654, %v617
        %685 = vst.msk [vmem:[#allocation3 + $0xf0] sm:$0xff] %vm654, %v619
        %686 = vst.msk [vmem:[#allocation3 + $0xf8] sm:$0xff] %vm654, %v621
        %v687 = vld [vmem:[#allocation2 + $0x2] sm:$0xff]
        %v688 = vld [vmem:[#allocation2 + $0xa] sm:$0xff]
        %v689 = vld [vmem:[#allocation2 + $0x1a] sm:$0xff]
        %v690 = vld [vmem:[#allocation2 + $0x22] sm:$0xff]
        %v691 = vld [vmem:[#allocation2 + $0x32] sm:$0xff]
        %v692 = vld [vmem:[#allocation2 + $0x3a] sm:$0xff]
        %v693 = vld [vmem:[#allocation2 + $0x4a] sm:$0xff]
        %v694 = vld [vmem:[#allocation2 + $0x52] sm:$0xff]
        %v695 = vld [vmem:[#allocation2 + $0x62] sm:$0xff]
        %v696 = vld [vmem:[#allocation2 + $0x6a] sm:$0xff]
        %v697 = vld [vmem:[#allocation2 + $0x7a] sm:$0xff]
        %v698 = vld [vmem:[#allocation2 + $0x82] sm:$0xff]
        %v699 = vld [vmem:[#allocation2 + $0x92] sm:$0xff]
        %v700 = vld [vmem:[#allocation2 + $0x9a] sm:$0xff]
        %v701 = vld [vmem:[#allocation2 + $0xaa] sm:$0xff]
        %v702 = vld [vmem:[#allocation2 + $0xb2] sm:$0xff]
        %v703 = vld [vmem:[#allocation2 + $0xc2] sm:$0xff]
        %v704 = vld [vmem:[#allocation2 + $0xca] sm:$0xff]
        %v705 = vld [vmem:[#allocation2 + $0xda] sm:$0xff]
        %v706 = vld [vmem:[#allocation2 + $0xe2] sm:$0xff]
        %v707 = vld [vmem:[#allocation2 + $0xf2] sm:$0xff]
        %v708 = vld [vmem:[#allocation2 + $0xfa] sm:$0xff]
        %v709 = vld [vmem:[#allocation2 + $0x10a] sm:$0xff]
        %v710 = vld [vmem:[#allocation2 + $0x112] sm:$0xff]
        %v711 = vld [vmem:[#allocation2 + $0x122] sm:$0xff]
        %v712 = vld [vmem:[#allocation2 + $0x12a] sm:$0xff]
        %v713 = vld [vmem:[#allocation2 + $0x13a] sm:$0xff]
        %v714 = vld [vmem:[#allocation2 + $0x142] sm:$0xff]
        %v715 = vld [vmem:[#allocation2 + $0x152] sm:$0xff]
        %v716 = vld [vmem:[#allocation2 + $0x15a] sm:$0xff]
        %v717 = vld [vmem:[#allocation2 + $0x16a] sm:$0xff]
        %v718 = vld [vmem:[#allocation2 + $0x172] sm:$0xff]
        %751 = vrot.lane.b32.xlu0 %v687, 8
        %v752 = vpop.permute.xlu0 %751
        %753 = vrot.lane.b32.xlu0 %v688, 8
        %v754 = vpop.permute.xlu0 %753
        %755 = vrot.lane.b32.xlu0 %v689, 8
        %v756 = vpop.permute.xlu0 %755
        %757 = vrot.lane.b32.xlu0 %v690, 8
        %v758 = vpop.permute.xlu0 %757
        %759 = vrot.lane.b32.xlu0 %v691, 8
        %v760 = vpop.permute.xlu0 %759
        %761 = vrot.lane.b32.xlu0 %v692, 8
        %v762 = vpop.permute.xlu0 %761
        %763 = vrot.lane.b32.xlu0 %v693, 8
        %v764 = vpop.permute.xlu0 %763
        %765 = vrot.lane.b32.xlu0 %v694, 8
        %v766 = vpop.permute.xlu0 %765
        %767 = vrot.lane.b32.xlu0 %v695, 8
        %v768 = vpop.permute.xlu0 %767
        %769 = vrot.lane.b32.xlu0 %v696, 8
        %v770 = vpop.permute.xlu0 %769
        %771 = vrot.lane.b32.xlu0 %v697, 8
        %v772 = vpop.permute.xlu0 %771
        %773 = vrot.lane.b32.xlu0 %v698, 8
        %v774 = vpop.permute.xlu0 %773
        %775 = vrot.lane.b32.xlu0 %v699, 8
        %v776 = vpop.permute.xlu0 %775
        %777 = vrot.lane.b32.xlu0 %v700, 8
        %v778 = vpop.permute.xlu0 %777
        %779 = vrot.lane.b32.xlu0 %v701, 8
        %v780 = vpop.permute.xlu0 %779
        %781 = vrot.lane.b32.xlu0 %v702, 8
        %v782 = vpop.permute.xlu0 %781
        %783 = vrot.lane.b32.xlu0 %v703, 8
        %v784 = vpop.permute.xlu0 %783
        %785 = vrot.lane.b32.xlu0 %v704, 8
        %v786 = vpop.permute.xlu0 %785
        %787 = vrot.lane.b32.xlu0 %v705, 8
        %v788 = vpop.permute.xlu0 %787
        %789 = vrot.lane.b32.xlu0 %v706, 8
        %v790 = vpop.permute.xlu0 %789
        %791 = vrot.lane.b32.xlu0 %v707, 8
        %v792 = vpop.permute.xlu0 %791
        %793 = vrot.lane.b32.xlu0 %v708, 8
        %v794 = vpop.permute.xlu0 %793
        %795 = vrot.lane.b32.xlu0 %v709, 8
        %v796 = vpop.permute.xlu0 %795
        %797 = vrot.lane.b32.xlu0 %v710, 8
        %v798 = vpop.permute.xlu0 %797
        %799 = vrot.lane.b32.xlu0 %v711, 8
        %v800 = vpop.permute.xlu0 %799
        %801 = vrot.lane.b32.xlu0 %v712, 8
        %v802 = vpop.permute.xlu0 %801
        %803 = vrot.lane.b32.xlu0 %v713, 8
        %v804 = vpop.permute.xlu0 %803
        %805 = vrot.lane.b32.xlu0 %v714, 8
        %v806 = vpop.permute.xlu0 %805
        %807 = vrot.lane.b32.xlu0 %v715, 8
        %v808 = vpop.permute.xlu0 %807
        %809 = vrot.lane.b32.xlu0 %v716, 8
        %v810 = vpop.permute.xlu0 %809
        %811 = vrot.lane.b32.xlu0 %v717, 8
        %v812 = vpop.permute.xlu0 %811
        %813 = vrot.lane.b32.xlu0 %v718, 8
        %v814 = vpop.permute.xlu0 %813
        %vm847 = vcmask 97344
        %848 = vst.msk [vmem:[#allocation3] sm:$0xff] %vm847, %v752
        %849 = vst.msk [vmem:[#allocation3 + $0x8] sm:$0xff] %vm847, %v754
        %850 = vst.msk [vmem:[#allocation3 + $0x10] sm:$0xff] %vm847, %v756
        %851 = vst.msk [vmem:[#allocation3 + $0x18] sm:$0xff] %vm847, %v758
        %852 = vst.msk [vmem:[#allocation3 + $0x20] sm:$0xff] %vm847, %v760
        %853 = vst.msk [vmem:[#allocation3 + $0x28] sm:$0xff] %vm847, %v762
        %854 = vst.msk [vmem:[#allocation3 + $0x30] sm:$0xff] %vm847, %v764
        %855 = vst.msk [vmem:[#allocation3 + $0x38] sm:$0xff] %vm847, %v766
        %856 = vst.msk [vmem:[#allocation3 + $0x40] sm:$0xff] %vm847, %v768
        %857 = vst.msk [vmem:[#allocation3 + $0x48] sm:$0xff] %vm847, %v770
        %858 = vst.msk [vmem:[#allocation3 + $0x50] sm:$0xff] %vm847, %v772
        %859 = vst.msk [vmem:[#allocation3 + $0x58] sm:$0xff] %vm847, %v774
        %860 = vst.msk [vmem:[#allocation3 + $0x60] sm:$0xff] %vm847, %v776
        %861 = vst.msk [vmem:[#allocation3 + $0x68] sm:$0xff] %vm847, %v778
        %862 = vst.msk [vmem:[#allocation3 + $0x70] sm:$0xff] %vm847, %v780
        %863 = vst.msk [vmem:[#allocation3 + $0x78] sm:$0xff] %vm847, %v782
        %864 = vst.msk [vmem:[#allocation3 + $0x80] sm:$0xff] %vm847, %v784
        %865 = vst.msk [vmem:[#allocation3 + $0x88] sm:$0xff] %vm847, %v786
        %866 = vst.msk [vmem:[#allocation3 + $0x90] sm:$0xff] %vm847, %v788
        %867 = vst.msk [vmem:[#allocation3 + $0x98] sm:$0xff] %vm847, %v790
        %868 = vst.msk [vmem:[#allocation3 + $0xa0] sm:$0xff] %vm847, %v792
        %869 = vst.msk [vmem:[#allocation3 + $0xa8] sm:$0xff] %vm847, %v794
        %870 = vst.msk [vmem:[#allocation3 + $0xb0] sm:$0xff] %vm847, %v796
        %871 = vst.msk [vmem:[#allocation3 + $0xb8] sm:$0xff] %vm847, %v798
        %872 = vst.msk [vmem:[#allocation3 + $0xc0] sm:$0xff] %vm847, %v800
        %873 = vst.msk [vmem:[#allocation3 + $0xc8] sm:$0xff] %vm847, %v802
        %874 = vst.msk [vmem:[#allocation3 + $0xd0] sm:$0xff] %vm847, %v804
        %875 = vst.msk [vmem:[#allocation3 + $0xd8] sm:$0xff] %vm847, %v806
        %876 = vst.msk [vmem:[#allocation3 + $0xe0] sm:$0xff] %vm847, %v808
        %877 = vst.msk [vmem:[#allocation3 + $0xe8] sm:$0xff] %vm847, %v810
        %878 = vst.msk [vmem:[#allocation3 + $0xf0] sm:$0xff] %vm847, %v812
        %879 = vst.msk [vmem:[#allocation3 + $0xf8] sm:$0xff] %vm847, %v814
        %v880 = vld [vmem:[%s397] sm:$0xff]
        %v881 = vld [vmem:[%s397 + $0x8] sm:$0xff]
        %v882 = vld [vmem:[%s397 + $0x18] sm:$0xff]
        %v883 = vld [vmem:[%s397 + $0x20] sm:$0xff]
        %v884 = vld [vmem:[%s397 + $0x30] sm:$0xff]
        %v885 = vld [vmem:[%s397 + $0x38] sm:$0xff]
        %v886 = vld [vmem:[%s397 + $0x48] sm:$0xff]
        %v887 = vld [vmem:[%s397 + $0x50] sm:$0xff]
        %v888 = vld [vmem:[%s397 + $0x60] sm:$0xff]
        %v889 = vld [vmem:[%s397 + $0x68] sm:$0xff]
        %v890 = vld [vmem:[%s397 + $0x78] sm:$0xff]
        %v891 = vld [vmem:[%s397 + $0x80] sm:$0xff]
        %v892 = vld [vmem:[%s397 + $0x90] sm:$0xff]
        %v893 = vld [vmem:[%s397 + $0x98] sm:$0xff]
        %v894 = vld [vmem:[%s397 + $0xa8] sm:$0xff]
        %v895 = vld [vmem:[%s397 + $0xb0] sm:$0xff]
        %v896 = vld [vmem:[%s397 + $0xc0] sm:$0xff]
        %v897 = vld [vmem:[%s397 + $0xc8] sm:$0xff]
        %v898 = vld [vmem:[%s397 + $0xd8] sm:$0xff]
        %v899 = vld [vmem:[%s397 + $0xe0] sm:$0xff]
        %v900 = vld [vmem:[%s397 + $0xf0] sm:$0xff]
        %v901 = vld [vmem:[%s397 + $0xf8] sm:$0xff]
        %v902 = vld [vmem:[%s397 + $0x108] sm:$0xff]
        %v903 = vld [vmem:[%s397 + $0x110] sm:$0xff]
        %v904 = vld [vmem:[%s397 + $0x120] sm:$0xff]
        %v905 = vld [vmem:[%s397 + $0x128] sm:$0xff]
        %v906 = vld [vmem:[%s397 + $0x138] sm:$0xff]
        %v907 = vld [vmem:[%s397 + $0x140] sm:$0xff]
        %v908 = vld [vmem:[%s397 + $0x150] sm:$0xff]
        %v909 = vld [vmem:[%s397 + $0x158] sm:$0xff]
        %v910 = vld [vmem:[%s397 + $0x168] sm:$0xff]
        %v911 = vld [vmem:[%s397 + $0x170] sm:$0xff]
        %944 = vrot.lane.b32.xlu0 %v880, 12
        %v945 = vpop.permute.xlu0 %944
        %946 = vrot.lane.b32.xlu0 %v881, 12
        %v947 = vpop.permute.xlu0 %946
        %948 = vrot.lane.b32.xlu0 %v882, 12
        %v949 = vpop.permute.xlu0 %948
        %950 = vrot.lane.b32.xlu0 %v883, 12
        %v951 = vpop.permute.xlu0 %950
        %952 = vrot.lane.b32.xlu0 %v884, 12
        %v953 = vpop.permute.xlu0 %952
        %954 = vrot.lane.b32.xlu0 %v885, 12
        %v955 = vpop.permute.xlu0 %954
        %956 = vrot.lane.b32.xlu0 %v886, 12
        %v957 = vpop.permute.xlu0 %956
        %958 = vrot.lane.b32.xlu0 %v887, 12
        %v959 = vpop.permute.xlu0 %958
        %960 = vrot.lane.b32.xlu0 %v888, 12
        %v961 = vpop.permute.xlu0 %960
        %962 = vrot.lane.b32.xlu0 %v889, 12
        %v963 = vpop.permute.xlu0 %962
        %964 = vrot.lane.b32.xlu0 %v890, 12
        %v965 = vpop.permute.xlu0 %964
        %966 = vrot.lane.b32.xlu0 %v891, 12
        %v967 = vpop.permute.xlu0 %966
        %968 = vrot.lane.b32.xlu0 %v892, 12
        %v969 = vpop.permute.xlu0 %968
        %970 = vrot.lane.b32.xlu0 %v893, 12
        %v971 = vpop.permute.xlu0 %970
        %972 = vrot.lane.b32.xlu0 %v894, 12
        %v973 = vpop.permute.xlu0 %972
        %974 = vrot.lane.b32.xlu0 %v895, 12
        %v975 = vpop.permute.xlu0 %974
        %976 = vrot.lane.b32.xlu0 %v896, 12
        %v977 = vpop.permute.xlu0 %976
        %978 = vrot.lane.b32.xlu0 %v897, 12
        %v979 = vpop.permute.xlu0 %978
        %980 = vrot.lane.b32.xlu0 %v898, 12
        %v981 = vpop.permute.xlu0 %980
        %982 = vrot.lane.b32.xlu0 %v899, 12
        %v983 = vpop.permute.xlu0 %982
        %984 = vrot.lane.b32.xlu0 %v900, 12
        %v985 = vpop.permute.xlu0 %984
        %986 = vrot.lane.b32.xlu0 %v901, 12
        %v987 = vpop.permute.xlu0 %986
        %988 = vrot.lane.b32.xlu0 %v902, 12
        %v989 = vpop.permute.xlu0 %988
        %990 = vrot.lane.b32.xlu0 %v903, 12
        %v991 = vpop.permute.xlu0 %990
        %992 = vrot.lane.b32.xlu0 %v904, 12
        %v993 = vpop.permute.xlu0 %992
        %994 = vrot.lane.b32.xlu0 %v905, 12
        %v995 = vpop.permute.xlu0 %994
        %996 = vrot.lane.b32.xlu0 %v906, 12
        %v997 = vpop.permute.xlu0 %996
        %998 = vrot.lane.b32.xlu0 %v907, 12
        %v999 = vpop.permute.xlu0 %998
        %1000 = vrot.lane.b32.xlu0 %v908, 12
        %v1001 = vpop.permute.xlu0 %1000
        %1002 = vrot.lane.b32.xlu0 %v909, 12
        %v1003 = vpop.permute.xlu0 %1002
        %1004 = vrot.lane.b32.xlu0 %v910, 12
        %v1005 = vpop.permute.xlu0 %1004
        %1006 = vrot.lane.b32.xlu0 %v911, 12
        %v1007 = vpop.permute.xlu0 %1006
        %vm1040 = vcmask 130144
        %1041 = vst.msk [vmem:[#allocation3] sm:$0xff] %vm1040, %v945
        %1042 = vst.msk [vmem:[#allocation3 + $0x8] sm:$0xff] %vm1040, %v947
        %1043 = vst.msk [vmem:[#allocation3 + $0x10] sm:$0xff] %vm1040, %v949
        %1044 = vst.msk [vmem:[#allocation3 + $0x18] sm:$0xff] %vm1040, %v951
        %1045 = vst.msk [vmem:[#allocation3 + $0x20] sm:$0xff] %vm1040, %v953
        %1046 = vst.msk [vmem:[#allocation3 + $0x28] sm:$0xff] %vm1040, %v955
        %1047 = vst.msk [vmem:[#allocation3 + $0x30] sm:$0xff] %vm1040, %v957
        %1048 = vst.msk [vmem:[#allocation3 + $0x38] sm:$0xff] %vm1040, %v959
        %1049 = vst.msk [vmem:[#allocation3 + $0x40] sm:$0xff] %vm1040, %v961
        %1050 = vst.msk [vmem:[#allocation3 + $0x48] sm:$0xff] %vm1040, %v963
        %1051 = vst.msk [vmem:[#allocation3 + $0x50] sm:$0xff] %vm1040, %v965
        %1052 = vst.msk [vmem:[#allocation3 + $0x58] sm:$0xff] %vm1040, %v967
        %1053 = vst.msk [vmem:[#allocation3 + $0x60] sm:$0xff] %vm1040, %v969
        %1054 = vst.msk [vmem:[#allocation3 + $0x68] sm:$0xff] %vm1040, %v971
        %1055 = vst.msk [vmem:[#allocation3 + $0x70] sm:$0xff] %vm1040, %v973
        %1056 = vst.msk [vmem:[#allocation3 + $0x78] sm:$0xff] %vm1040, %v975
        %1057 = vst.msk [vmem:[#allocation3 + $0x80] sm:$0xff] %vm1040, %v977
        %1058 = vst.msk [vmem:[#allocation3 + $0x88] sm:$0xff] %vm1040, %v979
        %1059 = vst.msk [vmem:[#allocation3 + $0x90] sm:$0xff] %vm1040, %v981
        %1060 = vst.msk [vmem:[#allocation3 + $0x98] sm:$0xff] %vm1040, %v983
        %1061 = vst.msk [vmem:[#allocation3 + $0xa0] sm:$0xff] %vm1040, %v985
        %1062 = vst.msk [vmem:[#allocation3 + $0xa8] sm:$0xff] %vm1040, %v987
        %1063 = vst.msk [vmem:[#allocation3 + $0xb0] sm:$0xff] %vm1040, %v989
        %1064 = vst.msk [vmem:[#allocation3 + $0xb8] sm:$0xff] %vm1040, %v991
        %1065 = vst.msk [vmem:[#allocation3 + $0xc0] sm:$0xff] %vm1040, %v993
        %1066 = vst.msk [vmem:[#allocation3 + $0xc8] sm:$0xff] %vm1040, %v995
        %1067 = vst.msk [vmem:[#allocation3 + $0xd0] sm:$0xff] %vm1040, %v997
        %1068 = vst.msk [vmem:[#allocation3 + $0xd8] sm:$0xff] %vm1040, %v999
        %1069 = vst.msk [vmem:[#allocation3 + $0xe0] sm:$0xff] %vm1040, %v1001
        %1070 = vst.msk [vmem:[#allocation3 + $0xe8] sm:$0xff] %vm1040, %v1003
        %1071 = vst.msk [vmem:[#allocation3 + $0xf0] sm:$0xff] %vm1040, %v1005
        %1072 = vst.msk [vmem:[#allocation3 + $0xf8] sm:$0xff] %vm1040, %v1007
        %v1073 = vld [vmem:[%s397 + $0x1] sm:$0xff]
        %v1074 = vld [vmem:[%s397 + $0x9] sm:$0xff]
        %v1075 = vld [vmem:[%s397 + $0x19] sm:$0xff]
        %v1076 = vld [vmem:[%s397 + $0x21] sm:$0xff]
        %v1077 = vld [vmem:[%s397 + $0x31] sm:$0xff]
        %v1078 = vld [vmem:[%s397 + $0x39] sm:$0xff]
        %v1079 = vld [vmem:[%s397 + $0x49] sm:$0xff]
        %v1080 = vld [vmem:[%s397 + $0x51] sm:$0xff]
        %v1081 = vld [vmem:[%s397 + $0x61] sm:$0xff]
        %v1082 = vld [vmem:[%s397 + $0x69] sm:$0xff]
        %v1083 = vld [vmem:[%s397 + $0x79] sm:$0xff]
        %v1084 = vld [vmem:[%s397 + $0x81] sm:$0xff]
        %v1085 = vld [vmem:[%s397 + $0x91] sm:$0xff]
        %v1086 = vld [vmem:[%s397 + $0x99] sm:$0xff]
        %v1087 = vld [vmem:[%s397 + $0xa9] sm:$0xff]
        %v1088 = vld [vmem:[%s397 + $0xb1] sm:$0xff]
        %v1089 = vld [vmem:[%s397 + $0xc1] sm:$0xff]
        %v1090 = vld [vmem:[%s397 + $0xc9] sm:$0xff]
        %v1091 = vld [vmem:[%s397 + $0xd9] sm:$0xff]
        %v1092 = vld [vmem:[%s397 + $0xe1] sm:$0xff]
        %v1093 = vld [vmem:[%s397 + $0xf1] sm:$0xff]
        %v1094 = vld [vmem:[%s397 + $0xf9] sm:$0xff]
        %v1095 = vld [vmem:[%s397 + $0x109] sm:$0xff]
        %v1096 = vld [vmem:[%s397 + $0x111] sm:$0xff]
        %v1097 = vld [vmem:[%s397 + $0x121] sm:$0xff]
        %v1098 = vld [vmem:[%s397 + $0x129] sm:$0xff]
        %v1099 = vld [vmem:[%s397 + $0x139] sm:$0xff]
        %v1100 = vld [vmem:[%s397 + $0x141] sm:$0xff]
        %v1101 = vld [vmem:[%s397 + $0x151] sm:$0xff]
        %v1102 = vld [vmem:[%s397 + $0x159] sm:$0xff]
        %v1103 = vld [vmem:[%s397 + $0x169] sm:$0xff]
        %v1104 = vld [vmem:[%s397 + $0x171] sm:$0xff]
        %1137 = vrot.lane.b32.xlu0 %v1073, 16
        %v1138 = vpop.permute.xlu0 %1137
        %1139 = vrot.lane.b32.xlu0 %v1074, 16
        %v1140 = vpop.permute.xlu0 %1139
        %1141 = vrot.lane.b32.xlu0 %v1075, 16
        %v1142 = vpop.permute.xlu0 %1141
        %1143 = vrot.lane.b32.xlu0 %v1076, 16
        %v1144 = vpop.permute.xlu0 %1143
        %1145 = vrot.lane.b32.xlu0 %v1077, 16
        %v1146 = vpop.permute.xlu0 %1145
        %1147 = vrot.lane.b32.xlu0 %v1078, 16
        %v1148 = vpop.permute.xlu0 %1147
        %1149 = vrot.lane.b32.xlu0 %v1079, 16
        %v1150 = vpop.permute.xlu0 %1149
        %1151 = vrot.lane.b32.xlu0 %v1080, 16
        %v1152 = vpop.permute.xlu0 %1151
        %1153 = vrot.lane.b32.xlu0 %v1081, 16
        %v1154 = vpop.permute.xlu0 %1153
        %1155 = vrot.lane.b32.xlu0 %v1082, 16
        %v1156 = vpop.permute.xlu0 %1155
        %1157 = vrot.lane.b32.xlu0 %v1083, 16
        %v1158 = vpop.permute.xlu0 %1157
        %1159 = vrot.lane.b32.xlu0 %v1084, 16
        %v1160 = vpop.permute.xlu0 %1159
        %1161 = vrot.lane.b32.xlu0 %v1085, 16
        %v1162 = vpop.permute.xlu0 %1161
        %1163 = vrot.lane.b32.xlu0 %v1086, 16
        %v1164 = vpop.permute.xlu0 %1163
        %1165 = vrot.lane.b32.xlu0 %v1087, 16
        %v1166 = vpop.permute.xlu0 %1165
        %1167 = vrot.lane.b32.xlu0 %v1088, 16
        %v1168 = vpop.permute.xlu0 %1167
        %1169 = vrot.lane.b32.xlu0 %v1089, 16
        %v1170 = vpop.permute.xlu0 %1169
        %1171 = vrot.lane.b32.xlu0 %v1090, 16
        %v1172 = vpop.permute.xlu0 %1171
        %1173 = vrot.lane.b32.xlu0 %v1091, 16
        %v1174 = vpop.permute.xlu0 %1173
        %1175 = vrot.lane.b32.xlu0 %v1092, 16
        %v1176 = vpop.permute.xlu0 %1175
        %1177 = vrot.lane.b32.xlu0 %v1093, 16
        %v1178 = vpop.permute.xlu0 %1177
        %1179 = vrot.lane.b32.xlu0 %v1094, 16
        %v1180 = vpop.permute.xlu0 %1179
        %1181 = vrot.lane.b32.xlu0 %v1095, 16
        %v1182 = vpop.permute.xlu0 %1181
        %1183 = vrot.lane.b32.xlu0 %v1096, 16
        %v1184 = vpop.permute.xlu0 %1183
        %1185 = vrot.lane.b32.xlu0 %v1097, 16
        %v1186 = vpop.permute.xlu0 %1185
        %1187 = vrot.lane.b32.xlu0 %v1098, 16
        %v1188 = vpop.permute.xlu0 %1187
        %1189 = vrot.lane.b32.xlu0 %v1099, 16
        %v1190 = vpop.permute.xlu0 %1189
        %1191 = vrot.lane.b32.xlu0 %v1100, 16
        %v1192 = vpop.permute.xlu0 %1191
        %1193 = vrot.lane.b32.xlu0 %v1101, 16
        %v1194 = vpop.permute.xlu0 %1193
        %1195 = vrot.lane.b32.xlu0 %v1102, 16
        %v1196 = vpop.permute.xlu0 %1195
        %1197 = vrot.lane.b32.xlu0 %v1103, 16
        %v1198 = vpop.permute.xlu0 %1197
        %1199 = vrot.lane.b32.xlu0 %v1104, 16
        %v1200 = vpop.permute.xlu0 %1199
        %vm1233 = vcmask 162944
        %1234 = vst.msk [vmem:[#allocation3] sm:$0xff] %vm1233, %v1138
        %1235 = vst.msk [vmem:[#allocation3 + $0x8] sm:$0xff] %vm1233, %v1140
        %1236 = vst.msk [vmem:[#allocation3 + $0x10] sm:$0xff] %vm1233, %v1142
        %1237 = vst.msk [vmem:[#allocation3 + $0x18] sm:$0xff] %vm1233, %v1144
        %1238 = vst.msk [vmem:[#allocation3 + $0x20] sm:$0xff] %vm1233, %v1146
        %1239 = vst.msk [vmem:[#allocation3 + $0x28] sm:$0xff] %vm1233, %v1148
        %1240 = vst.msk [vmem:[#allocation3 + $0x30] sm:$0xff] %vm1233, %v1150
        %1241 = vst.msk [vmem:[#allocation3 + $0x38] sm:$0xff] %vm1233, %v1152
        %1242 = vst.msk [vmem:[#allocation3 + $0x40] sm:$0xff] %vm1233, %v1154
        %1243 = vst.msk [vmem:[#allocation3 + $0x48] sm:$0xff] %vm1233, %v1156
        %1244 = vst.msk [vmem:[#allocation3 + $0x50] sm:$0xff] %vm1233, %v1158
        %1245 = vst.msk [vmem:[#allocation3 + $0x58] sm:$0xff] %vm1233, %v1160
        %1246 = vst.msk [vmem:[#allocation3 + $0x60] sm:$0xff] %vm1233, %v1162
        %1247 = vst.msk [vmem:[#allocation3 + $0x68] sm:$0xff] %vm1233, %v1164
        %1248 = vst.msk [vmem:[#allocation3 + $0x70] sm:$0xff] %vm1233, %v1166
        %1249 = vst.msk [vmem:[#allocation3 + $0x78] sm:$0xff] %vm1233, %v1168
        %1250 = vst.msk [vmem:[#allocation3 + $0x80] sm:$0xff] %vm1233, %v1170
        %1251 = vst.msk [vmem:[#allocation3 + $0x88] sm:$0xff] %vm1233, %v1172
        %1252 = vst.msk [vmem:[#allocation3 + $0x90] sm:$0xff] %vm1233, %v1174
        %1253 = vst.msk [vmem:[#allocation3 + $0x98] sm:$0xff] %vm1233, %v1176
        %1254 = vst.msk [vmem:[#allocation3 + $0xa0] sm:$0xff] %vm1233, %v1178
        %1255 = vst.msk [vmem:[#allocation3 + $0xa8] sm:$0xff] %vm1233, %v1180
        %1256 = vst.msk [vmem:[#allocation3 + $0xb0] sm:$0xff] %vm1233, %v1182
        %1257 = vst.msk [vmem:[#allocation3 + $0xb8] sm:$0xff] %vm1233, %v1184
        %1258 = vst.msk [vmem:[#allocation3 + $0xc0] sm:$0xff] %vm1233, %v1186
        %1259 = vst.msk [vmem:[#allocation3 + $0xc8] sm:$0xff] %vm1233, %v1188
        %1260 = vst.msk [vmem:[#allocation3 + $0xd0] sm:$0xff] %vm1233, %v1190
        %1261 = vst.msk [vmem:[#allocation3 + $0xd8] sm:$0xff] %vm1233, %v1192
        %1262 = vst.msk [vmem:[#allocation3 + $0xe0] sm:$0xff] %vm1233, %v1194
        %1263 = vst.msk [vmem:[#allocation3 + $0xe8] sm:$0xff] %vm1233, %v1196
        %1264 = vst.msk [vmem:[#allocation3 + $0xf0] sm:$0xff] %vm1233, %v1198
        %1265 = vst.msk [vmem:[#allocation3 + $0xf8] sm:$0xff] %vm1233, %v1200
        %v1266 = vld [vmem:[%s397 + $0x2] sm:$0xff]
        %v1267 = vld [vmem:[%s397 + $0xa] sm:$0xff]
        %v1268 = vld [vmem:[%s397 + $0x1a] sm:$0xff]
        %v1269 = vld [vmem:[%s397 + $0x22] sm:$0xff]
        %v1270 = vld [vmem:[%s397 + $0x32] sm:$0xff]
        %v1271 = vld [vmem:[%s397 + $0x3a] sm:$0xff]
        %v1272 = vld [vmem:[%s397 + $0x4a] sm:$0xff]
        %v1273 = vld [vmem:[%s397 + $0x52] sm:$0xff]
        %v1274 = vld [vmem:[%s397 + $0x62] sm:$0xff]
        %v1275 = vld [vmem:[%s397 + $0x6a] sm:$0xff]
        %v1276 = vld [vmem:[%s397 + $0x7a] sm:$0xff]
        %v1277 = vld [vmem:[%s397 + $0x82] sm:$0xff]
        %v1278 = vld [vmem:[%s397 + $0x92] sm:$0xff]
        %v1279 = vld [vmem:[%s397 + $0x9a] sm:$0xff]
        %v1280 = vld [vmem:[%s397 + $0xaa] sm:$0xff]
        %v1281 = vld [vmem:[%s397 + $0xb2] sm:$0xff]
        %v1282 = vld [vmem:[%s397 + $0xc2] sm:$0xff]
        %v1283 = vld [vmem:[%s397 + $0xca] sm:$0xff]
        %v1284 = vld [vmem:[%s397 + $0xda] sm:$0xff]
        %v1285 = vld [vmem:[%s397 + $0xe2] sm:$0xff]
        %v1286 = vld [vmem:[%s397 + $0xf2] sm:$0xff]
        %v1287 = vld [vmem:[%s397 + $0xfa] sm:$0xff]
        %v1288 = vld [vmem:[%s397 + $0x10a] sm:$0xff]
        %v1289 = vld [vmem:[%s397 + $0x112] sm:$0xff]
        %v1290 = vld [vmem:[%s397 + $0x122] sm:$0xff]
        %v1291 = vld [vmem:[%s397 + $0x12a] sm:$0xff]
        %v1292 = vld [vmem:[%s397 + $0x13a] sm:$0xff]
        %v1293 = vld [vmem:[%s397 + $0x142] sm:$0xff]
        %v1294 = vld [vmem:[%s397 + $0x152] sm:$0xff]
        %v1295 = vld [vmem:[%s397 + $0x15a] sm:$0xff]
        %v1296 = vld [vmem:[%s397 + $0x16a] sm:$0xff]
        %v1297 = vld [vmem:[%s397 + $0x172] sm:$0xff]
        %1330 = vrot.lane.b32.xlu0 %v1266, 20
        %v1331 = vpop.permute.xlu0 %1330
        %1332 = vrot.lane.b32.xlu0 %v1267, 20
        %v1333 = vpop.permute.xlu0 %1332
        %1334 = vrot.lane.b32.xlu0 %v1268, 20
        %v1335 = vpop.permute.xlu0 %1334
        %1336 = vrot.lane.b32.xlu0 %v1269, 20
        %v1337 = vpop.permute.xlu0 %1336
        %1338 = vrot.lane.b32.xlu0 %v1270, 20
        %v1339 = vpop.permute.xlu0 %1338
        %1340 = vrot.lane.b32.xlu0 %v1271, 20
        %v1341 = vpop.permute.xlu0 %1340
        %1342 = vrot.lane.b32.xlu0 %v1272, 20
        %v1343 = vpop.permute.xlu0 %1342
        %1344 = vrot.lane.b32.xlu0 %v1273, 20
        %v1345 = vpop.permute.xlu0 %1344
        %1346 = vrot.lane.b32.xlu0 %v1274, 20
        %v1347 = vpop.permute.xlu0 %1346
        %1348 = vrot.lane.b32.xlu0 %v1275, 20
        %v1349 = vpop.permute.xlu0 %1348
        %1350 = vrot.lane.b32.xlu0 %v1276, 20
        %v1351 = vpop.permute.xlu0 %1350
        %1352 = vrot.lane.b32.xlu0 %v1277, 20
        %v1353 = vpop.permute.xlu0 %1352
        %1354 = vrot.lane.b32.xlu0 %v1278, 20
        %v1355 = vpop.permute.xlu0 %1354
        %1356 = vrot.lane.b32.xlu0 %v1279, 20
        %v1357 = vpop.permute.xlu0 %1356
        %1358 = vrot.lane.b32.xlu0 %v1280, 20
        %v1359 = vpop.permute.xlu0 %1358
        %1360 = vrot.lane.b32.xlu0 %v1281, 20
        %v1361 = vpop.permute.xlu0 %1360
        %1362 = vrot.lane.b32.xlu0 %v1282, 20
        %v1363 = vpop.permute.xlu0 %1362
        %1364 = vrot.lane.b32.xlu0 %v1283, 20
        %v1365 = vpop.permute.xlu0 %1364
        %1366 = vrot.lane.b32.xlu0 %v1284, 20
        %v1367 = vpop.permute.xlu0 %1366
        %1368 = vrot.lane.b32.xlu0 %v1285, 20
        %v1369 = vpop.permute.xlu0 %1368
        %1370 = vrot.lane.b32.xlu0 %v1286, 20
        %v1371 = vpop.permute.xlu0 %1370
        %1372 = vrot.lane.b32.xlu0 %v1287, 20
        %v1373 = vpop.permute.xlu0 %1372
        %1374 = vrot.lane.b32.xlu0 %v1288, 20
        %v1375 = vpop.permute.xlu0 %1374
        %1376 = vrot.lane.b32.xlu0 %v1289, 20
        %v1377 = vpop.permute.xlu0 %1376
        %1378 = vrot.lane.b32.xlu0 %v1290, 20
        %v1379 = vpop.permute.xlu0 %1378
        %1380 = vrot.lane.b32.xlu0 %v1291, 20
        %v1381 = vpop.permute.xlu0 %1380
        %1382 = vrot.lane.b32.xlu0 %v1292, 20
        %v1383 = vpop.permute.xlu0 %1382
        %1384 = vrot.lane.b32.xlu0 %v1293, 20
        %v1385 = vpop.permute.xlu0 %1384
        %1386 = vrot.lane.b32.xlu0 %v1294, 20
        %v1387 = vpop.permute.xlu0 %1386
        %1388 = vrot.lane.b32.xlu0 %v1295, 20
        %v1389 = vpop.permute.xlu0 %1388
        %1390 = vrot.lane.b32.xlu0 %v1296, 20
        %v1391 = vpop.permute.xlu0 %1390
        %1392 = vrot.lane.b32.xlu0 %v1297, 20
        %v1393 = vpop.permute.xlu0 %1392
        %vm1426 = vcmask 195744
        %1427 = vst.msk [vmem:[#allocation3] sm:$0xff] %vm1426, %v1331
        %1428 = vst.msk [vmem:[#allocation3 + $0x8] sm:$0xff] %vm1426, %v1333
        %1429 = vst.msk [vmem:[#allocation3 + $0x10] sm:$0xff] %vm1426, %v1335
        %1430 = vst.msk [vmem:[#allocation3 + $0x18] sm:$0xff] %vm1426, %v1337
        %1431 = vst.msk [vmem:[#allocation3 + $0x20] sm:$0xff] %vm1426, %v1339
        %1432 = vst.msk [vmem:[#allocation3 + $0x28] sm:$0xff] %vm1426, %v1341
        %1433 = vst.msk [vmem:[#allocation3 + $0x30] sm:$0xff] %vm1426, %v1343
        %1434 = vst.msk [vmem:[#allocation3 + $0x38] sm:$0xff] %vm1426, %v1345
        %1435 = vst.msk [vmem:[#allocation3 + $0x40] sm:$0xff] %vm1426, %v1347
        %1436 = vst.msk [vmem:[#allocation3 + $0x48] sm:$0xff] %vm1426, %v1349
        %1437 = vst.msk [vmem:[#allocation3 + $0x50] sm:$0xff] %vm1426, %v1351
        %1438 = vst.msk [vmem:[#allocation3 + $0x58] sm:$0xff] %vm1426, %v1353
        %1439 = vst.msk [vmem:[#allocation3 + $0x60] sm:$0xff] %vm1426, %v1355
        %1440 = vst.msk [vmem:[#allocation3 + $0x68] sm:$0xff] %vm1426, %v1357
        %1441 = vst.msk [vmem:[#allocation3 + $0x70] sm:$0xff] %vm1426, %v1359
        %1442 = vst.msk [vmem:[#allocation3 + $0x78] sm:$0xff] %vm1426, %v1361
        %1443 = vst.msk [vmem:[#allocation3 + $0x80] sm:$0xff] %vm1426, %v1363
        %1444 = vst.msk [vmem:[#allocation3 + $0x88] sm:$0xff] %vm1426, %v1365
        %1445 = vst.msk [vmem:[#allocation3 + $0x90] sm:$0xff] %vm1426, %v1367
        %1446 = vst.msk [vmem:[#allocation3 + $0x98] sm:$0xff] %vm1426, %v1369
        %1447 = vst.msk [vmem:[#allocation3 + $0xa0] sm:$0xff] %vm1426, %v1371
        %1448 = vst.msk [vmem:[#allocation3 + $0xa8] sm:$0xff] %vm1426, %v1373
        %1449 = vst.msk [vmem:[#allocation3 + $0xb0] sm:$0xff] %vm1426, %v1375
        %1450 = vst.msk [vmem:[#allocation3 + $0xb8] sm:$0xff] %vm1426, %v1377
        %1451 = vst.msk [vmem:[#allocation3 + $0xc0] sm:$0xff] %vm1426, %v1379
        %1452 = vst.msk [vmem:[#allocation3 + $0xc8] sm:$0xff] %vm1426, %v1381
        %1453 = vst.msk [vmem:[#allocation3 + $0xd0] sm:$0xff] %vm1426, %v1383
        %1454 = vst.msk [vmem:[#allocation3 + $0xd8] sm:$0xff] %vm1426, %v1385
        %1455 = vst.msk [vmem:[#allocation3 + $0xe0] sm:$0xff] %vm1426, %v1387
        %1456 = vst.msk [vmem:[#allocation3 + $0xe8] sm:$0xff] %vm1426, %v1389
        %1457 = vst.msk [vmem:[#allocation3 + $0xf0] sm:$0xff] %vm1426, %v1391
        %1458 = vst.msk [vmem:[#allocation3 + $0xf8] sm:$0xff] %vm1426, %v1393
        %s1459 = scalar_lea.vmem [#allocation2], 48
        %v1460 = vld [vmem:[%s1459] sm:$0xff]
        %v1461 = vld [vmem:[%s1459 + $0x8] sm:$0xff]
        %v1462 = vld [vmem:[%s1459 + $0x18] sm:$0xff]
        %v1463 = vld [vmem:[%s1459 + $0x20] sm:$0xff]
        %v1464 = vld [vmem:[%s1459 + $0x30] sm:$0xff]
        %v1465 = vld [vmem:[%s1459 + $0x38] sm:$0xff]
        %v1466 = vld [vmem:[%s1459 + $0x48] sm:$0xff]
        %v1467 = vld [vmem:[%s1459 + $0x50] sm:$0xff]
        %v1468 = vld [vmem:[%s1459 + $0x60] sm:$0xff]
        %v1469 = vld [vmem:[%s1459 + $0x68] sm:$0xff]
        %v1470 = vld [vmem:[%s1459 + $0x78] sm:$0xff]
        %v1471 = vld [vmem:[%s1459 + $0x80] sm:$0xff]
        %v1472 = vld [vmem:[%s1459 + $0x90] sm:$0xff]
        %v1473 = vld [vmem:[%s1459 + $0x98] sm:$0xff]
        %v1474 = vld [vmem:[%s1459 + $0xa8] sm:$0xff]
        %v1475 = vld [vmem:[%s1459 + $0xb0] sm:$0xff]
        %v1476 = vld [vmem:[%s1459 + $0xc0] sm:$0xff]
        %v1477 = vld [vmem:[%s1459 + $0xc8] sm:$0xff]
        %v1478 = vld [vmem:[%s1459 + $0xd8] sm:$0xff]
        %v1479 = vld [vmem:[%s1459 + $0xe0] sm:$0xff]
        %v1480 = vld [vmem:[%s1459 + $0xf0] sm:$0xff]
        %v1481 = vld [vmem:[%s1459 + $0xf8] sm:$0xff]
        %v1482 = vld [vmem:[%s1459 + $0x108] sm:$0xff]
        %v1483 = vld [vmem:[%s1459 + $0x110] sm:$0xff]
        %v1484 = vld [vmem:[%s1459 + $0x120] sm:$0xff]
        %v1485 = vld [vmem:[%s1459 + $0x128] sm:$0xff]
        %v1486 = vld [vmem:[%s1459 + $0x138] sm:$0xff]
        %v1487 = vld [vmem:[%s1459 + $0x140] sm:$0xff]
        %v1488 = vld [vmem:[%s1459 + $0x150] sm:$0xff]
        %v1489 = vld [vmem:[%s1459 + $0x158] sm:$0xff]
        %v1490 = vld [vmem:[%s1459 + $0x168] sm:$0xff]
        %v1491 = vld [vmem:[%s1459 + $0x170] sm:$0xff]
        %1524 = vrot.lane.b32.xlu0 %v1460, 24
        %v1525 = vpop.permute.xlu0 %1524
        %1526 = vrot.lane.b32.xlu0 %v1461, 24
        %v1527 = vpop.permute.xlu0 %1526
        %1528 = vrot.lane.b32.xlu0 %v1462, 24
        %v1529 = vpop.permute.xlu0 %1528
        %1530 = vrot.lane.b32.xlu0 %v1463, 24
        %v1531 = vpop.permute.xlu0 %1530
        %1532 = vrot.lane.b32.xlu0 %v1464, 24
        %v1533 = vpop.permute.xlu0 %1532
        %1534 = vrot.lane.b32.xlu0 %v1465, 24
        %v1535 = vpop.permute.xlu0 %1534
        %1536 = vrot.lane.b32.xlu0 %v1466, 24
        %v1537 = vpop.permute.xlu0 %1536
        %1538 = vrot.lane.b32.xlu0 %v1467, 24
        %v1539 = vpop.permute.xlu0 %1538
        %1540 = vrot.lane.b32.xlu0 %v1468, 24
        %v1541 = vpop.permute.xlu0 %1540
        %1542 = vrot.lane.b32.xlu0 %v1469, 24
        %v1543 = vpop.permute.xlu0 %1542
        %1544 = vrot.lane.b32.xlu0 %v1470, 24
        %v1545 = vpop.permute.xlu0 %1544
        %1546 = vrot.lane.b32.xlu0 %v1471, 24
        %v1547 = vpop.permute.xlu0 %1546
        %1548 = vrot.lane.b32.xlu0 %v1472, 24
        %v1549 = vpop.permute.xlu0 %1548
        %1550 = vrot.lane.b32.xlu0 %v1473, 24
        %v1551 = vpop.permute.xlu0 %1550
        %1552 = vrot.lane.b32.xlu0 %v1474, 24
        %v1553 = vpop.permute.xlu0 %1552
        %1554 = vrot.lane.b32.xlu0 %v1475, 24
        %v1555 = vpop.permute.xlu0 %1554
        %1556 = vrot.lane.b32.xlu0 %v1476, 24
        %v1557 = vpop.permute.xlu0 %1556
        %1558 = vrot.lane.b32.xlu0 %v1477, 24
        %v1559 = vpop.permute.xlu0 %1558
        %1560 = vrot.lane.b32.xlu0 %v1478, 24
        %v1561 = vpop.permute.xlu0 %1560
        %1562 = vrot.lane.b32.xlu0 %v1479, 24
        %v1563 = vpop.permute.xlu0 %1562
        %1564 = vrot.lane.b32.xlu0 %v1480, 24
        %v1565 = vpop.permute.xlu0 %1564
        %1566 = vrot.lane.b32.xlu0 %v1481, 24
        %v1567 = vpop.permute.xlu0 %1566
        %1568 = vrot.lane.b32.xlu0 %v1482, 24
        %v1569 = vpop.permute.xlu0 %1568
        %1570 = vrot.lane.b32.xlu0 %v1483, 24
        %v1571 = vpop.permute.xlu0 %1570
        %1572 = vrot.lane.b32.xlu0 %v1484, 24
        %v1573 = vpop.permute.xlu0 %1572
        %1574 = vrot.lane.b32.xlu0 %v1485, 24
        %v1575 = vpop.permute.xlu0 %1574
        %1576 = vrot.lane.b32.xlu0 %v1486, 24
        %v1577 = vpop.permute.xlu0 %1576
        %1578 = vrot.lane.b32.xlu0 %v1487, 24
        %v1579 = vpop.permute.xlu0 %1578
        %1580 = vrot.lane.b32.xlu0 %v1488, 24
        %v1581 = vpop.permute.xlu0 %1580
        %1582 = vrot.lane.b32.xlu0 %v1489, 24
        %v1583 = vpop.permute.xlu0 %1582
        %1584 = vrot.lane.b32.xlu0 %v1490, 24
        %v1585 = vpop.permute.xlu0 %1584
        %1586 = vrot.lane.b32.xlu0 %v1491, 24
        %v1587 = vpop.permute.xlu0 %1586
        %vm1620 = vcmask 228544
        %1621 = vst.msk [vmem:[#allocation3] sm:$0xff] %vm1620, %v1525
        %1622 = vst.msk [vmem:[#allocation3 + $0x8] sm:$0xff] %vm1620, %v1527
        %1623 = vst.msk [vmem:[#allocation3 + $0x10] sm:$0xff] %vm1620, %v1529
        %1624 = vst.msk [vmem:[#allocation3 + $0x18] sm:$0xff] %vm1620, %v1531
        %1625 = vst.msk [vmem:[#allocation3 + $0x20] sm:$0xff] %vm1620, %v1533
        %1626 = vst.msk [vmem:[#allocation3 + $0x28] sm:$0xff] %vm1620, %v1535
        %1627 = vst.msk [vmem:[#allocation3 + $0x30] sm:$0xff] %vm1620, %v1537
        %1628 = vst.msk [vmem:[#allocation3 + $0x38] sm:$0xff] %vm1620, %v1539
        %1629 = vst.msk [vmem:[#allocation3 + $0x40] sm:$0xff] %vm1620, %v1541
        %1630 = vst.msk [vmem:[#allocation3 + $0x48] sm:$0xff] %vm1620, %v1543
        %1631 = vst.msk [vmem:[#allocation3 + $0x50] sm:$0xff] %vm1620, %v1545
        %1632 = vst.msk [vmem:[#allocation3 + $0x58] sm:$0xff] %vm1620, %v1547
        %1633 = vst.msk [vmem:[#allocation3 + $0x60] sm:$0xff] %vm1620, %v1549
        %1634 = vst.msk [vmem:[#allocation3 + $0x68] sm:$0xff] %vm1620, %v1551
        %1635 = vst.msk [vmem:[#allocation3 + $0x70] sm:$0xff] %vm1620, %v1553
        %1636 = vst.msk [vmem:[#allocation3 + $0x78] sm:$0xff] %vm1620, %v1555
        %1637 = vst.msk [vmem:[#allocation3 + $0x80] sm:$0xff] %vm1620, %v1557
        %1638 = vst.msk [vmem:[#allocation3 + $0x88] sm:$0xff] %vm1620, %v1559
        %1639 = vst.msk [vmem:[#allocation3 + $0x90] sm:$0xff] %vm1620, %v1561
        %1640 = vst.msk [vmem:[#allocation3 + $0x98] sm:$0xff] %vm1620, %v1563
        %1641 = vst.msk [vmem:[#allocation3 + $0xa0] sm:$0xff] %vm1620, %v1565
        %1642 = vst.msk [vmem:[#allocation3 + $0xa8] sm:$0xff] %vm1620, %v1567
        %1643 = vst.msk [vmem:[#allocation3 + $0xb0] sm:$0xff] %vm1620, %v1569
        %1644 = vst.msk [vmem:[#allocation3 + $0xb8] sm:$0xff] %vm1620, %v1571
        %1645 = vst.msk [vmem:[#allocation3 + $0xc0] sm:$0xff] %vm1620, %v1573
        %1646 = vst.msk [vmem:[#allocation3 + $0xc8] sm:$0xff] %vm1620, %v1575
        %1647 = vst.msk [vmem:[#allocation3 + $0xd0] sm:$0xff] %vm1620, %v1577
        %1648 = vst.msk [vmem:[#allocation3 + $0xd8] sm:$0xff] %vm1620, %v1579
        %1649 = vst.msk [vmem:[#allocation3 + $0xe0] sm:$0xff] %vm1620, %v1581
        %1650 = vst.msk [vmem:[#allocation3 + $0xe8] sm:$0xff] %vm1620, %v1583
        %1651 = vst.msk [vmem:[#allocation3 + $0xf0] sm:$0xff] %vm1620, %v1585
        %1652 = vst.msk [vmem:[#allocation3 + $0xf8] sm:$0xff] %vm1620, %v1587
        %v1653 = vld [vmem:[%s1459 + $0x1] sm:$0xff]
        %v1654 = vld [vmem:[%s1459 + $0x9] sm:$0xff]
        %v1655 = vld [vmem:[%s1459 + $0x19] sm:$0xff]
        %v1656 = vld [vmem:[%s1459 + $0x21] sm:$0xff]
        %v1657 = vld [vmem:[%s1459 + $0x31] sm:$0xff]
        %v1658 = vld [vmem:[%s1459 + $0x39] sm:$0xff]
        %v1659 = vld [vmem:[%s1459 + $0x49] sm:$0xff]
        %v1660 = vld [vmem:[%s1459 + $0x51] sm:$0xff]
        %v1661 = vld [vmem:[%s1459 + $0x61] sm:$0xff]
        %v1662 = vld [vmem:[%s1459 + $0x69] sm:$0xff]
        %v1663 = vld [vmem:[%s1459 + $0x79] sm:$0xff]
        %v1664 = vld [vmem:[%s1459 + $0x81] sm:$0xff]
        %v1665 = vld [vmem:[%s1459 + $0x91] sm:$0xff]
        %v1666 = vld [vmem:[%s1459 + $0x99] sm:$0xff]
        %v1667 = vld [vmem:[%s1459 + $0xa9] sm:$0xff]
        %v1668 = vld [vmem:[%s1459 + $0xb1] sm:$0xff]
        %v1669 = vld [vmem:[%s1459 + $0xc1] sm:$0xff]
        %v1670 = vld [vmem:[%s1459 + $0xc9] sm:$0xff]
        %v1671 = vld [vmem:[%s1459 + $0xd9] sm:$0xff]
        %v1672 = vld [vmem:[%s1459 + $0xe1] sm:$0xff]
        %v1673 = vld [vmem:[%s1459 + $0xf1] sm:$0xff]
        %v1674 = vld [vmem:[%s1459 + $0xf9] sm:$0xff]
        %v1675 = vld [vmem:[%s1459 + $0x109] sm:$0xff]
        %v1676 = vld [vmem:[%s1459 + $0x111] sm:$0xff]
        %v1677 = vld [vmem:[%s1459 + $0x121] sm:$0xff]
        %v1678 = vld [vmem:[%s1459 + $0x129] sm:$0xff]
        %v1679 = vld [vmem:[%s1459 + $0x139] sm:$0xff]
        %v1680 = vld [vmem:[%s1459 + $0x141] sm:$0xff]
        %v1681 = vld [vmem:[%s1459 + $0x151] sm:$0xff]
        %v1682 = vld [vmem:[%s1459 + $0x159] sm:$0xff]
        %v1683 = vld [vmem:[%s1459 + $0x169] sm:$0xff]
        %v1684 = vld [vmem:[%s1459 + $0x171] sm:$0xff]
        %1717 = vrot.lane.b32.xlu0 %v1653, 28
        %v1718 = vpop.permute.xlu0 %1717
        %1719 = vrot.lane.b32.xlu0 %v1654, 28
        %v1720 = vpop.permute.xlu0 %1719
        %1721 = vrot.lane.b32.xlu0 %v1655, 28
        %v1722 = vpop.permute.xlu0 %1721
        %1723 = vrot.lane.b32.xlu0 %v1656, 28
        %v1724 = vpop.permute.xlu0 %1723
        %1725 = vrot.lane.b32.xlu0 %v1657, 28
        %v1726 = vpop.permute.xlu0 %1725
        %1727 = vrot.lane.b32.xlu0 %v1658, 28
        %v1728 = vpop.permute.xlu0 %1727
        %1729 = vrot.lane.b32.xlu0 %v1659, 28
        %v1730 = vpop.permute.xlu0 %1729
        %1731 = vrot.lane.b32.xlu0 %v1660, 28
        %v1732 = vpop.permute.xlu0 %1731
        %1733 = vrot.lane.b32.xlu0 %v1661, 28
        %v1734 = vpop.permute.xlu0 %1733
        %1735 = vrot.lane.b32.xlu0 %v1662, 28
        %v1736 = vpop.permute.xlu0 %1735
        %1737 = vrot.lane.b32.xlu0 %v1663, 28
        %v1738 = vpop.permute.xlu0 %1737
        %1739 = vrot.lane.b32.xlu0 %v1664, 28
        %v1740 = vpop.permute.xlu0 %1739
        %1741 = vrot.lane.b32.xlu0 %v1665, 28
        %v1742 = vpop.permute.xlu0 %1741
        %1743 = vrot.lane.b32.xlu0 %v1666, 28
        %v1744 = vpop.permute.xlu0 %1743
        %1745 = vrot.lane.b32.xlu0 %v1667, 28
        %v1746 = vpop.permute.xlu0 %1745
        %1747 = vrot.lane.b32.xlu0 %v1668, 28
        %v1748 = vpop.permute.xlu0 %1747
        %1749 = vrot.lane.b32.xlu0 %v1669, 28
        %v1750 = vpop.permute.xlu0 %1749
        %1751 = vrot.lane.b32.xlu0 %v1670, 28
        %v1752 = vpop.permute.xlu0 %1751
        %1753 = vrot.lane.b32.xlu0 %v1671, 28
        %v1754 = vpop.permute.xlu0 %1753
        %1755 = vrot.lane.b32.xlu0 %v1672, 28
        %v1756 = vpop.permute.xlu0 %1755
        %1757 = vrot.lane.b32.xlu0 %v1673, 28
        %v1758 = vpop.permute.xlu0 %1757
        %1759 = vrot.lane.b32.xlu0 %v1674, 28
        %v1760 = vpop.permute.xlu0 %1759
        %1761 = vrot.lane.b32.xlu0 %v1675, 28
        %v1762 = vpop.permute.xlu0 %1761
        %1763 = vrot.lane.b32.xlu0 %v1676, 28
        %v1764 = vpop.permute.xlu0 %1763
        %1765 = vrot.lane.b32.xlu0 %v1677, 28
        %v1766 = vpop.permute.xlu0 %1765
        %1767 = vrot.lane.b32.xlu0 %v1678, 28
        %v1768 = vpop.permute.xlu0 %1767
        %1769 = vrot.lane.b32.xlu0 %v1679, 28
        %v1770 = vpop.permute.xlu0 %1769
        %1771 = vrot.lane.b32.xlu0 %v1680, 28
        %v1772 = vpop.permute.xlu0 %1771
        %1773 = vrot.lane.b32.xlu0 %v1681, 28
        %v1774 = vpop.permute.xlu0 %1773
        %1775 = vrot.lane.b32.xlu0 %v1682, 28
        %v1776 = vpop.permute.xlu0 %1775
        %1777 = vrot.lane.b32.xlu0 %v1683, 28
        %v1778 = vpop.permute.xlu0 %1777
        %1779 = vrot.lane.b32.xlu0 %v1684, 28
        %v1780 = vpop.permute.xlu0 %1779
        %vm1813 = vcmask 261344
        %1814 = vst.msk [vmem:[#allocation3] sm:$0xff] %vm1813, %v1718
        %1815 = vst.msk [vmem:[#allocation3 + $0x8] sm:$0xff] %vm1813, %v1720
        %1816 = vst.msk [vmem:[#allocation3 + $0x10] sm:$0xff] %vm1813, %v1722
        %1817 = vst.msk [vmem:[#allocation3 + $0x18] sm:$0xff] %vm1813, %v1724
        %1818 = vst.msk [vmem:[#allocation3 + $0x20] sm:$0xff] %vm1813, %v1726
        %1819 = vst.msk [vmem:[#allocation3 + $0x28] sm:$0xff] %vm1813, %v1728
        %1820 = vst.msk [vmem:[#allocation3 + $0x30] sm:$0xff] %vm1813, %v1730
        %1821 = vst.msk [vmem:[#allocation3 + $0x38] sm:$0xff] %vm1813, %v1732
        %1822 = vst.msk [vmem:[#allocation3 + $0x40] sm:$0xff] %vm1813, %v1734
        %1823 = vst.msk [vmem:[#allocation3 + $0x48] sm:$0xff] %vm1813, %v1736
        %1824 = vst.msk [vmem:[#allocation3 + $0x50] sm:$0xff] %vm1813, %v1738
        %1825 = vst.msk [vmem:[#allocation3 + $0x58] sm:$0xff] %vm1813, %v1740
        %1826 = vst.msk [vmem:[#allocation3 + $0x60] sm:$0xff] %vm1813, %v1742
        %1827 = vst.msk [vmem:[#allocation3 + $0x68] sm:$0xff] %vm1813, %v1744
        %1828 = vst.msk [vmem:[#allocation3 + $0x70] sm:$0xff] %vm1813, %v1746
        %1829 = vst.msk [vmem:[#allocation3 + $0x78] sm:$0xff] %vm1813, %v1748
        %1830 = vst.msk [vmem:[#allocation3 + $0x80] sm:$0xff] %vm1813, %v1750
        %1831 = vst.msk [vmem:[#allocation3 + $0x88] sm:$0xff] %vm1813, %v1752
        %1832 = vst.msk [vmem:[#allocation3 + $0x90] sm:$0xff] %vm1813, %v1754
        %1833 = vst.msk [vmem:[#allocation3 + $0x98] sm:$0xff] %vm1813, %v1756
        %1834 = vst.msk [vmem:[#allocation3 + $0xa0] sm:$0xff] %vm1813, %v1758
        %1835 = vst.msk [vmem:[#allocation3 + $0xa8] sm:$0xff] %vm1813, %v1760
        %1836 = vst.msk [vmem:[#allocation3 + $0xb0] sm:$0xff] %vm1813, %v1762
        %1837 = vst.msk [vmem:[#allocation3 + $0xb8] sm:$0xff] %vm1813, %v1764
        %1838 = vst.msk [vmem:[#allocation3 + $0xc0] sm:$0xff] %vm1813, %v1766
        %1839 = vst.msk [vmem:[#allocation3 + $0xc8] sm:$0xff] %vm1813, %v1768
        %1840 = vst.msk [vmem:[#allocation3 + $0xd0] sm:$0xff] %vm1813, %v1770
        %1841 = vst.msk [vmem:[#allocation3 + $0xd8] sm:$0xff] %vm1813, %v1772
        %1842 = vst.msk [vmem:[#allocation3 + $0xe0] sm:$0xff] %vm1813, %v1774
        %1843 = vst.msk [vmem:[#allocation3 + $0xe8] sm:$0xff] %vm1813, %v1776
        %1844 = vst.msk [vmem:[#allocation3 + $0xf0] sm:$0xff] %vm1813, %v1778
        %1845 = vst.msk [vmem:[#allocation3 + $0xf8] sm:$0xff] %vm1813, %v1780
        %v1846 = vld [vmem:[%s1459 + $0x2] sm:$0xff]
        %v1847 = vld [vmem:[%s1459 + $0xa] sm:$0xff]
        %v1848 = vld [vmem:[%s1459 + $0x1a] sm:$0xff]
        %v1849 = vld [vmem:[%s1459 + $0x22] sm:$0xff]
        %v1850 = vld [vmem:[%s1459 + $0x32] sm:$0xff]
        %v1851 = vld [vmem:[%s1459 + $0x3a] sm:$0xff]
        %v1852 = vld [vmem:[%s1459 + $0x4a] sm:$0xff]
        %v1853 = vld [vmem:[%s1459 + $0x52] sm:$0xff]
        %v1854 = vld [vmem:[%s1459 + $0x62] sm:$0xff]
        %v1855 = vld [vmem:[%s1459 + $0x6a] sm:$0xff]
        %v1856 = vld [vmem:[%s1459 + $0x7a] sm:$0xff]
        %v1857 = vld [vmem:[%s1459 + $0x82] sm:$0xff]
        %v1858 = vld [vmem:[%s1459 + $0x92] sm:$0xff]
        %v1859 = vld [vmem:[%s1459 + $0x9a] sm:$0xff]
        %v1860 = vld [vmem:[%s1459 + $0xaa] sm:$0xff]
        %v1861 = vld [vmem:[%s1459 + $0xb2] sm:$0xff]
        %v1862 = vld [vmem:[%s1459 + $0xc2] sm:$0xff]
        %v1863 = vld [vmem:[%s1459 + $0xca] sm:$0xff]
        %v1864 = vld [vmem:[%s1459 + $0xda] sm:$0xff]
        %v1865 = vld [vmem:[%s1459 + $0xe2] sm:$0xff]
        %v1866 = vld [vmem:[%s1459 + $0xf2] sm:$0xff]
        %v1867 = vld [vmem:[%s1459 + $0xfa] sm:$0xff]
        %v1868 = vld [vmem:[%s1459 + $0x10a] sm:$0xff]
        %v1869 = vld [vmem:[%s1459 + $0x112] sm:$0xff]
        %v1870 = vld [vmem:[%s1459 + $0x122] sm:$0xff]
        %v1871 = vld [vmem:[%s1459 + $0x12a] sm:$0xff]
        %v1872 = vld [vmem:[%s1459 + $0x13a] sm:$0xff]
        %v1873 = vld [vmem:[%s1459 + $0x142] sm:$0xff]
        %v1874 = vld [vmem:[%s1459 + $0x152] sm:$0xff]
        %v1875 = vld [vmem:[%s1459 + $0x15a] sm:$0xff]
        %v1876 = vld [vmem:[%s1459 + $0x16a] sm:$0xff]
        %v1877 = vld [vmem:[%s1459 + $0x172] sm:$0xff]
        %1910 = vrot.lane.b32.xlu0 %v1846, 32
        %v1911 = vpop.permute.xlu0 %1910
        %1912 = vrot.lane.b32.xlu0 %v1847, 32
        %v1913 = vpop.permute.xlu0 %1912
        %1914 = vrot.lane.b32.xlu0 %v1848, 32
        %v1915 = vpop.permute.xlu0 %1914
        %1916 = vrot.lane.b32.xlu0 %v1849, 32
        %v1917 = vpop.permute.xlu0 %1916
        %1918 = vrot.lane.b32.xlu0 %v1850, 32
        %v1919 = vpop.permute.xlu0 %1918
        %1920 = vrot.lane.b32.xlu0 %v1851, 32
        %v1921 = vpop.permute.xlu0 %1920
        %1922 = vrot.lane.b32.xlu0 %v1852, 32
        %v1923 = vpop.permute.xlu0 %1922
        %1924 = vrot.lane.b32.xlu0 %v1853, 32
        %v1925 = vpop.permute.xlu0 %1924
        %1926 = vrot.lane.b32.xlu0 %v1854, 32
        %v1927 = vpop.permute.xlu0 %1926
        %1928 = vrot.lane.b32.xlu0 %v1855, 32
        %v1929 = vpop.permute.xlu0 %1928
        %1930 = vrot.lane.b32.xlu0 %v1856, 32
        %v1931 = vpop.permute.xlu0 %1930
        %1932 = vrot.lane.b32.xlu0 %v1857, 32
        %v1933 = vpop.permute.xlu0 %1932
        %1934 = vrot.lane.b32.xlu0 %v1858, 32
        %v1935 = vpop.permute.xlu0 %1934
        %1936 = vrot.lane.b32.xlu0 %v1859, 32
        %v1937 = vpop.permute.xlu0 %1936
        %1938 = vrot.lane.b32.xlu0 %v1860, 32
        %v1939 = vpop.permute.xlu0 %1938
        %1940 = vrot.lane.b32.xlu0 %v1861, 32
        %v1941 = vpop.permute.xlu0 %1940
        %1942 = vrot.lane.b32.xlu0 %v1862, 32
        %v1943 = vpop.permute.xlu0 %1942
        %1944 = vrot.lane.b32.xlu0 %v1863, 32
        %v1945 = vpop.permute.xlu0 %1944
        %1946 = vrot.lane.b32.xlu0 %v1864, 32
        %v1947 = vpop.permute.xlu0 %1946
        %1948 = vrot.lane.b32.xlu0 %v1865, 32
        %v1949 = vpop.permute.xlu0 %1948
        %1950 = vrot.lane.b32.xlu0 %v1866, 32
        %v1951 = vpop.permute.xlu0 %1950
        %1952 = vrot.lane.b32.xlu0 %v1867, 32
        %v1953 = vpop.permute.xlu0 %1952
        %1954 = vrot.lane.b32.xlu0 %v1868, 32
        %v1955 = vpop.permute.xlu0 %1954
        %1956 = vrot.lane.b32.xlu0 %v1869, 32
        %v1957 = vpop.permute.xlu0 %1956
        %1958 = vrot.lane.b32.xlu0 %v1870, 32
        %v1959 = vpop.permute.xlu0 %1958
        %1960 = vrot.lane.b32.xlu0 %v1871, 32
        %v1961 = vpop.permute.xlu0 %1960
        %1962 = vrot.lane.b32.xlu0 %v1872, 32
        %v1963 = vpop.permute.xlu0 %1962
        %1964 = vrot.lane.b32.xlu0 %v1873, 32
        %v1965 = vpop.permute.xlu0 %1964
        %1966 = vrot.lane.b32.xlu0 %v1874, 32
        %v1967 = vpop.permute.xlu0 %1966
        %1968 = vrot.lane.b32.xlu0 %v1875, 32
        %v1969 = vpop.permute.xlu0 %1968
        %1970 = vrot.lane.b32.xlu0 %v1876, 32
        %v1971 = vpop.permute.xlu0 %1970
        %1972 = vrot.lane.b32.xlu0 %v1877, 32
        %v1973 = vpop.permute.xlu0 %1972
        %vm2006 = vcmask 294144
        %2007 = vst.msk [vmem:[#allocation3] sm:$0xff] %vm2006, %v1911
        %2008 = vst.msk [vmem:[#allocation3 + $0x8] sm:$0xff] %vm2006, %v1913
        %2009 = vst.msk [vmem:[#allocation3 + $0x10] sm:$0xff] %vm2006, %v1915
        %2010 = vst.msk [vmem:[#allocation3 + $0x18] sm:$0xff] %vm2006, %v1917
        %2011 = vst.msk [vmem:[#allocation3 + $0x20] sm:$0xff] %vm2006, %v1919
        %2012 = vst.msk [vmem:[#allocation3 + $0x28] sm:$0xff] %vm2006, %v1921
        %2013 = vst.msk [vmem:[#allocation3 + $0x30] sm:$0xff] %vm2006, %v1923
        %2014 = vst.msk [vmem:[#allocation3 + $0x38] sm:$0xff] %vm2006, %v1925
        %2015 = vst.msk [vmem:[#allocation3 + $0x40] sm:$0xff] %vm2006, %v1927
        %2016 = vst.msk [vmem:[#allocation3 + $0x48] sm:$0xff] %vm2006, %v1929
        %2017 = vst.msk [vmem:[#allocation3 + $0x50] sm:$0xff] %vm2006, %v1931
        %2018 = vst.msk [vmem:[#allocation3 + $0x58] sm:$0xff] %vm2006, %v1933
        %2019 = vst.msk [vmem:[#allocation3 + $0x60] sm:$0xff] %vm2006, %v1935
        %2020 = vst.msk [vmem:[#allocation3 + $0x68] sm:$0xff] %vm2006, %v1937
        %2021 = vst.msk [vmem:[#allocation3 + $0x70] sm:$0xff] %vm2006, %v1939
        %2022 = vst.msk [vmem:[#allocation3 + $0x78] sm:$0xff] %vm2006, %v1941
        %2023 = vst.msk [vmem:[#allocation3 + $0x80] sm:$0xff] %vm2006, %v1943
        %2024 = vst.msk [vmem:[#allocation3 + $0x88] sm:$0xff] %vm2006, %v1945
        %2025 = vst.msk [vmem:[#allocation3 + $0x90] sm:$0xff] %vm2006, %v1947
        %2026 = vst.msk [vmem:[#allocation3 + $0x98] sm:$0xff] %vm2006, %v1949
        %2027 = vst.msk [vmem:[#allocation3 + $0xa0] sm:$0xff] %vm2006, %v1951
        %2028 = vst.msk [vmem:[#allocation3 + $0xa8] sm:$0xff] %vm2006, %v1953
        %2029 = vst.msk [vmem:[#allocation3 + $0xb0] sm:$0xff] %vm2006, %v1955
        %2030 = vst.msk [vmem:[#allocation3 + $0xb8] sm:$0xff] %vm2006, %v1957
        %2031 = vst.msk [vmem:[#allocation3 + $0xc0] sm:$0xff] %vm2006, %v1959
        %2032 = vst.msk [vmem:[#allocation3 + $0xc8] sm:$0xff] %vm2006, %v1961
        %2033 = vst.msk [vmem:[#allocation3 + $0xd0] sm:$0xff] %vm2006, %v1963
        %2034 = vst.msk [vmem:[#allocation3 + $0xd8] sm:$0xff] %vm2006, %v1965
        %2035 = vst.msk [vmem:[#allocation3 + $0xe0] sm:$0xff] %vm2006, %v1967
        %2036 = vst.msk [vmem:[#allocation3 + $0xe8] sm:$0xff] %vm2006, %v1969
        %2037 = vst.msk [vmem:[#allocation3 + $0xf0] sm:$0xff] %vm2006, %v1971
        %2038 = vst.msk [vmem:[#allocation3 + $0xf8] sm:$0xff] %vm2006, %v1973
        %v2039 = vld [vmem:[#allocation3] sm:$0xff]
        %v2040 = vld [vmem:[#allocation3 + $0x8] sm:$0xff]
        %v2041 = vld [vmem:[#allocation3 + $0x10] sm:$0xff]
        %v2042 = vld [vmem:[#allocation3 + $0x18] sm:$0xff]
        %v2043 = vld [vmem:[#allocation3 + $0x20] sm:$0xff]
        %v2044 = vld [vmem:[#allocation3 + $0x28] sm:$0xff]
        %v2045 = vld [vmem:[#allocation3 + $0x30] sm:$0xff]
        %v2046 = vld [vmem:[#allocation3 + $0x38] sm:$0xff]
        %v2047 = vld [vmem:[#allocation3 + $0x40] sm:$0xff]
        %v2048 = vld [vmem:[#allocation3 + $0x48] sm:$0xff]
        %v2049 = vld [vmem:[#allocation3 + $0x50] sm:$0xff]
        %v2050 = vld [vmem:[#allocation3 + $0x58] sm:$0xff]
        %v2051 = vld [vmem:[#allocation3 + $0x60] sm:$0xff]
        %v2052 = vld [vmem:[#allocation3 + $0x68] sm:$0xff]
        %v2053 = vld [vmem:[#allocation3 + $0x70] sm:$0xff]
        %v2054 = vld [vmem:[#allocation3 + $0x78] sm:$0xff]
        %v2055 = vld [vmem:[#allocation3 + $0x80] sm:$0xff]
        %v2056 = vld [vmem:[#allocation3 + $0x88] sm:$0xff]
        %v2057 = vld [vmem:[#allocation3 + $0x90] sm:$0xff]
        %v2058 = vld [vmem:[#allocation3 + $0x98] sm:$0xff]
        %v2059 = vld [vmem:[#allocation3 + $0xa0] sm:$0xff]
        %v2060 = vld [vmem:[#allocation3 + $0xa8] sm:$0xff]
        %v2061 = vld [vmem:[#allocation3 + $0xb0] sm:$0xff]
        %v2062 = vld [vmem:[#allocation3 + $0xb8] sm:$0xff]
        %v2063 = vld [vmem:[#allocation3 + $0xc0] sm:$0xff]
        %v2064 = vld [vmem:[#allocation3 + $0xc8] sm:$0xff]
        %v2065 = vld [vmem:[#allocation3 + $0xd0] sm:$0xff]
        %v2066 = vld [vmem:[#allocation3 + $0xd8] sm:$0xff]
        %v2067 = vld [vmem:[#allocation3 + $0xe0] sm:$0xff]
        %v2068 = vld [vmem:[#allocation3 + $0xe8] sm:$0xff]
        %v2069 = vld [vmem:[#allocation3 + $0xf0] sm:$0xff]
        %v2070 = vld [vmem:[#allocation3 + $0xf8] sm:$0xff]
        %v2071 = vpack.c.bf16 %v2040, %v2039
        %v2072 = vpack.c.bf16 %v2042, %v2041
        %v2073 = vpack.c.bf16 %v2044, %v2043
        %v2074 = vpack.c.bf16 %v2046, %v2045
        %v2075 = vpack.c.bf16 %v2048, %v2047
        %v2076 = vpack.c.bf16 %v2050, %v2049
        %v2077 = vpack.c.bf16 %v2052, %v2051
        %v2078 = vpack.c.bf16 %v2054, %v2053
        %v2079 = vpack.c.bf16 %v2056, %v2055
        %v2080 = vpack.c.bf16 %v2058, %v2057
        %v2081 = vpack.c.bf16 %v2060, %v2059
        %v2082 = vpack.c.bf16 %v2062, %v2061
        %v2083 = vpack.c.bf16 %v2064, %v2063
        %v2084 = vpack.c.bf16 %v2066, %v2065
        %v2085 = vpack.c.bf16 %v2068, %v2067
        %v2086 = vpack.c.bf16 %v2070, %v2069
        %v2087 = vld [vmem:[#allocation7] sm:$0xf]
        %v2088 = vld [vmem:[#allocation7 + $0x4] sm:$0xf]
        %v2089 = vld [vmem:[#allocation7 + $0x8] sm:$0xf]
        %v2090 = vld [vmem:[#allocation7 + $0xc] sm:$0xf]
        %v2091 = vld [vmem:[#allocation7 + $0x10] sm:$0x3]
        %v2097 = vunpack.c.l.b16 %v2087
        %v2098 = vunpack.c.l.b16 %v2088
        %v2099 = vunpack.c.l.b16 %v2089
        %v2100 = vunpack.c.l.b16 %v2090
        %v2101 = vunpack.c.l.b16 %v2091
        %v2102 = vpack.c.b16 %v2098, %v2097
        %v2103 = vpack.c.b16 %v2100, %v2099
        %v2104 = vpack.c.b16 %v2101, %v2101
        %vm2107 = vcmask 293888
        %v2109 = vsel %vm2107, %v2071, 0
        %v2112 = vsel %vm2107, %v2072, 0
        %v2115 = vsel %vm2107, %v2073, 0
        %v2118 = vsel %vm2107, %v2074, 0
        %v2121 = vsel %vm2107, %v2075, 0
        %v2124 = vsel %vm2107, %v2076, 0
        %v2127 = vsel %vm2107, %v2077, 0
        %v2130 = vsel %vm2107, %v2078, 0
        %v2133 = vsel %vm2107, %v2079, 0
        %v2136 = vsel %vm2107, %v2080, 0
        %v2139 = vsel %vm2107, %v2081, 0
        %v2142 = vsel %vm2107, %v2082, 0
        %v2145 = vsel %vm2107, %v2083, 0
        %v2148 = vsel %vm2107, %v2084, 0
        %v2151 = vsel %vm2107, %v2085, 0
        %v2154 = vsel %vm2107, %v2086, 0
        %vm2156 = vcmask 1041408
        %v2158 = vsel %vm2156, %v2104, 0
        %2160 = vmatprep.subr.bf16.mxu0 0
        %2161 = vmatpush1.bf16.msra.mxu0 %v2102
        %2162 = vmatprep.subr.bf16.mxu0 0
        %2163 = vmatpush1.bf16.msra.mxu0 %v2103
        %2164 = vmatprep.subr.bf16.mxu0 0
        %2165 = vmatpush1.bf16.msra.mxu0 %v2158
        %2166 = vmatprep.subr.bf16.mxu0 0
        %2167 = vmatpush1.bf16.msra.mxu0 0
        %2168 = vmatprep.subr.bf16.mxu0 0
        %2169 = vmatpush1.bf16.msra.mxu0 0
        %2170 = vmatprep.subr.bf16.mxu0 0
        %2171 = vmatpush1.bf16.msra.mxu0 0
        %2172 = vmatprep.subr.bf16.mxu0 0
        %2173 = vmatpush1.bf16.msra.mxu0 0
        %2174 = vmatprep.subr.bf16.mxu0 0
        %2175 = vmatpush1.bf16.msra.mxu0 0
        %2176 = vmatprep.subr.bf16.mxu0 0
        %2177 = vmatpush1.bf16.msra.mxu0 0
        %2178 = vmatprep.subr.bf16.mxu0 0
        %2179 = vmatpush1.bf16.msra.mxu0 0
        %2180 = vmatprep.subr.bf16.mxu0 0
        %2181 = vmatpush1.bf16.msra.mxu0 0
        %2182 = vmatprep.subr.bf16.mxu0 0
        %2183 = vmatpush1.bf16.msra.mxu0 0
        %2184 = vmatprep.subr.bf16.mxu0 0
        %2185 = vmatpush1.bf16.msra.mxu0 0
        %2186 = vmatprep.subr.bf16.mxu0 0
        %2187 = vmatpush1.bf16.msra.mxu0 0
        %2188 = vmatprep.subr.bf16.mxu0 0
        %2189 = vmatpush1.bf16.msra.mxu0 0
        %2190 = vmatprep.subr.bf16.mxu0 0
        %2191 = vmatpush1.bf16.msra.mxu0 0
        %2192 = vmatprep.mubr.bf16.mxu0 0
        %2193 = vmatmul.mubr.bf16.gmra.mrb[0].mxu0 %v2109
        %v2194 = vpop.f32.mrb[0].mxu0
        %v2195 = vadd.f32 0.0, %v2194
        %v2196 = vpop.f32.mrb[0].mxu0
        %v2197 = vpop.f32.mrb[0].mxu0
        %v2198 = vadd.f32 0.0, %v2197
        %v2199 = vpop.f32.mrb[0].mxu0
        %2200 = vmatprep.mubr.bf16.mxu0 0
        %2201 = vmatmul.mubr.bf16.gmra.mrb[0].mxu0 %v2112
        %v2202 = vpop.f32.mrb[0].mxu0
        %v2203 = vadd.f32 0.0, %v2202
        %v2204 = vpop.f32.mrb[0].mxu0
        %v2205 = vpop.f32.mrb[0].mxu0
        %v2206 = vadd.f32 0.0, %v2205
        %v2207 = vpop.f32.mrb[0].mxu0
        %2208 = vmatprep.mubr.bf16.mxu0 0
        %2209 = vmatmul.mubr.bf16.gmra.mrb[0].mxu0 %v2115
        %v2210 = vpop.f32.mrb[0].mxu0
        %v2211 = vadd.f32 0.0, %v2210
        %v2212 = vpop.f32.mrb[0].mxu0
        %v2213 = vpop.f32.mrb[0].mxu0
        %v2214 = vadd.f32 0.0, %v2213
        %v2215 = vpop.f32.mrb[0].mxu0
        %2216 = vmatprep.mubr.bf16.mxu0 0
        %2217 = vmatmul.mubr.bf16.gmra.mrb[0].mxu0 %v2118
        %v2218 = vpop.f32.mrb[0].mxu0
        %v2219 = vadd.f32 0.0, %v2218
        %v2220 = vpop.f32.mrb[0].mxu0
        %v2221 = vpop.f32.mrb[0].mxu0
        %v2222 = vadd.f32 0.0, %v2221
        %v2223 = vpop.f32.mrb[0].mxu0
        %2224 = vmatprep.mubr.bf16.mxu0 0
        %2225 = vmatmul.mubr.bf16.gmra.mrb[0].mxu0 %v2121
        %v2226 = vpop.f32.mrb[0].mxu0
        %v2227 = vadd.f32 0.0, %v2226
        %v2228 = vpop.f32.mrb[0].mxu0
        %v2229 = vpop.f32.mrb[0].mxu0
        %v2230 = vadd.f32 0.0, %v2229
        %v2231 = vpop.f32.mrb[0].mxu0
        %2232 = vmatprep.mubr.bf16.mxu0 0
        %2233 = vmatmul.mubr.bf16.gmra.mrb[0].mxu0 %v2124
        %v2234 = vpop.f32.mrb[0].mxu0
        %v2235 = vadd.f32 0.0, %v2234
        %v2236 = vpop.f32.mrb[0].mxu0
        %v2237 = vpop.f32.mrb[0].mxu0
        %v2238 = vadd.f32 0.0, %v2237
        %v2239 = vpop.f32.mrb[0].mxu0
        %2240 = vmatprep.mubr.bf16.mxu0 0
        %2241 = vmatmul.mubr.bf16.gmra.mrb[0].mxu0 %v2127
        %v2242 = vpop.f32.mrb[0].mxu0
        %v2243 = vadd.f32 0.0, %v2242
        %v2244 = vpop.f32.mrb[0].mxu0
        %v2245 = vpop.f32.mrb[0].mxu0
        %v2246 = vadd.f32 0.0, %v2245
        %v2247 = vpop.f32.mrb[0].mxu0
        %2248 = vmatprep.mubr.bf16.mxu0 0
        %2249 = vmatmul.mubr.bf16.gmra.mrb[0].mxu0 %v2130
        %v2250 = vpop.f32.mrb[0].mxu0
        %v2251 = vadd.f32 0.0, %v2250
        %v2252 = vpop.f32.mrb[0].mxu0
        %v2253 = vpop.f32.mrb[0].mxu0
        %v2254 = vadd.f32 0.0, %v2253
        %v2255 = vpop.f32.mrb[0].mxu0
        %2256 = vmatprep.mubr.bf16.mxu0 0
        %2257 = vmatmul.mubr.bf16.gmra.mrb[0].mxu0 %v2133
        %v2258 = vpop.f32.mrb[0].mxu0
        %v2259 = vadd.f32 0.0, %v2258
        %v2260 = vpop.f32.mrb[0].mxu0
        %v2261 = vpop.f32.mrb[0].mxu0
        %v2262 = vadd.f32 0.0, %v2261
        %v2263 = vpop.f32.mrb[0].mxu0
        %2264 = vmatprep.mubr.bf16.mxu0 0
        %2265 = vmatmul.mubr.bf16.gmra.mrb[0].mxu0 %v2136
        %v2266 = vpop.f32.mrb[0].mxu0
        %v2267 = vadd.f32 0.0, %v2266
        %v2268 = vpop.f32.mrb[0].mxu0
        %v2269 = vpop.f32.mrb[0].mxu0
        %v2270 = vadd.f32 0.0, %v2269
        %v2271 = vpop.f32.mrb[0].mxu0
        %2272 = vmatprep.mubr.bf16.mxu0 0
        %2273 = vmatmul.mubr.bf16.gmra.mrb[0].mxu0 %v2139
        %v2274 = vpop.f32.mrb[0].mxu0
        %v2275 = vadd.f32 0.0, %v2274
        %v2276 = vpop.f32.mrb[0].mxu0
        %v2277 = vpop.f32.mrb[0].mxu0
        %v2278 = vadd.f32 0.0, %v2277
        %v2279 = vpop.f32.mrb[0].mxu0
        %2280 = vmatprep.mubr.bf16.mxu0 0
        %2281 = vmatmul.mubr.bf16.gmra.mrb[0].mxu0 %v2142
        %v2282 = vpop.f32.mrb[0].mxu0
        %v2283 = vadd.f32 0.0, %v2282
        %v2284 = vpop.f32.mrb[0].mxu0
        %v2285 = vpop.f32.mrb[0].mxu0
        %v2286 = vadd.f32 0.0, %v2285
        %v2287 = vpop.f32.mrb[0].mxu0
        %2288 = vmatprep.mubr.bf16.mxu0 0
        %2289 = vmatmul.mubr.bf16.gmra.mrb[0].mxu0 %v2145
        %v2290 = vpop.f32.mrb[0].mxu0
        %v2291 = vadd.f32 0.0, %v2290
        %v2292 = vpop.f32.mrb[0].mxu0
        %v2293 = vpop.f32.mrb[0].mxu0
        %v2294 = vadd.f32 0.0, %v2293
        %v2295 = vpop.f32.mrb[0].mxu0
        %2296 = vmatprep.mubr.bf16.mxu0 0
        %2297 = vmatmul.mubr.bf16.gmra.mrb[0].mxu0 %v2148
        %v2298 = vpop.f32.mrb[0].mxu0
        %v2299 = vadd.f32 0.0, %v2298
        %v2300 = vpop.f32.mrb[0].mxu0
        %v2301 = vpop.f32.mrb[0].mxu0
        %v2302 = vadd.f32 0.0, %v2301
        %v2303 = vpop.f32.mrb[0].mxu0
        %2304 = vmatprep.mubr.bf16.mxu0 0
        %2305 = vmatmul.mubr.bf16.gmra.mrb[0].mxu0 %v2151
        %v2306 = vpop.f32.mrb[0].mxu0
        %v2307 = vadd.f32 0.0, %v2306
        %v2308 = vpop.f32.mrb[0].mxu0
        %v2309 = vpop.f32.mrb[0].mxu0
        %v2310 = vadd.f32 0.0, %v2309
        %v2311 = vpop.f32.mrb[0].mxu0
        %2312 = vmatprep.mubr.bf16.mxu0 0
        %2313 = vmatmul.mubr.bf16.gmra.mrb[0].mxu0 %v2154
        %v2314 = vpop.f32.mrb[0].mxu0
        %v2315 = vadd.f32 0.0, %v2314
        %v2316 = vpop.f32.mrb[0].mxu0
        %v2317 = vpop.f32.mrb[0].mxu0
        %v2318 = vadd.f32 0.0, %v2317
        %v2319 = vpop.f32.mrb[0].mxu0
        %2320 = vdwg.mxu0
        %2321 = vst.msk [vmem:[%s291] sm:$0xff] %vm319, %v2195
        %2322 = vst.msk [vmem:[%s291 + $0x8] sm:$0xff] %vm319, %v2198
        %2323 = vst.msk [vmem:[%s291 + $0x10] sm:$0xff] %vm319, %v2203
        %2324 = vst.msk [vmem:[%s291 + $0x18] sm:$0xff] %vm319, %v2206
        %2325 = vst.msk [vmem:[%s291 + $0x20] sm:$0xff] %vm319, %v2211
        %2326 = vst.msk [vmem:[%s291 + $0x28] sm:$0xff] %vm319, %v2214
        %2327 = vst.msk [vmem:[%s291 + $0x30] sm:$0xff] %vm319, %v2219
        %2328 = vst.msk [vmem:[%s291 + $0x38] sm:$0xff] %vm319, %v2222
        %2329 = vst.msk [vmem:[%s291 + $0x40] sm:$0xff] %vm319, %v2227
        %2330 = vst.msk [vmem:[%s291 + $0x48] sm:$0xff] %vm319, %v2230
        %2331 = vst.msk [vmem:[%s291 + $0x50] sm:$0xff] %vm319, %v2235
        %2332 = vst.msk [vmem:[%s291 + $0x58] sm:$0xff] %vm319, %v2238
        %2333 = vst.msk [vmem:[%s291 + $0x60] sm:$0xff] %vm319, %v2243
        %2334 = vst.msk [vmem:[%s291 + $0x68] sm:$0xff] %vm319, %v2246
        %2335 = vst.msk [vmem:[%s291 + $0x70] sm:$0xff] %vm319, %v2251
        %2336 = vst.msk [vmem:[%s291 + $0x78] sm:$0xff] %vm319, %v2254
        %2337 = vst.msk [vmem:[%s291 + $0x80] sm:$0xff] %vm319, %v2259
        %2338 = vst.msk [vmem:[%s291 + $0x88] sm:$0xff] %vm319, %v2262
        %2339 = vst.msk [vmem:[%s291 + $0x90] sm:$0xff] %vm319, %v2267
        %2340 = vst.msk [vmem:[%s291 + $0x98] sm:$0xff] %vm319, %v2270
        %2341 = vst.msk [vmem:[%s291 + $0xa0] sm:$0xff] %vm319, %v2275
        %2342 = vst.msk [vmem:[%s291 + $0xa8] sm:$0xff] %vm319, %v2278
        %2343 = vst.msk [vmem:[%s291 + $0xb0] sm:$0xff] %vm319, %v2283
        %2344 = vst.msk [vmem:[%s291 + $0xb8] sm:$0xff] %vm319, %v2286
        %2345 = vst.msk [vmem:[%s291 + $0xc0] sm:$0xff] %vm319, %v2291
        %2346 = vst.msk [vmem:[%s291 + $0xc8] sm:$0xff] %vm319, %v2294
        %2347 = vst.msk [vmem:[%s291 + $0xd0] sm:$0xff] %vm319, %v2299
        %2348 = vst.msk [vmem:[%s291 + $0xd8] sm:$0xff] %vm319, %v2302
        %2349 = vst.msk [vmem:[%s291 + $0xe0] sm:$0xff] %vm319, %v2307
        %2350 = vst.msk [vmem:[%s291 + $0xe8] sm:$0xff] %vm319, %v2310
        %2351 = vst.msk [vmem:[%s291 + $0xf0] sm:$0xff] %vm319, %v2315
        %2352 = vst.msk [vmem:[%s291 + $0xf8] sm:$0xff] %vm319, %v2318
        %2385 = vrot.lane.b32.xlu0 %v2195, 124
        %v2386 = vpop.permute.xlu0 %2385
        %2387 = vrot.lane.b32.xlu0 %v2198, 124
        %v2388 = vpop.permute.xlu0 %2387
        %2389 = vrot.lane.b32.xlu0 %v2203, 124
        %v2390 = vpop.permute.xlu0 %2389
        %2391 = vrot.lane.b32.xlu0 %v2206, 124
        %v2392 = vpop.permute.xlu0 %2391
        %2393 = vrot.lane.b32.xlu0 %v2211, 124
        %v2394 = vpop.permute.xlu0 %2393
        %2395 = vrot.lane.b32.xlu0 %v2214, 124
        %v2396 = vpop.permute.xlu0 %2395
        %2397 = vrot.lane.b32.xlu0 %v2219, 124
        %v2398 = vpop.permute.xlu0 %2397
        %2399 = vrot.lane.b32.xlu0 %v2222, 124
        %v2400 = vpop.permute.xlu0 %2399
        %2401 = vrot.lane.b32.xlu0 %v2227, 124
        %v2402 = vpop.permute.xlu0 %2401
        %2403 = vrot.lane.b32.xlu0 %v2230, 124
        %v2404 = vpop.permute.xlu0 %2403
        %2405 = vrot.lane.b32.xlu0 %v2235, 124
        %v2406 = vpop.permute.xlu0 %2405
        %2407 = vrot.lane.b32.xlu0 %v2238, 124
        %v2408 = vpop.permute.xlu0 %2407
        %2409 = vrot.lane.b32.xlu0 %v2243, 124
        %v2410 = vpop.permute.xlu0 %2409
        %2411 = vrot.lane.b32.xlu0 %v2246, 124
        %v2412 = vpop.permute.xlu0 %2411
        %2413 = vrot.lane.b32.xlu0 %v2251, 124
        %v2414 = vpop.permute.xlu0 %2413
        %2415 = vrot.lane.b32.xlu0 %v2254, 124
        %v2416 = vpop.permute.xlu0 %2415
        %2417 = vrot.lane.b32.xlu0 %v2259, 124
        %v2418 = vpop.permute.xlu0 %2417
        %2419 = vrot.lane.b32.xlu0 %v2262, 124
        %v2420 = vpop.permute.xlu0 %2419
        %2421 = vrot.lane.b32.xlu0 %v2267, 124
        %v2422 = vpop.permute.xlu0 %2421
        %2423 = vrot.lane.b32.xlu0 %v2270, 124
        %v2424 = vpop.permute.xlu0 %2423
        %2425 = vrot.lane.b32.xlu0 %v2275, 124
        %v2426 = vpop.permute.xlu0 %2425
        %2427 = vrot.lane.b32.xlu0 %v2278, 124
        %v2428 = vpop.permute.xlu0 %2427
        %2429 = vrot.lane.b32.xlu0 %v2283, 124
        %v2430 = vpop.permute.xlu0 %2429
        %2431 = vrot.lane.b32.xlu0 %v2286, 124
        %v2432 = vpop.permute.xlu0 %2431
        %2433 = vrot.lane.b32.xlu0 %v2291, 124
        %v2434 = vpop.permute.xlu0 %2433
        %2435 = vrot.lane.b32.xlu0 %v2294, 124
        %v2436 = vpop.permute.xlu0 %2435
        %2437 = vrot.lane.b32.xlu0 %v2299, 124
        %v2438 = vpop.permute.xlu0 %2437
        %2439 = vrot.lane.b32.xlu0 %v2302, 124
        %v2440 = vpop.permute.xlu0 %2439
        %2441 = vrot.lane.b32.xlu0 %v2307, 124
        %v2442 = vpop.permute.xlu0 %2441
        %2443 = vrot.lane.b32.xlu0 %v2310, 124
        %v2444 = vpop.permute.xlu0 %2443
        %2445 = vrot.lane.b32.xlu0 %v2315, 124
        %v2446 = vpop.permute.xlu0 %2445
        %2447 = vrot.lane.b32.xlu0 %v2318, 124
        %v2448 = vpop.permute.xlu0 %2447
        %2481 = vst.msk [vmem:[%s298] sm:$0xff] %vm319, %v2386
        %2482 = vst.msk [vmem:[%s298 + $0x8] sm:$0xff] %vm319, %v2388
        %2483 = vst.msk [vmem:[%s298 + $0x10] sm:$0xff] %vm319, %v2390
        %2484 = vst.msk [vmem:[%s298 + $0x18] sm:$0xff] %vm319, %v2392
        %2485 = vst.msk [vmem:[%s298 + $0x20] sm:$0xff] %vm319, %v2394
        %2486 = vst.msk [vmem:[%s298 + $0x28] sm:$0xff] %vm319, %v2396
        %2487 = vst.msk [vmem:[%s298 + $0x30] sm:$0xff] %vm319, %v2398
        %2488 = vst.msk [vmem:[%s298 + $0x38] sm:$0xff] %vm319, %v2400
        %2489 = vst.msk [vmem:[%s298 + $0x40] sm:$0xff] %vm319, %v2402
        %2490 = vst.msk [vmem:[%s298 + $0x48] sm:$0xff] %vm319, %v2404
        %2491 = vst.msk [vmem:[%s298 + $0x50] sm:$0xff] %vm319, %v2406
        %2492 = vst.msk [vmem:[%s298 + $0x58] sm:$0xff] %vm319, %v2408
        %2493 = vst.msk [vmem:[%s298 + $0x60] sm:$0xff] %vm319, %v2410
        %2494 = vst.msk [vmem:[%s298 + $0x68] sm:$0xff] %vm319, %v2412
        %2495 = vst.msk [vmem:[%s298 + $0x70] sm:$0xff] %vm319, %v2414
        %2496 = vst.msk [vmem:[%s298 + $0x78] sm:$0xff] %vm319, %v2416
        %2497 = vst.msk [vmem:[%s298 + $0x80] sm:$0xff] %vm319, %v2418
        %2498 = vst.msk [vmem:[%s298 + $0x88] sm:$0xff] %vm319, %v2420
        %2499 = vst.msk [vmem:[%s298 + $0x90] sm:$0xff] %vm319, %v2422
        %2500 = vst.msk [vmem:[%s298 + $0x98] sm:$0xff] %vm319, %v2424
        %2501 = vst.msk [vmem:[%s298 + $0xa0] sm:$0xff] %vm319, %v2426
        %2502 = vst.msk [vmem:[%s298 + $0xa8] sm:$0xff] %vm319, %v2428
        %2503 = vst.msk [vmem:[%s298 + $0xb0] sm:$0xff] %vm319, %v2430
        %2504 = vst.msk [vmem:[%s298 + $0xb8] sm:$0xff] %vm319, %v2432
        %2505 = vst.msk [vmem:[%s298 + $0xc0] sm:$0xff] %vm319, %v2434
        %2506 = vst.msk [vmem:[%s298 + $0xc8] sm:$0xff] %vm319, %v2436
        %2507 = vst.msk [vmem:[%s298 + $0xd0] sm:$0xff] %vm319, %v2438
        %2508 = vst.msk [vmem:[%s298 + $0xd8] sm:$0xff] %vm319, %v2440
        %2509 = vst.msk [vmem:[%s298 + $0xe0] sm:$0xff] %vm319, %v2442
        %2510 = vst.msk [vmem:[%s298 + $0xe8] sm:$0xff] %vm319, %v2444
        %2511 = vst.msk [vmem:[%s298 + $0xf0] sm:$0xff] %vm319, %v2446
        %2512 = vst.msk [vmem:[%s298 + $0xf8] sm:$0xff] %vm319, %v2448
        %2513 = vrot.lane.b32.xlu0 %v2195, 120
        %v2514 = vpop.permute.xlu0 %2513
        %2515 = vrot.lane.b32.xlu0 %v2198, 120
        %v2516 = vpop.permute.xlu0 %2515
        %2517 = vrot.lane.b32.xlu0 %v2203, 120
        %v2518 = vpop.permute.xlu0 %2517
        %2519 = vrot.lane.b32.xlu0 %v2206, 120
        %v2520 = vpop.permute.xlu0 %2519
        %2521 = vrot.lane.b32.xlu0 %v2211, 120
        %v2522 = vpop.permute.xlu0 %2521
        %2523 = vrot.lane.b32.xlu0 %v2214, 120
        %v2524 = vpop.permute.xlu0 %2523
        %2525 = vrot.lane.b32.xlu0 %v2219, 120
        %v2526 = vpop.permute.xlu0 %2525
        %2527 = vrot.lane.b32.xlu0 %v2222, 120
        %v2528 = vpop.permute.xlu0 %2527
        %2529 = vrot.lane.b32.xlu0 %v2227, 120
        %v2530 = vpop.permute.xlu0 %2529
        %2531 = vrot.lane.b32.xlu0 %v2230, 120
        %v2532 = vpop.permute.xlu0 %2531
        %2533 = vrot.lane.b32.xlu0 %v2235, 120
        %v2534 = vpop.permute.xlu0 %2533
        %2535 = vrot.lane.b32.xlu0 %v2238, 120
        %v2536 = vpop.permute.xlu0 %2535
        %2537 = vrot.lane.b32.xlu0 %v2243, 120
        %v2538 = vpop.permute.xlu0 %2537
        %2539 = vrot.lane.b32.xlu0 %v2246, 120
        %v2540 = vpop.permute.xlu0 %2539
        %2541 = vrot.lane.b32.xlu0 %v2251, 120
        %v2542 = vpop.permute.xlu0 %2541
        %2543 = vrot.lane.b32.xlu0 %v2254, 120
        %v2544 = vpop.permute.xlu0 %2543
        %2545 = vrot.lane.b32.xlu0 %v2259, 120
        %v2546 = vpop.permute.xlu0 %2545
        %2547 = vrot.lane.b32.xlu0 %v2262, 120
        %v2548 = vpop.permute.xlu0 %2547
        %2549 = vrot.lane.b32.xlu0 %v2267, 120
        %v2550 = vpop.permute.xlu0 %2549
        %2551 = vrot.lane.b32.xlu0 %v2270, 120
        %v2552 = vpop.permute.xlu0 %2551
        %2553 = vrot.lane.b32.xlu0 %v2275, 120
        %v2554 = vpop.permute.xlu0 %2553
        %2555 = vrot.lane.b32.xlu0 %v2278, 120
        %v2556 = vpop.permute.xlu0 %2555
        %2557 = vrot.lane.b32.xlu0 %v2283, 120
        %v2558 = vpop.permute.xlu0 %2557
        %2559 = vrot.lane.b32.xlu0 %v2286, 120
        %v2560 = vpop.permute.xlu0 %2559
        %2561 = vrot.lane.b32.xlu0 %v2291, 120
        %v2562 = vpop.permute.xlu0 %2561
        %2563 = vrot.lane.b32.xlu0 %v2294, 120
        %v2564 = vpop.permute.xlu0 %2563
        %2565 = vrot.lane.b32.xlu0 %v2299, 120
        %v2566 = vpop.permute.xlu0 %2565
        %2567 = vrot.lane.b32.xlu0 %v2302, 120
        %v2568 = vpop.permute.xlu0 %2567
        %2569 = vrot.lane.b32.xlu0 %v2307, 120
        %v2570 = vpop.permute.xlu0 %2569
        %2571 = vrot.lane.b32.xlu0 %v2310, 120
        %v2572 = vpop.permute.xlu0 %2571
        %2573 = vrot.lane.b32.xlu0 %v2315, 120
        %v2574 = vpop.permute.xlu0 %2573
        %2575 = vrot.lane.b32.xlu0 %v2318, 120
        %v2576 = vpop.permute.xlu0 %2575
        %2609 = vst.msk [vmem:[%s305] sm:$0xff] %vm319, %v2514
        %2610 = vst.msk [vmem:[%s305 + $0x8] sm:$0xff] %vm319, %v2516
        %2611 = vst.msk [vmem:[%s305 + $0x10] sm:$0xff] %vm319, %v2518
        %2612 = vst.msk [vmem:[%s305 + $0x18] sm:$0xff] %vm319, %v2520
        %2613 = vst.msk [vmem:[%s305 + $0x20] sm:$0xff] %vm319, %v2522
        %2614 = vst.msk [vmem:[%s305 + $0x28] sm:$0xff] %vm319, %v2524
        %2615 = vst.msk [vmem:[%s305 + $0x30] sm:$0xff] %vm319, %v2526
        %2616 = vst.msk [vmem:[%s305 + $0x38] sm:$0xff] %vm319, %v2528
        %2617 = vst.msk [vmem:[%s305 + $0x40] sm:$0xff] %vm319, %v2530
        %2618 = vst.msk [vmem:[%s305 + $0x48] sm:$0xff] %vm319, %v2532
        %2619 = vst.msk [vmem:[%s305 + $0x50] sm:$0xff] %vm319, %v2534
        %2620 = vst.msk [vmem:[%s305 + $0x58] sm:$0xff] %vm319, %v2536
        %2621 = vst.msk [vmem:[%s305 + $0x60] sm:$0xff] %vm319, %v2538
        %2622 = vst.msk [vmem:[%s305 + $0x68] sm:$0xff] %vm319, %v2540
        %2623 = vst.msk [vmem:[%s305 + $0x70] sm:$0xff] %vm319, %v2542
        %2624 = vst.msk [vmem:[%s305 + $0x78] sm:$0xff] %vm319, %v2544
        %2625 = vst.msk [vmem:[%s305 + $0x80] sm:$0xff] %vm319, %v2546
        %2626 = vst.msk [vmem:[%s305 + $0x88] sm:$0xff] %vm319, %v2548
        %2627 = vst.msk [vmem:[%s305 + $0x90] sm:$0xff] %vm319, %v2550
        %2628 = vst.msk [vmem:[%s305 + $0x98] sm:$0xff] %vm319, %v2552
        %2629 = vst.msk [vmem:[%s305 + $0xa0] sm:$0xff] %vm319, %v2554
        %2630 = vst.msk [vmem:[%s305 + $0xa8] sm:$0xff] %vm319, %v2556
        %2631 = vst.msk [vmem:[%s305 + $0xb0] sm:$0xff] %vm319, %v2558
        %2632 = vst.msk [vmem:[%s305 + $0xb8] sm:$0xff] %vm319, %v2560
        %2633 = vst.msk [vmem:[%s305 + $0xc0] sm:$0xff] %vm319, %v2562
        %2634 = vst.msk [vmem:[%s305 + $0xc8] sm:$0xff] %vm319, %v2564
        %2635 = vst.msk [vmem:[%s305 + $0xd0] sm:$0xff] %vm319, %v2566
        %2636 = vst.msk [vmem:[%s305 + $0xd8] sm:$0xff] %vm319, %v2568
        %2637 = vst.msk [vmem:[%s305 + $0xe0] sm:$0xff] %vm319, %v2570
        %2638 = vst.msk [vmem:[%s305 + $0xe8] sm:$0xff] %vm319, %v2572
        %2639 = vst.msk [vmem:[%s305 + $0xf0] sm:$0xff] %vm319, %v2574
        %2640 = vst.msk [vmem:[%s305 + $0xf8] sm:$0xff] %vm319, %v2576
        %v2641 = vsel %vm319, %v2195, 0.0
        %v2642 = vsel %vm319, %v2198, 0.0
        %v2643 = vadd.f32 %v2641, %v2642
        %v2644 = vsel %vm319, %v2203, 0.0
        %v2645 = vadd.f32 %v2643, %v2644
        %v2646 = vsel %vm319, %v2206, 0.0
        %v2647 = vadd.f32 %v2645, %v2646
        %v2648 = vsel %vm319, %v2211, 0.0
        %v2649 = vadd.f32 %v2647, %v2648
        %v2650 = vsel %vm319, %v2214, 0.0
        %v2651 = vadd.f32 %v2649, %v2650
        %v2652 = vsel %vm319, %v2219, 0.0
        %v2653 = vadd.f32 %v2651, %v2652
        %v2654 = vsel %vm319, %v2222, 0.0
        %v2655 = vadd.f32 %v2653, %v2654
        %v2656 = vsel %vm319, %v2227, 0.0
        %v2657 = vadd.f32 %v2655, %v2656
        %v2658 = vsel %vm319, %v2230, 0.0
        %v2659 = vadd.f32 %v2657, %v2658
        %v2660 = vsel %vm319, %v2235, 0.0
        %v2661 = vadd.f32 %v2659, %v2660
        %v2662 = vsel %vm319, %v2238, 0.0
        %v2663 = vadd.f32 %v2661, %v2662
        %v2664 = vsel %vm319, %v2243, 0.0
        %v2665 = vadd.f32 %v2663, %v2664
        %v2666 = vsel %vm319, %v2246, 0.0
        %v2667 = vadd.f32 %v2665, %v2666
        %v2668 = vsel %vm319, %v2251, 0.0
        %v2669 = vadd.f32 %v2667, %v2668
        %v2670 = vsel %vm319, %v2254, 0.0
        %v2671 = vadd.f32 %v2669, %v2670
        %v2672 = vsel %vm319, %v2259, 0.0
        %v2673 = vadd.f32 %v2671, %v2672
        %v2674 = vsel %vm319, %v2262, 0.0
        %v2675 = vadd.f32 %v2673, %v2674
        %v2676 = vsel %vm319, %v2267, 0.0
        %v2677 = vadd.f32 %v2675, %v2676
        %v2678 = vsel %vm319, %v2270, 0.0
        %v2679 = vadd.f32 %v2677, %v2678
        %v2680 = vsel %vm319, %v2275, 0.0
        %v2681 = vadd.f32 %v2679, %v2680
        %v2682 = vsel %vm319, %v2278, 0.0
        %v2683 = vadd.f32 %v2681, %v2682
        %v2684 = vsel %vm319, %v2283, 0.0
        %v2685 = vadd.f32 %v2683, %v2684
        %v2686 = vsel %vm319, %v2286, 0.0
        %v2687 = vadd.f32 %v2685, %v2686
        %v2688 = vsel %vm319, %v2291, 0.0
        %v2689 = vadd.f32 %v2687, %v2688
        %v2690 = vsel %vm319, %v2294, 0.0
        %v2691 = vadd.f32 %v2689, %v2690
        %v2692 = vsel %vm319, %v2299, 0.0
        %v2693 = vadd.f32 %v2691, %v2692
        %v2694 = vsel %vm319, %v2302, 0.0
        %v2695 = vadd.f32 %v2693, %v2694
        %v2696 = vsel %vm319, %v2307, 0.0
        %v2697 = vadd.f32 %v2695, %v2696
        %v2698 = vsel %vm319, %v2310, 0.0
        %v2699 = vadd.f32 %v2697, %v2698
        %v2700 = vsel %vm319, %v2315, 0.0
        %v2701 = vadd.f32 %v2699, %v2700
        %v2702 = vsel %vm319, %v2318, 0.0
        %v2703 = vadd.f32 %v2701, %v2702
        %v2704 = vrot.slane %v2703, 4
        %v2705 = vadd.f32 %v2703, %v2704
        %v2706 = vrot.slane %v2705, 2
        %v2707 = vadd.f32 %v2705, %v2706
        %v2708 = vrot.slane %v2707, 1
        %v2709 = vadd.f32 %v2707, %v2708
        %2710 = vst.msk [vmem:[%s311] sm:$0x1] %vm328, %v2709
        %v2711 = vmul.f32 %v2195, %v2195
        %v2712 = vmul.f32 %v2198, %v2198
        %v2713 = vmul.f32 %v2203, %v2203
        %v2714 = vmul.f32 %v2206, %v2206
        %v2715 = vmul.f32 %v2211, %v2211
        %v2716 = vmul.f32 %v2214, %v2214
        %v2717 = vmul.f32 %v2219, %v2219
        %v2718 = vmul.f32 %v2222, %v2222
        %v2719 = vmul.f32 %v2227, %v2227
        %v2720 = vmul.f32 %v2230, %v2230
        %v2721 = vmul.f32 %v2235, %v2235
        %v2722 = vmul.f32 %v2238, %v2238
        %v2723 = vmul.f32 %v2243, %v2243
        %v2724 = vmul.f32 %v2246, %v2246
        %v2725 = vmul.f32 %v2251, %v2251
        %v2726 = vmul.f32 %v2254, %v2254
        %v2727 = vmul.f32 %v2259, %v2259
        %v2728 = vmul.f32 %v2262, %v2262
        %v2729 = vmul.f32 %v2267, %v2267
        %v2730 = vmul.f32 %v2270, %v2270
        %v2731 = vmul.f32 %v2275, %v2275
        %v2732 = vmul.f32 %v2278, %v2278
        %v2733 = vmul.f32 %v2283, %v2283
        %v2734 = vmul.f32 %v2286, %v2286
        %v2735 = vmul.f32 %v2291, %v2291
        %v2736 = vmul.f32 %v2294, %v2294
        %v2737 = vmul.f32 %v2299, %v2299
        %v2738 = vmul.f32 %v2302, %v2302
        %v2739 = vmul.f32 %v2307, %v2307
        %v2740 = vmul.f32 %v2310, %v2310
        %v2741 = vmul.f32 %v2315, %v2315
        %v2742 = vmul.f32 %v2318, %v2318
        %v2743 = vsel %vm319, %v2711, 0.0
        %v2744 = vsel %vm319, %v2712, 0.0
        %v2745 = vadd.f32 %v2743, %v2744
        %v2746 = vsel %vm319, %v2713, 0.0
        %v2747 = vadd.f32 %v2745, %v2746
        %v2748 = vsel %vm319, %v2714, 0.0
        %v2749 = vadd.f32 %v2747, %v2748
        %v2750 = vsel %vm319, %v2715, 0.0
        %v2751 = vadd.f32 %v2749, %v2750
        %v2752 = vsel %vm319, %v2716, 0.0
        %v2753 = vadd.f32 %v2751, %v2752
        %v2754 = vsel %vm319, %v2717, 0.0
        %v2755 = vadd.f32 %v2753, %v2754
        %v2756 = vsel %vm319, %v2718, 0.0
        %v2757 = vadd.f32 %v2755, %v2756
        %v2758 = vsel %vm319, %v2719, 0.0
        %v2759 = vadd.f32 %v2757, %v2758
        %v2760 = vsel %vm319, %v2720, 0.0
        %v2761 = vadd.f32 %v2759, %v2760
        %v2762 = vsel %vm319, %v2721, 0.0
        %v2763 = vadd.f32 %v2761, %v2762
        %v2764 = vsel %vm319, %v2722, 0.0
        %v2765 = vadd.f32 %v2763, %v2764
        %v2766 = vsel %vm319, %v2723, 0.0
        %v2767 = vadd.f32 %v2765, %v2766
        %v2768 = vsel %vm319, %v2724, 0.0
        %v2769 = vadd.f32 %v2767, %v2768
        %v2770 = vsel %vm319, %v2725, 0.0
        %v2771 = vadd.f32 %v2769, %v2770
        %v2772 = vsel %vm319, %v2726, 0.0
        %v2773 = vadd.f32 %v2771, %v2772
        %v2774 = vsel %vm319, %v2727, 0.0
        %v2775 = vadd.f32 %v2773, %v2774
        %v2776 = vsel %vm319, %v2728, 0.0
        %v2777 = vadd.f32 %v2775, %v2776
        %v2778 = vsel %vm319, %v2729, 0.0
        %v2779 = vadd.f32 %v2777, %v2778
        %v2780 = vsel %vm319, %v2730, 0.0
        %v2781 = vadd.f32 %v2779, %v2780
        %v2782 = vsel %vm319, %v2731, 0.0
        %v2783 = vadd.f32 %v2781, %v2782
        %v2784 = vsel %vm319, %v2732, 0.0
        %v2785 = vadd.f32 %v2783, %v2784
        %v2786 = vsel %vm319, %v2733, 0.0
        %v2787 = vadd.f32 %v2785, %v2786
        %v2788 = vsel %vm319, %v2734, 0.0
        %v2789 = vadd.f32 %v2787, %v2788
        %v2790 = vsel %vm319, %v2735, 0.0
        %v2791 = vadd.f32 %v2789, %v2790
        %v2792 = vsel %vm319, %v2736, 0.0
        %v2793 = vadd.f32 %v2791, %v2792
        %v2794 = vsel %vm319, %v2737, 0.0
        %v2795 = vadd.f32 %v2793, %v2794
        %v2796 = vsel %vm319, %v2738, 0.0
        %v2797 = vadd.f32 %v2795, %v2796
        %v2798 = vsel %vm319, %v2739, 0.0
        %v2799 = vadd.f32 %v2797, %v2798
        %v2800 = vsel %vm319, %v2740, 0.0
        %v2801 = vadd.f32 %v2799, %v2800
        %v2802 = vsel %vm319, %v2741, 0.0
        %v2803 = vadd.f32 %v2801, %v2802
        %v2804 = vsel %vm319, %v2742, 0.0
        %v2805 = vadd.f32 %v2803, %v2804
        %v2806 = vrot.slane %v2805, 4
        %v2807 = vadd.f32 %v2805, %v2806
        %v2808 = vrot.slane %v2807, 2
        %v2809 = vadd.f32 %v2807, %v2808
        %v2810 = vrot.slane %v2809, 1
        %v2811 = vadd.f32 %v2809, %v2810
        %2812 = vst.msk [vmem:[%s317] sm:$0x1] %vm328, %v2811
        %s2813 = sand.u32 %s86, 1
        %s2814 = scalar_lea.sflag [#allocation6], %s2813
        %s2815 = sand.u32 %s86, 1
        %s2816 = smul.addr %s2815, 256
        %s2817 = scalar_lea.vmem [#allocation9], %s2816
        %s2818 = sand.u32 %s31, 1
        %s2819 = scalar_lea.sflag [#allocation11], %s2818
        %s2820 = sand.u32 %s112, 1
        %s2821 = smul.addr %s2820, 256
        %s2822 = scalar_lea.vmem [#allocation10], %s2821
        %s2823 = sand.u32 %s31, 1
        %s2824 = scalar_lea.sflag [#allocation11], %s2823
        %s2825 = sand.u32 %s138, 1
        %s2826 = smul.addr %s2825, 256
        %s2827 = scalar_lea.vmem [#allocation12], %s2826
        %s2828 = sand.u32 %s31, 1
        %s2829 = scalar_lea.sflag [#allocation14], %s2828
        %s2830 = sand.u32 %s164, 1
        %s2831 = scalar_lea.vmem [#allocation13], %s2830
        %s2832 = sand.u32 %s31, 1
        %s2833 = scalar_lea.sflag [#allocation14], %s2832
        %s2834 = sand.u32 %s190, 1
        %s2835 = scalar_lea.vmem [#allocation15], %s2834
        // Predicated region
        $region37: #{basic_block_forward.3} parent=27 // pred_check
          %p2836 = pneg %p96
        $region38: #{basic_block_forward.3} parent=27 // pred_check_branch
          %2838 = sbr.rel (%p2836) target = $region40
        $region39: #{basic_block_forward.3} parent=27 // pred_region
          %s2840 = ssub.s32 4096, 4096
          %2841 = vsyncadd %s2814, %s2840
          %s2842 = smul.addr %s31, 32
          %s2843 = smul.addr %s2842, 128
          %s2844 = scalar_lea.hbm %s2, %s2843
          %s2845 = sshll.u32 %s2817, 4
          %s2846 = int_to_ptr.vmem [resolvable:$true] %s2845
          %2851 = dma.vmem_to_hbm [thread:$0]  %s2846, 4096, %s2844, %s2814, 128, 128, 8
        $region40: #{basic_block_forward.3} parent=27 // pred_fallthru
          _
        // Predicated region
        $region41: #{basic_block_forward.3} parent=27 // pred_check
          %p2852 = pneg %p122
        $region42: #{basic_block_forward.3} parent=27 // pred_check_branch
          %2854 = sbr.rel (%p2852) target = $region44
        $region43: #{basic_block_forward.3} parent=27 // pred_region
          %s2856 = ssub.s32 4096, 4096
          %2857 = vsyncadd %s2819, %s2856
          %s2858 = smul.addr %s31, 32
          %s2859 = smul.addr %s2858, 128
          %s2860 = scalar_lea.hbm %s3, %s2859
          %s2861 = sshll.u32 %s2822, 4
          %s2862 = int_to_ptr.vmem [resolvable:$true] %s2861
          %2867 = dma.vmem_to_hbm [thread:$0]  %s2862, 4096, %s2860, %s2819, 128, 128, 8
        $region44: #{basic_block_forward.3} parent=27 // pred_fallthru
          _
        // Predicated region
        $region45: #{basic_block_forward.3} parent=27 // pred_check
          %p2868 = pneg %p148
        $region46: #{basic_block_forward.3} parent=27 // pred_check_branch
          %2870 = sbr.rel (%p2868) target = $region48
        $region47: #{basic_block_forward.3} parent=27 // pred_region
          %s2872 = ssub.s32 4096, 4096
          %2873 = vsyncadd %s2824, %s2872
          %s2874 = smul.addr %s31, 32
          %s2875 = smul.addr %s2874, 128
          %s2876 = scalar_lea.hbm %s4, %s2875
          %s2877 = sshll.u32 %s2827, 4
          %s2878 = int_to_ptr.vmem [resolvable:$true] %s2877
          %2883 = dma.vmem_to_hbm [thread:$0]  %s2878, 4096, %s2876, %s2824, 128, 128, 8
        $region48: #{basic_block_forward.3} parent=27 // pred_fallthru
          _
        // Predicated region
        $region49: #{basic_block_forward.3} parent=27 // pred_check
          %p2884 = pneg %p174
        $region50: #{basic_block_forward.3} parent=27 // pred_check_branch
          %2886 = sbr.rel (%p2884) target = $region52
        $region51: #{basic_block_forward.3} parent=27 // pred_region
          %s2888 = ssub.s32 16, 16
          %2889 = vsyncadd %s2829, %s2888
          %s2890 = smul.addr %s31, 16
          %s2891 = scalar_lea.hbm %s5, %s2890
          %s2893 = sshll.u32 %s2831, 4
          %s2894 = int_to_ptr.vmem [resolvable:$true] %s2893
          %2896 = dma.vmem_to_hbm [thread:$0]  %s2894, 16, %s2891, %s2829
        $region52: #{basic_block_forward.3} parent=27 // pred_fallthru
          _
        // Predicated region
        $region53: #{basic_block_forward.3} parent=27 // pred_check
          %p2897 = pneg %p200
        $region54: #{basic_block_forward.3} parent=27 // pred_check_branch
          %2899 = sbr.rel (%p2897) target = $region56
        $region55: #{basic_block_forward.3} parent=27 // pred_region
          %s2901 = ssub.s32 16, 16
          %2902 = vsyncadd %s2833, %s2901
          %s2903 = smul.addr %s31, 16
          %s2904 = scalar_lea.hbm %s6, %s2903
          %s2906 = sshll.u32 %s2835, 4
          %s2907 = int_to_ptr.vmem [resolvable:$true] %s2906
          %2909 = dma.vmem_to_hbm [thread:$0]  %s2907, 16, %s2904, %s2833
        $region56: #{basic_block_forward.3} parent=27 // pred_fallthru
          _
      $region28: #{basic_block_forward.3} parent=5 // pred_fallthru
        _
      %p2910 = scmp.le.s32.totalorder 2, %s26
      // Predicated region
      $region57: #{basic_block_forward.3} parent=5 // pred_check
        %p2911 = pneg %p2910
      $region58: #{basic_block_forward.3} parent=5 // pred_check_branch
        %2913 = sbr.rel (%p2911) target = $region60
      $region59: #{basic_block_forward.3} parent=5 // pred_region
        %s2914 = ssub.s32 %s26, 2
        // Predicated region
        $region61: #{basic_block_forward.3} parent=59 // pred_check
          %p2915 = pneg %p102
        $region62: #{basic_block_forward.3} parent=59 // pred_check_branch
          %2917 = sbr.rel (%p2915) target = $region64
        $region63: #{basic_block_forward.3} parent=59 // pred_region
          %s2918 = sand.u32 %s87, 1
          %s2919 = scalar_lea.sflag [#allocation6], %s2918
          %s2920 = sand.u32 %s87, 1
          %s2921 = smul.addr %s2920, 256
          %s2922 = scalar_lea.vmem [#allocation9], %s2921
          %2923 = dma.done %s2919, 4096
        $region64: #{basic_block_forward.3} parent=59 // pred_fallthru
          _
        // Predicated region
        $region65: #{basic_block_forward.3} parent=59 // pred_check
          %p2924 = pneg %p128
        $region66: #{basic_block_forward.3} parent=59 // pred_check_branch
          %2926 = sbr.rel (%p2924) target = $region68
        $region67: #{basic_block_forward.3} parent=59 // pred_region
          %s2927 = sand.u32 %s32, 1
          %s2928 = scalar_lea.sflag [#allocation11], %s2927
          %s2929 = sand.u32 %s113, 1
          %s2930 = smul.addr %s2929, 256
          %s2931 = scalar_lea.vmem [#allocation10], %s2930
          %2932 = dma.done %s2928, 4096
        $region68: #{basic_block_forward.3} parent=59 // pred_fallthru
          _
        // Predicated region
        $region69: #{basic_block_forward.3} parent=59 // pred_check
          %p2933 = pneg %p154
        $region70: #{basic_block_forward.3} parent=59 // pred_check_branch
          %2935 = sbr.rel (%p2933) target = $region72
        $region71: #{basic_block_forward.3} parent=59 // pred_region
          %s2936 = sand.u32 %s32, 1
          %s2937 = scalar_lea.sflag [#allocation11], %s2936
          %s2938 = sand.u32 %s139, 1
          %s2939 = smul.addr %s2938, 256
          %s2940 = scalar_lea.vmem [#allocation12], %s2939
          %2941 = dma.done %s2937, 4096
        $region72: #{basic_block_forward.3} parent=59 // pred_fallthru
          _
        // Predicated region
        $region73: #{basic_block_forward.3} parent=59 // pred_check
          %p2942 = pneg %p180
        $region74: #{basic_block_forward.3} parent=59 // pred_check_branch
          %2944 = sbr.rel (%p2942) target = $region76
        $region75: #{basic_block_forward.3} parent=59 // pred_region
          %s2945 = sand.u32 %s32, 1
          %s2946 = scalar_lea.sflag [#allocation14], %s2945
          %s2947 = sand.u32 %s165, 1
          %s2948 = scalar_lea.vmem [#allocation13], %s2947
          %2949 = dma.done %s2946, 16
        $region76: #{basic_block_forward.3} parent=59 // pred_fallthru
          _
        // Predicated region
        $region77: #{basic_block_forward.3} parent=59 // pred_check
          %p2950 = pneg %p206
        $region78: #{basic_block_forward.3} parent=59 // pred_check_branch
          %2952 = sbr.rel (%p2950) target = $region80
        $region79: #{basic_block_forward.3} parent=59 // pred_region
          %s2953 = sand.u32 %s32, 1
          %s2954 = scalar_lea.sflag [#allocation14], %s2953
          %s2955 = sand.u32 %s191, 1
          %s2956 = scalar_lea.vmem [#allocation15], %s2955
          %2957 = dma.done %s2954, 16
        $region80: #{basic_block_forward.3} parent=59 // pred_fallthru
          _
      $region60: #{basic_block_forward.3} parent=5 // pred_fallthru
        _
    $region6: #{basic_block_forward.3} parent=1 // loop_footer
      %s30 = sadd.s32 1, %s26
    $region7: #{basic_block_forward.3} parent=1 // loop_footer_branch
      %25 = sbr.rel target = $region3
    $region8: #{basic_block_forward.3} parent=1 // loop_exit
      _
    %2958 = vsyncpa [#allocation5], 1
    %s2959 = scalar_lea.sflag [#allocation5], 1
    %2960 = vsyncpa %s2959, 1
    %2961 = vsyncpa [#allocation8], 1
    %2962 = vsyncpa [#allocation6], 1
    %s2963 = scalar_lea.sflag [#allocation6], 1
    %2964 = vsyncpa %s2963, 1
    %2965 = vsyncpa [#allocation11], 1
    %s2966 = scalar_lea.sflag [#allocation11], 1
    %2967 = vsyncpa %s2966, 1
    %2968 = vsyncpa [#allocation14], 1
    %s2969 = scalar_lea.sflag [#allocation14], 1
    %2970 = vsyncpa %s2969, 1

// kernel: basic_block_forward.5
$region0: #{basic_block_forward.5}
  #allocation0 [shape = 'u32[]', space=smem, size = 0x4, offset = 0x4, fixed_abs, tag = 'smem constant byte address 0x4 - core index']
  #allocation1 [shape = 'u32[144,128]{1,0:T(1,128)}', space=vmem, size = 0x12000, scoped, tag = 'internal scratch']
  %s0 = inlined_call_operand.hbm [shape: f32[16,128], index: 0, kind: input, shape index: {}]
  %s1 = inlined_call_operand.hbm [shape: f32[1,128], index: 1, kind: input, shape index: {}]
  %s2 = inlined_call_operand.hbm [shape: f32[1,128], index: 2, kind: input, shape index: {}]
  %s3 = inlined_call_operand.hbm [shape: f32[16,128], index: 3, kind: input, shape index: {}]
  %s4 = inlined_call_operand.hbm [shape: f32[16,128], index: 4, kind: input, shape index: {}]
  %s5 = inlined_call_operand.hbm [shape: f32[16,128], index: 5, kind: input, shape index: {}]
  %s6 = inlined_call_operand.hbm [shape: f32[2,16,128], index: 6, kind: input, shape index: {}]
  %s7 = inlined_call_operand.hbm [shape: f32[16,128], index: 7, kind: output, shape index: {0}]
  %s8 = inlined_call_operand.hbm [shape: f32[16,128], index: 8, kind: output, shape index: {1}]
  %9 = xla_tuple %s7, %s8
  %s10 = sld [smem:[#allocation0]]
  $region74: #{basic_block_forward.5} parent=0
    _
  %s12 = ssub.s32 1, %s10
  %s13 = scalar_select 0, %s12, %s10
  $region1: #{basic_block_forward.5} parent=0
    #allocation2 [shape = 'u8[8192]{0}', space=vmem, size = 0x2000, scoped, tag = 'input window, operand 0, single buffered']
    #allocation3 [shape = 's32[1]{0}', space=sflag, size = 0x4, scoped, tag = 'scoped memory for basic_block_forward.5']
    #allocation4 [shape = 's32[1]{0}', space=sflag, size = 0x4, scoped, tag = 'scoped memory for basic_block_forward.5']
    #allocation5 [shape = 'u8[512]{0}', space=vmem, size = 0x400, scoped, tag = 'input window, operand 1, single buffered']
    #allocation6 [shape = 's32[1]{0}', space=sflag, size = 0x4, scoped, tag = 'scoped memory for basic_block_forward.5']
    #allocation7 [shape = 'u8[512]{0}', space=vmem, size = 0x400, scoped, tag = 'input window, operand 2, single buffered']
    #allocation8 [shape = 'u8[8192]{0}', space=vmem, size = 0x2000, scoped, tag = 'input window, operand 3, single buffered']
    #allocation9 [shape = 's32[1]{0}', space=sflag, size = 0x4, scoped, tag = 'scoped memory for basic_block_forward.5']
    #allocation10 [shape = 'u8[8192]{0}', space=vmem, size = 0x2000, scoped, tag = 'input window, operand 4, single buffered']
    #allocation11 [shape = 'u8[8192]{0}', space=vmem, size = 0x2000, scoped, tag = 'input window, operand 5, single buffered']
    #allocation12 [shape = 's32[1]{0}', space=sflag, size = 0x4, scoped, tag = 'scoped memory for basic_block_forward.5']
    #allocation13 [shape = 'u8[16384]{0}', space=vmem, size = 0x4000, scoped, tag = 'input window, operand 6, single buffered']
    #allocation14 [shape = 'u8[8192]{0}', space=vmem, size = 0x2000, scoped, tag = 'output window, operand 0, single buffered']
    #allocation15 [shape = 'u8[8192]{0}', space=vmem, size = 0x2000, scoped, tag = 'output window, operand 1, single buffered']
    #allocation16 [shape = 's32[1]{0}', space=sflag, size = 0x4, scoped, tag = 'scoped memory for basic_block_forward.5']
    %14 = vsyncpa [#allocation3], 0
    %15 = vsyncpa [#allocation6], 0
    %16 = vsyncpa [#allocation9], 0
    %17 = vsyncpa [#allocation12], 0
    %18 = vsyncpa [#allocation4], 0
    %19 = vsyncpa [#allocation16], 0
    // Predicated region
    $region2: #{basic_block_forward.5} parent=1 // pred_check
      _
    $region3: #{basic_block_forward.5} parent=1 // pred_check_branch
      %21 = sbr.rel (0) target = $region5
    $region4: #{basic_block_forward.5} parent=1 // pred_region
      %s23 = ssub.s32 256, 256
      %24 = vsyncadd [#allocation3], %s23
      %s25 = sshll.u32 [#allocation2], 4
      %s26 = int_to_ptr.vmem [resolvable:$true] %s25
      %31 = dma.hbm_to_vmem [thread:$0]  %s0, 256, %s26, [#allocation3], 128, 128, 8
    $region5: #{basic_block_forward.5} parent=1 // pred_fallthru
      _
    // Predicated region
    $region6: #{basic_block_forward.5} parent=1 // pred_check
      _
    $region7: #{basic_block_forward.5} parent=1 // pred_check_branch
      %33 = sbr.rel (0) target = $region9
    $region8: #{basic_block_forward.5} parent=1 // pred_region
      %s35 = ssub.s32 16, 16
      %36 = vsyncadd [#allocation6], %s35
      %s38 = sshll.u32 [#allocation5], 4
      %s39 = int_to_ptr.vmem [resolvable:$true] %s38
      %41 = dma.hbm_to_vmem [thread:$0]  %s1, 16, %s39, [#allocation6]
    $region9: #{basic_block_forward.5} parent=1 // pred_fallthru
      _
    // Predicated region
    $region10: #{basic_block_forward.5} parent=1 // pred_check
      _
    $region11: #{basic_block_forward.5} parent=1 // pred_check_branch
      %43 = sbr.rel (0) target = $region13
    $region12: #{basic_block_forward.5} parent=1 // pred_region
      %s45 = ssub.s32 16, 16
      %46 = vsyncadd [#allocation6], %s45
      %s48 = sshll.u32 [#allocation7], 4
      %s49 = int_to_ptr.vmem [resolvable:$true] %s48
      %51 = dma.hbm_to_vmem [thread:$0]  %s2, 16, %s49, [#allocation6]
    $region13: #{basic_block_forward.5} parent=1 // pred_fallthru
      _
    // Predicated region
    $region14: #{basic_block_forward.5} parent=1 // pred_check
      _
    $region15: #{basic_block_forward.5} parent=1 // pred_check_branch
      %53 = sbr.rel (0) target = $region17
    $region16: #{basic_block_forward.5} parent=1 // pred_region
      %s55 = ssub.s32 256, 256
      %56 = vsyncadd [#allocation9], %s55
      %s57 = sshll.u32 [#allocation8], 4
      %s58 = int_to_ptr.vmem [resolvable:$true] %s57
      %63 = dma.hbm_to_vmem [thread:$0]  %s3, 256, %s58, [#allocation9], 128, 128, 8
    $region17: #{basic_block_forward.5} parent=1 // pred_fallthru
      _
    // Predicated region
    $region18: #{basic_block_forward.5} parent=1 // pred_check
      _
    $region19: #{basic_block_forward.5} parent=1 // pred_check_branch
      %65 = sbr.rel (0) target = $region21
    $region20: #{basic_block_forward.5} parent=1 // pred_region
      %s67 = ssub.s32 256, 256
      %68 = vsyncadd [#allocation9], %s67
      %s69 = sshll.u32 [#allocation10], 4
      %s70 = int_to_ptr.vmem [resolvable:$true] %s69
      %75 = dma.hbm_to_vmem [thread:$0]  %s4, 256, %s70, [#allocation9], 128, 128, 8
    $region21: #{basic_block_forward.5} parent=1 // pred_fallthru
      _
    // Predicated region
    $region22: #{basic_block_forward.5} parent=1 // pred_check
      _
    $region23: #{basic_block_forward.5} parent=1 // pred_check_branch
      %77 = sbr.rel (0) target = $region25
    $region24: #{basic_block_forward.5} parent=1 // pred_region
      %s79 = ssub.s32 256, 256
      %80 = vsyncadd [#allocation12], %s79
      %s81 = sshll.u32 [#allocation11], 4
      %s82 = int_to_ptr.vmem [resolvable:$true] %s81
      %87 = dma.hbm_to_vmem [thread:$0]  %s5, 256, %s82, [#allocation12], 128, 128, 8
    $region25: #{basic_block_forward.5} parent=1 // pred_fallthru
      _
    // Predicated region
    $region26: #{basic_block_forward.5} parent=1 // pred_check
      _
    $region27: #{basic_block_forward.5} parent=1 // pred_check_branch
      %89 = sbr.rel (0) target = $region29
    $region28: #{basic_block_forward.5} parent=1 // pred_region
      %s91 = ssub.s32 512, 512
      %92 = vsyncadd [#allocation12], %s91
      %s93 = sshll.u32 [#allocation13], 4
      %s94 = int_to_ptr.vmem [resolvable:$true] %s93
      %99 = dma.hbm_to_vmem [thread:$0]  %s6, 512, %s94, [#allocation12], 128, 128, 8
    $region29: #{basic_block_forward.5} parent=1 // pred_fallthru
      _
    // Predicated region
    $region30: #{basic_block_forward.5} parent=1 // pred_check
      _
    $region31: #{basic_block_forward.5} parent=1 // pred_check_branch
      %101 = sbr.rel (0) target = $region33
    $region32: #{basic_block_forward.5} parent=1 // pred_region
      %102 = dma.done [#allocation3], 256
    $region33: #{basic_block_forward.5} parent=1 // pred_fallthru
      _
    // Predicated region
    $region34: #{basic_block_forward.5} parent=1 // pred_check
      _
    $region35: #{basic_block_forward.5} parent=1 // pred_check_branch
      %104 = sbr.rel (0) target = $region37
    $region36: #{basic_block_forward.5} parent=1 // pred_region
      %105 = dma.done [#allocation6], 16
    $region37: #{basic_block_forward.5} parent=1 // pred_fallthru
      _
    // Predicated region
    $region38: #{basic_block_forward.5} parent=1 // pred_check
      _
    $region39: #{basic_block_forward.5} parent=1 // pred_check_branch
      %107 = sbr.rel (0) target = $region41
    $region40: #{basic_block_forward.5} parent=1 // pred_region
      %108 = dma.done [#allocation6], 16
    $region41: #{basic_block_forward.5} parent=1 // pred_fallthru
      _
    // Predicated region
    $region42: #{basic_block_forward.5} parent=1 // pred_check
      _
    $region43: #{basic_block_forward.5} parent=1 // pred_check_branch
      %110 = sbr.rel (0) target = $region45
    $region44: #{basic_block_forward.5} parent=1 // pred_region
      %111 = dma.done [#allocation9], 256
    $region45: #{basic_block_forward.5} parent=1 // pred_fallthru
      _
    // Predicated region
    $region46: #{basic_block_forward.5} parent=1 // pred_check
      _
    $region47: #{basic_block_forward.5} parent=1 // pred_check_branch
      %113 = sbr.rel (0) target = $region49
    $region48: #{basic_block_forward.5} parent=1 // pred_region
      %114 = dma.done [#allocation9], 256
    $region49: #{basic_block_forward.5} parent=1 // pred_fallthru
      _
    // Predicated region
    $region50: #{basic_block_forward.5} parent=1 // pred_check
      _
    $region51: #{basic_block_forward.5} parent=1 // pred_check_branch
      %116 = sbr.rel (0) target = $region53
    $region52: #{basic_block_forward.5} parent=1 // pred_region
      %117 = dma.done [#allocation12], 256
    $region53: #{basic_block_forward.5} parent=1 // pred_fallthru
      _
    // Predicated region
    $region54: #{basic_block_forward.5} parent=1 // pred_check
      _
    $region55: #{basic_block_forward.5} parent=1 // pred_check_branch
      %119 = sbr.rel (0) target = $region57
    $region56: #{basic_block_forward.5} parent=1 // pred_region
      %120 = dma.done [#allocation12], 512
    $region57: #{basic_block_forward.5} parent=1 // pred_fallthru
      _
    %v121 = vld [vmem:[#allocation2] sm:$0xff]
    %v122 = vld [vmem:[#allocation2 + $0x8] sm:$0xff]
    %v123 = vld [vmem:[#allocation5] sm:$0x1]
    %v125 = vlaneseq
    %v126 = vshrl.u32 %v125, 7
    %v127 = vsub.s32 0, %v126
    %v128 = vrot.slane %v123, %v127
    %v130 = vsub.f32 %v121, %v128
    %v131 = vsub.f32 %v122, %v128
    %v132 = vld [vmem:[#allocation7] sm:$0x1]
    %v134 = vlaneseq
    %v135 = vshrl.u32 %v134, 7
    %v136 = vsub.s32 0, %v135
    %v137 = vrot.slane %v132, %v136
    %v139 = vmul.f32 %v130, %v137
    %v140 = vmul.f32 %v131, %v137
    %v141 = vld [vmem:[#allocation13] sm:$0xff]
    %v142 = vld [vmem:[#allocation13 + $0x8] sm:$0xff]
    %s143 = scalar_lea.vmem [#allocation13], 16
    %v144 = vld [vmem:[%s143] sm:$0xff]
    %v145 = vld [vmem:[%s143 + $0x8] sm:$0xff]
    %v146 = vmul.f32 %v141, %v144
    %v147 = vmul.f32 %v142, %v145
    %v148 = vld [vmem:[#allocation10] sm:$0xff]
    %v149 = vld [vmem:[#allocation10 + $0x8] sm:$0xff]
    %v150 = vld [vmem:[#allocation11] sm:$0xff]
    %v151 = vld [vmem:[#allocation11 + $0x8] sm:$0xff]
    %v152 = vmul.f32 %v148, %v150
    %v153 = vmul.f32 %v149, %v151
    %v154 = vmul.f32 %v152, %v146
    %v155 = vmul.f32 %v153, %v147
    %156 = vst [vmem:[#allocation15] sm:$0xff] %v154
    %157 = vst [vmem:[#allocation15 + $0x8] sm:$0xff] %v155
    %v158 = vld [vmem:[#allocation8] sm:$0xff]
    %v159 = vld [vmem:[#allocation8 + $0x8] sm:$0xff]
    %v160 = vadd.f32 %v139, %v158
    %v161 = vadd.f32 %v140, %v159
    %v162 = vadd.f32 %v160, %v154
    %v163 = vadd.f32 %v161, %v155
    %v164 = vmax.f32 %v162, 0.0
    %v165 = vmax.f32 %v163, 0.0
    %166 = vst [vmem:[#allocation14] sm:$0xff] %v164
    %167 = vst [vmem:[#allocation14 + $0x8] sm:$0xff] %v165
    // Predicated region
    $region58: #{basic_block_forward.5} parent=1 // pred_check
      _
    $region59: #{basic_block_forward.5} parent=1 // pred_check_branch
      %169 = sbr.rel (0) target = $region61
    $region60: #{basic_block_forward.5} parent=1 // pred_region
      %s171 = ssub.s32 256, 256
      %172 = vsyncadd [#allocation4], %s171
      %s173 = sshll.u32 [#allocation14], 4
      %s174 = int_to_ptr.vmem [resolvable:$true] %s173
      %179 = dma.vmem_to_hbm [thread:$0]  %s174, 256, %s7, [#allocation4], 128, 128, 8
    $region61: #{basic_block_forward.5} parent=1 // pred_fallthru
      _
    // Predicated region
    $region62: #{basic_block_forward.5} parent=1 // pred_check
      _
    $region63: #{basic_block_forward.5} parent=1 // pred_check_branch
      %181 = sbr.rel (0) target = $region65
    $region64: #{basic_block_forward.5} parent=1 // pred_region
      %s183 = ssub.s32 256, 256
      %184 = vsyncadd [#allocation16], %s183
      %s185 = sshll.u32 [#allocation15], 4
      %s186 = int_to_ptr.vmem [resolvable:$true] %s185
      %191 = dma.vmem_to_hbm [thread:$0]  %s186, 256, %s8, [#allocation16], 128, 128, 8
    $region65: #{basic_block_forward.5} parent=1 // pred_fallthru
      _
    // Predicated region
    $region66: #{basic_block_forward.5} parent=1 // pred_check
      _
    $region67: #{basic_block_forward.5} parent=1 // pred_check_branch
      %193 = sbr.rel (0) target = $region69
    $region68: #{basic_block_forward.5} parent=1 // pred_region
      %194 = dma.done [#allocation4], 256
    $region69: #{basic_block_forward.5} parent=1 // pred_fallthru
      _
    // Predicated region
    $region70: #{basic_block_forward.5} parent=1 // pred_check
      _
    $region71: #{basic_block_forward.5} parent=1 // pred_check_branch
      %196 = sbr.rel (0) target = $region73
    $region72: #{basic_block_forward.5} parent=1 // pred_region
      %197 = dma.done [#allocation16], 256
    $region73: #{basic_block_forward.5} parent=1 // pred_fallthru
      _
    %198 = vsyncpa [#allocation3], 1
    %199 = vsyncpa [#allocation6], 1
    %200 = vsyncpa [#allocation9], 1
    %201 = vsyncpa [#allocation12], 1
    %202 = vsyncpa [#allocation4], 1
    %203 = vsyncpa [#allocation16], 1

// kernel: basic_block_forward.4
$region0: #{basic_block_forward.4}
  #allocation0 [shape = 'u32[]', space=smem, size = 0x4, offset = 0x4, fixed_abs, tag = 'smem constant byte address 0x4 - core index']
  #allocation1 [shape = 'u32[144,128]{1,0:T(1,128)}', space=vmem, size = 0x12000, scoped, tag = 'internal scratch']
  #allocation2 [shape = 'f32[18,18,4]{2,1,0:T(8,128)}', space=vmem, size = 0x36000, scoped, tag = 'scratch operand']
  #allocation3 [shape = 'f32[256,36]{1,0:T(8,128)}', space=vmem, size = 0x20000, scoped, tag = 'scratch operand']
  %s0 = inlined_call_operand.hbm [shape: f32[2,256,4], index: 0, kind: input, shape index: {}]
  %s1 = inlined_call_operand.hbm [shape: bf16[36,4], index: 1, kind: input, shape index: {}]
  %s2 = inlined_call_operand.hbm [shape: f32[1,1,4], index: 2, kind: input, shape index: {}]
  %s3 = inlined_call_operand.hbm [shape: f32[1,1,4], index: 3, kind: input, shape index: {}]
  %s4 = inlined_call_operand.hbm [shape: f32[2,256,4], index: 4, kind: output, shape index: {0}]
  %s5 = inlined_call_operand.hbm [shape: f32[2,1,4], index: 5, kind: output, shape index: {1}]
  %s6 = inlined_call_operand.hbm [shape: f32[2,1,4], index: 6, kind: output, shape index: {2}]
  %7 = xla_tuple %s4, %s5, %s6
  %s8 = sld [smem:[#allocation0]]
  $region81: #{basic_block_forward.4} parent=0
    _
  %s10 = ssub.s32 1, %s8
  %s11 = scalar_select 0, %s10, %s8
  $region1: #{basic_block_forward.4} parent=0
    #allocation4 [shape = 'u8[262144]{0}', space=vmem, size = 0x40000, scoped, tag = 'input window, operand 0']
    #allocation5 [shape = 's32[2]{0}', space=sflag, size = 0x8, scoped, tag = 'scoped memory for basic_block_forward.4']
    #allocation6 [shape = 's32[2]{0}', space=sflag, size = 0x8, scoped, tag = 'scoped memory for basic_block_forward.4']
    #allocation7 [shape = 'u8[10240]{0}', space=vmem, size = 0x2800, scoped, tag = 'input window, operand 1, single buffered']
    #allocation8 [shape = 's32[1]{0}', space=sflag, size = 0x4, scoped, tag = 'scoped memory for basic_block_forward.4']
    #allocation9 [shape = 'u8[512]{0}', space=vmem, size = 0x400, scoped, tag = 'input window, operand 2, single buffered']
    #allocation10 [shape = 'u8[512]{0}', space=vmem, size = 0x400, scoped, tag = 'input window, operand 3, single buffered']
    #allocation11 [shape = 's32[1]{0}', space=sflag, size = 0x4, scoped, tag = 'scoped memory for basic_block_forward.4']
    #allocation12 [shape = 'u8[262144]{0}', space=vmem, size = 0x40000, scoped, tag = 'output window, operand 0']
    #allocation13 [shape = 'u8[1024]{0}', space=vmem, size = 0x400, scoped, tag = 'output window, operand 1']
    #allocation14 [shape = 's32[2]{0}', space=sflag, size = 0x8, scoped, tag = 'scoped memory for basic_block_forward.4']
    #allocation15 [shape = 'u8[1024]{0}', space=vmem, size = 0x400, scoped, tag = 'output window, operand 2']
    %12 = vsyncpa [#allocation5], 0
    %s13 = scalar_lea.sflag [#allocation5], 1
    %14 = vsyncpa %s13, 0
    %15 = vsyncpa [#allocation8], 0
    %16 = vsyncpa [#allocation11], 0
    %17 = vsyncpa [#allocation6], 0
    %s18 = scalar_lea.sflag [#allocation6], 1
    %19 = vsyncpa %s18, 0
    %20 = vsyncpa [#allocation14], 0
    %s21 = scalar_lea.sflag [#allocation14], 1
    %22 = vsyncpa %s21, 0
    loop: start=0, step=1, limit=4
    $region2: #{basic_block_forward.4} parent=1 // loop_pre_header
      _
    $region3: #{basic_block_forward.4} parent=1 // loop_header
      %s24 = sphi 0, %s28
      %p25 = scmp.ge.s32.totalorder %s24, 4
      %s34 = sphi 0, %s36
      %s37 = sphi 0, %s34
      %s38 = sphi 0, %s37
      %s54 = sphi 0, %s38
      %s58 = sphi 0, %s58
      %s60 = sphi 0, %s58
      %s61 = sphi 0, %s60
      %s75 = sphi 0, %s61
      %s79 = sphi 0, %s79
      %s81 = sphi 0, %s79
      %s82 = sphi 0, %s81
      %s96 = sphi 0, %s82
      %s100 = sphi 0, %s100
      %s102 = sphi 0, %s100
      %s103 = sphi 0, %s102
      %s117 = sphi 0, %s103
      %s123 = sphi 0, %s125
      %s126 = sphi 0, %s123
      %s127 = sphi 0, %s126
      %s143 = sphi 0, %s127
      %s149 = sphi 0, %s151
      %s152 = sphi 0, %s149
      %s153 = sphi 0, %s152
      %s169 = sphi 0, %s153
      %s175 = sphi 0, %s177
      %s178 = sphi 0, %s175
      %s179 = sphi 0, %s178
      %s195 = sphi 0, %s179
    $region4: #{basic_block_forward.4} parent=1 // loop_header_branch
      %27 = sbr.rel (%p25) target = $region8
    $region5: #{basic_block_forward.4} parent=1 // loop_body
      %s29 = ssub.s32 %s24, 1
      %s30 = ssub.s32 %s24, 2
      %s31 = sadd.s32 %s24, 1
      %s32 = ssub.s32 %s24, %s31
      %p33 = scmp.eq.s32.totalorder %s32, 0
      %s35 = sadd.s32 %s34, 1
      %s36 = scalar_select %p33, %s34, %s35
      %p39 = pneg %p33
      %p40 = scmp.eq.s32.totalorder %s24, 1
      %p41 = por %p39, %p40
      %p42 = scmp.ne.s32.totalorder %s34, %s37
      %p43 = scmp.eq.s32.totalorder %s24, 0
      %p44 = por %p42, %p43
      %p45 = scmp.ne.s32.totalorder %s34, %s37
      %p46 = scmp.eq.s32.totalorder %s29, 1
      %p47 = por %p45, %p46
      %p48 = scmp.ne.s32.totalorder %s37, %s38
      %p49 = scmp.eq.s32.totalorder %s29, 0
      %p50 = por %p48, %p49
      %p51 = scmp.ne.s32.totalorder %s37, %s38
      %p52 = scmp.eq.s32.totalorder %s30, 1
      %p53 = por %p51, %p52
      %p55 = scmp.ne.s32.totalorder %s38, %s54
      %p56 = scmp.eq.s32.totalorder %s30, 0
      %p57 = por %p55, %p56
      %s59 = sadd.s32 %s58, 1
      %p62 = scmp.eq.s32.totalorder %s24, 1
      %p63 = scmp.ne.s32.totalorder %s58, %s60
      %p64 = scmp.eq.s32.totalorder %s24, 0
      %p65 = por %p63, %p64
      %p66 = scmp.ne.s32.totalorder %s58, %s60
      %p67 = scmp.eq.s32.totalorder %s29, 1
      %p68 = por %p66, %p67
      %p69 = scmp.ne.s32.totalorder %s60, %s61
      %p70 = scmp.eq.s32.totalorder %s29, 0
      %p71 = por %p69, %p70
      %p72 = scmp.ne.s32.totalorder %s60, %s61
      %p73 = scmp.eq.s32.totalorder %s30, 1
      %p74 = por %p72, %p73
      %p76 = scmp.ne.s32.totalorder %s61, %s75
      %p77 = scmp.eq.s32.totalorder %s30, 0
      %p78 = por %p76, %p77
      %s80 = sadd.s32 %s79, 1
      %p83 = scmp.eq.s32.totalorder %s24, 1
      %p84 = scmp.ne.s32.totalorder %s79, %s81
      %p85 = scmp.eq.s32.totalorder %s24, 0
      %p86 = por %p84, %p85
      %p87 = scmp.ne.s32.totalorder %s79, %s81
      %p88 = scmp.eq.s32.totalorder %s29, 1
      %p89 = por %p87, %p88
      %p90 = scmp.ne.s32.totalorder %s81, %s82
      %p91 = scmp.eq.s32.totalorder %s29, 0
      %p92 = por %p90, %p91
      %p93 = scmp.ne.s32.totalorder %s81, %s82
      %p94 = scmp.eq.s32.totalorder %s30, 1
      %p95 = por %p93, %p94
      %p97 = scmp.ne.s32.totalorder %s82, %s96
      %p98 = scmp.eq.s32.totalorder %s30, 0
      %p99 = por %p97, %p98
      %s101 = sadd.s32 %s100, 1
      %p104 = scmp.eq.s32.totalorder %s24, 1
      %p105 = scmp.ne.s32.totalorder %s100, %s102
      %p106 = scmp.eq.s32.totalorder %s24, 0
      %p107 = por %p105, %p106
      %p108 = scmp.ne.s32.totalorder %s100, %s102
      %p109 = scmp.eq.s32.totalorder %s29, 1
      %p110 = por %p108, %p109
      %p111 = scmp.ne.s32.totalorder %s102, %s103
      %p112 = scmp.eq.s32.totalorder %s29, 0
      %p113 = por %p111, %p112
      %p114 = scmp.ne.s32.totalorder %s102, %s103
      %p115 = scmp.eq.s32.totalorder %s30, 1
      %p116 = por %p114, %p115
      %p118 = scmp.ne.s32.totalorder %s103, %s117
      %p119 = scmp.eq.s32.totalorder %s30, 0
      %p120 = por %p118, %p119
      %s121 = ssub.s32 %s24, %s31
      %p122 = scmp.eq.s32.totalorder %s121, 0
      %s124 = sadd.s32 %s123, 1
      %s125 = scalar_select %p122, %s123, %s124
      %p128 = pneg %p122
      %p129 = scmp.eq.s32.totalorder %s24, 1
      %p130 = por %p128, %p129
      %p131 = scmp.ne.s32.totalorder %s123, %s126
      %p132 = scmp.eq.s32.totalorder %s24, 0
      %p133 = por %p131, %p132
      %p134 = scmp.ne.s32.totalorder %s123, %s126
      %p135 = scmp.eq.s32.totalorder %s29, 1
      %p136 = por %p134, %p135
      %p137 = scmp.ne.s32.totalorder %s126, %s127
      %p138 = scmp.eq.s32.totalorder %s29, 0
      %p139 = por %p137, %p138
      %p140 = scmp.ne.s32.totalorder %s126, %s127
      %p141 = scmp.eq.s32.totalorder %s30, 1
      %p142 = por %p140, %p141
      %p144 = scmp.ne.s32.totalorder %s127, %s143
      %p145 = scmp.eq.s32.totalorder %s30, 0
      %p146 = por %p144, %p145
      %s147 = ssub.s32 %s24, %s31
      %p148 = scmp.eq.s32.totalorder %s147, 0
      %s150 = sadd.s32 %s149, 1
      %s151 = scalar_select %p148, %s149, %s150
      %p154 = pneg %p148
      %p155 = scmp.eq.s32.totalorder %s24, 1
      %p156 = por %p154, %p155
      %p157 = scmp.ne.s32.totalorder %s149, %s152
      %p158 = scmp.eq.s32.totalorder %s24, 0
      %p159 = por %p157, %p158
      %p160 = scmp.ne.s32.totalorder %s149, %s152
      %p161 = scmp.eq.s32.totalorder %s29, 1
      %p162 = por %p160, %p161
      %p163 = scmp.ne.s32.totalorder %s152, %s153
      %p164 = scmp.eq.s32.totalorder %s29, 0
      %p165 = por %p163, %p164
      %p166 = scmp.ne.s32.totalorder %s152, %s153
      %p167 = scmp.eq.s32.totalorder %s30, 1
      %p168 = por %p166, %p167
      %p170 = scmp.ne.s32.totalorder %s153, %s169
      %p171 = scmp.eq.s32.totalorder %s30, 0
      %p172 = por %p170, %p171
      %s173 = ssub.s32 %s24, %s31
      %p174 = scmp.eq.s32.totalorder %s173, 0
      %s176 = sadd.s32 %s175, 1
      %s177 = scalar_select %p174, %s175, %s176
      %p180 = pneg %p174
      %p181 = scmp.eq.s32.totalorder %s24, 1
      %p182 = por %p180, %p181
      %p183 = scmp.ne.s32.totalorder %s175, %s178
      %p184 = scmp.eq.s32.totalorder %s24, 0
      %p185 = por %p183, %p184
      %p186 = scmp.ne.s32.totalorder %s175, %s178
      %p187 = scmp.eq.s32.totalorder %s29, 1
      %p188 = por %p186, %p187
      %p189 = scmp.ne.s32.totalorder %s178, %s179
      %p190 = scmp.eq.s32.totalorder %s29, 0
      %p191 = por %p189, %p190
      %p192 = scmp.ne.s32.totalorder %s178, %s179
      %p193 = scmp.eq.s32.totalorder %s30, 1
      %p194 = por %p192, %p193
      %p196 = scmp.ne.s32.totalorder %s179, %s195
      %p197 = scmp.eq.s32.totalorder %s30, 0
      %p198 = por %p196, %p197
      %p199 = scmp.le.s32.totalorder 1, %s24
      %p200 = scmp.lt.s32.totalorder %s24, 3
      %p201 = pnand %p199, %p200
      %p202 = pneg %p201
      // Predicated region
      $region9: #{basic_block_forward.4} parent=5 // pred_check
        _
      $region10: #{basic_block_forward.4} parent=5 // pred_check_branch
        %204 = sbr.rel (%p201) target = $region12
      $region11: #{basic_block_forward.4} parent=5 // pred_region
        %s205 = ssub.s32 %s24, 1
        // Predicated region
        $region13: #{basic_block_forward.4} parent=11 // pred_check
          %p206 = pneg %p71
        $region14: #{basic_block_forward.4} parent=11 // pred_check_branch
          %208 = sbr.rel (%p206) target = $region16
        $region15: #{basic_block_forward.4} parent=11 // pred_region
          %s210 = ssub.s32 320, 320
          %211 = vsyncadd [#allocation8], %s210
          %s212 = sshll.u32 [#allocation7], 4
          %s213 = int_to_ptr.vmem [resolvable:$true] %s212
          %218 = dma.hbm_to_vmem [thread:$0]  %s1, 320, %s213, [#allocation8], 64, 64, 4
        $region16: #{basic_block_forward.4} parent=11 // pred_fallthru
          _
        // Predicated region
        $region17: #{basic_block_forward.4} parent=11 // pred_check
          %p219 = pneg %p92
        $region18: #{basic_block_forward.4} parent=11 // pred_check_branch
          %221 = sbr.rel (%p219) target = $region20
        $region19: #{basic_block_forward.4} parent=11 // pred_region
          %s223 = ssub.s32 16, 16
          %224 = vsyncadd [#allocation8], %s223
          %s226 = sshll.u32 [#allocation9], 4
          %s227 = int_to_ptr.vmem [resolvable:$true] %s226
          %229 = dma.hbm_to_vmem [thread:$0]  %s2, 16, %s227, [#allocation8]
        $region20: #{basic_block_forward.4} parent=11 // pred_fallthru
          _
        // Predicated region
        $region21: #{basic_block_forward.4} parent=11 // pred_check
          %p230 = pneg %p113
        $region22: #{basic_block_forward.4} parent=11 // pred_check_branch
          %232 = sbr.rel (%p230) target = $region24
        $region23: #{basic_block_forward.4} parent=11 // pred_region
          %s234 = ssub.s32 16, 16
          %235 = vsyncadd [#allocation11], %s234
          %s237 = sshll.u32 [#allocation10], 4
          %s238 = int_to_ptr.vmem [resolvable:$true] %s237
          %240 = dma.hbm_to_vmem [thread:$0]  %s3, 16, %s238, [#allocation11]
        $region24: #{basic_block_forward.4} parent=11 // pred_fallthru
          _
      $region12: #{basic_block_forward.4} parent=5 // pred_fallthru
        _
      %p241 = scmp.lt.s32.totalorder %s24, 2
      // Predicated region
      $region25: #{basic_block_forward.4} parent=5 // pred_check
        %p242 = pneg %p241
      $region26: #{basic_block_forward.4} parent=5 // pred_check_branch
        %244 = sbr.rel (%p242) target = $region28
      $region27: #{basic_block_forward.4} parent=5 // pred_region
        // Predicated region
        $region29: #{basic_block_forward.4} parent=27 // pred_check
          %p245 = pneg %p44
        $region30: #{basic_block_forward.4} parent=27 // pred_check_branch
          %247 = sbr.rel (%p245) target = $region32
        $region31: #{basic_block_forward.4} parent=27 // pred_region
          %s248 = sand.u32 %s34, 1
          %s249 = scalar_lea.sflag [#allocation5], %s248
          %s250 = sand.u32 %s34, 1
          %s251 = smul.addr %s250, 256
          %s252 = scalar_lea.vmem [#allocation4], %s251
          %s254 = ssub.s32 4096, 4096
          %255 = vsyncadd %s249, %s254
          %s256 = smul.addr %s24, 32
          %s257 = smul.addr %s256, 128
          %s258 = scalar_lea.hbm %s0, %s257
          %s259 = sshll.u32 %s252, 4
          %s260 = int_to_ptr.vmem [resolvable:$true] %s259
          %265 = dma.hbm_to_vmem [thread:$0]  %s258, 4096, %s260, %s249, 128, 128, 8
        $region32: #{basic_block_forward.4} parent=27 // pred_fallthru
          _
      $region28: #{basic_block_forward.4} parent=5 // pred_fallthru
        _
      %p266 = scmp.le.s32.totalorder 1, %s24
      %p267 = scmp.lt.s32.totalorder %s24, 3
      %p268 = pnand %p266, %p267
      %p269 = pneg %p268
      // Predicated region
      $region33: #{basic_block_forward.4} parent=5 // pred_check
        _
      $region34: #{basic_block_forward.4} parent=5 // pred_check_branch
        %271 = sbr.rel (%p268) target = $region36
      $region35: #{basic_block_forward.4} parent=5 // pred_region
        %s272 = ssub.s32 %s24, 1
        %s273 = sand.u32 %s37, 1
        %s274 = scalar_lea.sflag [#allocation5], %s273
        %s275 = sand.u32 %s37, 1
        %s276 = smul.addr %s275, 256
        %s277 = scalar_lea.vmem [#allocation4], %s276
        // Predicated region
        $region37: #{basic_block_forward.4} parent=35 // pred_check
          %p278 = pneg %p50
        $region38: #{basic_block_forward.4} parent=35 // pred_check_branch
          %280 = sbr.rel (%p278) target = $region40
        $region39: #{basic_block_forward.4} parent=35 // pred_region
          %281 = dma.done %s274, 4096
        $region40: #{basic_block_forward.4} parent=35 // pred_fallthru
          _
        // Predicated region
        $region41: #{basic_block_forward.4} parent=35 // pred_check
          %p282 = pneg %p71
        $region42: #{basic_block_forward.4} parent=35 // pred_check_branch
          %284 = sbr.rel (%p282) target = $region44
        $region43: #{basic_block_forward.4} parent=35 // pred_region
          %285 = dma.done [#allocation8], 320
        $region44: #{basic_block_forward.4} parent=35 // pred_fallthru
          _
        // Predicated region
        $region45: #{basic_block_forward.4} parent=35 // pred_check
          %p286 = pneg %p92
        $region46: #{basic_block_forward.4} parent=35 // pred_check_branch
          %288 = sbr.rel (%p286) target = $region48
        $region47: #{basic_block_forward.4} parent=35 // pred_region
          %289 = dma.done [#allocation8], 16
        $region48: #{basic_block_forward.4} parent=35 // pred_fallthru
          _
        // Predicated region
        $region49: #{basic_block_forward.4} parent=35 // pred_check
          %p290 = pneg %p113
        $region50: #{basic_block_forward.4} parent=35 // pred_check_branch
          %292 = sbr.rel (%p290) target = $region52
        $region51: #{basic_block_forward.4} parent=35 // pred_region
          %293 = dma.done [#allocation11], 16
        $region52: #{basic_block_forward.4} parent=35 // pred_fallthru
          _
        %s294 = sand.u32 %s37, 1
        %s295 = scalar_lea.sflag [#allocation5], %s294
        %s296 = sand.u32 %s37, 1
        %s297 = smul.addr %s296, 256
        %s298 = scalar_lea.vmem [#allocation4], %s297
        %p299 = pneg %p50
        %p300 = pneg %p47
        %p301 = pneg %p71
        %p302 = pneg %p68
        %p303 = pneg %p92
        %p304 = pneg %p89
        %p305 = pneg %p113
        %p306 = pneg %p110
        %p307 = pneg %p139
        %p308 = pneg %p136
        %s309 = sand.u32 %s126, 1
        %s310 = scalar_lea.sflag [#allocation6], %s309
        %s311 = sand.u32 %s126, 1
        %s312 = smul.addr %s311, 256
        %s313 = scalar_lea.vmem [#allocation12], %s312
        %p314 = pneg %p165
        %p315 = pneg %p162
        %s316 = sand.u32 %s29, 1
        %s317 = scalar_lea.sflag [#allocation14], %s316
        %s318 = sand.u32 %s152, 1
        %s319 = scalar_lea.vmem [#allocation13], %s318
        %p320 = pneg %p191
        %p321 = pneg %p188
        %s322 = sand.u32 %s29, 1
        %s323 = scalar_lea.sflag [#allocation14], %s322
        %s324 = sand.u32 %s178, 1
        %s325 = scalar_lea.vmem [#allocation15], %s324
        %vm327 = vcmask 31744
        %328 = vst.msk [vmem:[#allocation2] sm:$0xff] %vm327, 0.0
        %329 = vst.msk [vmem:[#allocation2 + $0x8] sm:$0xff] %vm327, 0.0
        %vm330 = vcmask 25600
        %331 = vst.msk [vmem:[#allocation2 + $0x10] sm:$0x3] %vm330, 0.0
        %s332 = scalar_lea.vmem [#allocation2], 408
        %333 = vst.msk [vmem:[%s332] sm:$0xff] %vm327, 0.0
        %334 = vst.msk [vmem:[%s332 + $0x8] sm:$0xff] %vm327, 0.0
        %335 = vst.msk [vmem:[%s332 + $0x10] sm:$0x3] %vm330, 0.0
        %vm336 = vcmask 24576
        %337 = vst.msk [vmem:[#allocation2] sm:$0x1] %vm336, 0.0
        %338 = vst.msk [vmem:[#allocation2 + $0x18] sm:$0x1] %vm336, 0.0
        %339 = vst.msk [vmem:[#allocation2 + $0x30] sm:$0x1] %vm336, 0.0
        %340 = vst.msk [vmem:[#allocation2 + $0x48] sm:$0x1] %vm336, 0.0
        %341 = vst.msk [vmem:[#allocation2 + $0x60] sm:$0x1] %vm336, 0.0
        %342 = vst.msk [vmem:[#allocation2 + $0x78] sm:$0x1] %vm336, 0.0
        %343 = vst.msk [vmem:[#allocation2 + $0x90] sm:$0x1] %vm336, 0.0
        %344 = vst.msk [vmem:[#allocation2 + $0xa8] sm:$0x1] %vm336, 0.0
        %345 = vst.msk [vmem:[#allocation2 + $0xc0] sm:$0x1] %vm336, 0.0
        %346 = vst.msk [vmem:[#allocation2 + $0xd8] sm:$0x1] %vm336, 0.0
        %347 = vst.msk [vmem:[#allocation2 + $0xf0] sm:$0x1] %vm336, 0.0
        %348 = vst.msk [vmem:[#allocation2 + $0x108] sm:$0x1] %vm336, 0.0
        %349 = vst.msk [vmem:[#allocation2 + $0x120] sm:$0x1] %vm336, 0.0
        %350 = vst.msk [vmem:[#allocation2 + $0x138] sm:$0x1] %vm336, 0.0
        %351 = vst.msk [vmem:[#allocation2 + $0x150] sm:$0x1] %vm336, 0.0
        %352 = vst.msk [vmem:[#allocation2 + $0x168] sm:$0x1] %vm336, 0.0
        %353 = vst.msk [vmem:[#allocation2 + $0x180] sm:$0x1] %vm336, 0.0
        %354 = vst.msk [vmem:[#allocation2 + $0x198] sm:$0x1] %vm336, 0.0
        %355 = vst.msk [vmem:[#allocation2 + $0x11] sm:$0x1] %vm336, 0.0
        %356 = vst.msk [vmem:[#allocation2 + $0x29] sm:$0x1] %vm336, 0.0
        %357 = vst.msk [vmem:[#allocation2 + $0x41] sm:$0x1] %vm336, 0.0
        %358 = vst.msk [vmem:[#allocation2 + $0x59] sm:$0x1] %vm336, 0.0
        %359 = vst.msk [vmem:[#allocation2 + $0x71] sm:$0x1] %vm336, 0.0
        %360 = vst.msk [vmem:[#allocation2 + $0x89] sm:$0x1] %vm336, 0.0
        %361 = vst.msk [vmem:[#allocation2 + $0xa1] sm:$0x1] %vm336, 0.0
        %362 = vst.msk [vmem:[#allocation2 + $0xb9] sm:$0x1] %vm336, 0.0
        %363 = vst.msk [vmem:[#allocation2 + $0xd1] sm:$0x1] %vm336, 0.0
        %364 = vst.msk [vmem:[#allocation2 + $0xe9] sm:$0x1] %vm336, 0.0
        %365 = vst.msk [vmem:[#allocation2 + $0x101] sm:$0x1] %vm336, 0.0
        %366 = vst.msk [vmem:[#allocation2 + $0x119] sm:$0x1] %vm336, 0.0
        %367 = vst.msk [vmem:[#allocation2 + $0x131] sm:$0x1] %vm336, 0.0
        %368 = vst.msk [vmem:[#allocation2 + $0x149] sm:$0x1] %vm336, 0.0
        %369 = vst.msk [vmem:[#allocation2 + $0x161] sm:$0x1] %vm336, 0.0
        %370 = vst.msk [vmem:[#allocation2 + $0x179] sm:$0x1] %vm336, 0.0
        %371 = vst.msk [vmem:[#allocation2 + $0x191] sm:$0x1] %vm336, 0.0
        %372 = vst.msk [vmem:[#allocation2 + $0x1a9] sm:$0x1] %vm336, 0.0
        %v373 = vld [vmem:[%s277] sm:$0xff]
        %v374 = vld [vmem:[%s277 + $0x8] sm:$0xff]
        %v375 = vld [vmem:[%s277 + $0x10] sm:$0xff]
        %v376 = vld [vmem:[%s277 + $0x18] sm:$0xff]
        %v377 = vld [vmem:[%s277 + $0x20] sm:$0xff]
        %v378 = vld [vmem:[%s277 + $0x28] sm:$0xff]
        %v379 = vld [vmem:[%s277 + $0x30] sm:$0xff]
        %v380 = vld [vmem:[%s277 + $0x38] sm:$0xff]
        %v381 = vld [vmem:[%s277 + $0x40] sm:$0xff]
        %v382 = vld [vmem:[%s277 + $0x48] sm:$0xff]
        %v383 = vld [vmem:[%s277 + $0x50] sm:$0xff]
        %v384 = vld [vmem:[%s277 + $0x58] sm:$0xff]
        %v385 = vld [vmem:[%s277 + $0x60] sm:$0xff]
        %v386 = vld [vmem:[%s277 + $0x68] sm:$0xff]
        %v387 = vld [vmem:[%s277 + $0x70] sm:$0xff]
        %v388 = vld [vmem:[%s277 + $0x78] sm:$0xff]
        %v389 = vld [vmem:[%s277 + $0x80] sm:$0xff]
        %v390 = vld [vmem:[%s277 + $0x88] sm:$0xff]
        %v391 = vld [vmem:[%s277 + $0x90] sm:$0xff]
        %v392 = vld [vmem:[%s277 + $0x98] sm:$0xff]
        %v393 = vld [vmem:[%s277 + $0xa0] sm:$0xff]
        %v394 = vld [vmem:[%s277 + $0xa8] sm:$0xff]
        %v395 = vld [vmem:[%s277 + $0xb0] sm:$0xff]
        %v396 = vld [vmem:[%s277 + $0xb8] sm:$0xff]
        %v397 = vld [vmem:[%s277 + $0xc0] sm:$0xff]
        %v398 = vld [vmem:[%s277 + $0xc8] sm:$0xff]
        %v399 = vld [vmem:[%s277 + $0xd0] sm:$0xff]
        %v400 = vld [vmem:[%s277 + $0xd8] sm:$0xff]
        %v401 = vld [vmem:[%s277 + $0xe0] sm:$0xff]
        %v402 = vld [vmem:[%s277 + $0xe8] sm:$0xff]
        %v403 = vld [vmem:[%s277 + $0xf0] sm:$0xff]
        %v404 = vld [vmem:[%s277 + $0xf8] sm:$0xff]
        %v405 = vld [vmem:[#allocation9] sm:$0x1]
        %v407 = vlaneseq
        %v408 = vshrl.u32 %v407, 7
        %v409 = vsub.s32 0, %v408
        %v410 = vrot.slane %v405, %v409
        %v412 = vsub.f32 %v373, %v410
        %v413 = vsub.f32 %v374, %v410
        %v414 = vsub.f32 %v375, %v410
        %v415 = vsub.f32 %v376, %v410
        %v416 = vsub.f32 %v377, %v410
        %v417 = vsub.f32 %v378, %v410
        %v418 = vsub.f32 %v379, %v410
        %v419 = vsub.f32 %v380, %v410
        %v420 = vsub.f32 %v381, %v410
        %v421 = vsub.f32 %v382, %v410
        %v422 = vsub.f32 %v383, %v410
        %v423 = vsub.f32 %v384, %v410
        %v424 = vsub.f32 %v385, %v410
        %v425 = vsub.f32 %v386, %v410
        %v426 = vsub.f32 %v387, %v410
        %v427 = vsub.f32 %v388, %v410
        %v428 = vsub.f32 %v389, %v410
        %v429 = vsub.f32 %v390, %v410
        %v430 = vsub.f32 %v391, %v410
        %v431 = vsub.f32 %v392, %v410
        %v432 = vsub.f32 %v393, %v410
        %v433 = vsub.f32 %v394, %v410
        %v434 = vsub.f32 %v395, %v410
        %v435 = vsub.f32 %v396, %v410
        %v436 = vsub.f32 %v397, %v410
        %v437 = vsub.f32 %v398, %v410
        %v438 = vsub.f32 %v399, %v410
        %v439 = vsub.f32 %v400, %v410
        %v440 = vsub.f32 %v401, %v410
        %v441 = vsub.f32 %v402, %v410
        %v442 = vsub.f32 %v403, %v410
        %v443 = vsub.f32 %v404, %v410
        %v444 = vld [vmem:[#allocation10] sm:$0x1]
        %v446 = vlaneseq
        %v447 = vshrl.u32 %v446, 7
        %v448 = vsub.s32 0, %v447
        %v449 = vrot.slane %v444, %v448
        %v451 = vmul.f32 %v412, %v449
        %v452 = vmul.f32 %v413, %v449
        %v453 = vmul.f32 %v414, %v449
        %v454 = vmul.f32 %v415, %v449
        %v455 = vmul.f32 %v416, %v449
        %v456 = vmul.f32 %v417, %v449
        %v457 = vmul.f32 %v418, %v449
        %v458 = vmul.f32 %v419, %v449
        %v459 = vmul.f32 %v420, %v449
        %v460 = vmul.f32 %v421, %v449
        %v461 = vmul.f32 %v422, %v449
        %v462 = vmul.f32 %v423, %v449
        %v463 = vmul.f32 %v424, %v449
        %v464 = vmul.f32 %v425, %v449
        %v465 = vmul.f32 %v426, %v449
        %v466 = vmul.f32 %v427, %v449
        %v467 = vmul.f32 %v428, %v449
        %v468 = vmul.f32 %v429, %v449
        %v469 = vmul.f32 %v430, %v449
        %v470 = vmul.f32 %v431, %v449
        %v471 = vmul.f32 %v432, %v449
        %v472 = vmul.f32 %v433, %v449
        %v473 = vmul.f32 %v434, %v449
        %v474 = vmul.f32 %v435, %v449
        %v475 = vmul.f32 %v436, %v449
        %v476 = vmul.f32 %v437, %v449
        %v477 = vmul.f32 %v438, %v449
        %v478 = vmul.f32 %v439, %v449
        %v479 = vmul.f32 %v440, %v449
        %v480 = vmul.f32 %v441, %v449
        %v481 = vmul.f32 %v442, %v449
        %v482 = vmul.f32 %v443, %v449
        %v483 = vmax.f32 %v451, 0.0
        %v484 = vmax.f32 %v452, 0.0
        %v485 = vmax.f32 %v453, 0.0
        %v486 = vmax.f32 %v454, 0.0
        %v487 = vmax.f32 %v455, 0.0
        %v488 = vmax.f32 %v456, 0.0
        %v489 = vmax.f32 %v457, 0.0
        %v490 = vmax.f32 %v458, 0.0
        %v491 = vmax.f32 %v459, 0.0
        %v492 = vmax.f32 %v460, 0.0
        %v493 = vmax.f32 %v461, 0.0
        %v494 = vmax.f32 %v462, 0.0
        %v495 = vmax.f32 %v463, 0.0
        %v496 = vmax.f32 %v464, 0.0
        %v497 = vmax.f32 %v465, 0.0
        %v498 = vmax.f32 %v466, 0.0
        %v499 = vmax.f32 %v467, 0.0
        %v500 = vmax.f32 %v468, 0.0
        %v501 = vmax.f32 %v469, 0.0
        %v502 = vmax.f32 %v470, 0.0
        %v503 = vmax.f32 %v471, 0.0
        %v504 = vmax.f32 %v472, 0.0
        %v505 = vmax.f32 %v473, 0.0
        %v506 = vmax.f32 %v474, 0.0
        %v507 = vmax.f32 %v475, 0.0
        %v508 = vmax.f32 %v476, 0.0
        %v509 = vmax.f32 %v477, 0.0
        %v510 = vmax.f32 %v478, 0.0
        %v511 = vmax.f32 %v479, 0.0
        %v512 = vmax.f32 %v480, 0.0
        %v513 = vmax.f32 %v481, 0.0
        %v514 = vmax.f32 %v482, 0.0
        %s515 = scalar_lea.vmem [#allocation2], 24
        %516 = vst.msk [vmem:[%s515 + $0x1] sm:$0xff] %vm327, %v483
        %517 = vst.msk [vmem:[%s515 + $0x9] sm:$0xff] %vm327, %v484
        %518 = vst.msk [vmem:[%s515 + $0x19] sm:$0xff] %vm327, %v485
        %519 = vst.msk [vmem:[%s515 + $0x21] sm:$0xff] %vm327, %v486
        %520 = vst.msk [vmem:[%s515 + $0x31] sm:$0xff] %vm327, %v487
        %521 = vst.msk [vmem:[%s515 + $0x39] sm:$0xff] %vm327, %v488
        %522 = vst.msk [vmem:[%s515 + $0x49] sm:$0xff] %vm327, %v489
        %523 = vst.msk [vmem:[%s515 + $0x51] sm:$0xff] %vm327, %v490
        %524 = vst.msk [vmem:[%s515 + $0x61] sm:$0xff] %vm327, %v491
        %525 = vst.msk [vmem:[%s515 + $0x69] sm:$0xff] %vm327, %v492
        %526 = vst.msk [vmem:[%s515 + $0x79] sm:$0xff] %vm327, %v493
        %527 = vst.msk [vmem:[%s515 + $0x81] sm:$0xff] %vm327, %v494
        %528 = vst.msk [vmem:[%s515 + $0x91] sm:$0xff] %vm327, %v495
        %529 = vst.msk [vmem:[%s515 + $0x99] sm:$0xff] %vm327, %v496
        %530 = vst.msk [vmem:[%s515 + $0xa9] sm:$0xff] %vm327, %v497
        %531 = vst.msk [vmem:[%s515 + $0xb1] sm:$0xff] %vm327, %v498
        %532 = vst.msk [vmem:[%s515 + $0xc1] sm:$0xff] %vm327, %v499
        %533 = vst.msk [vmem:[%s515 + $0xc9] sm:$0xff] %vm327, %v500
        %534 = vst.msk [vmem:[%s515 + $0xd9] sm:$0xff] %vm327, %v501
        %535 = vst.msk [vmem:[%s515 + $0xe1] sm:$0xff] %vm327, %v502
        %536 = vst.msk [vmem:[%s515 + $0xf1] sm:$0xff] %vm327, %v503
        %537 = vst.msk [vmem:[%s515 + $0xf9] sm:$0xff] %vm327, %v504
        %538 = vst.msk [vmem:[%s515 + $0x109] sm:$0xff] %vm327, %v505
        %539 = vst.msk [vmem:[%s515 + $0x111] sm:$0xff] %vm327, %v506
        %540 = vst.msk [vmem:[%s515 + $0x121] sm:$0xff] %vm327, %v507
        %541 = vst.msk [vmem:[%s515 + $0x129] sm:$0xff] %vm327, %v508
        %542 = vst.msk [vmem:[%s515 + $0x139] sm:$0xff] %vm327, %v509
        %543 = vst.msk [vmem:[%s515 + $0x141] sm:$0xff] %vm327, %v510
        %544 = vst.msk [vmem:[%s515 + $0x151] sm:$0xff] %vm327, %v511
        %545 = vst.msk [vmem:[%s515 + $0x159] sm:$0xff] %vm327, %v512
        %546 = vst.msk [vmem:[%s515 + $0x169] sm:$0xff] %vm327, %v513
        %547 = vst.msk [vmem:[%s515 + $0x171] sm:$0xff] %vm327, %v514
        %v548 = vld [vmem:[#allocation2] sm:$0xff]
        %v549 = vld [vmem:[#allocation2 + $0x8] sm:$0xff]
        %v550 = vld [vmem:[#allocation2 + $0x18] sm:$0xff]
        %v551 = vld [vmem:[#allocation2 + $0x20] sm:$0xff]
        %v552 = vld [vmem:[#allocation2 + $0x30] sm:$0xff]
        %v553 = vld [vmem:[#allocation2 + $0x38] sm:$0xff]
        %v554 = vld [vmem:[#allocation2 + $0x48] sm:$0xff]
        %v555 = vld [vmem:[#allocation2 + $0x50] sm:$0xff]
        %v556 = vld [vmem:[#allocation2 + $0x60] sm:$0xff]
        %v557 = vld [vmem:[#allocation2 + $0x68] sm:$0xff]
        %v558 = vld [vmem:[#allocation2 + $0x78] sm:$0xff]
        %v559 = vld [vmem:[#allocation2 + $0x80] sm:$0xff]
        %v560 = vld [vmem:[#allocation2 + $0x90] sm:$0xff]
        %v561 = vld [vmem:[#allocation2 + $0x98] sm:$0xff]
        %v562 = vld [vmem:[#allocation2 + $0xa8] sm:$0xff]
        %v563 = vld [vmem:[#allocation2 + $0xb0] sm:$0xff]
        %v564 = vld [vmem:[#allocation2 + $0xc0] sm:$0xff]
        %v565 = vld [vmem:[#allocation2 + $0xc8] sm:$0xff]
        %v566 = vld [vmem:[#allocation2 + $0xd8] sm:$0xff]
        %v567 = vld [vmem:[#allocation2 + $0xe0] sm:$0xff]
        %v568 = vld [vmem:[#allocation2 + $0xf0] sm:$0xff]
        %v569 = vld [vmem:[#allocation2 + $0xf8] sm:$0xff]
        %v570 = vld [vmem:[#allocation2 + $0x108] sm:$0xff]
        %v571 = vld [vmem:[#allocation2 + $0x110] sm:$0xff]
        %v572 = vld [vmem:[#allocation2 + $0x120] sm:$0xff]
        %v573 = vld [vmem:[#allocation2 + $0x128] sm:$0xff]
        %v574 = vld [vmem:[#allocation2 + $0x138] sm:$0xff]
        %v575 = vld [vmem:[#allocation2 + $0x140] sm:$0xff]
        %v576 = vld [vmem:[#allocation2 + $0x150] sm:$0xff]
        %v577 = vld [vmem:[#allocation2 + $0x158] sm:$0xff]
        %v578 = vld [vmem:[#allocation2 + $0x168] sm:$0xff]
        %v579 = vld [vmem:[#allocation2 + $0x170] sm:$0xff]
        %580 = vst.msk [vmem:[#allocation3] sm:$0xff] %vm327, %v548
        %581 = vst.msk [vmem:[#allocation3 + $0x8] sm:$0xff] %vm327, %v549
        %582 = vst.msk [vmem:[#allocation3 + $0x10] sm:$0xff] %vm327, %v550
        %583 = vst.msk [vmem:[#allocation3 + $0x18] sm:$0xff] %vm327, %v551
        %584 = vst.msk [vmem:[#allocation3 + $0x20] sm:$0xff] %vm327, %v552
        %585 = vst.msk [vmem:[#allocation3 + $0x28] sm:$0xff] %vm327, %v553
        %586 = vst.msk [vmem:[#allocation3 + $0x30] sm:$0xff] %vm327, %v554
        %587 = vst.msk [vmem:[#allocation3 + $0x38] sm:$0xff] %vm327, %v555
        %588 = vst.msk [vmem:[#allocation3 + $0x40] sm:$0xff] %vm327, %v556
        %589 = vst.msk [vmem:[#allocation3 + $0x48] sm:$0xff] %vm327, %v557
        %590 = vst.msk [vmem:[#allocation3 + $0x50] sm:$0xff] %vm327, %v558
        %591 = vst.msk [vmem:[#allocation3 + $0x58] sm:$0xff] %vm327, %v559
        %592 = vst.msk [vmem:[#allocation3 + $0x60] sm:$0xff] %vm327, %v560
        %593 = vst.msk [vmem:[#allocation3 + $0x68] sm:$0xff] %vm327, %v561
        %594 = vst.msk [vmem:[#allocation3 + $0x70] sm:$0xff] %vm327, %v562
        %595 = vst.msk [vmem:[#allocation3 + $0x78] sm:$0xff] %vm327, %v563
        %596 = vst.msk [vmem:[#allocation3 + $0x80] sm:$0xff] %vm327, %v564
        %597 = vst.msk [vmem:[#allocation3 + $0x88] sm:$0xff] %vm327, %v565
        %598 = vst.msk [vmem:[#allocation3 + $0x90] sm:$0xff] %vm327, %v566
        %599 = vst.msk [vmem:[#allocation3 + $0x98] sm:$0xff] %vm327, %v567
        %600 = vst.msk [vmem:[#allocation3 + $0xa0] sm:$0xff] %vm327, %v568
        %601 = vst.msk [vmem:[#allocation3 + $0xa8] sm:$0xff] %vm327, %v569
        %602 = vst.msk [vmem:[#allocation3 + $0xb0] sm:$0xff] %vm327, %v570
        %603 = vst.msk [vmem:[#allocation3 + $0xb8] sm:$0xff] %vm327, %v571
        %604 = vst.msk [vmem:[#allocation3 + $0xc0] sm:$0xff] %vm327, %v572
        %605 = vst.msk [vmem:[#allocation3 + $0xc8] sm:$0xff] %vm327, %v573
        %606 = vst.msk [vmem:[#allocation3 + $0xd0] sm:$0xff] %vm327, %v574
        %607 = vst.msk [vmem:[#allocation3 + $0xd8] sm:$0xff] %vm327, %v575
        %608 = vst.msk [vmem:[#allocation3 + $0xe0] sm:$0xff] %vm327, %v576
        %609 = vst.msk [vmem:[#allocation3 + $0xe8] sm:$0xff] %vm327, %v577
        %610 = vst.msk [vmem:[#allocation3 + $0xf0] sm:$0xff] %vm327, %v578
        %611 = vst.msk [vmem:[#allocation3 + $0xf8] sm:$0xff] %vm327, %v579
        %v612 = vld [vmem:[#allocation2 + $0x1] sm:$0xff]
        %v613 = vld [vmem:[#allocation2 + $0x9] sm:$0xff]
        %v614 = vld [vmem:[#allocation2 + $0x19] sm:$0xff]
        %v615 = vld [vmem:[#allocation2 + $0x21] sm:$0xff]
        %v616 = vld [vmem:[#allocation2 + $0x31] sm:$0xff]
        %v617 = vld [vmem:[#allocation2 + $0x39] sm:$0xff]
        %v618 = vld [vmem:[#allocation2 + $0x49] sm:$0xff]
        %v619 = vld [vmem:[#allocation2 + $0x51] sm:$0xff]
        %v620 = vld [vmem:[#allocation2 + $0x61] sm:$0xff]
        %v621 = vld [vmem:[#allocation2 + $0x69] sm:$0xff]
        %v622 = vld [vmem:[#allocation2 + $0x79] sm:$0xff]
        %v623 = vld [vmem:[#allocation2 + $0x81] sm:$0xff]
        %v624 = vld [vmem:[#allocation2 + $0x91] sm:$0xff]
        %v625 = vld [vmem:[#allocation2 + $0x99] sm:$0xff]
        %v626 = vld [vmem:[#allocation2 + $0xa9] sm:$0xff]
        %v627 = vld [vmem:[#allocation2 + $0xb1] sm:$0xff]
        %v628 = vld [vmem:[#allocation2 + $0xc1] sm:$0xff]
        %v629 = vld [vmem:[#allocation2 + $0xc9] sm:$0xff]
        %v630 = vld [vmem:[#allocation2 + $0xd9] sm:$0xff]
        %v631 = vld [vmem:[#allocation2 + $0xe1] sm:$0xff]
        %v632 = vld [vmem:[#allocation2 + $0xf1] sm:$0xff]
        %v633 = vld [vmem:[#allocation2 + $0xf9] sm:$0xff]
        %v634 = vld [vmem:[#allocation2 + $0x109] sm:$0xff]
        %v635 = vld [vmem:[#allocation2 + $0x111] sm:$0xff]
        %v636 = vld [vmem:[#allocation2 + $0x121] sm:$0xff]
        %v637 = vld [vmem:[#allocation2 + $0x129] sm:$0xff]
        %v638 = vld [vmem:[#allocation2 + $0x139] sm:$0xff]
        %v639 = vld [vmem:[#allocation2 + $0x141] sm:$0xff]
        %v640 = vld [vmem:[#allocation2 + $0x151] sm:$0xff]
        %v641 = vld [vmem:[#allocation2 + $0x159] sm:$0xff]
        %v642 = vld [vmem:[#allocation2 + $0x169] sm:$0xff]
        %v643 = vld [vmem:[#allocation2 + $0x171] sm:$0xff]
        %676 = vrot.lane.b32.xlu0 %v612, 4
        %v677 = vpop.permute.xlu0 %676
        %678 = vrot.lane.b32.xlu0 %v613, 4
        %v679 = vpop.permute.xlu0 %678
        %680 = vrot.lane.b32.xlu0 %v614, 4
        %v681 = vpop.permute.xlu0 %680
        %682 = vrot.lane.b32.xlu0 %v615, 4
        %v683 = vpop.permute.xlu0 %682
        %684 = vrot.lane.b32.xlu0 %v616, 4
        %v685 = vpop.permute.xlu0 %684
        %686 = vrot.lane.b32.xlu0 %v617, 4
        %v687 = vpop.permute.xlu0 %686
        %688 = vrot.lane.b32.xlu0 %v618, 4
        %v689 = vpop.permute.xlu0 %688
        %690 = vrot.lane.b32.xlu0 %v619, 4
        %v691 = vpop.permute.xlu0 %690
        %692 = vrot.lane.b32.xlu0 %v620, 4
        %v693 = vpop.permute.xlu0 %692
        %694 = vrot.lane.b32.xlu0 %v621, 4
        %v695 = vpop.permute.xlu0 %694
        %696 = vrot.lane.b32.xlu0 %v622, 4
        %v697 = vpop.permute.xlu0 %696
        %698 = vrot.lane.b32.xlu0 %v623, 4
        %v699 = vpop.permute.xlu0 %698
        %700 = vrot.lane.b32.xlu0 %v624, 4
        %v701 = vpop.permute.xlu0 %700
        %702 = vrot.lane.b32.xlu0 %v625, 4
        %v703 = vpop.permute.xlu0 %702
        %704 = vrot.lane.b32.xlu0 %v626, 4
        %v705 = vpop.permute.xlu0 %704
        %706 = vrot.lane.b32.xlu0 %v627, 4
        %v707 = vpop.permute.xlu0 %706
        %708 = vrot.lane.b32.xlu0 %v628, 4
        %v709 = vpop.permute.xlu0 %708
        %710 = vrot.lane.b32.xlu0 %v629, 4
        %v711 = vpop.permute.xlu0 %710
        %712 = vrot.lane.b32.xlu0 %v630, 4
        %v713 = vpop.permute.xlu0 %712
        %714 = vrot.lane.b32.xlu0 %v631, 4
        %v715 = vpop.permute.xlu0 %714
        %716 = vrot.lane.b32.xlu0 %v632, 4
        %v717 = vpop.permute.xlu0 %716
        %718 = vrot.lane.b32.xlu0 %v633, 4
        %v719 = vpop.permute.xlu0 %718
        %720 = vrot.lane.b32.xlu0 %v634, 4
        %v721 = vpop.permute.xlu0 %720
        %722 = vrot.lane.b32.xlu0 %v635, 4
        %v723 = vpop.permute.xlu0 %722
        %724 = vrot.lane.b32.xlu0 %v636, 4
        %v725 = vpop.permute.xlu0 %724
        %726 = vrot.lane.b32.xlu0 %v637, 4
        %v727 = vpop.permute.xlu0 %726
        %728 = vrot.lane.b32.xlu0 %v638, 4
        %v729 = vpop.permute.xlu0 %728
        %730 = vrot.lane.b32.xlu0 %v639, 4
        %v731 = vpop.permute.xlu0 %730
        %732 = vrot.lane.b32.xlu0 %v640, 4
        %v733 = vpop.permute.xlu0 %732
        %734 = vrot.lane.b32.xlu0 %v641, 4
        %v735 = vpop.permute.xlu0 %734
        %736 = vrot.lane.b32.xlu0 %v642, 4
        %v737 = vpop.permute.xlu0 %736
        %738 = vrot.lane.b32.xlu0 %v643, 4
        %v739 = vpop.permute.xlu0 %738
        %vm772 = vcmask 64544
        %773 = vst.msk [vmem:[#allocation3] sm:$0xff] %vm772, %v677
        %774 = vst.msk [vmem:[#allocation3 + $0x8] sm:$0xff] %vm772, %v679
        %775 = vst.msk [vmem:[#allocation3 + $0x10] sm:$0xff] %vm772, %v681
        %776 = vst.msk [vmem:[#allocation3 + $0x18] sm:$0xff] %vm772, %v683
        %777 = vst.msk [vmem:[#allocation3 + $0x20] sm:$0xff] %vm772, %v685
        %778 = vst.msk [vmem:[#allocation3 + $0x28] sm:$0xff] %vm772, %v687
        %779 = vst.msk [vmem:[#allocation3 + $0x30] sm:$0xff] %vm772, %v689
        %780 = vst.msk [vmem:[#allocation3 + $0x38] sm:$0xff] %vm772, %v691
        %781 = vst.msk [vmem:[#allocation3 + $0x40] sm:$0xff] %vm772, %v693
        %782 = vst.msk [vmem:[#allocation3 + $0x48] sm:$0xff] %vm772, %v695
        %783 = vst.msk [vmem:[#allocation3 + $0x50] sm:$0xff] %vm772, %v697
        %784 = vst.msk [vmem:[#allocation3 + $0x58] sm:$0xff] %vm772, %v699
        %785 = vst.msk [vmem:[#allocation3 + $0x60] sm:$0xff] %vm772, %v701
        %786 = vst.msk [vmem:[#allocation3 + $0x68] sm:$0xff] %vm772, %v703
        %787 = vst.msk [vmem:[#allocation3 + $0x70] sm:$0xff] %vm772, %v705
        %788 = vst.msk [vmem:[#allocation3 + $0x78] sm:$0xff] %vm772, %v707
        %789 = vst.msk [vmem:[#allocation3 + $0x80] sm:$0xff] %vm772, %v709
        %790 = vst.msk [vmem:[#allocation3 + $0x88] sm:$0xff] %vm772, %v711
        %791 = vst.msk [vmem:[#allocation3 + $0x90] sm:$0xff] %vm772, %v713
        %792 = vst.msk [vmem:[#allocation3 + $0x98] sm:$0xff] %vm772, %v715
        %793 = vst.msk [vmem:[#allocation3 + $0xa0] sm:$0xff] %vm772, %v717
        %794 = vst.msk [vmem:[#allocation3 + $0xa8] sm:$0xff] %vm772, %v719
        %795 = vst.msk [vmem:[#allocation3 + $0xb0] sm:$0xff] %vm772, %v721
        %796 = vst.msk [vmem:[#allocation3 + $0xb8] sm:$0xff] %vm772, %v723
        %797 = vst.msk [vmem:[#allocation3 + $0xc0] sm:$0xff] %vm772, %v725
        %798 = vst.msk [vmem:[#allocation3 + $0xc8] sm:$0xff] %vm772, %v727
        %799 = vst.msk [vmem:[#allocation3 + $0xd0] sm:$0xff] %vm772, %v729
        %800 = vst.msk [vmem:[#allocation3 + $0xd8] sm:$0xff] %vm772, %v731
        %801 = vst.msk [vmem:[#allocation3 + $0xe0] sm:$0xff] %vm772, %v733
        %802 = vst.msk [vmem:[#allocation3 + $0xe8] sm:$0xff] %vm772, %v735
        %803 = vst.msk [vmem:[#allocation3 + $0xf0] sm:$0xff] %vm772, %v737
        %804 = vst.msk [vmem:[#allocation3 + $0xf8] sm:$0xff] %vm772, %v739
        %v805 = vld [vmem:[#allocation2 + $0x2] sm:$0xff]
        %v806 = vld [vmem:[#allocation2 + $0xa] sm:$0xff]
        %v807 = vld [vmem:[#allocation2 + $0x1a] sm:$0xff]
        %v808 = vld [vmem:[#allocation2 + $0x22] sm:$0xff]
        %v809 = vld [vmem:[#allocation2 + $0x32] sm:$0xff]
        %v810 = vld [vmem:[#allocation2 + $0x3a] sm:$0xff]
        %v811 = vld [vmem:[#allocation2 + $0x4a] sm:$0xff]
        %v812 = vld [vmem:[#allocation2 + $0x52] sm:$0xff]
        %v813 = vld [vmem:[#allocation2 + $0x62] sm:$0xff]
        %v814 = vld [vmem:[#allocation2 + $0x6a] sm:$0xff]
        %v815 = vld [vmem:[#allocation2 + $0x7a] sm:$0xff]
        %v816 = vld [vmem:[#allocation2 + $0x82] sm:$0xff]
        %v817 = vld [vmem:[#allocation2 + $0x92] sm:$0xff]
        %v818 = vld [vmem:[#allocation2 + $0x9a] sm:$0xff]
        %v819 = vld [vmem:[#allocation2 + $0xaa] sm:$0xff]
        %v820 = vld [vmem:[#allocation2 + $0xb2] sm:$0xff]
        %v821 = vld [vmem:[#allocation2 + $0xc2] sm:$0xff]
        %v822 = vld [vmem:[#allocation2 + $0xca] sm:$0xff]
        %v823 = vld [vmem:[#allocation2 + $0xda] sm:$0xff]
        %v824 = vld [vmem:[#allocation2 + $0xe2] sm:$0xff]
        %v825 = vld [vmem:[#allocation2 + $0xf2] sm:$0xff]
        %v826 = vld [vmem:[#allocation2 + $0xfa] sm:$0xff]
        %v827 = vld [vmem:[#allocation2 + $0x10a] sm:$0xff]
        %v828 = vld [vmem:[#allocation2 + $0x112] sm:$0xff]
        %v829 = vld [vmem:[#allocation2 + $0x122] sm:$0xff]
        %v830 = vld [vmem:[#allocation2 + $0x12a] sm:$0xff]
        %v831 = vld [vmem:[#allocation2 + $0x13a] sm:$0xff]
        %v832 = vld [vmem:[#allocation2 + $0x142] sm:$0xff]
        %v833 = vld [vmem:[#allocation2 + $0x152] sm:$0xff]
        %v834 = vld [vmem:[#allocation2 + $0x15a] sm:$0xff]
        %v835 = vld [vmem:[#allocation2 + $0x16a] sm:$0xff]
        %v836 = vld [vmem:[#allocation2 + $0x172] sm:$0xff]
        %869 = vrot.lane.b32.xlu0 %v805, 8
        %v870 = vpop.permute.xlu0 %869
        %871 = vrot.lane.b32.xlu0 %v806, 8
        %v872 = vpop.permute.xlu0 %871
        %873 = vrot.lane.b32.xlu0 %v807, 8
        %v874 = vpop.permute.xlu0 %873
        %875 = vrot.lane.b32.xlu0 %v808, 8
        %v876 = vpop.permute.xlu0 %875
        %877 = vrot.lane.b32.xlu0 %v809, 8
        %v878 = vpop.permute.xlu0 %877
        %879 = vrot.lane.b32.xlu0 %v810, 8
        %v880 = vpop.permute.xlu0 %879
        %881 = vrot.lane.b32.xlu0 %v811, 8
        %v882 = vpop.permute.xlu0 %881
        %883 = vrot.lane.b32.xlu0 %v812, 8
        %v884 = vpop.permute.xlu0 %883
        %885 = vrot.lane.b32.xlu0 %v813, 8
        %v886 = vpop.permute.xlu0 %885
        %887 = vrot.lane.b32.xlu0 %v814, 8
        %v888 = vpop.permute.xlu0 %887
        %889 = vrot.lane.b32.xlu0 %v815, 8
        %v890 = vpop.permute.xlu0 %889
        %891 = vrot.lane.b32.xlu0 %v816, 8
        %v892 = vpop.permute.xlu0 %891
        %893 = vrot.lane.b32.xlu0 %v817, 8
        %v894 = vpop.permute.xlu0 %893
        %895 = vrot.lane.b32.xlu0 %v818, 8
        %v896 = vpop.permute.xlu0 %895
        %897 = vrot.lane.b32.xlu0 %v819, 8
        %v898 = vpop.permute.xlu0 %897
        %899 = vrot.lane.b32.xlu0 %v820, 8
        %v900 = vpop.permute.xlu0 %899
        %901 = vrot.lane.b32.xlu0 %v821, 8
        %v902 = vpop.permute.xlu0 %901
        %903 = vrot.lane.b32.xlu0 %v822, 8
        %v904 = vpop.permute.xlu0 %903
        %905 = vrot.lane.b32.xlu0 %v823, 8
        %v906 = vpop.permute.xlu0 %905
        %907 = vrot.lane.b32.xlu0 %v824, 8
        %v908 = vpop.permute.xlu0 %907
        %909 = vrot.lane.b32.xlu0 %v825, 8
        %v910 = vpop.permute.xlu0 %909
        %911 = vrot.lane.b32.xlu0 %v826, 8
        %v912 = vpop.permute.xlu0 %911
        %913 = vrot.lane.b32.xlu0 %v827, 8
        %v914 = vpop.permute.xlu0 %913
        %915 = vrot.lane.b32.xlu0 %v828, 8
        %v916 = vpop.permute.xlu0 %915
        %917 = vrot.lane.b32.xlu0 %v829, 8
        %v918 = vpop.permute.xlu0 %917
        %919 = vrot.lane.b32.xlu0 %v830, 8
        %v920 = vpop.permute.xlu0 %919
        %921 = vrot.lane.b32.xlu0 %v831, 8
        %v922 = vpop.permute.xlu0 %921
        %923 = vrot.lane.b32.xlu0 %v832, 8
        %v924 = vpop.permute.xlu0 %923
        %925 = vrot.lane.b32.xlu0 %v833, 8
        %v926 = vpop.permute.xlu0 %925
        %927 = vrot.lane.b32.xlu0 %v834, 8
        %v928 = vpop.permute.xlu0 %927
        %929 = vrot.lane.b32.xlu0 %v835, 8
        %v930 = vpop.permute.xlu0 %929
        %931 = vrot.lane.b32.xlu0 %v836, 8
        %v932 = vpop.permute.xlu0 %931
        %vm965 = vcmask 97344
        %966 = vst.msk [vmem:[#allocation3] sm:$0xff] %vm965, %v870
        %967 = vst.msk [vmem:[#allocation3 + $0x8] sm:$0xff] %vm965, %v872
        %968 = vst.msk [vmem:[#allocation3 + $0x10] sm:$0xff] %vm965, %v874
        %969 = vst.msk [vmem:[#allocation3 + $0x18] sm:$0xff] %vm965, %v876
        %970 = vst.msk [vmem:[#allocation3 + $0x20] sm:$0xff] %vm965, %v878
        %971 = vst.msk [vmem:[#allocation3 + $0x28] sm:$0xff] %vm965, %v880
        %972 = vst.msk [vmem:[#allocation3 + $0x30] sm:$0xff] %vm965, %v882
        %973 = vst.msk [vmem:[#allocation3 + $0x38] sm:$0xff] %vm965, %v884
        %974 = vst.msk [vmem:[#allocation3 + $0x40] sm:$0xff] %vm965, %v886
        %975 = vst.msk [vmem:[#allocation3 + $0x48] sm:$0xff] %vm965, %v888
        %976 = vst.msk [vmem:[#allocation3 + $0x50] sm:$0xff] %vm965, %v890
        %977 = vst.msk [vmem:[#allocation3 + $0x58] sm:$0xff] %vm965, %v892
        %978 = vst.msk [vmem:[#allocation3 + $0x60] sm:$0xff] %vm965, %v894
        %979 = vst.msk [vmem:[#allocation3 + $0x68] sm:$0xff] %vm965, %v896
        %980 = vst.msk [vmem:[#allocation3 + $0x70] sm:$0xff] %vm965, %v898
        %981 = vst.msk [vmem:[#allocation3 + $0x78] sm:$0xff] %vm965, %v900
        %982 = vst.msk [vmem:[#allocation3 + $0x80] sm:$0xff] %vm965, %v902
        %983 = vst.msk [vmem:[#allocation3 + $0x88] sm:$0xff] %vm965, %v904
        %984 = vst.msk [vmem:[#allocation3 + $0x90] sm:$0xff] %vm965, %v906
        %985 = vst.msk [vmem:[#allocation3 + $0x98] sm:$0xff] %vm965, %v908
        %986 = vst.msk [vmem:[#allocation3 + $0xa0] sm:$0xff] %vm965, %v910
        %987 = vst.msk [vmem:[#allocation3 + $0xa8] sm:$0xff] %vm965, %v912
        %988 = vst.msk [vmem:[#allocation3 + $0xb0] sm:$0xff] %vm965, %v914
        %989 = vst.msk [vmem:[#allocation3 + $0xb8] sm:$0xff] %vm965, %v916
        %990 = vst.msk [vmem:[#allocation3 + $0xc0] sm:$0xff] %vm965, %v918
        %991 = vst.msk [vmem:[#allocation3 + $0xc8] sm:$0xff] %vm965, %v920
        %992 = vst.msk [vmem:[#allocation3 + $0xd0] sm:$0xff] %vm965, %v922
        %993 = vst.msk [vmem:[#allocation3 + $0xd8] sm:$0xff] %vm965, %v924
        %994 = vst.msk [vmem:[#allocation3 + $0xe0] sm:$0xff] %vm965, %v926
        %995 = vst.msk [vmem:[#allocation3 + $0xe8] sm:$0xff] %vm965, %v928
        %996 = vst.msk [vmem:[#allocation3 + $0xf0] sm:$0xff] %vm965, %v930
        %997 = vst.msk [vmem:[#allocation3 + $0xf8] sm:$0xff] %vm965, %v932
        %v998 = vld [vmem:[%s515] sm:$0xff]
        %v999 = vld [vmem:[%s515 + $0x8] sm:$0xff]
        %v1000 = vld [vmem:[%s515 + $0x18] sm:$0xff]
        %v1001 = vld [vmem:[%s515 + $0x20] sm:$0xff]
        %v1002 = vld [vmem:[%s515 + $0x30] sm:$0xff]
        %v1003 = vld [vmem:[%s515 + $0x38] sm:$0xff]
        %v1004 = vld [vmem:[%s515 + $0x48] sm:$0xff]
        %v1005 = vld [vmem:[%s515 + $0x50] sm:$0xff]
        %v1006 = vld [vmem:[%s515 + $0x60] sm:$0xff]
        %v1007 = vld [vmem:[%s515 + $0x68] sm:$0xff]
        %v1008 = vld [vmem:[%s515 + $0x78] sm:$0xff]
        %v1009 = vld [vmem:[%s515 + $0x80] sm:$0xff]
        %v1010 = vld [vmem:[%s515 + $0x90] sm:$0xff]
        %v1011 = vld [vmem:[%s515 + $0x98] sm:$0xff]
        %v1012 = vld [vmem:[%s515 + $0xa8] sm:$0xff]
        %v1013 = vld [vmem:[%s515 + $0xb0] sm:$0xff]
        %v1014 = vld [vmem:[%s515 + $0xc0] sm:$0xff]
        %v1015 = vld [vmem:[%s515 + $0xc8] sm:$0xff]
        %v1016 = vld [vmem:[%s515 + $0xd8] sm:$0xff]
        %v1017 = vld [vmem:[%s515 + $0xe0] sm:$0xff]
        %v1018 = vld [vmem:[%s515 + $0xf0] sm:$0xff]
        %v1019 = vld [vmem:[%s515 + $0xf8] sm:$0xff]
        %v1020 = vld [vmem:[%s515 + $0x108] sm:$0xff]
        %v1021 = vld [vmem:[%s515 + $0x110] sm:$0xff]
        %v1022 = vld [vmem:[%s515 + $0x120] sm:$0xff]
        %v1023 = vld [vmem:[%s515 + $0x128] sm:$0xff]
        %v1024 = vld [vmem:[%s515 + $0x138] sm:$0xff]
        %v1025 = vld [vmem:[%s515 + $0x140] sm:$0xff]
        %v1026 = vld [vmem:[%s515 + $0x150] sm:$0xff]
        %v1027 = vld [vmem:[%s515 + $0x158] sm:$0xff]
        %v1028 = vld [vmem:[%s515 + $0x168] sm:$0xff]
        %v1029 = vld [vmem:[%s515 + $0x170] sm:$0xff]
        %1062 = vrot.lane.b32.xlu0 %v998, 12
        %v1063 = vpop.permute.xlu0 %1062
        %1064 = vrot.lane.b32.xlu0 %v999, 12
        %v1065 = vpop.permute.xlu0 %1064
        %1066 = vrot.lane.b32.xlu0 %v1000, 12
        %v1067 = vpop.permute.xlu0 %1066
        %1068 = vrot.lane.b32.xlu0 %v1001, 12
        %v1069 = vpop.permute.xlu0 %1068
        %1070 = vrot.lane.b32.xlu0 %v1002, 12
        %v1071 = vpop.permute.xlu0 %1070
        %1072 = vrot.lane.b32.xlu0 %v1003, 12
        %v1073 = vpop.permute.xlu0 %1072
        %1074 = vrot.lane.b32.xlu0 %v1004, 12
        %v1075 = vpop.permute.xlu0 %1074
        %1076 = vrot.lane.b32.xlu0 %v1005, 12
        %v1077 = vpop.permute.xlu0 %1076
        %1078 = vrot.lane.b32.xlu0 %v1006, 12
        %v1079 = vpop.permute.xlu0 %1078
        %1080 = vrot.lane.b32.xlu0 %v1007, 12
        %v1081 = vpop.permute.xlu0 %1080
        %1082 = vrot.lane.b32.xlu0 %v1008, 12
        %v1083 = vpop.permute.xlu0 %1082
        %1084 = vrot.lane.b32.xlu0 %v1009, 12
        %v1085 = vpop.permute.xlu0 %1084
        %1086 = vrot.lane.b32.xlu0 %v1010, 12
        %v1087 = vpop.permute.xlu0 %1086
        %1088 = vrot.lane.b32.xlu0 %v1011, 12
        %v1089 = vpop.permute.xlu0 %1088
        %1090 = vrot.lane.b32.xlu0 %v1012, 12
        %v1091 = vpop.permute.xlu0 %1090
        %1092 = vrot.lane.b32.xlu0 %v1013, 12
        %v1093 = vpop.permute.xlu0 %1092
        %1094 = vrot.lane.b32.xlu0 %v1014, 12
        %v1095 = vpop.permute.xlu0 %1094
        %1096 = vrot.lane.b32.xlu0 %v1015, 12
        %v1097 = vpop.permute.xlu0 %1096
        %1098 = vrot.lane.b32.xlu0 %v1016, 12
        %v1099 = vpop.permute.xlu0 %1098
        %1100 = vrot.lane.b32.xlu0 %v1017, 12
        %v1101 = vpop.permute.xlu0 %1100
        %1102 = vrot.lane.b32.xlu0 %v1018, 12
        %v1103 = vpop.permute.xlu0 %1102
        %1104 = vrot.lane.b32.xlu0 %v1019, 12
        %v1105 = vpop.permute.xlu0 %1104
        %1106 = vrot.lane.b32.xlu0 %v1020, 12
        %v1107 = vpop.permute.xlu0 %1106
        %1108 = vrot.lane.b32.xlu0 %v1021, 12
        %v1109 = vpop.permute.xlu0 %1108
        %1110 = vrot.lane.b32.xlu0 %v1022, 12
        %v1111 = vpop.permute.xlu0 %1110
        %1112 = vrot.lane.b32.xlu0 %v1023, 12
        %v1113 = vpop.permute.xlu0 %1112
        %1114 = vrot.lane.b32.xlu0 %v1024, 12
        %v1115 = vpop.permute.xlu0 %1114
        %1116 = vrot.lane.b32.xlu0 %v1025, 12
        %v1117 = vpop.permute.xlu0 %1116
        %1118 = vrot.lane.b32.xlu0 %v1026, 12
        %v1119 = vpop.permute.xlu0 %1118
        %1120 = vrot.lane.b32.xlu0 %v1027, 12
        %v1121 = vpop.permute.xlu0 %1120
        %1122 = vrot.lane.b32.xlu0 %v1028, 12
        %v1123 = vpop.permute.xlu0 %1122
        %1124 = vrot.lane.b32.xlu0 %v1029, 12
        %v1125 = vpop.permute.xlu0 %1124
        %vm1158 = vcmask 130144
        %1159 = vst.msk [vmem:[#allocation3] sm:$0xff] %vm1158, %v1063
        %1160 = vst.msk [vmem:[#allocation3 + $0x8] sm:$0xff] %vm1158, %v1065
        %1161 = vst.msk [vmem:[#allocation3 + $0x10] sm:$0xff] %vm1158, %v1067
        %1162 = vst.msk [vmem:[#allocation3 + $0x18] sm:$0xff] %vm1158, %v1069
        %1163 = vst.msk [vmem:[#allocation3 + $0x20] sm:$0xff] %vm1158, %v1071
        %1164 = vst.msk [vmem:[#allocation3 + $0x28] sm:$0xff] %vm1158, %v1073
        %1165 = vst.msk [vmem:[#allocation3 + $0x30] sm:$0xff] %vm1158, %v1075
        %1166 = vst.msk [vmem:[#allocation3 + $0x38] sm:$0xff] %vm1158, %v1077
        %1167 = vst.msk [vmem:[#allocation3 + $0x40] sm:$0xff] %vm1158, %v1079
        %1168 = vst.msk [vmem:[#allocation3 + $0x48] sm:$0xff] %vm1158, %v1081
        %1169 = vst.msk [vmem:[#allocation3 + $0x50] sm:$0xff] %vm1158, %v1083
        %1170 = vst.msk [vmem:[#allocation3 + $0x58] sm:$0xff] %vm1158, %v1085
        %1171 = vst.msk [vmem:[#allocation3 + $0x60] sm:$0xff] %vm1158, %v1087
        %1172 = vst.msk [vmem:[#allocation3 + $0x68] sm:$0xff] %vm1158, %v1089
        %1173 = vst.msk [vmem:[#allocation3 + $0x70] sm:$0xff] %vm1158, %v1091
        %1174 = vst.msk [vmem:[#allocation3 + $0x78] sm:$0xff] %vm1158, %v1093
        %1175 = vst.msk [vmem:[#allocation3 + $0x80] sm:$0xff] %vm1158, %v1095
        %1176 = vst.msk [vmem:[#allocation3 + $0x88] sm:$0xff] %vm1158, %v1097
        %1177 = vst.msk [vmem:[#allocation3 + $0x90] sm:$0xff] %vm1158, %v1099
        %1178 = vst.msk [vmem:[#allocation3 + $0x98] sm:$0xff] %vm1158, %v1101
        %1179 = vst.msk [vmem:[#allocation3 + $0xa0] sm:$0xff] %vm1158, %v1103
        %1180 = vst.msk [vmem:[#allocation3 + $0xa8] sm:$0xff] %vm1158, %v1105
        %1181 = vst.msk [vmem:[#allocation3 + $0xb0] sm:$0xff] %vm1158, %v1107
        %1182 = vst.msk [vmem:[#allocation3 + $0xb8] sm:$0xff] %vm1158, %v1109
        %1183 = vst.msk [vmem:[#allocation3 + $0xc0] sm:$0xff] %vm1158, %v1111
        %1184 = vst.msk [vmem:[#allocation3 + $0xc8] sm:$0xff] %vm1158, %v1113
        %1185 = vst.msk [vmem:[#allocation3 + $0xd0] sm:$0xff] %vm1158, %v1115
        %1186 = vst.msk [vmem:[#allocation3 + $0xd8] sm:$0xff] %vm1158, %v1117
        %1187 = vst.msk [vmem:[#allocation3 + $0xe0] sm:$0xff] %vm1158, %v1119
        %1188 = vst.msk [vmem:[#allocation3 + $0xe8] sm:$0xff] %vm1158, %v1121
        %1189 = vst.msk [vmem:[#allocation3 + $0xf0] sm:$0xff] %vm1158, %v1123
        %1190 = vst.msk [vmem:[#allocation3 + $0xf8] sm:$0xff] %vm1158, %v1125
        %v1191 = vld [vmem:[%s515 + $0x1] sm:$0xff]
        %v1192 = vld [vmem:[%s515 + $0x9] sm:$0xff]
        %v1193 = vld [vmem:[%s515 + $0x19] sm:$0xff]
        %v1194 = vld [vmem:[%s515 + $0x21] sm:$0xff]
        %v1195 = vld [vmem:[%s515 + $0x31] sm:$0xff]
        %v1196 = vld [vmem:[%s515 + $0x39] sm:$0xff]
        %v1197 = vld [vmem:[%s515 + $0x49] sm:$0xff]
        %v1198 = vld [vmem:[%s515 + $0x51] sm:$0xff]
        %v1199 = vld [vmem:[%s515 + $0x61] sm:$0xff]
        %v1200 = vld [vmem:[%s515 + $0x69] sm:$0xff]
        %v1201 = vld [vmem:[%s515 + $0x79] sm:$0xff]
        %v1202 = vld [vmem:[%s515 + $0x81] sm:$0xff]
        %v1203 = vld [vmem:[%s515 + $0x91] sm:$0xff]
        %v1204 = vld [vmem:[%s515 + $0x99] sm:$0xff]
        %v1205 = vld [vmem:[%s515 + $0xa9] sm:$0xff]
        %v1206 = vld [vmem:[%s515 + $0xb1] sm:$0xff]
        %v1207 = vld [vmem:[%s515 + $0xc1] sm:$0xff]
        %v1208 = vld [vmem:[%s515 + $0xc9] sm:$0xff]
        %v1209 = vld [vmem:[%s515 + $0xd9] sm:$0xff]
        %v1210 = vld [vmem:[%s515 + $0xe1] sm:$0xff]
        %v1211 = vld [vmem:[%s515 + $0xf1] sm:$0xff]
        %v1212 = vld [vmem:[%s515 + $0xf9] sm:$0xff]
        %v1213 = vld [vmem:[%s515 + $0x109] sm:$0xff]
        %v1214 = vld [vmem:[%s515 + $0x111] sm:$0xff]
        %v1215 = vld [vmem:[%s515 + $0x121] sm:$0xff]
        %v1216 = vld [vmem:[%s515 + $0x129] sm:$0xff]
        %v1217 = vld [vmem:[%s515 + $0x139] sm:$0xff]
        %v1218 = vld [vmem:[%s515 + $0x141] sm:$0xff]
        %v1219 = vld [vmem:[%s515 + $0x151] sm:$0xff]
        %v1220 = vld [vmem:[%s515 + $0x159] sm:$0xff]
        %v1221 = vld [vmem:[%s515 + $0x169] sm:$0xff]
        %v1222 = vld [vmem:[%s515 + $0x171] sm:$0xff]
        %1255 = vrot.lane.b32.xlu0 %v1191, 16
        %v1256 = vpop.permute.xlu0 %1255
        %1257 = vrot.lane.b32.xlu0 %v1192, 16
        %v1258 = vpop.permute.xlu0 %1257
        %1259 = vrot.lane.b32.xlu0 %v1193, 16
        %v1260 = vpop.permute.xlu0 %1259
        %1261 = vrot.lane.b32.xlu0 %v1194, 16
        %v1262 = vpop.permute.xlu0 %1261
        %1263 = vrot.lane.b32.xlu0 %v1195, 16
        %v1264 = vpop.permute.xlu0 %1263
        %1265 = vrot.lane.b32.xlu0 %v1196, 16
        %v1266 = vpop.permute.xlu0 %1265
        %1267 = vrot.lane.b32.xlu0 %v1197, 16
        %v1268 = vpop.permute.xlu0 %1267
        %1269 = vrot.lane.b32.xlu0 %v1198, 16
        %v1270 = vpop.permute.xlu0 %1269
        %1271 = vrot.lane.b32.xlu0 %v1199, 16
        %v1272 = vpop.permute.xlu0 %1271
        %1273 = vrot.lane.b32.xlu0 %v1200, 16
        %v1274 = vpop.permute.xlu0 %1273
        %1275 = vrot.lane.b32.xlu0 %v1201, 16
        %v1276 = vpop.permute.xlu0 %1275
        %1277 = vrot.lane.b32.xlu0 %v1202, 16
        %v1278 = vpop.permute.xlu0 %1277
        %1279 = vrot.lane.b32.xlu0 %v1203, 16
        %v1280 = vpop.permute.xlu0 %1279
        %1281 = vrot.lane.b32.xlu0 %v1204, 16
        %v1282 = vpop.permute.xlu0 %1281
        %1283 = vrot.lane.b32.xlu0 %v1205, 16
        %v1284 = vpop.permute.xlu0 %1283
        %1285 = vrot.lane.b32.xlu0 %v1206, 16
        %v1286 = vpop.permute.xlu0 %1285
        %1287 = vrot.lane.b32.xlu0 %v1207, 16
        %v1288 = vpop.permute.xlu0 %1287
        %1289 = vrot.lane.b32.xlu0 %v1208, 16
        %v1290 = vpop.permute.xlu0 %1289
        %1291 = vrot.lane.b32.xlu0 %v1209, 16
        %v1292 = vpop.permute.xlu0 %1291
        %1293 = vrot.lane.b32.xlu0 %v1210, 16
        %v1294 = vpop.permute.xlu0 %1293
        %1295 = vrot.lane.b32.xlu0 %v1211, 16
        %v1296 = vpop.permute.xlu0 %1295
        %1297 = vrot.lane.b32.xlu0 %v1212, 16
        %v1298 = vpop.permute.xlu0 %1297
        %1299 = vrot.lane.b32.xlu0 %v1213, 16
        %v1300 = vpop.permute.xlu0 %1299
        %1301 = vrot.lane.b32.xlu0 %v1214, 16
        %v1302 = vpop.permute.xlu0 %1301
        %1303 = vrot.lane.b32.xlu0 %v1215, 16
        %v1304 = vpop.permute.xlu0 %1303
        %1305 = vrot.lane.b32.xlu0 %v1216, 16
        %v1306 = vpop.permute.xlu0 %1305
        %1307 = vrot.lane.b32.xlu0 %v1217, 16
        %v1308 = vpop.permute.xlu0 %1307
        %1309 = vrot.lane.b32.xlu0 %v1218, 16
        %v1310 = vpop.permute.xlu0 %1309
        %1311 = vrot.lane.b32.xlu0 %v1219, 16
        %v1312 = vpop.permute.xlu0 %1311
        %1313 = vrot.lane.b32.xlu0 %v1220, 16
        %v1314 = vpop.permute.xlu0 %1313
        %1315 = vrot.lane.b32.xlu0 %v1221, 16
        %v1316 = vpop.permute.xlu0 %1315
        %1317 = vrot.lane.b32.xlu0 %v1222, 16
        %v1318 = vpop.permute.xlu0 %1317
        %vm1351 = vcmask 162944
        %1352 = vst.msk [vmem:[#allocation3] sm:$0xff] %vm1351, %v1256
        %1353 = vst.msk [vmem:[#allocation3 + $0x8] sm:$0xff] %vm1351, %v1258
        %1354 = vst.msk [vmem:[#allocation3 + $0x10] sm:$0xff] %vm1351, %v1260
        %1355 = vst.msk [vmem:[#allocation3 + $0x18] sm:$0xff] %vm1351, %v1262
        %1356 = vst.msk [vmem:[#allocation3 + $0x20] sm:$0xff] %vm1351, %v1264
        %1357 = vst.msk [vmem:[#allocation3 + $0x28] sm:$0xff] %vm1351, %v1266
        %1358 = vst.msk [vmem:[#allocation3 + $0x30] sm:$0xff] %vm1351, %v1268
        %1359 = vst.msk [vmem:[#allocation3 + $0x38] sm:$0xff] %vm1351, %v1270
        %1360 = vst.msk [vmem:[#allocation3 + $0x40] sm:$0xff] %vm1351, %v1272
        %1361 = vst.msk [vmem:[#allocation3 + $0x48] sm:$0xff] %vm1351, %v1274
        %1362 = vst.msk [vmem:[#allocation3 + $0x50] sm:$0xff] %vm1351, %v1276
        %1363 = vst.msk [vmem:[#allocation3 + $0x58] sm:$0xff] %vm1351, %v1278
        %1364 = vst.msk [vmem:[#allocation3 + $0x60] sm:$0xff] %vm1351, %v1280
        %1365 = vst.msk [vmem:[#allocation3 + $0x68] sm:$0xff] %vm1351, %v1282
        %1366 = vst.msk [vmem:[#allocation3 + $0x70] sm:$0xff] %vm1351, %v1284
        %1367 = vst.msk [vmem:[#allocation3 + $0x78] sm:$0xff] %vm1351, %v1286
        %1368 = vst.msk [vmem:[#allocation3 + $0x80] sm:$0xff] %vm1351, %v1288
        %1369 = vst.msk [vmem:[#allocation3 + $0x88] sm:$0xff] %vm1351, %v1290
        %1370 = vst.msk [vmem:[#allocation3 + $0x90] sm:$0xff] %vm1351, %v1292
        %1371 = vst.msk [vmem:[#allocation3 + $0x98] sm:$0xff] %vm1351, %v1294
        %1372 = vst.msk [vmem:[#allocation3 + $0xa0] sm:$0xff] %vm1351, %v1296
        %1373 = vst.msk [vmem:[#allocation3 + $0xa8] sm:$0xff] %vm1351, %v1298
        %1374 = vst.msk [vmem:[#allocation3 + $0xb0] sm:$0xff] %vm1351, %v1300
        %1375 = vst.msk [vmem:[#allocation3 + $0xb8] sm:$0xff] %vm1351, %v1302
        %1376 = vst.msk [vmem:[#allocation3 + $0xc0] sm:$0xff] %vm1351, %v1304
        %1377 = vst.msk [vmem:[#allocation3 + $0xc8] sm:$0xff] %vm1351, %v1306
        %1378 = vst.msk [vmem:[#allocation3 + $0xd0] sm:$0xff] %vm1351, %v1308
        %1379 = vst.msk [vmem:[#allocation3 + $0xd8] sm:$0xff] %vm1351, %v1310
        %1380 = vst.msk [vmem:[#allocation3 + $0xe0] sm:$0xff] %vm1351, %v1312
        %1381 = vst.msk [vmem:[#allocation3 + $0xe8] sm:$0xff] %vm1351, %v1314
        %1382 = vst.msk [vmem:[#allocation3 + $0xf0] sm:$0xff] %vm1351, %v1316
        %1383 = vst.msk [vmem:[#allocation3 + $0xf8] sm:$0xff] %vm1351, %v1318
        %v1384 = vld [vmem:[%s515 + $0x2] sm:$0xff]
        %v1385 = vld [vmem:[%s515 + $0xa] sm:$0xff]
        %v1386 = vld [vmem:[%s515 + $0x1a] sm:$0xff]
        %v1387 = vld [vmem:[%s515 + $0x22] sm:$0xff]
        %v1388 = vld [vmem:[%s515 + $0x32] sm:$0xff]
        %v1389 = vld [vmem:[%s515 + $0x3a] sm:$0xff]
        %v1390 = vld [vmem:[%s515 + $0x4a] sm:$0xff]
        %v1391 = vld [vmem:[%s515 + $0x52] sm:$0xff]
        %v1392 = vld [vmem:[%s515 + $0x62] sm:$0xff]
        %v1393 = vld [vmem:[%s515 + $0x6a] sm:$0xff]
        %v1394 = vld [vmem:[%s515 + $0x7a] sm:$0xff]
        %v1395 = vld [vmem:[%s515 + $0x82] sm:$0xff]
        %v1396 = vld [vmem:[%s515 + $0x92] sm:$0xff]
        %v1397 = vld [vmem:[%s515 + $0x9a] sm:$0xff]
        %v1398 = vld [vmem:[%s515 + $0xaa] sm:$0xff]
        %v1399 = vld [vmem:[%s515 + $0xb2] sm:$0xff]
        %v1400 = vld [vmem:[%s515 + $0xc2] sm:$0xff]
        %v1401 = vld [vmem:[%s515 + $0xca] sm:$0xff]
        %v1402 = vld [vmem:[%s515 + $0xda] sm:$0xff]
        %v1403 = vld [vmem:[%s515 + $0xe2] sm:$0xff]
        %v1404 = vld [vmem:[%s515 + $0xf2] sm:$0xff]
        %v1405 = vld [vmem:[%s515 + $0xfa] sm:$0xff]
        %v1406 = vld [vmem:[%s515 + $0x10a] sm:$0xff]
        %v1407 = vld [vmem:[%s515 + $0x112] sm:$0xff]
        %v1408 = vld [vmem:[%s515 + $0x122] sm:$0xff]
        %v1409 = vld [vmem:[%s515 + $0x12a] sm:$0xff]
        %v1410 = vld [vmem:[%s515 + $0x13a] sm:$0xff]
        %v1411 = vld [vmem:[%s515 + $0x142] sm:$0xff]
        %v1412 = vld [vmem:[%s515 + $0x152] sm:$0xff]
        %v1413 = vld [vmem:[%s515 + $0x15a] sm:$0xff]
        %v1414 = vld [vmem:[%s515 + $0x16a] sm:$0xff]
        %v1415 = vld [vmem:[%s515 + $0x172] sm:$0xff]
        %1448 = vrot.lane.b32.xlu0 %v1384, 20
        %v1449 = vpop.permute.xlu0 %1448
        %1450 = vrot.lane.b32.xlu0 %v1385, 20
        %v1451 = vpop.permute.xlu0 %1450
        %1452 = vrot.lane.b32.xlu0 %v1386, 20
        %v1453 = vpop.permute.xlu0 %1452
        %1454 = vrot.lane.b32.xlu0 %v1387, 20
        %v1455 = vpop.permute.xlu0 %1454
        %1456 = vrot.lane.b32.xlu0 %v1388, 20
        %v1457 = vpop.permute.xlu0 %1456
        %1458 = vrot.lane.b32.xlu0 %v1389, 20
        %v1459 = vpop.permute.xlu0 %1458
        %1460 = vrot.lane.b32.xlu0 %v1390, 20
        %v1461 = vpop.permute.xlu0 %1460
        %1462 = vrot.lane.b32.xlu0 %v1391, 20
        %v1463 = vpop.permute.xlu0 %1462
        %1464 = vrot.lane.b32.xlu0 %v1392, 20
        %v1465 = vpop.permute.xlu0 %1464
        %1466 = vrot.lane.b32.xlu0 %v1393, 20
        %v1467 = vpop.permute.xlu0 %1466
        %1468 = vrot.lane.b32.xlu0 %v1394, 20
        %v1469 = vpop.permute.xlu0 %1468
        %1470 = vrot.lane.b32.xlu0 %v1395, 20
        %v1471 = vpop.permute.xlu0 %1470
        %1472 = vrot.lane.b32.xlu0 %v1396, 20
        %v1473 = vpop.permute.xlu0 %1472
        %1474 = vrot.lane.b32.xlu0 %v1397, 20
        %v1475 = vpop.permute.xlu0 %1474
        %1476 = vrot.lane.b32.xlu0 %v1398, 20
        %v1477 = vpop.permute.xlu0 %1476
        %1478 = vrot.lane.b32.xlu0 %v1399, 20
        %v1479 = vpop.permute.xlu0 %1478
        %1480 = vrot.lane.b32.xlu0 %v1400, 20
        %v1481 = vpop.permute.xlu0 %1480
        %1482 = vrot.lane.b32.xlu0 %v1401, 20
        %v1483 = vpop.permute.xlu0 %1482
        %1484 = vrot.lane.b32.xlu0 %v1402, 20
        %v1485 = vpop.permute.xlu0 %1484
        %1486 = vrot.lane.b32.xlu0 %v1403, 20
        %v1487 = vpop.permute.xlu0 %1486
        %1488 = vrot.lane.b32.xlu0 %v1404, 20
        %v1489 = vpop.permute.xlu0 %1488
        %1490 = vrot.lane.b32.xlu0 %v1405, 20
        %v1491 = vpop.permute.xlu0 %1490
        %1492 = vrot.lane.b32.xlu0 %v1406, 20
        %v1493 = vpop.permute.xlu0 %1492
        %1494 = vrot.lane.b32.xlu0 %v1407, 20
        %v1495 = vpop.permute.xlu0 %1494
        %1496 = vrot.lane.b32.xlu0 %v1408, 20
        %v1497 = vpop.permute.xlu0 %1496
        %1498 = vrot.lane.b32.xlu0 %v1409, 20
        %v1499 = vpop.permute.xlu0 %1498
        %1500 = vrot.lane.b32.xlu0 %v1410, 20
        %v1501 = vpop.permute.xlu0 %1500
        %1502 = vrot.lane.b32.xlu0 %v1411, 20
        %v1503 = vpop.permute.xlu0 %1502
        %1504 = vrot.lane.b32.xlu0 %v1412, 20
        %v1505 = vpop.permute.xlu0 %1504
        %1506 = vrot.lane.b32.xlu0 %v1413, 20
        %v1507 = vpop.permute.xlu0 %1506
        %1508 = vrot.lane.b32.xlu0 %v1414, 20
        %v1509 = vpop.permute.xlu0 %1508
        %1510 = vrot.lane.b32.xlu0 %v1415, 20
        %v1511 = vpop.permute.xlu0 %1510
        %vm1544 = vcmask 195744
        %1545 = vst.msk [vmem:[#allocation3] sm:$0xff] %vm1544, %v1449
        %1546 = vst.msk [vmem:[#allocation3 + $0x8] sm:$0xff] %vm1544, %v1451
        %1547 = vst.msk [vmem:[#allocation3 + $0x10] sm:$0xff] %vm1544, %v1453
        %1548 = vst.msk [vmem:[#allocation3 + $0x18] sm:$0xff] %vm1544, %v1455
        %1549 = vst.msk [vmem:[#allocation3 + $0x20] sm:$0xff] %vm1544, %v1457
        %1550 = vst.msk [vmem:[#allocation3 + $0x28] sm:$0xff] %vm1544, %v1459
        %1551 = vst.msk [vmem:[#allocation3 + $0x30] sm:$0xff] %vm1544, %v1461
        %1552 = vst.msk [vmem:[#allocation3 + $0x38] sm:$0xff] %vm1544, %v1463
        %1553 = vst.msk [vmem:[#allocation3 + $0x40] sm:$0xff] %vm1544, %v1465
        %1554 = vst.msk [vmem:[#allocation3 + $0x48] sm:$0xff] %vm1544, %v1467
        %1555 = vst.msk [vmem:[#allocation3 + $0x50] sm:$0xff] %vm1544, %v1469
        %1556 = vst.msk [vmem:[#allocation3 + $0x58] sm:$0xff] %vm1544, %v1471
        %1557 = vst.msk [vmem:[#allocation3 + $0x60] sm:$0xff] %vm1544, %v1473
        %1558 = vst.msk [vmem:[#allocation3 + $0x68] sm:$0xff] %vm1544, %v1475
        %1559 = vst.msk [vmem:[#allocation3 + $0x70] sm:$0xff] %vm1544, %v1477
        %1560 = vst.msk [vmem:[#allocation3 + $0x78] sm:$0xff] %vm1544, %v1479
        %1561 = vst.msk [vmem:[#allocation3 + $0x80] sm:$0xff] %vm1544, %v1481
        %1562 = vst.msk [vmem:[#allocation3 + $0x88] sm:$0xff] %vm1544, %v1483
        %1563 = vst.msk [vmem:[#allocation3 + $0x90] sm:$0xff] %vm1544, %v1485
        %1564 = vst.msk [vmem:[#allocation3 + $0x98] sm:$0xff] %vm1544, %v1487
        %1565 = vst.msk [vmem:[#allocation3 + $0xa0] sm:$0xff] %vm1544, %v1489
        %1566 = vst.msk [vmem:[#allocation3 + $0xa8] sm:$0xff] %vm1544, %v1491
        %1567 = vst.msk [vmem:[#allocation3 + $0xb0] sm:$0xff] %vm1544, %v1493
        %1568 = vst.msk [vmem:[#allocation3 + $0xb8] sm:$0xff] %vm1544, %v1495
        %1569 = vst.msk [vmem:[#allocation3 + $0xc0] sm:$0xff] %vm1544, %v1497
        %1570 = vst.msk [vmem:[#allocation3 + $0xc8] sm:$0xff] %vm1544, %v1499
        %1571 = vst.msk [vmem:[#allocation3 + $0xd0] sm:$0xff] %vm1544, %v1501
        %1572 = vst.msk [vmem:[#allocation3 + $0xd8] sm:$0xff] %vm1544, %v1503
        %1573 = vst.msk [vmem:[#allocation3 + $0xe0] sm:$0xff] %vm1544, %v1505
        %1574 = vst.msk [vmem:[#allocation3 + $0xe8] sm:$0xff] %vm1544, %v1507
        %1575 = vst.msk [vmem:[#allocation3 + $0xf0] sm:$0xff] %vm1544, %v1509
        %1576 = vst.msk [vmem:[#allocation3 + $0xf8] sm:$0xff] %vm1544, %v1511
        %s1577 = scalar_lea.vmem [#allocation2], 48
        %v1578 = vld [vmem:[%s1577] sm:$0xff]
        %v1579 = vld [vmem:[%s1577 + $0x8] sm:$0xff]
        %v1580 = vld [vmem:[%s1577 + $0x18] sm:$0xff]
        %v1581 = vld [vmem:[%s1577 + $0x20] sm:$0xff]
        %v1582 = vld [vmem:[%s1577 + $0x30] sm:$0xff]
        %v1583 = vld [vmem:[%s1577 + $0x38] sm:$0xff]
        %v1584 = vld [vmem:[%s1577 + $0x48] sm:$0xff]
        %v1585 = vld [vmem:[%s1577 + $0x50] sm:$0xff]
        %v1586 = vld [vmem:[%s1577 + $0x60] sm:$0xff]
        %v1587 = vld [vmem:[%s1577 + $0x68] sm:$0xff]
        %v1588 = vld [vmem:[%s1577 + $0x78] sm:$0xff]
        %v1589 = vld [vmem:[%s1577 + $0x80] sm:$0xff]
        %v1590 = vld [vmem:[%s1577 + $0x90] sm:$0xff]
        %v1591 = vld [vmem:[%s1577 + $0x98] sm:$0xff]
        %v1592 = vld [vmem:[%s1577 + $0xa8] sm:$0xff]
        %v1593 = vld [vmem:[%s1577 + $0xb0] sm:$0xff]
        %v1594 = vld [vmem:[%s1577 + $0xc0] sm:$0xff]
        %v1595 = vld [vmem:[%s1577 + $0xc8] sm:$0xff]
        %v1596 = vld [vmem:[%s1577 + $0xd8] sm:$0xff]
        %v1597 = vld [vmem:[%s1577 + $0xe0] sm:$0xff]
        %v1598 = vld [vmem:[%s1577 + $0xf0] sm:$0xff]
        %v1599 = vld [vmem:[%s1577 + $0xf8] sm:$0xff]
        %v1600 = vld [vmem:[%s1577 + $0x108] sm:$0xff]
        %v1601 = vld [vmem:[%s1577 + $0x110] sm:$0xff]
        %v1602 = vld [vmem:[%s1577 + $0x120] sm:$0xff]
        %v1603 = vld [vmem:[%s1577 + $0x128] sm:$0xff]
        %v1604 = vld [vmem:[%s1577 + $0x138] sm:$0xff]
        %v1605 = vld [vmem:[%s1577 + $0x140] sm:$0xff]
        %v1606 = vld [vmem:[%s1577 + $0x150] sm:$0xff]
        %v1607 = vld [vmem:[%s1577 + $0x158] sm:$0xff]
        %v1608 = vld [vmem:[%s1577 + $0x168] sm:$0xff]
        %v1609 = vld [vmem:[%s1577 + $0x170] sm:$0xff]
        %1642 = vrot.lane.b32.xlu0 %v1578, 24
        %v1643 = vpop.permute.xlu0 %1642
        %1644 = vrot.lane.b32.xlu0 %v1579, 24
        %v1645 = vpop.permute.xlu0 %1644
        %1646 = vrot.lane.b32.xlu0 %v1580, 24
        %v1647 = vpop.permute.xlu0 %1646
        %1648 = vrot.lane.b32.xlu0 %v1581, 24
        %v1649 = vpop.permute.xlu0 %1648
        %1650 = vrot.lane.b32.xlu0 %v1582, 24
        %v1651 = vpop.permute.xlu0 %1650
        %1652 = vrot.lane.b32.xlu0 %v1583, 24
        %v1653 = vpop.permute.xlu0 %1652
        %1654 = vrot.lane.b32.xlu0 %v1584, 24
        %v1655 = vpop.permute.xlu0 %1654
        %1656 = vrot.lane.b32.xlu0 %v1585, 24
        %v1657 = vpop.permute.xlu0 %1656
        %1658 = vrot.lane.b32.xlu0 %v1586, 24
        %v1659 = vpop.permute.xlu0 %1658
        %1660 = vrot.lane.b32.xlu0 %v1587, 24
        %v1661 = vpop.permute.xlu0 %1660
        %1662 = vrot.lane.b32.xlu0 %v1588, 24
        %v1663 = vpop.permute.xlu0 %1662
        %1664 = vrot.lane.b32.xlu0 %v1589, 24
        %v1665 = vpop.permute.xlu0 %1664
        %1666 = vrot.lane.b32.xlu0 %v1590, 24
        %v1667 = vpop.permute.xlu0 %1666
        %1668 = vrot.lane.b32.xlu0 %v1591, 24
        %v1669 = vpop.permute.xlu0 %1668
        %1670 = vrot.lane.b32.xlu0 %v1592, 24
        %v1671 = vpop.permute.xlu0 %1670
        %1672 = vrot.lane.b32.xlu0 %v1593, 24
        %v1673 = vpop.permute.xlu0 %1672
        %1674 = vrot.lane.b32.xlu0 %v1594, 24
        %v1675 = vpop.permute.xlu0 %1674
        %1676 = vrot.lane.b32.xlu0 %v1595, 24
        %v1677 = vpop.permute.xlu0 %1676
        %1678 = vrot.lane.b32.xlu0 %v1596, 24
        %v1679 = vpop.permute.xlu0 %1678
        %1680 = vrot.lane.b32.xlu0 %v1597, 24
        %v1681 = vpop.permute.xlu0 %1680
        %1682 = vrot.lane.b32.xlu0 %v1598, 24
        %v1683 = vpop.permute.xlu0 %1682
        %1684 = vrot.lane.b32.xlu0 %v1599, 24
        %v1685 = vpop.permute.xlu0 %1684
        %1686 = vrot.lane.b32.xlu0 %v1600, 24
        %v1687 = vpop.permute.xlu0 %1686
        %1688 = vrot.lane.b32.xlu0 %v1601, 24
        %v1689 = vpop.permute.xlu0 %1688
        %1690 = vrot.lane.b32.xlu0 %v1602, 24
        %v1691 = vpop.permute.xlu0 %1690
        %1692 = vrot.lane.b32.xlu0 %v1603, 24
        %v1693 = vpop.permute.xlu0 %1692
        %1694 = vrot.lane.b32.xlu0 %v1604, 24
        %v1695 = vpop.permute.xlu0 %1694
        %1696 = vrot.lane.b32.xlu0 %v1605, 24
        %v1697 = vpop.permute.xlu0 %1696
        %1698 = vrot.lane.b32.xlu0 %v1606, 24
        %v1699 = vpop.permute.xlu0 %1698
        %1700 = vrot.lane.b32.xlu0 %v1607, 24
        %v1701 = vpop.permute.xlu0 %1700
        %1702 = vrot.lane.b32.xlu0 %v1608, 24
        %v1703 = vpop.permute.xlu0 %1702
        %1704 = vrot.lane.b32.xlu0 %v1609, 24
        %v1705 = vpop.permute.xlu0 %1704
        %vm1738 = vcmask 228544
        %1739 = vst.msk [vmem:[#allocation3] sm:$0xff] %vm1738, %v1643
        %1740 = vst.msk [vmem:[#allocation3 + $0x8] sm:$0xff] %vm1738, %v1645
        %1741 = vst.msk [vmem:[#allocation3 + $0x10] sm:$0xff] %vm1738, %v1647
        %1742 = vst.msk [vmem:[#allocation3 + $0x18] sm:$0xff] %vm1738, %v1649
        %1743 = vst.msk [vmem:[#allocation3 + $0x20] sm:$0xff] %vm1738, %v1651
        %1744 = vst.msk [vmem:[#allocation3 + $0x28] sm:$0xff] %vm1738, %v1653
        %1745 = vst.msk [vmem:[#allocation3 + $0x30] sm:$0xff] %vm1738, %v1655
        %1746 = vst.msk [vmem:[#allocation3 + $0x38] sm:$0xff] %vm1738, %v1657
        %1747 = vst.msk [vmem:[#allocation3 + $0x40] sm:$0xff] %vm1738, %v1659
        %1748 = vst.msk [vmem:[#allocation3 + $0x48] sm:$0xff] %vm1738, %v1661
        %1749 = vst.msk [vmem:[#allocation3 + $0x50] sm:$0xff] %vm1738, %v1663
        %1750 = vst.msk [vmem:[#allocation3 + $0x58] sm:$0xff] %vm1738, %v1665
        %1751 = vst.msk [vmem:[#allocation3 + $0x60] sm:$0xff] %vm1738, %v1667
        %1752 = vst.msk [vmem:[#allocation3 + $0x68] sm:$0xff] %vm1738, %v1669
        %1753 = vst.msk [vmem:[#allocation3 + $0x70] sm:$0xff] %vm1738, %v1671
        %1754 = vst.msk [vmem:[#allocation3 + $0x78] sm:$0xff] %vm1738, %v1673
        %1755 = vst.msk [vmem:[#allocation3 + $0x80] sm:$0xff] %vm1738, %v1675
        %1756 = vst.msk [vmem:[#allocation3 + $0x88] sm:$0xff] %vm1738, %v1677
        %1757 = vst.msk [vmem:[#allocation3 + $0x90] sm:$0xff] %vm1738, %v1679
        %1758 = vst.msk [vmem:[#allocation3 + $0x98] sm:$0xff] %vm1738, %v1681
        %1759 = vst.msk [vmem:[#allocation3 + $0xa0] sm:$0xff] %vm1738, %v1683
        %1760 = vst.msk [vmem:[#allocation3 + $0xa8] sm:$0xff] %vm1738, %v1685
        %1761 = vst.msk [vmem:[#allocation3 + $0xb0] sm:$0xff] %vm1738, %v1687
        %1762 = vst.msk [vmem:[#allocation3 + $0xb8] sm:$0xff] %vm1738, %v1689
        %1763 = vst.msk [vmem:[#allocation3 + $0xc0] sm:$0xff] %vm1738, %v1691
        %1764 = vst.msk [vmem:[#allocation3 + $0xc8] sm:$0xff] %vm1738, %v1693
        %1765 = vst.msk [vmem:[#allocation3 + $0xd0] sm:$0xff] %vm1738, %v1695
        %1766 = vst.msk [vmem:[#allocation3 + $0xd8] sm:$0xff] %vm1738, %v1697
        %1767 = vst.msk [vmem:[#allocation3 + $0xe0] sm:$0xff] %vm1738, %v1699
        %1768 = vst.msk [vmem:[#allocation3 + $0xe8] sm:$0xff] %vm1738, %v1701
        %1769 = vst.msk [vmem:[#allocation3 + $0xf0] sm:$0xff] %vm1738, %v1703
        %1770 = vst.msk [vmem:[#allocation3 + $0xf8] sm:$0xff] %vm1738, %v1705
        %v1771 = vld [vmem:[%s1577 + $0x1] sm:$0xff]
        %v1772 = vld [vmem:[%s1577 + $0x9] sm:$0xff]
        %v1773 = vld [vmem:[%s1577 + $0x19] sm:$0xff]
        %v1774 = vld [vmem:[%s1577 + $0x21] sm:$0xff]
        %v1775 = vld [vmem:[%s1577 + $0x31] sm:$0xff]
        %v1776 = vld [vmem:[%s1577 + $0x39] sm:$0xff]
        %v1777 = vld [vmem:[%s1577 + $0x49] sm:$0xff]
        %v1778 = vld [vmem:[%s1577 + $0x51] sm:$0xff]
        %v1779 = vld [vmem:[%s1577 + $0x61] sm:$0xff]
        %v1780 = vld [vmem:[%s1577 + $0x69] sm:$0xff]
        %v1781 = vld [vmem:[%s1577 + $0x79] sm:$0xff]
        %v1782 = vld [vmem:[%s1577 + $0x81] sm:$0xff]
        %v1783 = vld [vmem:[%s1577 + $0x91] sm:$0xff]
        %v1784 = vld [vmem:[%s1577 + $0x99] sm:$0xff]
        %v1785 = vld [vmem:[%s1577 + $0xa9] sm:$0xff]
        %v1786 = vld [vmem:[%s1577 + $0xb1] sm:$0xff]
        %v1787 = vld [vmem:[%s1577 + $0xc1] sm:$0xff]
        %v1788 = vld [vmem:[%s1577 + $0xc9] sm:$0xff]
        %v1789 = vld [vmem:[%s1577 + $0xd9] sm:$0xff]
        %v1790 = vld [vmem:[%s1577 + $0xe1] sm:$0xff]
        %v1791 = vld [vmem:[%s1577 + $0xf1] sm:$0xff]
        %v1792 = vld [vmem:[%s1577 + $0xf9] sm:$0xff]
        %v1793 = vld [vmem:[%s1577 + $0x109] sm:$0xff]
        %v1794 = vld [vmem:[%s1577 + $0x111] sm:$0xff]
        %v1795 = vld [vmem:[%s1577 + $0x121] sm:$0xff]
        %v1796 = vld [vmem:[%s1577 + $0x129] sm:$0xff]
        %v1797 = vld [vmem:[%s1577 + $0x139] sm:$0xff]
        %v1798 = vld [vmem:[%s1577 + $0x141] sm:$0xff]
        %v1799 = vld [vmem:[%s1577 + $0x151] sm:$0xff]
        %v1800 = vld [vmem:[%s1577 + $0x159] sm:$0xff]
        %v1801 = vld [vmem:[%s1577 + $0x169] sm:$0xff]
        %v1802 = vld [vmem:[%s1577 + $0x171] sm:$0xff]
        %1835 = vrot.lane.b32.xlu0 %v1771, 28
        %v1836 = vpop.permute.xlu0 %1835
        %1837 = vrot.lane.b32.xlu0 %v1772, 28
        %v1838 = vpop.permute.xlu0 %1837
        %1839 = vrot.lane.b32.xlu0 %v1773, 28
        %v1840 = vpop.permute.xlu0 %1839
        %1841 = vrot.lane.b32.xlu0 %v1774, 28
        %v1842 = vpop.permute.xlu0 %1841
        %1843 = vrot.lane.b32.xlu0 %v1775, 28
        %v1844 = vpop.permute.xlu0 %1843
        %1845 = vrot.lane.b32.xlu0 %v1776, 28
        %v1846 = vpop.permute.xlu0 %1845
        %1847 = vrot.lane.b32.xlu0 %v1777, 28
        %v1848 = vpop.permute.xlu0 %1847
        %1849 = vrot.lane.b32.xlu0 %v1778, 28
        %v1850 = vpop.permute.xlu0 %1849
        %1851 = vrot.lane.b32.xlu0 %v1779, 28
        %v1852 = vpop.permute.xlu0 %1851
        %1853 = vrot.lane.b32.xlu0 %v1780, 28
        %v1854 = vpop.permute.xlu0 %1853
        %1855 = vrot.lane.b32.xlu0 %v1781, 28
        %v1856 = vpop.permute.xlu0 %1855
        %1857 = vrot.lane.b32.xlu0 %v1782, 28
        %v1858 = vpop.permute.xlu0 %1857
        %1859 = vrot.lane.b32.xlu0 %v1783, 28
        %v1860 = vpop.permute.xlu0 %1859
        %1861 = vrot.lane.b32.xlu0 %v1784, 28
        %v1862 = vpop.permute.xlu0 %1861
        %1863 = vrot.lane.b32.xlu0 %v1785, 28
        %v1864 = vpop.permute.xlu0 %1863
        %1865 = vrot.lane.b32.xlu0 %v1786, 28
        %v1866 = vpop.permute.xlu0 %1865
        %1867 = vrot.lane.b32.xlu0 %v1787, 28
        %v1868 = vpop.permute.xlu0 %1867
        %1869 = vrot.lane.b32.xlu0 %v1788, 28
        %v1870 = vpop.permute.xlu0 %1869
        %1871 = vrot.lane.b32.xlu0 %v1789, 28
        %v1872 = vpop.permute.xlu0 %1871
        %1873 = vrot.lane.b32.xlu0 %v1790, 28
        %v1874 = vpop.permute.xlu0 %1873
        %1875 = vrot.lane.b32.xlu0 %v1791, 28
        %v1876 = vpop.permute.xlu0 %1875
        %1877 = vrot.lane.b32.xlu0 %v1792, 28
        %v1878 = vpop.permute.xlu0 %1877
        %1879 = vrot.lane.b32.xlu0 %v1793, 28
        %v1880 = vpop.permute.xlu0 %1879
        %1881 = vrot.lane.b32.xlu0 %v1794, 28
        %v1882 = vpop.permute.xlu0 %1881
        %1883 = vrot.lane.b32.xlu0 %v1795, 28
        %v1884 = vpop.permute.xlu0 %1883
        %1885 = vrot.lane.b32.xlu0 %v1796, 28
        %v1886 = vpop.permute.xlu0 %1885
        %1887 = vrot.lane.b32.xlu0 %v1797, 28
        %v1888 = vpop.permute.xlu0 %1887
        %1889 = vrot.lane.b32.xlu0 %v1798, 28
        %v1890 = vpop.permute.xlu0 %1889
        %1891 = vrot.lane.b32.xlu0 %v1799, 28
        %v1892 = vpop.permute.xlu0 %1891
        %1893 = vrot.lane.b32.xlu0 %v1800, 28
        %v1894 = vpop.permute.xlu0 %1893
        %1895 = vrot.lane.b32.xlu0 %v1801, 28
        %v1896 = vpop.permute.xlu0 %1895
        %1897 = vrot.lane.b32.xlu0 %v1802, 28
        %v1898 = vpop.permute.xlu0 %1897
        %vm1931 = vcmask 261344
        %1932 = vst.msk [vmem:[#allocation3] sm:$0xff] %vm1931, %v1836
        %1933 = vst.msk [vmem:[#allocation3 + $0x8] sm:$0xff] %vm1931, %v1838
        %1934 = vst.msk [vmem:[#allocation3 + $0x10] sm:$0xff] %vm1931, %v1840
        %1935 = vst.msk [vmem:[#allocation3 + $0x18] sm:$0xff] %vm1931, %v1842
        %1936 = vst.msk [vmem:[#allocation3 + $0x20] sm:$0xff] %vm1931, %v1844
        %1937 = vst.msk [vmem:[#allocation3 + $0x28] sm:$0xff] %vm1931, %v1846
        %1938 = vst.msk [vmem:[#allocation3 + $0x30] sm:$0xff] %vm1931, %v1848
        %1939 = vst.msk [vmem:[#allocation3 + $0x38] sm:$0xff] %vm1931, %v1850
        %1940 = vst.msk [vmem:[#allocation3 + $0x40] sm:$0xff] %vm1931, %v1852
        %1941 = vst.msk [vmem:[#allocation3 + $0x48] sm:$0xff] %vm1931, %v1854
        %1942 = vst.msk [vmem:[#allocation3 + $0x50] sm:$0xff] %vm1931, %v1856
        %1943 = vst.msk [vmem:[#allocation3 + $0x58] sm:$0xff] %vm1931, %v1858
        %1944 = vst.msk [vmem:[#allocation3 + $0x60] sm:$0xff] %vm1931, %v1860
        %1945 = vst.msk [vmem:[#allocation3 + $0x68] sm:$0xff] %vm1931, %v1862
        %1946 = vst.msk [vmem:[#allocation3 + $0x70] sm:$0xff] %vm1931, %v1864
        %1947 = vst.msk [vmem:[#allocation3 + $0x78] sm:$0xff] %vm1931, %v1866
        %1948 = vst.msk [vmem:[#allocation3 + $0x80] sm:$0xff] %vm1931, %v1868
        %1949 = vst.msk [vmem:[#allocation3 + $0x88] sm:$0xff] %vm1931, %v1870
        %1950 = vst.msk [vmem:[#allocation3 + $0x90] sm:$0xff] %vm1931, %v1872
        %1951 = vst.msk [vmem:[#allocation3 + $0x98] sm:$0xff] %vm1931, %v1874
        %1952 = vst.msk [vmem:[#allocation3 + $0xa0] sm:$0xff] %vm1931, %v1876
        %1953 = vst.msk [vmem:[#allocation3 + $0xa8] sm:$0xff] %vm1931, %v1878
        %1954 = vst.msk [vmem:[#allocation3 + $0xb0] sm:$0xff] %vm1931, %v1880
        %1955 = vst.msk [vmem:[#allocation3 + $0xb8] sm:$0xff] %vm1931, %v1882
        %1956 = vst.msk [vmem:[#allocation3 + $0xc0] sm:$0xff] %vm1931, %v1884
        %1957 = vst.msk [vmem:[#allocation3 + $0xc8] sm:$0xff] %vm1931, %v1886
        %1958 = vst.msk [vmem:[#allocation3 + $0xd0] sm:$0xff] %vm1931, %v1888
        %1959 = vst.msk [vmem:[#allocation3 + $0xd8] sm:$0xff] %vm1931, %v1890
        %1960 = vst.msk [vmem:[#allocation3 + $0xe0] sm:$0xff] %vm1931, %v1892
        %1961 = vst.msk [vmem:[#allocation3 + $0xe8] sm:$0xff] %vm1931, %v1894
        %1962 = vst.msk [vmem:[#allocation3 + $0xf0] sm:$0xff] %vm1931, %v1896
        %1963 = vst.msk [vmem:[#allocation3 + $0xf8] sm:$0xff] %vm1931, %v1898
        %v1964 = vld [vmem:[%s1577 + $0x2] sm:$0xff]
        %v1965 = vld [vmem:[%s1577 + $0xa] sm:$0xff]
        %v1966 = vld [vmem:[%s1577 + $0x1a] sm:$0xff]
        %v1967 = vld [vmem:[%s1577 + $0x22] sm:$0xff]
        %v1968 = vld [vmem:[%s1577 + $0x32] sm:$0xff]
        %v1969 = vld [vmem:[%s1577 + $0x3a] sm:$0xff]
        %v1970 = vld [vmem:[%s1577 + $0x4a] sm:$0xff]
        %v1971 = vld [vmem:[%s1577 + $0x52] sm:$0xff]
        %v1972 = vld [vmem:[%s1577 + $0x62] sm:$0xff]
        %v1973 = vld [vmem:[%s1577 + $0x6a] sm:$0xff]
        %v1974 = vld [vmem:[%s1577 + $0x7a] sm:$0xff]
        %v1975 = vld [vmem:[%s1577 + $0x82] sm:$0xff]
        %v1976 = vld [vmem:[%s1577 + $0x92] sm:$0xff]
        %v1977 = vld [vmem:[%s1577 + $0x9a] sm:$0xff]
        %v1978 = vld [vmem:[%s1577 + $0xaa] sm:$0xff]
        %v1979 = vld [vmem:[%s1577 + $0xb2] sm:$0xff]
        %v1980 = vld [vmem:[%s1577 + $0xc2] sm:$0xff]
        %v1981 = vld [vmem:[%s1577 + $0xca] sm:$0xff]
        %v1982 = vld [vmem:[%s1577 + $0xda] sm:$0xff]
        %v1983 = vld [vmem:[%s1577 + $0xe2] sm:$0xff]
        %v1984 = vld [vmem:[%s1577 + $0xf2] sm:$0xff]
        %v1985 = vld [vmem:[%s1577 + $0xfa] sm:$0xff]
        %v1986 = vld [vmem:[%s1577 + $0x10a] sm:$0xff]
        %v1987 = vld [vmem:[%s1577 + $0x112] sm:$0xff]
        %v1988 = vld [vmem:[%s1577 + $0x122] sm:$0xff]
        %v1989 = vld [vmem:[%s1577 + $0x12a] sm:$0xff]
        %v1990 = vld [vmem:[%s1577 + $0x13a] sm:$0xff]
        %v1991 = vld [vmem:[%s1577 + $0x142] sm:$0xff]
        %v1992 = vld [vmem:[%s1577 + $0x152] sm:$0xff]
        %v1993 = vld [vmem:[%s1577 + $0x15a] sm:$0xff]
        %v1994 = vld [vmem:[%s1577 + $0x16a] sm:$0xff]
        %v1995 = vld [vmem:[%s1577 + $0x172] sm:$0xff]
        %2028 = vrot.lane.b32.xlu0 %v1964, 32
        %v2029 = vpop.permute.xlu0 %2028
        %2030 = vrot.lane.b32.xlu0 %v1965, 32
        %v2031 = vpop.permute.xlu0 %2030
        %2032 = vrot.lane.b32.xlu0 %v1966, 32
        %v2033 = vpop.permute.xlu0 %2032
        %2034 = vrot.lane.b32.xlu0 %v1967, 32
        %v2035 = vpop.permute.xlu0 %2034
        %2036 = vrot.lane.b32.xlu0 %v1968, 32
        %v2037 = vpop.permute.xlu0 %2036
        %2038 = vrot.lane.b32.xlu0 %v1969, 32
        %v2039 = vpop.permute.xlu0 %2038
        %2040 = vrot.lane.b32.xlu0 %v1970, 32
        %v2041 = vpop.permute.xlu0 %2040
        %2042 = vrot.lane.b32.xlu0 %v1971, 32
        %v2043 = vpop.permute.xlu0 %2042
        %2044 = vrot.lane.b32.xlu0 %v1972, 32
        %v2045 = vpop.permute.xlu0 %2044
        %2046 = vrot.lane.b32.xlu0 %v1973, 32
        %v2047 = vpop.permute.xlu0 %2046
        %2048 = vrot.lane.b32.xlu0 %v1974, 32
        %v2049 = vpop.permute.xlu0 %2048
        %2050 = vrot.lane.b32.xlu0 %v1975, 32
        %v2051 = vpop.permute.xlu0 %2050
        %2052 = vrot.lane.b32.xlu0 %v1976, 32
        %v2053 = vpop.permute.xlu0 %2052
        %2054 = vrot.lane.b32.xlu0 %v1977, 32
        %v2055 = vpop.permute.xlu0 %2054
        %2056 = vrot.lane.b32.xlu0 %v1978, 32
        %v2057 = vpop.permute.xlu0 %2056
        %2058 = vrot.lane.b32.xlu0 %v1979, 32
        %v2059 = vpop.permute.xlu0 %2058
        %2060 = vrot.lane.b32.xlu0 %v1980, 32
        %v2061 = vpop.permute.xlu0 %2060
        %2062 = vrot.lane.b32.xlu0 %v1981, 32
        %v2063 = vpop.permute.xlu0 %2062
        %2064 = vrot.lane.b32.xlu0 %v1982, 32
        %v2065 = vpop.permute.xlu0 %2064
        %2066 = vrot.lane.b32.xlu0 %v1983, 32
        %v2067 = vpop.permute.xlu0 %2066
        %2068 = vrot.lane.b32.xlu0 %v1984, 32
        %v2069 = vpop.permute.xlu0 %2068
        %2070 = vrot.lane.b32.xlu0 %v1985, 32
        %v2071 = vpop.permute.xlu0 %2070
        %2072 = vrot.lane.b32.xlu0 %v1986, 32
        %v2073 = vpop.permute.xlu0 %2072
        %2074 = vrot.lane.b32.xlu0 %v1987, 32
        %v2075 = vpop.permute.xlu0 %2074
        %2076 = vrot.lane.b32.xlu0 %v1988, 32
        %v2077 = vpop.permute.xlu0 %2076
        %2078 = vrot.lane.b32.xlu0 %v1989, 32
        %v2079 = vpop.permute.xlu0 %2078
        %2080 = vrot.lane.b32.xlu0 %v1990, 32
        %v2081 = vpop.permute.xlu0 %2080
        %2082 = vrot.lane.b32.xlu0 %v1991, 32
        %v2083 = vpop.permute.xlu0 %2082
        %2084 = vrot.lane.b32.xlu0 %v1992, 32
        %v2085 = vpop.permute.xlu0 %2084
        %2086 = vrot.lane.b32.xlu0 %v1993, 32
        %v2087 = vpop.permute.xlu0 %2086
        %2088 = vrot.lane.b32.xlu0 %v1994, 32
        %v2089 = vpop.permute.xlu0 %2088
        %2090 = vrot.lane.b32.xlu0 %v1995, 32
        %v2091 = vpop.permute.xlu0 %2090
        %vm2124 = vcmask 294144
        %2125 = vst.msk [vmem:[#allocation3] sm:$0xff] %vm2124, %v2029
        %2126 = vst.msk [vmem:[#allocation3 + $0x8] sm:$0xff] %vm2124, %v2031
        %2127 = vst.msk [vmem:[#allocation3 + $0x10] sm:$0xff] %vm2124, %v2033
        %2128 = vst.msk [vmem:[#allocation3 + $0x18] sm:$0xff] %vm2124, %v2035
        %2129 = vst.msk [vmem:[#allocation3 + $0x20] sm:$0xff] %vm2124, %v2037
        %2130 = vst.msk [vmem:[#allocation3 + $0x28] sm:$0xff] %vm2124, %v2039
        %2131 = vst.msk [vmem:[#allocation3 + $0x30] sm:$0xff] %vm2124, %v2041
        %2132 = vst.msk [vmem:[#allocation3 + $0x38] sm:$0xff] %vm2124, %v2043
        %2133 = vst.msk [vmem:[#allocation3 + $0x40] sm:$0xff] %vm2124, %v2045
        %2134 = vst.msk [vmem:[#allocation3 + $0x48] sm:$0xff] %vm2124, %v2047
        %2135 = vst.msk [vmem:[#allocation3 + $0x50] sm:$0xff] %vm2124, %v2049
        %2136 = vst.msk [vmem:[#allocation3 + $0x58] sm:$0xff] %vm2124, %v2051
        %2137 = vst.msk [vmem:[#allocation3 + $0x60] sm:$0xff] %vm2124, %v2053
        %2138 = vst.msk [vmem:[#allocation3 + $0x68] sm:$0xff] %vm2124, %v2055
        %2139 = vst.msk [vmem:[#allocation3 + $0x70] sm:$0xff] %vm2124, %v2057
        %2140 = vst.msk [vmem:[#allocation3 + $0x78] sm:$0xff] %vm2124, %v2059
        %2141 = vst.msk [vmem:[#allocation3 + $0x80] sm:$0xff] %vm2124, %v2061
        %2142 = vst.msk [vmem:[#allocation3 + $0x88] sm:$0xff] %vm2124, %v2063
        %2143 = vst.msk [vmem:[#allocation3 + $0x90] sm:$0xff] %vm2124, %v2065
        %2144 = vst.msk [vmem:[#allocation3 + $0x98] sm:$0xff] %vm2124, %v2067
        %2145 = vst.msk [vmem:[#allocation3 + $0xa0] sm:$0xff] %vm2124, %v2069
        %2146 = vst.msk [vmem:[#allocation3 + $0xa8] sm:$0xff] %vm2124, %v2071
        %2147 = vst.msk [vmem:[#allocation3 + $0xb0] sm:$0xff] %vm2124, %v2073
        %2148 = vst.msk [vmem:[#allocation3 + $0xb8] sm:$0xff] %vm2124, %v2075
        %2149 = vst.msk [vmem:[#allocation3 + $0xc0] sm:$0xff] %vm2124, %v2077
        %2150 = vst.msk [vmem:[#allocation3 + $0xc8] sm:$0xff] %vm2124, %v2079
        %2151 = vst.msk [vmem:[#allocation3 + $0xd0] sm:$0xff] %vm2124, %v2081
        %2152 = vst.msk [vmem:[#allocation3 + $0xd8] sm:$0xff] %vm2124, %v2083
        %2153 = vst.msk [vmem:[#allocation3 + $0xe0] sm:$0xff] %vm2124, %v2085
        %2154 = vst.msk [vmem:[#allocation3 + $0xe8] sm:$0xff] %vm2124, %v2087
        %2155 = vst.msk [vmem:[#allocation3 + $0xf0] sm:$0xff] %vm2124, %v2089
        %2156 = vst.msk [vmem:[#allocation3 + $0xf8] sm:$0xff] %vm2124, %v2091
        %v2157 = vld [vmem:[#allocation3] sm:$0xff]
        %v2158 = vld [vmem:[#allocation3 + $0x8] sm:$0xff]
        %v2159 = vld [vmem:[#allocation3 + $0x10] sm:$0xff]
        %v2160 = vld [vmem:[#allocation3 + $0x18] sm:$0xff]
        %v2161 = vld [vmem:[#allocation3 + $0x20] sm:$0xff]
        %v2162 = vld [vmem:[#allocation3 + $0x28] sm:$0xff]
        %v2163 = vld [vmem:[#allocation3 + $0x30] sm:$0xff]
        %v2164 = vld [vmem:[#allocation3 + $0x38] sm:$0xff]
        %v2165 = vld [vmem:[#allocation3 + $0x40] sm:$0xff]
        %v2166 = vld [vmem:[#allocation3 + $0x48] sm:$0xff]
        %v2167 = vld [vmem:[#allocation3 + $0x50] sm:$0xff]
        %v2168 = vld [vmem:[#allocation3 + $0x58] sm:$0xff]
        %v2169 = vld [vmem:[#allocation3 + $0x60] sm:$0xff]
        %v2170 = vld [vmem:[#allocation3 + $0x68] sm:$0xff]
        %v2171 = vld [vmem:[#allocation3 + $0x70] sm:$0xff]
        %v2172 = vld [vmem:[#allocation3 + $0x78] sm:$0xff]
        %v2173 = vld [vmem:[#allocation3 + $0x80] sm:$0xff]
        %v2174 = vld [vmem:[#allocation3 + $0x88] sm:$0xff]
        %v2175 = vld [vmem:[#allocation3 + $0x90] sm:$0xff]
        %v2176 = vld [vmem:[#allocation3 + $0x98] sm:$0xff]
        %v2177 = vld [vmem:[#allocation3 + $0xa0] sm:$0xff]
        %v2178 = vld [vmem:[#allocation3 + $0xa8] sm:$0xff]
        %v2179 = vld [vmem:[#allocation3 + $0xb0] sm:$0xff]
        %v2180 = vld [vmem:[#allocation3 + $0xb8] sm:$0xff]
        %v2181 = vld [vmem:[#allocation3 + $0xc0] sm:$0xff]
        %v2182 = vld [vmem:[#allocation3 + $0xc8] sm:$0xff]
        %v2183 = vld [vmem:[#allocation3 + $0xd0] sm:$0xff]
        %v2184 = vld [vmem:[#allocation3 + $0xd8] sm:$0xff]
        %v2185 = vld [vmem:[#allocation3 + $0xe0] sm:$0xff]
        %v2186 = vld [vmem:[#allocation3 + $0xe8] sm:$0xff]
        %v2187 = vld [vmem:[#allocation3 + $0xf0] sm:$0xff]
        %v2188 = vld [vmem:[#allocation3 + $0xf8] sm:$0xff]
        %v2189 = vpack.c.bf16 %v2158, %v2157
        %v2190 = vpack.c.bf16 %v2160, %v2159
        %v2191 = vpack.c.bf16 %v2162, %v2161
        %v2192 = vpack.c.bf16 %v2164, %v2163
        %v2193 = vpack.c.bf16 %v2166, %v2165
        %v2194 = vpack.c.bf16 %v2168, %v2167
        %v2195 = vpack.c.bf16 %v2170, %v2169
        %v2196 = vpack.c.bf16 %v2172, %v2171
        %v2197 = vpack.c.bf16 %v2174, %v2173
        %v2198 = vpack.c.bf16 %v2176, %v2175
        %v2199 = vpack.c.bf16 %v2178, %v2177
        %v2200 = vpack.c.bf16 %v2180, %v2179
        %v2201 = vpack.c.bf16 %v2182, %v2181
        %v2202 = vpack.c.bf16 %v2184, %v2183
        %v2203 = vpack.c.bf16 %v2186, %v2185
        %v2204 = vpack.c.bf16 %v2188, %v2187
        %v2205 = vld [vmem:[#allocation7] sm:$0xf]
        %v2206 = vld [vmem:[#allocation7 + $0x4] sm:$0xf]
        %v2207 = vld [vmem:[#allocation7 + $0x8] sm:$0xf]
        %v2208 = vld [vmem:[#allocation7 + $0xc] sm:$0xf]
        %v2209 = vld [vmem:[#allocation7 + $0x10] sm:$0x3]
        %v2215 = vunpack.c.l.b16 %v2205
        %v2216 = vunpack.c.l.b16 %v2206
        %v2217 = vunpack.c.l.b16 %v2207
        %v2218 = vunpack.c.l.b16 %v2208
        %v2219 = vunpack.c.l.b16 %v2209
        %v2220 = vpack.c.b16 %v2216, %v2215
        %v2221 = vpack.c.b16 %v2218, %v2217
        %v2222 = vpack.c.b16 %v2219, %v2219
        %vm2225 = vcmask 293888
        %v2227 = vsel %vm2225, %v2189, 0
        %v2230 = vsel %vm2225, %v2190, 0
        %v2233 = vsel %vm2225, %v2191, 0
        %v2236 = vsel %vm2225, %v2192, 0
        %v2239 = vsel %vm2225, %v2193, 0
        %v2242 = vsel %vm2225, %v2194, 0
        %v2245 = vsel %vm2225, %v2195, 0
        %v2248 = vsel %vm2225, %v2196, 0
        %v2251 = vsel %vm2225, %v2197, 0
        %v2254 = vsel %vm2225, %v2198, 0
        %v2257 = vsel %vm2225, %v2199, 0
        %v2260 = vsel %vm2225, %v2200, 0
        %v2263 = vsel %vm2225, %v2201, 0
        %v2266 = vsel %vm2225, %v2202, 0
        %v2269 = vsel %vm2225, %v2203, 0
        %v2272 = vsel %vm2225, %v2204, 0
        %vm2274 = vcmask 1041408
        %v2276 = vsel %vm2274, %v2222, 0
        %2278 = vmatprep.subr.bf16.mxu0 0
        %2279 = vmatpush1.bf16.msra.mxu0 %v2220
        %2280 = vmatprep.subr.bf16.mxu0 0
        %2281 = vmatpush1.bf16.msra.mxu0 %v2221
        %2282 = vmatprep.subr.bf16.mxu0 0
        %2283 = vmatpush1.bf16.msra.mxu0 %v2276
        %2284 = vmatprep.subr.bf16.mxu0 0
        %2285 = vmatpush1.bf16.msra.mxu0 0
        %2286 = vmatprep.subr.bf16.mxu0 0
        %2287 = vmatpush1.bf16.msra.mxu0 0
        %2288 = vmatprep.subr.bf16.mxu0 0
        %2289 = vmatpush1.bf16.msra.mxu0 0
        %2290 = vmatprep.subr.bf16.mxu0 0
        %2291 = vmatpush1.bf16.msra.mxu0 0
        %2292 = vmatprep.subr.bf16.mxu0 0
        %2293 = vmatpush1.bf16.msra.mxu0 0
        %2294 = vmatprep.subr.bf16.mxu0 0
        %2295 = vmatpush1.bf16.msra.mxu0 0
        %2296 = vmatprep.subr.bf16.mxu0 0
        %2297 = vmatpush1.bf16.msra.mxu0 0
        %2298 = vmatprep.subr.bf16.mxu0 0
        %2299 = vmatpush1.bf16.msra.mxu0 0
        %2300 = vmatprep.subr.bf16.mxu0 0
        %2301 = vmatpush1.bf16.msra.mxu0 0
        %2302 = vmatprep.subr.bf16.mxu0 0
        %2303 = vmatpush1.bf16.msra.mxu0 0
        %2304 = vmatprep.subr.bf16.mxu0 0
        %2305 = vmatpush1.bf16.msra.mxu0 0
        %2306 = vmatprep.subr.bf16.mxu0 0
        %2307 = vmatpush1.bf16.msra.mxu0 0
        %2308 = vmatprep.subr.bf16.mxu0 0
        %2309 = vmatpush1.bf16.msra.mxu0 0
        %2310 = vmatprep.mubr.bf16.mxu0 0
        %2311 = vmatmul.mubr.bf16.gmra.mrb[0].mxu0 %v2227
        %v2312 = vpop.f32.mrb[0].mxu0
        %v2313 = vadd.f32 0.0, %v2312
        %v2314 = vpop.f32.mrb[0].mxu0
        %v2315 = vpop.f32.mrb[0].mxu0
        %v2316 = vadd.f32 0.0, %v2315
        %v2317 = vpop.f32.mrb[0].mxu0
        %2318 = vmatprep.mubr.bf16.mxu0 0
        %2319 = vmatmul.mubr.bf16.gmra.mrb[0].mxu0 %v2230
        %v2320 = vpop.f32.mrb[0].mxu0
        %v2321 = vadd.f32 0.0, %v2320
        %v2322 = vpop.f32.mrb[0].mxu0
        %v2323 = vpop.f32.mrb[0].mxu0
        %v2324 = vadd.f32 0.0, %v2323
        %v2325 = vpop.f32.mrb[0].mxu0
        %2326 = vmatprep.mubr.bf16.mxu0 0
        %2327 = vmatmul.mubr.bf16.gmra.mrb[0].mxu0 %v2233
        %v2328 = vpop.f32.mrb[0].mxu0
        %v2329 = vadd.f32 0.0, %v2328
        %v2330 = vpop.f32.mrb[0].mxu0
        %v2331 = vpop.f32.mrb[0].mxu0
        %v2332 = vadd.f32 0.0, %v2331
        %v2333 = vpop.f32.mrb[0].mxu0
        %2334 = vmatprep.mubr.bf16.mxu0 0
        %2335 = vmatmul.mubr.bf16.gmra.mrb[0].mxu0 %v2236
        %v2336 = vpop.f32.mrb[0].mxu0
        %v2337 = vadd.f32 0.0, %v2336
        %v2338 = vpop.f32.mrb[0].mxu0
        %v2339 = vpop.f32.mrb[0].mxu0
        %v2340 = vadd.f32 0.0, %v2339
        %v2341 = vpop.f32.mrb[0].mxu0
        %2342 = vmatprep.mubr.bf16.mxu0 0
        %2343 = vmatmul.mubr.bf16.gmra.mrb[0].mxu0 %v2239
        %v2344 = vpop.f32.mrb[0].mxu0
        %v2345 = vadd.f32 0.0, %v2344
        %v2346 = vpop.f32.mrb[0].mxu0
        %v2347 = vpop.f32.mrb[0].mxu0
        %v2348 = vadd.f32 0.0, %v2347
        %v2349 = vpop.f32.mrb[0].mxu0
        %2350 = vmatprep.mubr.bf16.mxu0 0
        %2351 = vmatmul.mubr.bf16.gmra.mrb[0].mxu0 %v2242
        %v2352 = vpop.f32.mrb[0].mxu0
        %v2353 = vadd.f32 0.0, %v2352
        %v2354 = vpop.f32.mrb[0].mxu0
        %v2355 = vpop.f32.mrb[0].mxu0
        %v2356 = vadd.f32 0.0, %v2355
        %v2357 = vpop.f32.mrb[0].mxu0
        %2358 = vmatprep.mubr.bf16.mxu0 0
        %2359 = vmatmul.mubr.bf16.gmra.mrb[0].mxu0 %v2245
        %v2360 = vpop.f32.mrb[0].mxu0
        %v2361 = vadd.f32 0.0, %v2360
        %v2362 = vpop.f32.mrb[0].mxu0
        %v2363 = vpop.f32.mrb[0].mxu0
        %v2364 = vadd.f32 0.0, %v2363
        %v2365 = vpop.f32.mrb[0].mxu0
        %2366 = vmatprep.mubr.bf16.mxu0 0
        %2367 = vmatmul.mubr.bf16.gmra.mrb[0].mxu0 %v2248
        %v2368 = vpop.f32.mrb[0].mxu0
        %v2369 = vadd.f32 0.0, %v2368
        %v2370 = vpop.f32.mrb[0].mxu0
        %v2371 = vpop.f32.mrb[0].mxu0
        %v2372 = vadd.f32 0.0, %v2371
        %v2373 = vpop.f32.mrb[0].mxu0
        %2374 = vmatprep.mubr.bf16.mxu0 0
        %2375 = vmatmul.mubr.bf16.gmra.mrb[0].mxu0 %v2251
        %v2376 = vpop.f32.mrb[0].mxu0
        %v2377 = vadd.f32 0.0, %v2376
        %v2378 = vpop.f32.mrb[0].mxu0
        %v2379 = vpop.f32.mrb[0].mxu0
        %v2380 = vadd.f32 0.0, %v2379
        %v2381 = vpop.f32.mrb[0].mxu0
        %2382 = vmatprep.mubr.bf16.mxu0 0
        %2383 = vmatmul.mubr.bf16.gmra.mrb[0].mxu0 %v2254
        %v2384 = vpop.f32.mrb[0].mxu0
        %v2385 = vadd.f32 0.0, %v2384
        %v2386 = vpop.f32.mrb[0].mxu0
        %v2387 = vpop.f32.mrb[0].mxu0
        %v2388 = vadd.f32 0.0, %v2387
        %v2389 = vpop.f32.mrb[0].mxu0
        %2390 = vmatprep.mubr.bf16.mxu0 0
        %2391 = vmatmul.mubr.bf16.gmra.mrb[0].mxu0 %v2257
        %v2392 = vpop.f32.mrb[0].mxu0
        %v2393 = vadd.f32 0.0, %v2392
        %v2394 = vpop.f32.mrb[0].mxu0
        %v2395 = vpop.f32.mrb[0].mxu0
        %v2396 = vadd.f32 0.0, %v2395
        %v2397 = vpop.f32.mrb[0].mxu0
        %2398 = vmatprep.mubr.bf16.mxu0 0
        %2399 = vmatmul.mubr.bf16.gmra.mrb[0].mxu0 %v2260
        %v2400 = vpop.f32.mrb[0].mxu0
        %v2401 = vadd.f32 0.0, %v2400
        %v2402 = vpop.f32.mrb[0].mxu0
        %v2403 = vpop.f32.mrb[0].mxu0
        %v2404 = vadd.f32 0.0, %v2403
        %v2405 = vpop.f32.mrb[0].mxu0
        %2406 = vmatprep.mubr.bf16.mxu0 0
        %2407 = vmatmul.mubr.bf16.gmra.mrb[0].mxu0 %v2263
        %v2408 = vpop.f32.mrb[0].mxu0
        %v2409 = vadd.f32 0.0, %v2408
        %v2410 = vpop.f32.mrb[0].mxu0
        %v2411 = vpop.f32.mrb[0].mxu0
        %v2412 = vadd.f32 0.0, %v2411
        %v2413 = vpop.f32.mrb[0].mxu0
        %2414 = vmatprep.mubr.bf16.mxu0 0
        %2415 = vmatmul.mubr.bf16.gmra.mrb[0].mxu0 %v2266
        %v2416 = vpop.f32.mrb[0].mxu0
        %v2417 = vadd.f32 0.0, %v2416
        %v2418 = vpop.f32.mrb[0].mxu0
        %v2419 = vpop.f32.mrb[0].mxu0
        %v2420 = vadd.f32 0.0, %v2419
        %v2421 = vpop.f32.mrb[0].mxu0
        %2422 = vmatprep.mubr.bf16.mxu0 0
        %2423 = vmatmul.mubr.bf16.gmra.mrb[0].mxu0 %v2269
        %v2424 = vpop.f32.mrb[0].mxu0
        %v2425 = vadd.f32 0.0, %v2424
        %v2426 = vpop.f32.mrb[0].mxu0
        %v2427 = vpop.f32.mrb[0].mxu0
        %v2428 = vadd.f32 0.0, %v2427
        %v2429 = vpop.f32.mrb[0].mxu0
        %2430 = vmatprep.mubr.bf16.mxu0 0
        %2431 = vmatmul.mubr.bf16.gmra.mrb[0].mxu0 %v2272
        %v2432 = vpop.f32.mrb[0].mxu0
        %v2433 = vadd.f32 0.0, %v2432
        %v2434 = vpop.f32.mrb[0].mxu0
        %v2435 = vpop.f32.mrb[0].mxu0
        %v2436 = vadd.f32 0.0, %v2435
        %v2437 = vpop.f32.mrb[0].mxu0
        %2438 = vdwg.mxu0
        %2439 = vst.msk [vmem:[%s313] sm:$0xff] %vm327, %v2313
        %2440 = vst.msk [vmem:[%s313 + $0x8] sm:$0xff] %vm327, %v2316
        %2441 = vst.msk [vmem:[%s313 + $0x10] sm:$0xff] %vm327, %v2321
        %2442 = vst.msk [vmem:[%s313 + $0x18] sm:$0xff] %vm327, %v2324
        %2443 = vst.msk [vmem:[%s313 + $0x20] sm:$0xff] %vm327, %v2329
        %2444 = vst.msk [vmem:[%s313 + $0x28] sm:$0xff] %vm327, %v2332
        %2445 = vst.msk [vmem:[%s313 + $0x30] sm:$0xff] %vm327, %v2337
        %2446 = vst.msk [vmem:[%s313 + $0x38] sm:$0xff] %vm327, %v2340
        %2447 = vst.msk [vmem:[%s313 + $0x40] sm:$0xff] %vm327, %v2345
        %2448 = vst.msk [vmem:[%s313 + $0x48] sm:$0xff] %vm327, %v2348
        %2449 = vst.msk [vmem:[%s313 + $0x50] sm:$0xff] %vm327, %v2353
        %2450 = vst.msk [vmem:[%s313 + $0x58] sm:$0xff] %vm327, %v2356
        %2451 = vst.msk [vmem:[%s313 + $0x60] sm:$0xff] %vm327, %v2361
        %2452 = vst.msk [vmem:[%s313 + $0x68] sm:$0xff] %vm327, %v2364
        %2453 = vst.msk [vmem:[%s313 + $0x70] sm:$0xff] %vm327, %v2369
        %2454 = vst.msk [vmem:[%s313 + $0x78] sm:$0xff] %vm327, %v2372
        %2455 = vst.msk [vmem:[%s313 + $0x80] sm:$0xff] %vm327, %v2377
        %2456 = vst.msk [vmem:[%s313 + $0x88] sm:$0xff] %vm327, %v2380
        %2457 = vst.msk [vmem:[%s313 + $0x90] sm:$0xff] %vm327, %v2385
        %2458 = vst.msk [vmem:[%s313 + $0x98] sm:$0xff] %vm327, %v2388
        %2459 = vst.msk [vmem:[%s313 + $0xa0] sm:$0xff] %vm327, %v2393
        %2460 = vst.msk [vmem:[%s313 + $0xa8] sm:$0xff] %vm327, %v2396
        %2461 = vst.msk [vmem:[%s313 + $0xb0] sm:$0xff] %vm327, %v2401
        %2462 = vst.msk [vmem:[%s313 + $0xb8] sm:$0xff] %vm327, %v2404
        %2463 = vst.msk [vmem:[%s313 + $0xc0] sm:$0xff] %vm327, %v2409
        %2464 = vst.msk [vmem:[%s313 + $0xc8] sm:$0xff] %vm327, %v2412
        %2465 = vst.msk [vmem:[%s313 + $0xd0] sm:$0xff] %vm327, %v2417
        %2466 = vst.msk [vmem:[%s313 + $0xd8] sm:$0xff] %vm327, %v2420
        %2467 = vst.msk [vmem:[%s313 + $0xe0] sm:$0xff] %vm327, %v2425
        %2468 = vst.msk [vmem:[%s313 + $0xe8] sm:$0xff] %vm327, %v2428
        %2469 = vst.msk [vmem:[%s313 + $0xf0] sm:$0xff] %vm327, %v2433
        %2470 = vst.msk [vmem:[%s313 + $0xf8] sm:$0xff] %vm327, %v2436
        %v2471 = vsel %vm327, %v2313, 0.0
        %v2472 = vsel %vm327, %v2316, 0.0
        %v2473 = vadd.f32 %v2471, %v2472
        %v2474 = vsel %vm327, %v2321, 0.0
        %v2475 = vadd.f32 %v2473, %v2474
        %v2476 = vsel %vm327, %v2324, 0.0
        %v2477 = vadd.f32 %v2475, %v2476
        %v2478 = vsel %vm327, %v2329, 0.0
        %v2479 = vadd.f32 %v2477, %v2478
        %v2480 = vsel %vm327, %v2332, 0.0
        %v2481 = vadd.f32 %v2479, %v2480
        %v2482 = vsel %vm327, %v2337, 0.0
        %v2483 = vadd.f32 %v2481, %v2482
        %v2484 = vsel %vm327, %v2340, 0.0
        %v2485 = vadd.f32 %v2483, %v2484
        %v2486 = vsel %vm327, %v2345, 0.0
        %v2487 = vadd.f32 %v2485, %v2486
        %v2488 = vsel %vm327, %v2348, 0.0
        %v2489 = vadd.f32 %v2487, %v2488
        %v2490 = vsel %vm327, %v2353, 0.0
        %v2491 = vadd.f32 %v2489, %v2490
        %v2492 = vsel %vm327, %v2356, 0.0
        %v2493 = vadd.f32 %v2491, %v2492
        %v2494 = vsel %vm327, %v2361, 0.0
        %v2495 = vadd.f32 %v2493, %v2494
        %v2496 = vsel %vm327, %v2364, 0.0
        %v2497 = vadd.f32 %v2495, %v2496
        %v2498 = vsel %vm327, %v2369, 0.0
        %v2499 = vadd.f32 %v2497, %v2498
        %v2500 = vsel %vm327, %v2372, 0.0
        %v2501 = vadd.f32 %v2499, %v2500
        %v2502 = vsel %vm327, %v2377, 0.0
        %v2503 = vadd.f32 %v2501, %v2502
        %v2504 = vsel %vm327, %v2380, 0.0
        %v2505 = vadd.f32 %v2503, %v2504
        %v2506 = vsel %vm327, %v2385, 0.0
        %v2507 = vadd.f32 %v2505, %v2506
        %v2508 = vsel %vm327, %v2388, 0.0
        %v2509 = vadd.f32 %v2507, %v2508
        %v2510 = vsel %vm327, %v2393, 0.0
        %v2511 = vadd.f32 %v2509, %v2510
        %v2512 = vsel %vm327, %v2396, 0.0
        %v2513 = vadd.f32 %v2511, %v2512
        %v2514 = vsel %vm327, %v2401, 0.0
        %v2515 = vadd.f32 %v2513, %v2514
        %v2516 = vsel %vm327, %v2404, 0.0
        %v2517 = vadd.f32 %v2515, %v2516
        %v2518 = vsel %vm327, %v2409, 0.0
        %v2519 = vadd.f32 %v2517, %v2518
        %v2520 = vsel %vm327, %v2412, 0.0
        %v2521 = vadd.f32 %v2519, %v2520
        %v2522 = vsel %vm327, %v2417, 0.0
        %v2523 = vadd.f32 %v2521, %v2522
        %v2524 = vsel %vm327, %v2420, 0.0
        %v2525 = vadd.f32 %v2523, %v2524
        %v2526 = vsel %vm327, %v2425, 0.0
        %v2527 = vadd.f32 %v2525, %v2526
        %v2528 = vsel %vm327, %v2428, 0.0
        %v2529 = vadd.f32 %v2527, %v2528
        %v2530 = vsel %vm327, %v2433, 0.0
        %v2531 = vadd.f32 %v2529, %v2530
        %v2532 = vsel %vm327, %v2436, 0.0
        %v2533 = vadd.f32 %v2531, %v2532
        %v2534 = vrot.slane %v2533, 4
        %v2535 = vadd.f32 %v2533, %v2534
        %v2536 = vrot.slane %v2535, 2
        %v2537 = vadd.f32 %v2535, %v2536
        %v2538 = vrot.slane %v2537, 1
        %v2539 = vadd.f32 %v2537, %v2538
        %2540 = vst.msk [vmem:[%s319] sm:$0x1] %vm336, %v2539
        %v2541 = vmul.f32 %v2313, %v2313
        %v2542 = vmul.f32 %v2316, %v2316
        %v2543 = vmul.f32 %v2321, %v2321
        %v2544 = vmul.f32 %v2324, %v2324
        %v2545 = vmul.f32 %v2329, %v2329
        %v2546 = vmul.f32 %v2332, %v2332
        %v2547 = vmul.f32 %v2337, %v2337
        %v2548 = vmul.f32 %v2340, %v2340
        %v2549 = vmul.f32 %v2345, %v2345
        %v2550 = vmul.f32 %v2348, %v2348
        %v2551 = vmul.f32 %v2353, %v2353
        %v2552 = vmul.f32 %v2356, %v2356
        %v2553 = vmul.f32 %v2361, %v2361
        %v2554 = vmul.f32 %v2364, %v2364
        %v2555 = vmul.f32 %v2369, %v2369
        %v2556 = vmul.f32 %v2372, %v2372
        %v2557 = vmul.f32 %v2377, %v2377
        %v2558 = vmul.f32 %v2380, %v2380
        %v2559 = vmul.f32 %v2385, %v2385
        %v2560 = vmul.f32 %v2388, %v2388
        %v2561 = vmul.f32 %v2393, %v2393
        %v2562 = vmul.f32 %v2396, %v2396
        %v2563 = vmul.f32 %v2401, %v2401
        %v2564 = vmul.f32 %v2404, %v2404
        %v2565 = vmul.f32 %v2409, %v2409
        %v2566 = vmul.f32 %v2412, %v2412
        %v2567 = vmul.f32 %v2417, %v2417
        %v2568 = vmul.f32 %v2420, %v2420
        %v2569 = vmul.f32 %v2425, %v2425
        %v2570 = vmul.f32 %v2428, %v2428
        %v2571 = vmul.f32 %v2433, %v2433
        %v2572 = vmul.f32 %v2436, %v2436
        %v2573 = vsel %vm327, %v2541, 0.0
        %v2574 = vsel %vm327, %v2542, 0.0
        %v2575 = vadd.f32 %v2573, %v2574
        %v2576 = vsel %vm327, %v2543, 0.0
        %v2577 = vadd.f32 %v2575, %v2576
        %v2578 = vsel %vm327, %v2544, 0.0
        %v2579 = vadd.f32 %v2577, %v2578
        %v2580 = vsel %vm327, %v2545, 0.0
        %v2581 = vadd.f32 %v2579, %v2580
        %v2582 = vsel %vm327, %v2546, 0.0
        %v2583 = vadd.f32 %v2581, %v2582
        %v2584 = vsel %vm327, %v2547, 0.0
        %v2585 = vadd.f32 %v2583, %v2584
        %v2586 = vsel %vm327, %v2548, 0.0
        %v2587 = vadd.f32 %v2585, %v2586
        %v2588 = vsel %vm327, %v2549, 0.0
        %v2589 = vadd.f32 %v2587, %v2588
        %v2590 = vsel %vm327, %v2550, 0.0
        %v2591 = vadd.f32 %v2589, %v2590
        %v2592 = vsel %vm327, %v2551, 0.0
        %v2593 = vadd.f32 %v2591, %v2592
        %v2594 = vsel %vm327, %v2552, 0.0
        %v2595 = vadd.f32 %v2593, %v2594
        %v2596 = vsel %vm327, %v2553, 0.0
        %v2597 = vadd.f32 %v2595, %v2596
        %v2598 = vsel %vm327, %v2554, 0.0
        %v2599 = vadd.f32 %v2597, %v2598
        %v2600 = vsel %vm327, %v2555, 0.0
        %v2601 = vadd.f32 %v2599, %v2600
        %v2602 = vsel %vm327, %v2556, 0.0
        %v2603 = vadd.f32 %v2601, %v2602
        %v2604 = vsel %vm327, %v2557, 0.0
        %v2605 = vadd.f32 %v2603, %v2604
        %v2606 = vsel %vm327, %v2558, 0.0
        %v2607 = vadd.f32 %v2605, %v2606
        %v2608 = vsel %vm327, %v2559, 0.0
        %v2609 = vadd.f32 %v2607, %v2608
        %v2610 = vsel %vm327, %v2560, 0.0
        %v2611 = vadd.f32 %v2609, %v2610
        %v2612 = vsel %vm327, %v2561, 0.0
        %v2613 = vadd.f32 %v2611, %v2612
        %v2614 = vsel %vm327, %v2562, 0.0
        %v2615 = vadd.f32 %v2613, %v2614
        %v2616 = vsel %vm327, %v2563, 0.0
        %v2617 = vadd.f32 %v2615, %v2616
        %v2618 = vsel %vm327, %v2564, 0.0
        %v2619 = vadd.f32 %v2617, %v2618
        %v2620 = vsel %vm327, %v2565, 0.0
        %v2621 = vadd.f32 %v2619, %v2620
        %v2622 = vsel %vm327, %v2566, 0.0
        %v2623 = vadd.f32 %v2621, %v2622
        %v2624 = vsel %vm327, %v2567, 0.0
        %v2625 = vadd.f32 %v2623, %v2624
        %v2626 = vsel %vm327, %v2568, 0.0
        %v2627 = vadd.f32 %v2625, %v2626
        %v2628 = vsel %vm327, %v2569, 0.0
        %v2629 = vadd.f32 %v2627, %v2628
        %v2630 = vsel %vm327, %v2570, 0.0
        %v2631 = vadd.f32 %v2629, %v2630
        %v2632 = vsel %vm327, %v2571, 0.0
        %v2633 = vadd.f32 %v2631, %v2632
        %v2634 = vsel %vm327, %v2572, 0.0
        %v2635 = vadd.f32 %v2633, %v2634
        %v2636 = vrot.slane %v2635, 4
        %v2637 = vadd.f32 %v2635, %v2636
        %v2638 = vrot.slane %v2637, 2
        %v2639 = vadd.f32 %v2637, %v2638
        %v2640 = vrot.slane %v2639, 1
        %v2641 = vadd.f32 %v2639, %v2640
        %2642 = vst.msk [vmem:[%s325] sm:$0x1] %vm336, %v2641
        %s2643 = sand.u32 %s126, 1
        %s2644 = scalar_lea.sflag [#allocation6], %s2643
        %s2645 = sand.u32 %s126, 1
        %s2646 = smul.addr %s2645, 256
        %s2647 = scalar_lea.vmem [#allocation12], %s2646
        %s2648 = sand.u32 %s29, 1
        %s2649 = scalar_lea.sflag [#allocation14], %s2648
        %s2650 = sand.u32 %s152, 1
        %s2651 = scalar_lea.vmem [#allocation13], %s2650
        %s2652 = sand.u32 %s29, 1
        %s2653 = scalar_lea.sflag [#allocation14], %s2652
        %s2654 = sand.u32 %s178, 1
        %s2655 = scalar_lea.vmem [#allocation15], %s2654
        // Predicated region
        $region53: #{basic_block_forward.4} parent=35 // pred_check
          %p2656 = pneg %p136
        $region54: #{basic_block_forward.4} parent=35 // pred_check_branch
          %2658 = sbr.rel (%p2656) target = $region56
        $region55: #{basic_block_forward.4} parent=35 // pred_region
          %s2660 = ssub.s32 4096, 4096
          %2661 = vsyncadd %s2644, %s2660
          %s2662 = smul.addr %s29, 32
          %s2663 = smul.addr %s2662, 128
          %s2664 = scalar_lea.hbm %s4, %s2663
          %s2665 = sshll.u32 %s2647, 4
          %s2666 = int_to_ptr.vmem [resolvable:$true] %s2665
          %2671 = dma.vmem_to_hbm [thread:$0]  %s2666, 4096, %s2664, %s2644, 128, 128, 8
        $region56: #{basic_block_forward.4} parent=35 // pred_fallthru
          _
        // Predicated region
        $region57: #{basic_block_forward.4} parent=35 // pred_check
          %p2672 = pneg %p162
        $region58: #{basic_block_forward.4} parent=35 // pred_check_branch
          %2674 = sbr.rel (%p2672) target = $region60
        $region59: #{basic_block_forward.4} parent=35 // pred_region
          %s2676 = ssub.s32 16, 16
          %2677 = vsyncadd %s2649, %s2676
          %s2678 = smul.addr %s29, 16
          %s2679 = scalar_lea.hbm %s5, %s2678
          %s2681 = sshll.u32 %s2651, 4
          %s2682 = int_to_ptr.vmem [resolvable:$true] %s2681
          %2684 = dma.vmem_to_hbm [thread:$0]  %s2682, 16, %s2679, %s2649
        $region60: #{basic_block_forward.4} parent=35 // pred_fallthru
          _
        // Predicated region
        $region61: #{basic_block_forward.4} parent=35 // pred_check
          %p2685 = pneg %p188
        $region62: #{basic_block_forward.4} parent=35 // pred_check_branch
          %2687 = sbr.rel (%p2685) target = $region64
        $region63: #{basic_block_forward.4} parent=35 // pred_region
          %s2689 = ssub.s32 16, 16
          %2690 = vsyncadd %s2653, %s2689
          %s2691 = smul.addr %s29, 16
          %s2692 = scalar_lea.hbm %s6, %s2691
          %s2694 = sshll.u32 %s2655, 4
          %s2695 = int_to_ptr.vmem [resolvable:$true] %s2694
          %2697 = dma.vmem_to_hbm [thread:$0]  %s2695, 16, %s2692, %s2653
        $region64: #{basic_block_forward.4} parent=35 // pred_fallthru
          _
      $region36: #{basic_block_forward.4} parent=5 // pred_fallthru
        _
      %p2698 = scmp.le.s32.totalorder 2, %s24
      // Predicated region
      $region65: #{basic_block_forward.4} parent=5 // pred_check
        %p2699 = pneg %p2698
      $region66: #{basic_block_forward.4} parent=5 // pred_check_branch
        %2701 = sbr.rel (%p2699) target = $region68
      $region67: #{basic_block_forward.4} parent=5 // pred_region
        %s2702 = ssub.s32 %s24, 2
        // Predicated region
        $region69: #{basic_block_forward.4} parent=67 // pred_check
          %p2703 = pneg %p142
        $region70: #{basic_block_forward.4} parent=67 // pred_check_branch
          %2705 = sbr.rel (%p2703) target = $region72
        $region71: #{basic_block_forward.4} parent=67 // pred_region
          %s2706 = sand.u32 %s127, 1
          %s2707 = scalar_lea.sflag [#allocation6], %s2706
          %s2708 = sand.u32 %s127, 1
          %s2709 = smul.addr %s2708, 256
          %s2710 = scalar_lea.vmem [#allocation12], %s2709
          %2711 = dma.done %s2707, 4096
        $region72: #{basic_block_forward.4} parent=67 // pred_fallthru
          _
        // Predicated region
        $region73: #{basic_block_forward.4} parent=67 // pred_check
          %p2712 = pneg %p168
        $region74: #{basic_block_forward.4} parent=67 // pred_check_branch
          %2714 = sbr.rel (%p2712) target = $region76
        $region75: #{basic_block_forward.4} parent=67 // pred_region
          %s2715 = sand.u32 %s30, 1
          %s2716 = scalar_lea.sflag [#allocation14], %s2715
          %s2717 = sand.u32 %s153, 1
          %s2718 = scalar_lea.vmem [#allocation13], %s2717
          %2719 = dma.done %s2716, 16
        $region76: #{basic_block_forward.4} parent=67 // pred_fallthru
          _
        // Predicated region
        $region77: #{basic_block_forward.4} parent=67 // pred_check
          %p2720 = pneg %p194
        $region78: #{basic_block_forward.4} parent=67 // pred_check_branch
          %2722 = sbr.rel (%p2720) target = $region80
        $region79: #{basic_block_forward.4} parent=67 // pred_region
          %s2723 = sand.u32 %s30, 1
          %s2724 = scalar_lea.sflag [#allocation14], %s2723
          %s2725 = sand.u32 %s179, 1
          %s2726 = scalar_lea.vmem [#allocation15], %s2725
          %2727 = dma.done %s2724, 16
        $region80: #{basic_block_forward.4} parent=67 // pred_fallthru
          _
      $region68: #{basic_block_forward.4} parent=5 // pred_fallthru
        _
    $region6: #{basic_block_forward.4} parent=1 // loop_footer
      %s28 = sadd.s32 1, %s24
    $region7: #{basic_block_forward.4} parent=1 // loop_footer_branch
      %23 = sbr.rel target = $region3
    $region8: #{basic_block_forward.4} parent=1 // loop_exit
      _
    %2728 = vsyncpa [#allocation5], 1
    %s2729 = scalar_lea.sflag [#allocation5], 1
    %2730 = vsyncpa %s2729, 1
    %2731 = vsyncpa [#allocation8], 1
    %2732 = vsyncpa [#allocation11], 1
    %2733 = vsyncpa [#allocation6], 1
    %s2734 = scalar_lea.sflag [#allocation6], 1
    %2735 = vsyncpa %s2734, 1
    %2736 = vsyncpa [#allocation14], 1
    %s2737 = scalar_lea.sflag [#allocation14], 1
    %2738 = vsyncpa %s2737, 1

</llo_original>
